<compile_context>
chip_gen: v7x
topology: tpu7x:2x2x1
jax: 0.10.0
libtpu: 0.0.40
codegen_flags: <defaults>
</compile_context>

<pallas_src>
import jax
import jax.numpy as jnp
from jax.experimental import pallas as pl
from jax.experimental.pallas import tpu as pltpu

HIDDEN = 2048
IN_DIM = 2
OUT_DIM = 1


def mlp_kernel(xt_ref, w1a_ref, w1b_ref, b1_ref, w2_ref, b2_ref, o_ref):
    # xt:  (2, TB)     input tile, batch on lanes
    # w1a: (2048, 1)   column 0 of l1.weight
    # w1b: (2048, 1)   column 1 of l1.weight
    # b1:  (2048, 1)   l1.bias as a column
    # w2:  (2048, 1)   l2.weight as a column
    # b2:  (1, 1)      l2.bias
    # o:   (1, TB)     output tile, batch on lanes (lane-dense store)
    x0 = xt_ref[0:1, :]                                   # (1, TB)
    x1 = xt_ref[1:2, :]                                   # (1, TB)

    # Layer 1: K=2 contraction as VPU broadcast-FMA (MXU would be <2% utilized).
    h = w1a_ref[...] * x0 + w1b_ref[...] * x1 + b1_ref[...]   # (2048, TB)
    h = jnp.maximum(h, 0.0)                                    # ReLU

    # Layer 2: N=1 matmul as elementwise mul + reduction over hidden units.
    y = jnp.sum(h * w2_ref[...], axis=0, keepdims=True)        # (1, TB)
    o_ref[...] = (y + b2_ref[...]).astype(o_ref.dtype)


def _round_up(x, m):
    return (x + m - 1) // m * m


def _pick_tile(bp, cap):
    for t in (1024, 512, 256, 128):
        if t <= cap and bp % t == 0:
            return t
    return 128


def net_forward(x, w1, b1, w2, b2, *, batch_tile=256):
    """Forward pass of Net.

    Args (PyTorch nn.Linear parameter layouts):
      x:  (B, 2)      float32
      w1: (2048, 2)   l1.weight
      b1: (2048,)     l1.bias
      w2: (1, 2048)   l2.weight
      b2: (1,)        l2.bias
    Returns: (B, 1) float32
    """
    B = x.shape[0]
    bp = _round_up(max(B, 1), 128)
    tb = _pick_tile(bp, batch_tile)

    # Lane-dense plumbing: batch goes on the last (lane) axis everywhere.
    x_p = jnp.pad(x.astype(jnp.float32), ((0, bp - B), (0, 0)))
    x_t = x_p.T                                    # (2, Bp)
    w1a = w1[:, 0:1].astype(jnp.float32)           # (2048, 1)
    w1b = w1[:, 1:2].astype(jnp.float32)           # (2048, 1)
    b1_c = b1.reshape(HIDDEN, 1).astype(jnp.float32)
    w2_c = w2.reshape(HIDDEN, 1).astype(jnp.float32)
    b2_c = b2.reshape(1, 1).astype(jnp.float32)

    out = pl.pallas_call(
        mlp_kernel,
        out_shape=jax.ShapeDtypeStruct((1, bp), jnp.float32),
        grid_spec=pltpu.PrefetchScalarGridSpec(
            num_scalar_prefetch=0,
            grid=(bp // tb,),
            in_specs=[
                pl.BlockSpec((IN_DIM, tb), lambda i: (0, i)),   # x tile
                pl.BlockSpec((HIDDEN, 1), lambda i: (0, 0)),    # w1 col 0 (resident)
                pl.BlockSpec((HIDDEN, 1), lambda i: (0, 0)),    # w1 col 1 (resident)
                pl.BlockSpec((HIDDEN, 1), lambda i: (0, 0)),    # b1       (resident)
                pl.BlockSpec((HIDDEN, 1), lambda i: (0, 0)),    # w2       (resident)
                pl.BlockSpec((1, 1), lambda i: (0, 0)),         # b2       (resident)
            ],
            out_specs=pl.BlockSpec((1, tb), lambda i: (0, i)),
        ),
        compiler_params=pltpu.CompilerParams(
            dimension_semantics=("parallel",),          # megacore-shard the batch
            vmem_limit_bytes=32 * 1024 * 1024,
        ),
    )(x_t, w1a, w1b, b1_c, w2_c, b2_c)

    return out[0, :B].reshape(B, OUT_DIM)


def init_params(key):
    """Deterministic init mimicking torch.nn.Linear defaults, PyTorch layouts."""
    k1, k2, k3, k4 = jax.random.split(key, 4)
    bound1 = 1.0 / jnp.sqrt(IN_DIM)
    bound2 = 1.0 / jnp.sqrt(HIDDEN)
    w1 = jax.random.uniform(k1, (HIDDEN, IN_DIM), jnp.float32, -bound1, bound1)   # l1.weight
    b1 = jax.random.uniform(k2, (HIDDEN,), jnp.float32, -bound1, bound1)          # l1.bias
    w2 = jax.random.uniform(k3, (OUT_DIM, HIDDEN), jnp.float32, -bound2, bound2)  # l2.weight
    b2 = jax.random.uniform(k4, (OUT_DIM,), jnp.float32, -bound2, bound2)         # l2.bias
    return w1, b1, w2, b2


if __name__ == "__main__":
    key = jax.random.PRNGKey(0)
    pkey, xkey = jax.random.split(key)
    w1, b1, w2, b2 = init_params(pkey)

    B = 512  # small demo batch; exercises 2 grid steps at batch_tile=256
    x = jax.random.normal(xkey, (B, IN_DIM), jnp.float32)

    out = jax.block_until_ready(net_forward(x, w1, b1, w2, b2))

    # Pure-JAX reference (HIGHEST precision so the f32 reference dot matches
    # the exact-f32 VPU arithmetic in the kernel).
    hp = jax.lax.Precision.HIGHEST
    h_ref = jnp.maximum(jnp.dot(x, w1.T, precision=hp) + b1[None, :], 0.0)
    ref = jnp.dot(h_ref, w2.T, precision=hp) + b2[None, :]

    assert out.shape == (B, OUT_DIM)
    assert jnp.allclose(out, ref, atol=1e-4, rtol=1e-4), float(jnp.max(jnp.abs(out - ref)))

    print("KERNEL_OK")
</pallas_src>

<mosaic_0001>
module attributes {stable_mosaic.version = 11 : i64} {
  func.func @mlp_kernel(%arg0: i32, %arg1: memref<2x256xf32, #tpu.memory_space<vmem>>, %arg2: memref<2048x1xf32, #tpu.memory_space<vmem>>, %arg3: memref<2048x1xf32, #tpu.memory_space<vmem>>, %arg4: memref<2048x1xf32, #tpu.memory_space<vmem>>, %arg5: memref<2048x1xf32, #tpu.memory_space<vmem>>, %arg6: memref<1x1xf32, #tpu.memory_space<vmem>>, %arg7: memref<1x256xf32, #tpu.memory_space<vmem>>) attributes {dimension_semantics = [#tpu.dimension_semantics<parallel>], iteration_bounds = array<i64: 2>, scalar_prefetch = 0 : i64, scratch_operands = 0 : i64, tpu.core_type = #tpu.core_type<tc>, window_params = [{transform_indices = @transform_0, window_bounds = array<i64: 2, 256>}, {pipeline_mode = #tpu.pipeline_mode<synchronous>, transform_indices = @transform_1, window_bounds = array<i64: 2048, 1>}, {pipeline_mode = #tpu.pipeline_mode<synchronous>, transform_indices = @transform_2, window_bounds = array<i64: 2048, 1>}, {pipeline_mode = #tpu.pipeline_mode<synchronous>, transform_indices = @transform_3, window_bounds = array<i64: 2048, 1>}, {pipeline_mode = #tpu.pipeline_mode<synchronous>, transform_indices = @transform_4, window_bounds = array<i64: 2048, 1>}, {pipeline_mode = #tpu.pipeline_mode<synchronous>, transform_indices = @transform_5, window_bounds = array<i64: 1, 1>}, {transform_indices = @transform_6, window_bounds = array<i64: 1, 256>}]} {
    %c0 = arith.constant 0 : index
    %c0_0 = arith.constant 0 : index
    %0 = vector.load %arg1[%c0, %c0_0] : memref<2x256xf32, #tpu.memory_space<vmem>>, vector<1x256xf32>
    %c1 = arith.constant 1 : index
    %c0_1 = arith.constant 0 : index
    %1 = vector.load %arg1[%c1, %c0_1] : memref<2x256xf32, #tpu.memory_space<vmem>>, vector<1x256xf32>
    %c0_2 = arith.constant 0 : index
    %c0_3 = arith.constant 0 : index
    %2 = vector.load %arg2[%c0_2, %c0_3] : memref<2048x1xf32, #tpu.memory_space<vmem>>, vector<2048x1xf32>
    %3 = vector.broadcast %2 : vector<2048x1xf32> to vector<2048x256xf32>
    %4 = vector.broadcast %0 : vector<1x256xf32> to vector<2048x256xf32>
    %5 = arith.mulf %3, %4 : vector<2048x256xf32>
    %c0_4 = arith.constant 0 : index
    %c0_5 = arith.constant 0 : index
    %6 = vector.load %arg3[%c0_4, %c0_5] : memref<2048x1xf32, #tpu.memory_space<vmem>>, vector<2048x1xf32>
    %7 = vector.broadcast %6 : vector<2048x1xf32> to vector<2048x256xf32>
    %8 = vector.broadcast %1 : vector<1x256xf32> to vector<2048x256xf32>
    %9 = arith.mulf %7, %8 : vector<2048x256xf32>
    %10 = arith.addf %5, %9 : vector<2048x256xf32>
    %c0_6 = arith.constant 0 : index
    %c0_7 = arith.constant 0 : index
    %11 = vector.load %arg4[%c0_6, %c0_7] : memref<2048x1xf32, #tpu.memory_space<vmem>>, vector<2048x1xf32>
    %12 = vector.broadcast %11 : vector<2048x1xf32> to vector<2048x256xf32>
    %13 = arith.addf %10, %12 : vector<2048x256xf32>
    %cst = arith.constant 0.000000e+00 : f32
    %14 = vector.broadcast %cst : f32 to vector<2048x256xf32>
    %15 = arith.maximumf %13, %14 : vector<2048x256xf32>
    %c0_8 = arith.constant 0 : index
    %c0_9 = arith.constant 0 : index
    %16 = vector.load %arg5[%c0_8, %c0_9] : memref<2048x1xf32, #tpu.memory_space<vmem>>, vector<2048x1xf32>
    %17 = vector.broadcast %16 : vector<2048x1xf32> to vector<2048x256xf32>
    %18 = arith.mulf %15, %17 : vector<2048x256xf32>
    %cst_10 = arith.constant dense<0.000000e+00> : vector<256xf32>
    %19 = vector.multi_reduction <add>, %18, %cst_10 [0] : vector<2048x256xf32> to vector<256xf32>
    %20 = vector.shape_cast %19 : vector<256xf32> to vector<1x256xf32>
    %c0_11 = arith.constant 0 : index
    %c0_12 = arith.constant 0 : index
    %21 = vector.load %arg6[%c0_11, %c0_12] : memref<1x1xf32, #tpu.memory_space<vmem>>, vector<1x1xf32>
    %22 = vector.broadcast %21 : vector<1x1xf32> to vector<1x256xf32>
    %23 = arith.addf %20, %22 : vector<1x256xf32>
    %c0_13 = arith.constant 0 : index
    %c0_14 = arith.constant 0 : index
    %24 = vector.load %arg7[%c0_13, %c0_14] : memref<1x256xf32, #tpu.memory_space<vmem>>, vector<1x256xf32>
    tpu.vector_store %arg7[%c0_13, %c0_14], %23 {strides = array<i32>} : memref<1x256xf32, #tpu.memory_space<vmem>>, vector<1x256xf32>,
    return
  }
  func.func @transform_0(%arg0: i32) -> (i32, i32) {
    %c0_i32 = arith.constant 0 : i32
    %c0_i32_0 = arith.constant 0 : i32
    return %c0_i32, %arg0 : i32, i32
  }
  func.func @transform_1(%arg0: i32) -> (i32, i32) {
    %c0_i32 = arith.constant 0 : i32
    %c0_i32_0 = arith.constant 0 : i32
    %c0_i32_1 = arith.constant 0 : i32
    return %c0_i32, %c0_i32_0 : i32, i32
  }
  func.func @transform_2(%arg0: i32) -> (i32, i32) {
    %c0_i32 = arith.constant 0 : i32
    %c0_i32_0 = arith.constant 0 : i32
    %c0_i32_1 = arith.constant 0 : i32
    return %c0_i32, %c0_i32_0 : i32, i32
  }
  func.func @transform_3(%arg0: i32) -> (i32, i32) {
    %c0_i32 = arith.constant 0 : i32
    %c0_i32_0 = arith.constant 0 : i32
    %c0_i32_1 = arith.constant 0 : i32
    return %c0_i32, %c0_i32_0 : i32, i32
  }
  func.func @transform_4(%arg0: i32) -> (i32, i32) {
    %c0_i32 = arith.constant 0 : i32
    %c0_i32_0 = arith.constant 0 : i32
    %c0_i32_1 = arith.constant 0 : i32
    return %c0_i32, %c0_i32_0 : i32, i32
  }
  func.func @transform_5(%arg0: i32) -> (i32, i32) {
    %c0_i32 = arith.constant 0 : i32
    %c0_i32_0 = arith.constant 0 : i32
    %c0_i32_1 = arith.constant 0 : i32
    return %c0_i32, %c0_i32_0 : i32, i32
  }
  func.func @transform_6(%arg0: i32) -> (i32, i32) {
    %c0_i32 = arith.constant 0 : i32
    %c0_i32_0 = arith.constant 0 : i32
    return %c0_i32, %arg0 : i32, i32
  }
}

</mosaic_0001>

<llo_original>
// kernel: tpu_custom_call.1
$region0: #{tpu_custom_call.1}
  #allocation0 [shape = 'u32[]', space=smem, size = 0x4, offset = 0x4, fixed_abs, tag = 'smem constant byte address 0x4 - core index']
  #allocation1 [shape = 'u32[144,128]{1,0:T(1,128)}', space=vmem, size = 0x12000, scoped, tag = 'internal scratch']
  #allocation2 [shape = 'f32[1,1]{1,0:T(1,128)S(1)}', space=vmem, size = 0x200, scoped, tag = 'scoped memory for tpu_custom_call.1']
  %s0 = inlined_call_operand.vmem [shape: f32[2,512], index: 0, kind: input, shape index: {}]
  %s1 = inlined_call_operand.vmem [shape: f32[2048,1], index: 1, kind: input, shape index: {}]
  %s2 = inlined_call_operand.vmem [shape: f32[2048,1], index: 2, kind: input, shape index: {}]
  %s3 = inlined_call_operand.vmem [shape: f32[2048,1], index: 3, kind: input, shape index: {}]
  %s4 = inlined_call_operand.vmem [shape: f32[2048,1], index: 4, kind: input, shape index: {}]
  %s5 = inlined_call_operand.<no memory space> [shape: f32[1,1], index: 5, kind: input, shape index: {}]
  %s6 = inlined_call_operand.hbm [shape: f32[1,512], index: 6, kind: output, shape index: {}]
  %s7 = sld [smem:[#allocation0]]
  $region57: #{tpu_custom_call.1} parent=0
    _
  %s9 = ssub.s32 1, %s7
  %s10 = scalar_select 0, %s9, %s7
  %v11 = vstv %s5
  %12 = vst [vmem:[#allocation2] sm:$0x1] %v11
  $region1: #{tpu_custom_call.1} parent=0
    #allocation3 [shape = 'u8[2048]{0}', space=vmem, size = 0x800, scoped, tag = 'output window, operand 0']
    #allocation4 [shape = 's32[2]{0}', space=sflag, size = 0x8, scoped, tag = 'scoped memory for tpu_custom_call.1']
    %13 = vsyncpa [#allocation4], 0
    %s14 = scalar_lea.sflag [#allocation4], 1
    %15 = vsyncpa %s14, 0
    loop: start=0, step=1, limit=4
    $region2: #{tpu_custom_call.1} parent=1 // loop_pre_header
      _
    $region3: #{tpu_custom_call.1} parent=1 // loop_header
      %s17 = sphi 0, %s21
      %p18 = scmp.ge.s32.totalorder %s17, 4
      %s27 = sphi 0, %s29
      %s30 = sphi 0, %s27
      %s31 = sphi 0, %s30
      %s47 = sphi 0, %s31
      %s51 = sphi 0, %s51
      %s53 = sphi 0, %s51
      %s54 = sphi 0, %s53
      %s68 = sphi 0, %s54
      %s72 = sphi 0, %s72
      %s74 = sphi 0, %s72
      %s75 = sphi 0, %s74
      %s89 = sphi 0, %s75
      %s93 = sphi 0, %s93
      %s95 = sphi 0, %s93
      %s96 = sphi 0, %s95
      %s110 = sphi 0, %s96
      %s114 = sphi 0, %s114
      %s116 = sphi 0, %s114
      %s117 = sphi 0, %s116
      %s131 = sphi 0, %s117
      %s135 = sphi 0, %s135
      %s137 = sphi 0, %s135
      %s138 = sphi 0, %s137
      %s152 = sphi 0, %s138
      %s158 = sphi 0, %s160
      %s161 = sphi 0, %s158
      %s162 = sphi 0, %s161
      %s178 = sphi 0, %s162
    $region4: #{tpu_custom_call.1} parent=1 // loop_header_branch
      %20 = sbr.rel (%p18) target = $region8
    $region5: #{tpu_custom_call.1} parent=1 // loop_body
      %s22 = ssub.s32 %s17, 1
      %s23 = ssub.s32 %s17, 2
      %s24 = sadd.s32 %s17, 1
      %s25 = ssub.s32 %s17, %s24
      %p26 = scmp.eq.s32.totalorder %s25, 0
      %s28 = sadd.s32 %s27, 1
      %s29 = scalar_select %p26, %s27, %s28
      %p32 = pneg %p26
      %p33 = scmp.eq.s32.totalorder %s17, 1
      %p34 = por %p32, %p33
      %p35 = scmp.ne.s32.totalorder %s27, %s30
      %p36 = scmp.eq.s32.totalorder %s17, 0
      %p37 = por %p35, %p36
      %p38 = scmp.ne.s32.totalorder %s27, %s30
      %p39 = scmp.eq.s32.totalorder %s22, 1
      %p40 = por %p38, %p39
      %p41 = scmp.ne.s32.totalorder %s30, %s31
      %p42 = scmp.eq.s32.totalorder %s22, 0
      %p43 = por %p41, %p42
      %p44 = scmp.ne.s32.totalorder %s30, %s31
      %p45 = scmp.eq.s32.totalorder %s23, 1
      %p46 = por %p44, %p45
      %p48 = scmp.ne.s32.totalorder %s31, %s47
      %p49 = scmp.eq.s32.totalorder %s23, 0
      %p50 = por %p48, %p49
      %s52 = sadd.s32 %s51, 1
      %p55 = scmp.eq.s32.totalorder %s17, 1
      %p56 = scmp.ne.s32.totalorder %s51, %s53
      %p57 = scmp.eq.s32.totalorder %s17, 0
      %p58 = por %p56, %p57
      %p59 = scmp.ne.s32.totalorder %s51, %s53
      %p60 = scmp.eq.s32.totalorder %s22, 1
      %p61 = por %p59, %p60
      %p62 = scmp.ne.s32.totalorder %s53, %s54
      %p63 = scmp.eq.s32.totalorder %s22, 0
      %p64 = por %p62, %p63
      %p65 = scmp.ne.s32.totalorder %s53, %s54
      %p66 = scmp.eq.s32.totalorder %s23, 1
      %p67 = por %p65, %p66
      %p69 = scmp.ne.s32.totalorder %s54, %s68
      %p70 = scmp.eq.s32.totalorder %s23, 0
      %p71 = por %p69, %p70
      %s73 = sadd.s32 %s72, 1
      %p76 = scmp.eq.s32.totalorder %s17, 1
      %p77 = scmp.ne.s32.totalorder %s72, %s74
      %p78 = scmp.eq.s32.totalorder %s17, 0
      %p79 = por %p77, %p78
      %p80 = scmp.ne.s32.totalorder %s72, %s74
      %p81 = scmp.eq.s32.totalorder %s22, 1
      %p82 = por %p80, %p81
      %p83 = scmp.ne.s32.totalorder %s74, %s75
      %p84 = scmp.eq.s32.totalorder %s22, 0
      %p85 = por %p83, %p84
      %p86 = scmp.ne.s32.totalorder %s74, %s75
      %p87 = scmp.eq.s32.totalorder %s23, 1
      %p88 = por %p86, %p87
      %p90 = scmp.ne.s32.totalorder %s75, %s89
      %p91 = scmp.eq.s32.totalorder %s23, 0
      %p92 = por %p90, %p91
      %s94 = sadd.s32 %s93, 1
      %p97 = scmp.eq.s32.totalorder %s17, 1
      %p98 = scmp.ne.s32.totalorder %s93, %s95
      %p99 = scmp.eq.s32.totalorder %s17, 0
      %p100 = por %p98, %p99
      %p101 = scmp.ne.s32.totalorder %s93, %s95
      %p102 = scmp.eq.s32.totalorder %s22, 1
      %p103 = por %p101, %p102
      %p104 = scmp.ne.s32.totalorder %s95, %s96
      %p105 = scmp.eq.s32.totalorder %s22, 0
      %p106 = por %p104, %p105
      %p107 = scmp.ne.s32.totalorder %s95, %s96
      %p108 = scmp.eq.s32.totalorder %s23, 1
      %p109 = por %p107, %p108
      %p111 = scmp.ne.s32.totalorder %s96, %s110
      %p112 = scmp.eq.s32.totalorder %s23, 0
      %p113 = por %p111, %p112
      %s115 = sadd.s32 %s114, 1
      %p118 = scmp.eq.s32.totalorder %s17, 1
      %p119 = scmp.ne.s32.totalorder %s114, %s116
      %p120 = scmp.eq.s32.totalorder %s17, 0
      %p121 = por %p119, %p120
      %p122 = scmp.ne.s32.totalorder %s114, %s116
      %p123 = scmp.eq.s32.totalorder %s22, 1
      %p124 = por %p122, %p123
      %p125 = scmp.ne.s32.totalorder %s116, %s117
      %p126 = scmp.eq.s32.totalorder %s22, 0
      %p127 = por %p125, %p126
      %p128 = scmp.ne.s32.totalorder %s116, %s117
      %p129 = scmp.eq.s32.totalorder %s23, 1
      %p130 = por %p128, %p129
      %p132 = scmp.ne.s32.totalorder %s117, %s131
      %p133 = scmp.eq.s32.totalorder %s23, 0
      %p134 = por %p132, %p133
      %s136 = sadd.s32 %s135, 1
      %p139 = scmp.eq.s32.totalorder %s17, 1
      %p140 = scmp.ne.s32.totalorder %s135, %s137
      %p141 = scmp.eq.s32.totalorder %s17, 0
      %p142 = por %p140, %p141
      %p143 = scmp.ne.s32.totalorder %s135, %s137
      %p144 = scmp.eq.s32.totalorder %s22, 1
      %p145 = por %p143, %p144
      %p146 = scmp.ne.s32.totalorder %s137, %s138
      %p147 = scmp.eq.s32.totalorder %s22, 0
      %p148 = por %p146, %p147
      %p149 = scmp.ne.s32.totalorder %s137, %s138
      %p150 = scmp.eq.s32.totalorder %s23, 1
      %p151 = por %p149, %p150
      %p153 = scmp.ne.s32.totalorder %s138, %s152
      %p154 = scmp.eq.s32.totalorder %s23, 0
      %p155 = por %p153, %p154
      %s156 = ssub.s32 %s17, %s24
      %p157 = scmp.eq.s32.totalorder %s156, 0
      %s159 = sadd.s32 %s158, 1
      %s160 = scalar_select %p157, %s158, %s159
      %p163 = pneg %p157
      %p164 = scmp.eq.s32.totalorder %s17, 1
      %p165 = por %p163, %p164
      %p166 = scmp.ne.s32.totalorder %s158, %s161
      %p167 = scmp.eq.s32.totalorder %s17, 0
      %p168 = por %p166, %p167
      %p169 = scmp.ne.s32.totalorder %s158, %s161
      %p170 = scmp.eq.s32.totalorder %s22, 1
      %p171 = por %p169, %p170
      %p172 = scmp.ne.s32.totalorder %s161, %s162
      %p173 = scmp.eq.s32.totalorder %s22, 0
      %p174 = por %p172, %p173
      %p175 = scmp.ne.s32.totalorder %s161, %s162
      %p176 = scmp.eq.s32.totalorder %s23, 1
      %p177 = por %p175, %p176
      %p179 = scmp.ne.s32.totalorder %s162, %s178
      %p180 = scmp.eq.s32.totalorder %s23, 0
      %p181 = por %p179, %p180
      %p182 = scmp.le.s32.totalorder 1, %s17
      %p183 = scmp.lt.s32.totalorder %s17, 3
      %p184 = pnand %p182, %p183
      %p185 = pneg %p184
      // Predicated region
      $region9: #{tpu_custom_call.1} parent=5 // pred_check
        _
      $region10: #{tpu_custom_call.1} parent=5 // pred_check_branch
        %187 = sbr.rel (%p184) target = $region12
      $region11: #{tpu_custom_call.1} parent=5 // pred_region
        %s188 = ssub.s32 %s17, 1
        // Predicated region
        $region13: #{tpu_custom_call.1} parent=11 // pred_check
          %p189 = pneg %p64
        $region14: #{tpu_custom_call.1} parent=11 // pred_check_branch
          %191 = sbr.rel (%p189) target = $region16
        $region15: #{tpu_custom_call.1} parent=11 // pred_region
          _
        $region16: #{tpu_custom_call.1} parent=11 // pred_fallthru
          _
        // Predicated region
        $region17: #{tpu_custom_call.1} parent=11 // pred_check
          %p192 = pneg %p85
        $region18: #{tpu_custom_call.1} parent=11 // pred_check_branch
          %194 = sbr.rel (%p192) target = $region20
        $region19: #{tpu_custom_call.1} parent=11 // pred_region
          _
        $region20: #{tpu_custom_call.1} parent=11 // pred_fallthru
          _
        // Predicated region
        $region21: #{tpu_custom_call.1} parent=11 // pred_check
          %p195 = pneg %p106
        $region22: #{tpu_custom_call.1} parent=11 // pred_check_branch
          %197 = sbr.rel (%p195) target = $region24
        $region23: #{tpu_custom_call.1} parent=11 // pred_region
          _
        $region24: #{tpu_custom_call.1} parent=11 // pred_fallthru
          _
        // Predicated region
        $region25: #{tpu_custom_call.1} parent=11 // pred_check
          %p198 = pneg %p127
        $region26: #{tpu_custom_call.1} parent=11 // pred_check_branch
          %200 = sbr.rel (%p198) target = $region28
        $region27: #{tpu_custom_call.1} parent=11 // pred_region
          _
        $region28: #{tpu_custom_call.1} parent=11 // pred_fallthru
          _
        // Predicated region
        $region29: #{tpu_custom_call.1} parent=11 // pred_check
          %p201 = pneg %p148
        $region30: #{tpu_custom_call.1} parent=11 // pred_check_branch
          %203 = sbr.rel (%p201) target = $region32
        $region31: #{tpu_custom_call.1} parent=11 // pred_region
          _
        $region32: #{tpu_custom_call.1} parent=11 // pred_fallthru
          _
      $region12: #{tpu_custom_call.1} parent=5 // pred_fallthru
        _
      %p204 = scmp.lt.s32.totalorder %s17, 2
      // Predicated region
      $region33: #{tpu_custom_call.1} parent=5 // pred_check
        %p205 = pneg %p204
      $region34: #{tpu_custom_call.1} parent=5 // pred_check_branch
        %207 = sbr.rel (%p205) target = $region36
      $region35: #{tpu_custom_call.1} parent=5 // pred_region
        // Predicated region
        $region37: #{tpu_custom_call.1} parent=35 // pred_check
          %p208 = pneg %p37
        $region38: #{tpu_custom_call.1} parent=35 // pred_check_branch
          %210 = sbr.rel (%p208) target = $region40
        $region39: #{tpu_custom_call.1} parent=35 // pred_region
          %s211 = smul.u32 2, %s17
          %p212 = scmp.lt.s32.totalorder %s211, 3
          %s213 = scalar_select %p212, %s211, 3
          %s214 = smul.addr %s213, 2
          %s215 = scalar_lea.vmem %s0, %s214
          %s216 = smul.u32 2, %s17
        $region40: #{tpu_custom_call.1} parent=35 // pred_fallthru
          _
      $region36: #{tpu_custom_call.1} parent=5 // pred_fallthru
        _
      %p217 = scmp.le.s32.totalorder 1, %s17
      %p218 = scmp.lt.s32.totalorder %s17, 3
      %p219 = pnand %p217, %p218
      %p220 = pneg %p219
      // Predicated region
      $region41: #{tpu_custom_call.1} parent=5 // pred_check
        _
      $region42: #{tpu_custom_call.1} parent=5 // pred_check_branch
        %222 = sbr.rel (%p219) target = $region44
      $region43: #{tpu_custom_call.1} parent=5 // pred_region
        %s223 = ssub.s32 %s17, 1
        %s224 = smul.u32 2, %s22
        %p225 = scmp.lt.s32.totalorder %s224, 3
        %s226 = scalar_select %p225, %s224, 3
        %s227 = smul.addr %s226, 2
        %s228 = scalar_lea.vmem %s0, %s227
        %p229 = pneg %p43
        %p230 = pneg %p40
        %p231 = pneg %p64
        %p232 = pneg %p61
        %p233 = pneg %p85
        %p234 = pneg %p82
        %p235 = pneg %p106
        %p236 = pneg %p103
        %p237 = pneg %p127
        %p238 = pneg %p124
        %p239 = pneg %p148
        %p240 = pneg %p145
        %p241 = pneg %p174
        %p242 = pneg %p171
        %s243 = sand.u32 %s161, 1
        %s244 = scalar_lea.sflag [#allocation4], %s243
        %s245 = sand.u32 %s161, 1
        %s246 = smul.addr %s245, 2
        %s247 = scalar_lea.vmem [#allocation3], %s246
        %s248 = smul.u32 2, %s22
        %p249 = scmp.lt.s32.totalorder %s248, 3
        %s250 = scalar_select %p249, %s248, 3
        %s251 = smul.addr %s250, 2
        %s252 = scalar_lea.vmem %s0, %s251
        %s253 = smul.u32 2, %s22
        %s254 = smul.u32 2, %s22
        %v255 = vld [vmem:[%s252] ss:$2 sm:$0x3]
        %s256 = scalar_lea.vmem %s252, 1
        %v257 = vld [vmem:[%s256] ss:$2 sm:$0x3]
        %v258 = vld [vmem:[%s1] sm:$0xff]
        %v259 = vld [vmem:[%s1 + $0x8] sm:$0xff]
        %v260 = vld [vmem:[%s1 + $0x10] sm:$0xff]
        %v261 = vld [vmem:[%s1 + $0x18] sm:$0xff]
        %v262 = vld [vmem:[%s1 + $0x20] sm:$0xff]
        %v263 = vld [vmem:[%s1 + $0x28] sm:$0xff]
        %v264 = vld [vmem:[%s1 + $0x30] sm:$0xff]
        %v265 = vld [vmem:[%s1 + $0x38] sm:$0xff]
        %v266 = vld [vmem:[%s1 + $0x40] sm:$0xff]
        %v267 = vld [vmem:[%s1 + $0x48] sm:$0xff]
        %v268 = vld [vmem:[%s1 + $0x50] sm:$0xff]
        %v269 = vld [vmem:[%s1 + $0x58] sm:$0xff]
        %v270 = vld [vmem:[%s1 + $0x60] sm:$0xff]
        %v271 = vld [vmem:[%s1 + $0x68] sm:$0xff]
        %v272 = vld [vmem:[%s1 + $0x70] sm:$0xff]
        %v273 = vld [vmem:[%s1 + $0x78] sm:$0xff]
        %v274 = vld [vmem:[%s1 + $0x80] sm:$0xff]
        %v275 = vld [vmem:[%s1 + $0x88] sm:$0xff]
        %v276 = vld [vmem:[%s1 + $0x90] sm:$0xff]
        %v277 = vld [vmem:[%s1 + $0x98] sm:$0xff]
        %v278 = vld [vmem:[%s1 + $0xa0] sm:$0xff]
        %v279 = vld [vmem:[%s1 + $0xa8] sm:$0xff]
        %v280 = vld [vmem:[%s1 + $0xb0] sm:$0xff]
        %v281 = vld [vmem:[%s1 + $0xb8] sm:$0xff]
        %v282 = vld [vmem:[%s1 + $0xc0] sm:$0xff]
        %v283 = vld [vmem:[%s1 + $0xc8] sm:$0xff]
        %v284 = vld [vmem:[%s1 + $0xd0] sm:$0xff]
        %v285 = vld [vmem:[%s1 + $0xd8] sm:$0xff]
        %v286 = vld [vmem:[%s1 + $0xe0] sm:$0xff]
        %v287 = vld [vmem:[%s1 + $0xe8] sm:$0xff]
        %v288 = vld [vmem:[%s1 + $0xf0] sm:$0xff]
        %v289 = vld [vmem:[%s1 + $0xf8] sm:$0xff]
        %v290 = vld [vmem:[%s1 + $0x100] sm:$0xff]
        %v291 = vld [vmem:[%s1 + $0x108] sm:$0xff]
        %v292 = vld [vmem:[%s1 + $0x110] sm:$0xff]
        %v293 = vld [vmem:[%s1 + $0x118] sm:$0xff]
        %v294 = vld [vmem:[%s1 + $0x120] sm:$0xff]
        %v295 = vld [vmem:[%s1 + $0x128] sm:$0xff]
        %v296 = vld [vmem:[%s1 + $0x130] sm:$0xff]
        %v297 = vld [vmem:[%s1 + $0x138] sm:$0xff]
        %v298 = vld [vmem:[%s1 + $0x140] sm:$0xff]
        %v299 = vld [vmem:[%s1 + $0x148] sm:$0xff]
        %v300 = vld [vmem:[%s1 + $0x150] sm:$0xff]
        %v301 = vld [vmem:[%s1 + $0x158] sm:$0xff]
        %v302 = vld [vmem:[%s1 + $0x160] sm:$0xff]
        %v303 = vld [vmem:[%s1 + $0x168] sm:$0xff]
        %v304 = vld [vmem:[%s1 + $0x170] sm:$0xff]
        %v305 = vld [vmem:[%s1 + $0x178] sm:$0xff]
        %v306 = vld [vmem:[%s1 + $0x180] sm:$0xff]
        %v307 = vld [vmem:[%s1 + $0x188] sm:$0xff]
        %v308 = vld [vmem:[%s1 + $0x190] sm:$0xff]
        %v309 = vld [vmem:[%s1 + $0x198] sm:$0xff]
        %v310 = vld [vmem:[%s1 + $0x1a0] sm:$0xff]
        %v311 = vld [vmem:[%s1 + $0x1a8] sm:$0xff]
        %v312 = vld [vmem:[%s1 + $0x1b0] sm:$0xff]
        %v313 = vld [vmem:[%s1 + $0x1b8] sm:$0xff]
        %v314 = vld [vmem:[%s1 + $0x1c0] sm:$0xff]
        %v315 = vld [vmem:[%s1 + $0x1c8] sm:$0xff]
        %v316 = vld [vmem:[%s1 + $0x1d0] sm:$0xff]
        %v317 = vld [vmem:[%s1 + $0x1d8] sm:$0xff]
        %v318 = vld [vmem:[%s1 + $0x1e0] sm:$0xff]
        %v319 = vld [vmem:[%s1 + $0x1e8] sm:$0xff]
        %v320 = vld [vmem:[%s1 + $0x1f0] sm:$0xff]
        %v321 = vld [vmem:[%s1 + $0x1f8] sm:$0xff]
        %v322 = vld [vmem:[%s1 + $0x200] sm:$0xff]
        %v323 = vld [vmem:[%s1 + $0x208] sm:$0xff]
        %v324 = vld [vmem:[%s1 + $0x210] sm:$0xff]
        %v325 = vld [vmem:[%s1 + $0x218] sm:$0xff]
        %v326 = vld [vmem:[%s1 + $0x220] sm:$0xff]
        %v327 = vld [vmem:[%s1 + $0x228] sm:$0xff]
        %v328 = vld [vmem:[%s1 + $0x230] sm:$0xff]
        %v329 = vld [vmem:[%s1 + $0x238] sm:$0xff]
        %v330 = vld [vmem:[%s1 + $0x240] sm:$0xff]
        %v331 = vld [vmem:[%s1 + $0x248] sm:$0xff]
        %v332 = vld [vmem:[%s1 + $0x250] sm:$0xff]
        %v333 = vld [vmem:[%s1 + $0x258] sm:$0xff]
        %v334 = vld [vmem:[%s1 + $0x260] sm:$0xff]
        %v335 = vld [vmem:[%s1 + $0x268] sm:$0xff]
        %v336 = vld [vmem:[%s1 + $0x270] sm:$0xff]
        %v337 = vld [vmem:[%s1 + $0x278] sm:$0xff]
        %v338 = vld [vmem:[%s1 + $0x280] sm:$0xff]
        %v339 = vld [vmem:[%s1 + $0x288] sm:$0xff]
        %v340 = vld [vmem:[%s1 + $0x290] sm:$0xff]
        %v341 = vld [vmem:[%s1 + $0x298] sm:$0xff]
        %v342 = vld [vmem:[%s1 + $0x2a0] sm:$0xff]
        %v343 = vld [vmem:[%s1 + $0x2a8] sm:$0xff]
        %v344 = vld [vmem:[%s1 + $0x2b0] sm:$0xff]
        %v345 = vld [vmem:[%s1 + $0x2b8] sm:$0xff]
        %v346 = vld [vmem:[%s1 + $0x2c0] sm:$0xff]
        %v347 = vld [vmem:[%s1 + $0x2c8] sm:$0xff]
        %v348 = vld [vmem:[%s1 + $0x2d0] sm:$0xff]
        %v349 = vld [vmem:[%s1 + $0x2d8] sm:$0xff]
        %v350 = vld [vmem:[%s1 + $0x2e0] sm:$0xff]
        %v351 = vld [vmem:[%s1 + $0x2e8] sm:$0xff]
        %v352 = vld [vmem:[%s1 + $0x2f0] sm:$0xff]
        %v353 = vld [vmem:[%s1 + $0x2f8] sm:$0xff]
        %v354 = vld [vmem:[%s1 + $0x300] sm:$0xff]
        %v355 = vld [vmem:[%s1 + $0x308] sm:$0xff]
        %v356 = vld [vmem:[%s1 + $0x310] sm:$0xff]
        %v357 = vld [vmem:[%s1 + $0x318] sm:$0xff]
        %v358 = vld [vmem:[%s1 + $0x320] sm:$0xff]
        %v359 = vld [vmem:[%s1 + $0x328] sm:$0xff]
        %v360 = vld [vmem:[%s1 + $0x330] sm:$0xff]
        %v361 = vld [vmem:[%s1 + $0x338] sm:$0xff]
        %v362 = vld [vmem:[%s1 + $0x340] sm:$0xff]
        %v363 = vld [vmem:[%s1 + $0x348] sm:$0xff]
        %v364 = vld [vmem:[%s1 + $0x350] sm:$0xff]
        %v365 = vld [vmem:[%s1 + $0x358] sm:$0xff]
        %v366 = vld [vmem:[%s1 + $0x360] sm:$0xff]
        %v367 = vld [vmem:[%s1 + $0x368] sm:$0xff]
        %v368 = vld [vmem:[%s1 + $0x370] sm:$0xff]
        %v369 = vld [vmem:[%s1 + $0x378] sm:$0xff]
        %v370 = vld [vmem:[%s1 + $0x380] sm:$0xff]
        %v371 = vld [vmem:[%s1 + $0x388] sm:$0xff]
        %v372 = vld [vmem:[%s1 + $0x390] sm:$0xff]
        %v373 = vld [vmem:[%s1 + $0x398] sm:$0xff]
        %v374 = vld [vmem:[%s1 + $0x3a0] sm:$0xff]
        %v375 = vld [vmem:[%s1 + $0x3a8] sm:$0xff]
        %v376 = vld [vmem:[%s1 + $0x3b0] sm:$0xff]
        %v377 = vld [vmem:[%s1 + $0x3b8] sm:$0xff]
        %v378 = vld [vmem:[%s1 + $0x3c0] sm:$0xff]
        %v379 = vld [vmem:[%s1 + $0x3c8] sm:$0xff]
        %v380 = vld [vmem:[%s1 + $0x3d0] sm:$0xff]
        %v381 = vld [vmem:[%s1 + $0x3d8] sm:$0xff]
        %v382 = vld [vmem:[%s1 + $0x3e0] sm:$0xff]
        %v383 = vld [vmem:[%s1 + $0x3e8] sm:$0xff]
        %v384 = vld [vmem:[%s1 + $0x3f0] sm:$0xff]
        %v385 = vld [vmem:[%s1 + $0x3f8] sm:$0xff]
        %v386 = vld [vmem:[%s1 + $0x400] sm:$0xff]
        %v387 = vld [vmem:[%s1 + $0x408] sm:$0xff]
        %v388 = vld [vmem:[%s1 + $0x410] sm:$0xff]
        %v389 = vld [vmem:[%s1 + $0x418] sm:$0xff]
        %v390 = vld [vmem:[%s1 + $0x420] sm:$0xff]
        %v391 = vld [vmem:[%s1 + $0x428] sm:$0xff]
        %v392 = vld [vmem:[%s1 + $0x430] sm:$0xff]
        %v393 = vld [vmem:[%s1 + $0x438] sm:$0xff]
        %v394 = vld [vmem:[%s1 + $0x440] sm:$0xff]
        %v395 = vld [vmem:[%s1 + $0x448] sm:$0xff]
        %v396 = vld [vmem:[%s1 + $0x450] sm:$0xff]
        %v397 = vld [vmem:[%s1 + $0x458] sm:$0xff]
        %v398 = vld [vmem:[%s1 + $0x460] sm:$0xff]
        %v399 = vld [vmem:[%s1 + $0x468] sm:$0xff]
        %v400 = vld [vmem:[%s1 + $0x470] sm:$0xff]
        %v401 = vld [vmem:[%s1 + $0x478] sm:$0xff]
        %v402 = vld [vmem:[%s1 + $0x480] sm:$0xff]
        %v403 = vld [vmem:[%s1 + $0x488] sm:$0xff]
        %v404 = vld [vmem:[%s1 + $0x490] sm:$0xff]
        %v405 = vld [vmem:[%s1 + $0x498] sm:$0xff]
        %v406 = vld [vmem:[%s1 + $0x4a0] sm:$0xff]
        %v407 = vld [vmem:[%s1 + $0x4a8] sm:$0xff]
        %v408 = vld [vmem:[%s1 + $0x4b0] sm:$0xff]
        %v409 = vld [vmem:[%s1 + $0x4b8] sm:$0xff]
        %v410 = vld [vmem:[%s1 + $0x4c0] sm:$0xff]
        %v411 = vld [vmem:[%s1 + $0x4c8] sm:$0xff]
        %v412 = vld [vmem:[%s1 + $0x4d0] sm:$0xff]
        %v413 = vld [vmem:[%s1 + $0x4d8] sm:$0xff]
        %v414 = vld [vmem:[%s1 + $0x4e0] sm:$0xff]
        %v415 = vld [vmem:[%s1 + $0x4e8] sm:$0xff]
        %v416 = vld [vmem:[%s1 + $0x4f0] sm:$0xff]
        %v417 = vld [vmem:[%s1 + $0x4f8] sm:$0xff]
        %v418 = vld [vmem:[%s1 + $0x500] sm:$0xff]
        %v419 = vld [vmem:[%s1 + $0x508] sm:$0xff]
        %v420 = vld [vmem:[%s1 + $0x510] sm:$0xff]
        %v421 = vld [vmem:[%s1 + $0x518] sm:$0xff]
        %v422 = vld [vmem:[%s1 + $0x520] sm:$0xff]
        %v423 = vld [vmem:[%s1 + $0x528] sm:$0xff]
        %v424 = vld [vmem:[%s1 + $0x530] sm:$0xff]
        %v425 = vld [vmem:[%s1 + $0x538] sm:$0xff]
        %v426 = vld [vmem:[%s1 + $0x540] sm:$0xff]
        %v427 = vld [vmem:[%s1 + $0x548] sm:$0xff]
        %v428 = vld [vmem:[%s1 + $0x550] sm:$0xff]
        %v429 = vld [vmem:[%s1 + $0x558] sm:$0xff]
        %v430 = vld [vmem:[%s1 + $0x560] sm:$0xff]
        %v431 = vld [vmem:[%s1 + $0x568] sm:$0xff]
        %v432 = vld [vmem:[%s1 + $0x570] sm:$0xff]
        %v433 = vld [vmem:[%s1 + $0x578] sm:$0xff]
        %v434 = vld [vmem:[%s1 + $0x580] sm:$0xff]
        %v435 = vld [vmem:[%s1 + $0x588] sm:$0xff]
        %v436 = vld [vmem:[%s1 + $0x590] sm:$0xff]
        %v437 = vld [vmem:[%s1 + $0x598] sm:$0xff]
        %v438 = vld [vmem:[%s1 + $0x5a0] sm:$0xff]
        %v439 = vld [vmem:[%s1 + $0x5a8] sm:$0xff]
        %v440 = vld [vmem:[%s1 + $0x5b0] sm:$0xff]
        %v441 = vld [vmem:[%s1 + $0x5b8] sm:$0xff]
        %v442 = vld [vmem:[%s1 + $0x5c0] sm:$0xff]
        %v443 = vld [vmem:[%s1 + $0x5c8] sm:$0xff]
        %v444 = vld [vmem:[%s1 + $0x5d0] sm:$0xff]
        %v445 = vld [vmem:[%s1 + $0x5d8] sm:$0xff]
        %v446 = vld [vmem:[%s1 + $0x5e0] sm:$0xff]
        %v447 = vld [vmem:[%s1 + $0x5e8] sm:$0xff]
        %v448 = vld [vmem:[%s1 + $0x5f0] sm:$0xff]
        %v449 = vld [vmem:[%s1 + $0x5f8] sm:$0xff]
        %v450 = vld [vmem:[%s1 + $0x600] sm:$0xff]
        %v451 = vld [vmem:[%s1 + $0x608] sm:$0xff]
        %v452 = vld [vmem:[%s1 + $0x610] sm:$0xff]
        %v453 = vld [vmem:[%s1 + $0x618] sm:$0xff]
        %v454 = vld [vmem:[%s1 + $0x620] sm:$0xff]
        %v455 = vld [vmem:[%s1 + $0x628] sm:$0xff]
        %v456 = vld [vmem:[%s1 + $0x630] sm:$0xff]
        %v457 = vld [vmem:[%s1 + $0x638] sm:$0xff]
        %v458 = vld [vmem:[%s1 + $0x640] sm:$0xff]
        %v459 = vld [vmem:[%s1 + $0x648] sm:$0xff]
        %v460 = vld [vmem:[%s1 + $0x650] sm:$0xff]
        %v461 = vld [vmem:[%s1 + $0x658] sm:$0xff]
        %v462 = vld [vmem:[%s1 + $0x660] sm:$0xff]
        %v463 = vld [vmem:[%s1 + $0x668] sm:$0xff]
        %v464 = vld [vmem:[%s1 + $0x670] sm:$0xff]
        %v465 = vld [vmem:[%s1 + $0x678] sm:$0xff]
        %v466 = vld [vmem:[%s1 + $0x680] sm:$0xff]
        %v467 = vld [vmem:[%s1 + $0x688] sm:$0xff]
        %v468 = vld [vmem:[%s1 + $0x690] sm:$0xff]
        %v469 = vld [vmem:[%s1 + $0x698] sm:$0xff]
        %v470 = vld [vmem:[%s1 + $0x6a0] sm:$0xff]
        %v471 = vld [vmem:[%s1 + $0x6a8] sm:$0xff]
        %v472 = vld [vmem:[%s1 + $0x6b0] sm:$0xff]
        %v473 = vld [vmem:[%s1 + $0x6b8] sm:$0xff]
        %v474 = vld [vmem:[%s1 + $0x6c0] sm:$0xff]
        %v475 = vld [vmem:[%s1 + $0x6c8] sm:$0xff]
        %v476 = vld [vmem:[%s1 + $0x6d0] sm:$0xff]
        %v477 = vld [vmem:[%s1 + $0x6d8] sm:$0xff]
        %v478 = vld [vmem:[%s1 + $0x6e0] sm:$0xff]
        %v479 = vld [vmem:[%s1 + $0x6e8] sm:$0xff]
        %v480 = vld [vmem:[%s1 + $0x6f0] sm:$0xff]
        %v481 = vld [vmem:[%s1 + $0x6f8] sm:$0xff]
        %v482 = vld [vmem:[%s1 + $0x700] sm:$0xff]
        %v483 = vld [vmem:[%s1 + $0x708] sm:$0xff]
        %v484 = vld [vmem:[%s1 + $0x710] sm:$0xff]
        %v485 = vld [vmem:[%s1 + $0x718] sm:$0xff]
        %v486 = vld [vmem:[%s1 + $0x720] sm:$0xff]
        %v487 = vld [vmem:[%s1 + $0x728] sm:$0xff]
        %v488 = vld [vmem:[%s1 + $0x730] sm:$0xff]
        %v489 = vld [vmem:[%s1 + $0x738] sm:$0xff]
        %v490 = vld [vmem:[%s1 + $0x740] sm:$0xff]
        %v491 = vld [vmem:[%s1 + $0x748] sm:$0xff]
        %v492 = vld [vmem:[%s1 + $0x750] sm:$0xff]
        %v493 = vld [vmem:[%s1 + $0x758] sm:$0xff]
        %v494 = vld [vmem:[%s1 + $0x760] sm:$0xff]
        %v495 = vld [vmem:[%s1 + $0x768] sm:$0xff]
        %v496 = vld [vmem:[%s1 + $0x770] sm:$0xff]
        %v497 = vld [vmem:[%s1 + $0x778] sm:$0xff]
        %v498 = vld [vmem:[%s1 + $0x780] sm:$0xff]
        %v499 = vld [vmem:[%s1 + $0x788] sm:$0xff]
        %v500 = vld [vmem:[%s1 + $0x790] sm:$0xff]
        %v501 = vld [vmem:[%s1 + $0x798] sm:$0xff]
        %v502 = vld [vmem:[%s1 + $0x7a0] sm:$0xff]
        %v503 = vld [vmem:[%s1 + $0x7a8] sm:$0xff]
        %v504 = vld [vmem:[%s1 + $0x7b0] sm:$0xff]
        %v505 = vld [vmem:[%s1 + $0x7b8] sm:$0xff]
        %v506 = vld [vmem:[%s1 + $0x7c0] sm:$0xff]
        %v507 = vld [vmem:[%s1 + $0x7c8] sm:$0xff]
        %v508 = vld [vmem:[%s1 + $0x7d0] sm:$0xff]
        %v509 = vld [vmem:[%s1 + $0x7d8] sm:$0xff]
        %v510 = vld [vmem:[%s1 + $0x7e0] sm:$0xff]
        %v511 = vld [vmem:[%s1 + $0x7e8] sm:$0xff]
        %v512 = vld [vmem:[%s1 + $0x7f0] sm:$0xff]
        %v513 = vld [vmem:[%s1 + $0x7f8] sm:$0xff]
        %515 = vset.pattern.permute.xlu0 0
        %516 = vperm.xlu0 %515, %v258
        %v517 = vpop.permute.xlu0 %516
        %520 = vset.pattern.permute.xlu0 0
        %521 = vperm.xlu0 %520, %v259
        %v522 = vpop.permute.xlu0 %521
        %525 = vset.pattern.permute.xlu0 0
        %526 = vperm.xlu0 %525, %v260
        %v527 = vpop.permute.xlu0 %526
        %530 = vset.pattern.permute.xlu0 0
        %531 = vperm.xlu0 %530, %v261
        %v532 = vpop.permute.xlu0 %531
        %535 = vset.pattern.permute.xlu0 0
        %536 = vperm.xlu0 %535, %v262
        %v537 = vpop.permute.xlu0 %536
        %540 = vset.pattern.permute.xlu0 0
        %541 = vperm.xlu0 %540, %v263
        %v542 = vpop.permute.xlu0 %541
        %545 = vset.pattern.permute.xlu0 0
        %546 = vperm.xlu0 %545, %v264
        %v547 = vpop.permute.xlu0 %546
        %550 = vset.pattern.permute.xlu0 0
        %551 = vperm.xlu0 %550, %v265
        %v552 = vpop.permute.xlu0 %551
        %555 = vset.pattern.permute.xlu0 0
        %556 = vperm.xlu0 %555, %v266
        %v557 = vpop.permute.xlu0 %556
        %560 = vset.pattern.permute.xlu0 0
        %561 = vperm.xlu0 %560, %v267
        %v562 = vpop.permute.xlu0 %561
        %565 = vset.pattern.permute.xlu0 0
        %566 = vperm.xlu0 %565, %v268
        %v567 = vpop.permute.xlu0 %566
        %570 = vset.pattern.permute.xlu0 0
        %571 = vperm.xlu0 %570, %v269
        %v572 = vpop.permute.xlu0 %571
        %575 = vset.pattern.permute.xlu0 0
        %576 = vperm.xlu0 %575, %v270
        %v577 = vpop.permute.xlu0 %576
        %580 = vset.pattern.permute.xlu0 0
        %581 = vperm.xlu0 %580, %v271
        %v582 = vpop.permute.xlu0 %581
        %585 = vset.pattern.permute.xlu0 0
        %586 = vperm.xlu0 %585, %v272
        %v587 = vpop.permute.xlu0 %586
        %590 = vset.pattern.permute.xlu0 0
        %591 = vperm.xlu0 %590, %v273
        %v592 = vpop.permute.xlu0 %591
        %595 = vset.pattern.permute.xlu0 0
        %596 = vperm.xlu0 %595, %v274
        %v597 = vpop.permute.xlu0 %596
        %600 = vset.pattern.permute.xlu0 0
        %601 = vperm.xlu0 %600, %v275
        %v602 = vpop.permute.xlu0 %601
        %605 = vset.pattern.permute.xlu0 0
        %606 = vperm.xlu0 %605, %v276
        %v607 = vpop.permute.xlu0 %606
        %610 = vset.pattern.permute.xlu0 0
        %611 = vperm.xlu0 %610, %v277
        %v612 = vpop.permute.xlu0 %611
        %615 = vset.pattern.permute.xlu0 0
        %616 = vperm.xlu0 %615, %v278
        %v617 = vpop.permute.xlu0 %616
        %620 = vset.pattern.permute.xlu0 0
        %621 = vperm.xlu0 %620, %v279
        %v622 = vpop.permute.xlu0 %621
        %625 = vset.pattern.permute.xlu0 0
        %626 = vperm.xlu0 %625, %v280
        %v627 = vpop.permute.xlu0 %626
        %630 = vset.pattern.permute.xlu0 0
        %631 = vperm.xlu0 %630, %v281
        %v632 = vpop.permute.xlu0 %631
        %635 = vset.pattern.permute.xlu0 0
        %636 = vperm.xlu0 %635, %v282
        %v637 = vpop.permute.xlu0 %636
        %640 = vset.pattern.permute.xlu0 0
        %641 = vperm.xlu0 %640, %v283
        %v642 = vpop.permute.xlu0 %641
        %645 = vset.pattern.permute.xlu0 0
        %646 = vperm.xlu0 %645, %v284
        %v647 = vpop.permute.xlu0 %646
        %650 = vset.pattern.permute.xlu0 0
        %651 = vperm.xlu0 %650, %v285
        %v652 = vpop.permute.xlu0 %651
        %655 = vset.pattern.permute.xlu0 0
        %656 = vperm.xlu0 %655, %v286
        %v657 = vpop.permute.xlu0 %656
        %660 = vset.pattern.permute.xlu0 0
        %661 = vperm.xlu0 %660, %v287
        %v662 = vpop.permute.xlu0 %661
        %665 = vset.pattern.permute.xlu0 0
        %666 = vperm.xlu0 %665, %v288
        %v667 = vpop.permute.xlu0 %666
        %670 = vset.pattern.permute.xlu0 0
        %671 = vperm.xlu0 %670, %v289
        %v672 = vpop.permute.xlu0 %671
        %675 = vset.pattern.permute.xlu0 0
        %676 = vperm.xlu0 %675, %v290
        %v677 = vpop.permute.xlu0 %676
        %680 = vset.pattern.permute.xlu0 0
        %681 = vperm.xlu0 %680, %v291
        %v682 = vpop.permute.xlu0 %681
        %685 = vset.pattern.permute.xlu0 0
        %686 = vperm.xlu0 %685, %v292
        %v687 = vpop.permute.xlu0 %686
        %690 = vset.pattern.permute.xlu0 0
        %691 = vperm.xlu0 %690, %v293
        %v692 = vpop.permute.xlu0 %691
        %695 = vset.pattern.permute.xlu0 0
        %696 = vperm.xlu0 %695, %v294
        %v697 = vpop.permute.xlu0 %696
        %700 = vset.pattern.permute.xlu0 0
        %701 = vperm.xlu0 %700, %v295
        %v702 = vpop.permute.xlu0 %701
        %705 = vset.pattern.permute.xlu0 0
        %706 = vperm.xlu0 %705, %v296
        %v707 = vpop.permute.xlu0 %706
        %710 = vset.pattern.permute.xlu0 0
        %711 = vperm.xlu0 %710, %v297
        %v712 = vpop.permute.xlu0 %711
        %715 = vset.pattern.permute.xlu0 0
        %716 = vperm.xlu0 %715, %v298
        %v717 = vpop.permute.xlu0 %716
        %720 = vset.pattern.permute.xlu0 0
        %721 = vperm.xlu0 %720, %v299
        %v722 = vpop.permute.xlu0 %721
        %725 = vset.pattern.permute.xlu0 0
        %726 = vperm.xlu0 %725, %v300
        %v727 = vpop.permute.xlu0 %726
        %730 = vset.pattern.permute.xlu0 0
        %731 = vperm.xlu0 %730, %v301
        %v732 = vpop.permute.xlu0 %731
        %735 = vset.pattern.permute.xlu0 0
        %736 = vperm.xlu0 %735, %v302
        %v737 = vpop.permute.xlu0 %736
        %740 = vset.pattern.permute.xlu0 0
        %741 = vperm.xlu0 %740, %v303
        %v742 = vpop.permute.xlu0 %741
        %745 = vset.pattern.permute.xlu0 0
        %746 = vperm.xlu0 %745, %v304
        %v747 = vpop.permute.xlu0 %746
        %750 = vset.pattern.permute.xlu0 0
        %751 = vperm.xlu0 %750, %v305
        %v752 = vpop.permute.xlu0 %751
        %755 = vset.pattern.permute.xlu0 0
        %756 = vperm.xlu0 %755, %v306
        %v757 = vpop.permute.xlu0 %756
        %760 = vset.pattern.permute.xlu0 0
        %761 = vperm.xlu0 %760, %v307
        %v762 = vpop.permute.xlu0 %761
        %765 = vset.pattern.permute.xlu0 0
        %766 = vperm.xlu0 %765, %v308
        %v767 = vpop.permute.xlu0 %766
        %770 = vset.pattern.permute.xlu0 0
        %771 = vperm.xlu0 %770, %v309
        %v772 = vpop.permute.xlu0 %771
        %775 = vset.pattern.permute.xlu0 0
        %776 = vperm.xlu0 %775, %v310
        %v777 = vpop.permute.xlu0 %776
        %780 = vset.pattern.permute.xlu0 0
        %781 = vperm.xlu0 %780, %v311
        %v782 = vpop.permute.xlu0 %781
        %785 = vset.pattern.permute.xlu0 0
        %786 = vperm.xlu0 %785, %v312
        %v787 = vpop.permute.xlu0 %786
        %790 = vset.pattern.permute.xlu0 0
        %791 = vperm.xlu0 %790, %v313
        %v792 = vpop.permute.xlu0 %791
        %795 = vset.pattern.permute.xlu0 0
        %796 = vperm.xlu0 %795, %v314
        %v797 = vpop.permute.xlu0 %796
        %800 = vset.pattern.permute.xlu0 0
        %801 = vperm.xlu0 %800, %v315
        %v802 = vpop.permute.xlu0 %801
        %805 = vset.pattern.permute.xlu0 0
        %806 = vperm.xlu0 %805, %v316
        %v807 = vpop.permute.xlu0 %806
        %810 = vset.pattern.permute.xlu0 0
        %811 = vperm.xlu0 %810, %v317
        %v812 = vpop.permute.xlu0 %811
        %815 = vset.pattern.permute.xlu0 0
        %816 = vperm.xlu0 %815, %v318
        %v817 = vpop.permute.xlu0 %816
        %820 = vset.pattern.permute.xlu0 0
        %821 = vperm.xlu0 %820, %v319
        %v822 = vpop.permute.xlu0 %821
        %825 = vset.pattern.permute.xlu0 0
        %826 = vperm.xlu0 %825, %v320
        %v827 = vpop.permute.xlu0 %826
        %830 = vset.pattern.permute.xlu0 0
        %831 = vperm.xlu0 %830, %v321
        %v832 = vpop.permute.xlu0 %831
        %835 = vset.pattern.permute.xlu0 0
        %836 = vperm.xlu0 %835, %v322
        %v837 = vpop.permute.xlu0 %836
        %840 = vset.pattern.permute.xlu0 0
        %841 = vperm.xlu0 %840, %v323
        %v842 = vpop.permute.xlu0 %841
        %845 = vset.pattern.permute.xlu0 0
        %846 = vperm.xlu0 %845, %v324
        %v847 = vpop.permute.xlu0 %846
        %850 = vset.pattern.permute.xlu0 0
        %851 = vperm.xlu0 %850, %v325
        %v852 = vpop.permute.xlu0 %851
        %855 = vset.pattern.permute.xlu0 0
        %856 = vperm.xlu0 %855, %v326
        %v857 = vpop.permute.xlu0 %856
        %860 = vset.pattern.permute.xlu0 0
        %861 = vperm.xlu0 %860, %v327
        %v862 = vpop.permute.xlu0 %861
        %865 = vset.pattern.permute.xlu0 0
        %866 = vperm.xlu0 %865, %v328
        %v867 = vpop.permute.xlu0 %866
        %870 = vset.pattern.permute.xlu0 0
        %871 = vperm.xlu0 %870, %v329
        %v872 = vpop.permute.xlu0 %871
        %875 = vset.pattern.permute.xlu0 0
        %876 = vperm.xlu0 %875, %v330
        %v877 = vpop.permute.xlu0 %876
        %880 = vset.pattern.permute.xlu0 0
        %881 = vperm.xlu0 %880, %v331
        %v882 = vpop.permute.xlu0 %881
        %885 = vset.pattern.permute.xlu0 0
        %886 = vperm.xlu0 %885, %v332
        %v887 = vpop.permute.xlu0 %886
        %890 = vset.pattern.permute.xlu0 0
        %891 = vperm.xlu0 %890, %v333
        %v892 = vpop.permute.xlu0 %891
        %895 = vset.pattern.permute.xlu0 0
        %896 = vperm.xlu0 %895, %v334
        %v897 = vpop.permute.xlu0 %896
        %900 = vset.pattern.permute.xlu0 0
        %901 = vperm.xlu0 %900, %v335
        %v902 = vpop.permute.xlu0 %901
        %905 = vset.pattern.permute.xlu0 0
        %906 = vperm.xlu0 %905, %v336
        %v907 = vpop.permute.xlu0 %906
        %910 = vset.pattern.permute.xlu0 0
        %911 = vperm.xlu0 %910, %v337
        %v912 = vpop.permute.xlu0 %911
        %915 = vset.pattern.permute.xlu0 0
        %916 = vperm.xlu0 %915, %v338
        %v917 = vpop.permute.xlu0 %916
        %920 = vset.pattern.permute.xlu0 0
        %921 = vperm.xlu0 %920, %v339
        %v922 = vpop.permute.xlu0 %921
        %925 = vset.pattern.permute.xlu0 0
        %926 = vperm.xlu0 %925, %v340
        %v927 = vpop.permute.xlu0 %926
        %930 = vset.pattern.permute.xlu0 0
        %931 = vperm.xlu0 %930, %v341
        %v932 = vpop.permute.xlu0 %931
        %935 = vset.pattern.permute.xlu0 0
        %936 = vperm.xlu0 %935, %v342
        %v937 = vpop.permute.xlu0 %936
        %940 = vset.pattern.permute.xlu0 0
        %941 = vperm.xlu0 %940, %v343
        %v942 = vpop.permute.xlu0 %941
        %945 = vset.pattern.permute.xlu0 0
        %946 = vperm.xlu0 %945, %v344
        %v947 = vpop.permute.xlu0 %946
        %950 = vset.pattern.permute.xlu0 0
        %951 = vperm.xlu0 %950, %v345
        %v952 = vpop.permute.xlu0 %951
        %955 = vset.pattern.permute.xlu0 0
        %956 = vperm.xlu0 %955, %v346
        %v957 = vpop.permute.xlu0 %956
        %960 = vset.pattern.permute.xlu0 0
        %961 = vperm.xlu0 %960, %v347
        %v962 = vpop.permute.xlu0 %961
        %965 = vset.pattern.permute.xlu0 0
        %966 = vperm.xlu0 %965, %v348
        %v967 = vpop.permute.xlu0 %966
        %970 = vset.pattern.permute.xlu0 0
        %971 = vperm.xlu0 %970, %v349
        %v972 = vpop.permute.xlu0 %971
        %975 = vset.pattern.permute.xlu0 0
        %976 = vperm.xlu0 %975, %v350
        %v977 = vpop.permute.xlu0 %976
        %980 = vset.pattern.permute.xlu0 0
        %981 = vperm.xlu0 %980, %v351
        %v982 = vpop.permute.xlu0 %981
        %985 = vset.pattern.permute.xlu0 0
        %986 = vperm.xlu0 %985, %v352
        %v987 = vpop.permute.xlu0 %986
        %990 = vset.pattern.permute.xlu0 0
        %991 = vperm.xlu0 %990, %v353
        %v992 = vpop.permute.xlu0 %991
        %995 = vset.pattern.permute.xlu0 0
        %996 = vperm.xlu0 %995, %v354
        %v997 = vpop.permute.xlu0 %996
        %1000 = vset.pattern.permute.xlu0 0
        %1001 = vperm.xlu0 %1000, %v355
        %v1002 = vpop.permute.xlu0 %1001
        %1005 = vset.pattern.permute.xlu0 0
        %1006 = vperm.xlu0 %1005, %v356
        %v1007 = vpop.permute.xlu0 %1006
        %1010 = vset.pattern.permute.xlu0 0
        %1011 = vperm.xlu0 %1010, %v357
        %v1012 = vpop.permute.xlu0 %1011
        %1015 = vset.pattern.permute.xlu0 0
        %1016 = vperm.xlu0 %1015, %v358
        %v1017 = vpop.permute.xlu0 %1016
        %1020 = vset.pattern.permute.xlu0 0
        %1021 = vperm.xlu0 %1020, %v359
        %v1022 = vpop.permute.xlu0 %1021
        %1025 = vset.pattern.permute.xlu0 0
        %1026 = vperm.xlu0 %1025, %v360
        %v1027 = vpop.permute.xlu0 %1026
        %1030 = vset.pattern.permute.xlu0 0
        %1031 = vperm.xlu0 %1030, %v361
        %v1032 = vpop.permute.xlu0 %1031
        %1035 = vset.pattern.permute.xlu0 0
        %1036 = vperm.xlu0 %1035, %v362
        %v1037 = vpop.permute.xlu0 %1036
        %1040 = vset.pattern.permute.xlu0 0
        %1041 = vperm.xlu0 %1040, %v363
        %v1042 = vpop.permute.xlu0 %1041
        %1045 = vset.pattern.permute.xlu0 0
        %1046 = vperm.xlu0 %1045, %v364
        %v1047 = vpop.permute.xlu0 %1046
        %1050 = vset.pattern.permute.xlu0 0
        %1051 = vperm.xlu0 %1050, %v365
        %v1052 = vpop.permute.xlu0 %1051
        %1055 = vset.pattern.permute.xlu0 0
        %1056 = vperm.xlu0 %1055, %v366
        %v1057 = vpop.permute.xlu0 %1056
        %1060 = vset.pattern.permute.xlu0 0
        %1061 = vperm.xlu0 %1060, %v367
        %v1062 = vpop.permute.xlu0 %1061
        %1065 = vset.pattern.permute.xlu0 0
        %1066 = vperm.xlu0 %1065, %v368
        %v1067 = vpop.permute.xlu0 %1066
        %1070 = vset.pattern.permute.xlu0 0
        %1071 = vperm.xlu0 %1070, %v369
        %v1072 = vpop.permute.xlu0 %1071
        %1075 = vset.pattern.permute.xlu0 0
        %1076 = vperm.xlu0 %1075, %v370
        %v1077 = vpop.permute.xlu0 %1076
        %1080 = vset.pattern.permute.xlu0 0
        %1081 = vperm.xlu0 %1080, %v371
        %v1082 = vpop.permute.xlu0 %1081
        %1085 = vset.pattern.permute.xlu0 0
        %1086 = vperm.xlu0 %1085, %v372
        %v1087 = vpop.permute.xlu0 %1086
        %1090 = vset.pattern.permute.xlu0 0
        %1091 = vperm.xlu0 %1090, %v373
        %v1092 = vpop.permute.xlu0 %1091
        %1095 = vset.pattern.permute.xlu0 0
        %1096 = vperm.xlu0 %1095, %v374
        %v1097 = vpop.permute.xlu0 %1096
        %1100 = vset.pattern.permute.xlu0 0
        %1101 = vperm.xlu0 %1100, %v375
        %v1102 = vpop.permute.xlu0 %1101
        %1105 = vset.pattern.permute.xlu0 0
        %1106 = vperm.xlu0 %1105, %v376
        %v1107 = vpop.permute.xlu0 %1106
        %1110 = vset.pattern.permute.xlu0 0
        %1111 = vperm.xlu0 %1110, %v377
        %v1112 = vpop.permute.xlu0 %1111
        %1115 = vset.pattern.permute.xlu0 0
        %1116 = vperm.xlu0 %1115, %v378
        %v1117 = vpop.permute.xlu0 %1116
        %1120 = vset.pattern.permute.xlu0 0
        %1121 = vperm.xlu0 %1120, %v379
        %v1122 = vpop.permute.xlu0 %1121
        %1125 = vset.pattern.permute.xlu0 0
        %1126 = vperm.xlu0 %1125, %v380
        %v1127 = vpop.permute.xlu0 %1126
        %1130 = vset.pattern.permute.xlu0 0
        %1131 = vperm.xlu0 %1130, %v381
        %v1132 = vpop.permute.xlu0 %1131
        %1135 = vset.pattern.permute.xlu0 0
        %1136 = vperm.xlu0 %1135, %v382
        %v1137 = vpop.permute.xlu0 %1136
        %1140 = vset.pattern.permute.xlu0 0
        %1141 = vperm.xlu0 %1140, %v383
        %v1142 = vpop.permute.xlu0 %1141
        %1145 = vset.pattern.permute.xlu0 0
        %1146 = vperm.xlu0 %1145, %v384
        %v1147 = vpop.permute.xlu0 %1146
        %1150 = vset.pattern.permute.xlu0 0
        %1151 = vperm.xlu0 %1150, %v385
        %v1152 = vpop.permute.xlu0 %1151
        %1155 = vset.pattern.permute.xlu0 0
        %1156 = vperm.xlu0 %1155, %v386
        %v1157 = vpop.permute.xlu0 %1156
        %1160 = vset.pattern.permute.xlu0 0
        %1161 = vperm.xlu0 %1160, %v387
        %v1162 = vpop.permute.xlu0 %1161
        %1165 = vset.pattern.permute.xlu0 0
        %1166 = vperm.xlu0 %1165, %v388
        %v1167 = vpop.permute.xlu0 %1166
        %1170 = vset.pattern.permute.xlu0 0
        %1171 = vperm.xlu0 %1170, %v389
        %v1172 = vpop.permute.xlu0 %1171
        %1175 = vset.pattern.permute.xlu0 0
        %1176 = vperm.xlu0 %1175, %v390
        %v1177 = vpop.permute.xlu0 %1176
        %1180 = vset.pattern.permute.xlu0 0
        %1181 = vperm.xlu0 %1180, %v391
        %v1182 = vpop.permute.xlu0 %1181
        %1185 = vset.pattern.permute.xlu0 0
        %1186 = vperm.xlu0 %1185, %v392
        %v1187 = vpop.permute.xlu0 %1186
        %1190 = vset.pattern.permute.xlu0 0
        %1191 = vperm.xlu0 %1190, %v393
        %v1192 = vpop.permute.xlu0 %1191
        %1195 = vset.pattern.permute.xlu0 0
        %1196 = vperm.xlu0 %1195, %v394
        %v1197 = vpop.permute.xlu0 %1196
        %1200 = vset.pattern.permute.xlu0 0
        %1201 = vperm.xlu0 %1200, %v395
        %v1202 = vpop.permute.xlu0 %1201
        %1205 = vset.pattern.permute.xlu0 0
        %1206 = vperm.xlu0 %1205, %v396
        %v1207 = vpop.permute.xlu0 %1206
        %1210 = vset.pattern.permute.xlu0 0
        %1211 = vperm.xlu0 %1210, %v397
        %v1212 = vpop.permute.xlu0 %1211
        %1215 = vset.pattern.permute.xlu0 0
        %1216 = vperm.xlu0 %1215, %v398
        %v1217 = vpop.permute.xlu0 %1216
        %1220 = vset.pattern.permute.xlu0 0
        %1221 = vperm.xlu0 %1220, %v399
        %v1222 = vpop.permute.xlu0 %1221
        %1225 = vset.pattern.permute.xlu0 0
        %1226 = vperm.xlu0 %1225, %v400
        %v1227 = vpop.permute.xlu0 %1226
        %1230 = vset.pattern.permute.xlu0 0
        %1231 = vperm.xlu0 %1230, %v401
        %v1232 = vpop.permute.xlu0 %1231
        %1235 = vset.pattern.permute.xlu0 0
        %1236 = vperm.xlu0 %1235, %v402
        %v1237 = vpop.permute.xlu0 %1236
        %1240 = vset.pattern.permute.xlu0 0
        %1241 = vperm.xlu0 %1240, %v403
        %v1242 = vpop.permute.xlu0 %1241
        %1245 = vset.pattern.permute.xlu0 0
        %1246 = vperm.xlu0 %1245, %v404
        %v1247 = vpop.permute.xlu0 %1246
        %1250 = vset.pattern.permute.xlu0 0
        %1251 = vperm.xlu0 %1250, %v405
        %v1252 = vpop.permute.xlu0 %1251
        %1255 = vset.pattern.permute.xlu0 0
        %1256 = vperm.xlu0 %1255, %v406
        %v1257 = vpop.permute.xlu0 %1256
        %1260 = vset.pattern.permute.xlu0 0
        %1261 = vperm.xlu0 %1260, %v407
        %v1262 = vpop.permute.xlu0 %1261
        %1265 = vset.pattern.permute.xlu0 0
        %1266 = vperm.xlu0 %1265, %v408
        %v1267 = vpop.permute.xlu0 %1266
        %1270 = vset.pattern.permute.xlu0 0
        %1271 = vperm.xlu0 %1270, %v409
        %v1272 = vpop.permute.xlu0 %1271
        %1275 = vset.pattern.permute.xlu0 0
        %1276 = vperm.xlu0 %1275, %v410
        %v1277 = vpop.permute.xlu0 %1276
        %1280 = vset.pattern.permute.xlu0 0
        %1281 = vperm.xlu0 %1280, %v411
        %v1282 = vpop.permute.xlu0 %1281
        %1285 = vset.pattern.permute.xlu0 0
        %1286 = vperm.xlu0 %1285, %v412
        %v1287 = vpop.permute.xlu0 %1286
        %1290 = vset.pattern.permute.xlu0 0
        %1291 = vperm.xlu0 %1290, %v413
        %v1292 = vpop.permute.xlu0 %1291
        %1295 = vset.pattern.permute.xlu0 0
        %1296 = vperm.xlu0 %1295, %v414
        %v1297 = vpop.permute.xlu0 %1296
        %1300 = vset.pattern.permute.xlu0 0
        %1301 = vperm.xlu0 %1300, %v415
        %v1302 = vpop.permute.xlu0 %1301
        %1305 = vset.pattern.permute.xlu0 0
        %1306 = vperm.xlu0 %1305, %v416
        %v1307 = vpop.permute.xlu0 %1306
        %1310 = vset.pattern.permute.xlu0 0
        %1311 = vperm.xlu0 %1310, %v417
        %v1312 = vpop.permute.xlu0 %1311
        %1315 = vset.pattern.permute.xlu0 0
        %1316 = vperm.xlu0 %1315, %v418
        %v1317 = vpop.permute.xlu0 %1316
        %1320 = vset.pattern.permute.xlu0 0
        %1321 = vperm.xlu0 %1320, %v419
        %v1322 = vpop.permute.xlu0 %1321
        %1325 = vset.pattern.permute.xlu0 0
        %1326 = vperm.xlu0 %1325, %v420
        %v1327 = vpop.permute.xlu0 %1326
        %1330 = vset.pattern.permute.xlu0 0
        %1331 = vperm.xlu0 %1330, %v421
        %v1332 = vpop.permute.xlu0 %1331
        %1335 = vset.pattern.permute.xlu0 0
        %1336 = vperm.xlu0 %1335, %v422
        %v1337 = vpop.permute.xlu0 %1336
        %1340 = vset.pattern.permute.xlu0 0
        %1341 = vperm.xlu0 %1340, %v423
        %v1342 = vpop.permute.xlu0 %1341
        %1345 = vset.pattern.permute.xlu0 0
        %1346 = vperm.xlu0 %1345, %v424
        %v1347 = vpop.permute.xlu0 %1346
        %1350 = vset.pattern.permute.xlu0 0
        %1351 = vperm.xlu0 %1350, %v425
        %v1352 = vpop.permute.xlu0 %1351
        %1355 = vset.pattern.permute.xlu0 0
        %1356 = vperm.xlu0 %1355, %v426
        %v1357 = vpop.permute.xlu0 %1356
        %1360 = vset.pattern.permute.xlu0 0
        %1361 = vperm.xlu0 %1360, %v427
        %v1362 = vpop.permute.xlu0 %1361
        %1365 = vset.pattern.permute.xlu0 0
        %1366 = vperm.xlu0 %1365, %v428
        %v1367 = vpop.permute.xlu0 %1366
        %1370 = vset.pattern.permute.xlu0 0
        %1371 = vperm.xlu0 %1370, %v429
        %v1372 = vpop.permute.xlu0 %1371
        %1375 = vset.pattern.permute.xlu0 0
        %1376 = vperm.xlu0 %1375, %v430
        %v1377 = vpop.permute.xlu0 %1376
        %1380 = vset.pattern.permute.xlu0 0
        %1381 = vperm.xlu0 %1380, %v431
        %v1382 = vpop.permute.xlu0 %1381
        %1385 = vset.pattern.permute.xlu0 0
        %1386 = vperm.xlu0 %1385, %v432
        %v1387 = vpop.permute.xlu0 %1386
        %1390 = vset.pattern.permute.xlu0 0
        %1391 = vperm.xlu0 %1390, %v433
        %v1392 = vpop.permute.xlu0 %1391
        %1395 = vset.pattern.permute.xlu0 0
        %1396 = vperm.xlu0 %1395, %v434
        %v1397 = vpop.permute.xlu0 %1396
        %1400 = vset.pattern.permute.xlu0 0
        %1401 = vperm.xlu0 %1400, %v435
        %v1402 = vpop.permute.xlu0 %1401
        %1405 = vset.pattern.permute.xlu0 0
        %1406 = vperm.xlu0 %1405, %v436
        %v1407 = vpop.permute.xlu0 %1406
        %1410 = vset.pattern.permute.xlu0 0
        %1411 = vperm.xlu0 %1410, %v437
        %v1412 = vpop.permute.xlu0 %1411
        %1415 = vset.pattern.permute.xlu0 0
        %1416 = vperm.xlu0 %1415, %v438
        %v1417 = vpop.permute.xlu0 %1416
        %1420 = vset.pattern.permute.xlu0 0
        %1421 = vperm.xlu0 %1420, %v439
        %v1422 = vpop.permute.xlu0 %1421
        %1425 = vset.pattern.permute.xlu0 0
        %1426 = vperm.xlu0 %1425, %v440
        %v1427 = vpop.permute.xlu0 %1426
        %1430 = vset.pattern.permute.xlu0 0
        %1431 = vperm.xlu0 %1430, %v441
        %v1432 = vpop.permute.xlu0 %1431
        %1435 = vset.pattern.permute.xlu0 0
        %1436 = vperm.xlu0 %1435, %v442
        %v1437 = vpop.permute.xlu0 %1436
        %1440 = vset.pattern.permute.xlu0 0
        %1441 = vperm.xlu0 %1440, %v443
        %v1442 = vpop.permute.xlu0 %1441
        %1445 = vset.pattern.permute.xlu0 0
        %1446 = vperm.xlu0 %1445, %v444
        %v1447 = vpop.permute.xlu0 %1446
        %1450 = vset.pattern.permute.xlu0 0
        %1451 = vperm.xlu0 %1450, %v445
        %v1452 = vpop.permute.xlu0 %1451
        %1455 = vset.pattern.permute.xlu0 0
        %1456 = vperm.xlu0 %1455, %v446
        %v1457 = vpop.permute.xlu0 %1456
        %1460 = vset.pattern.permute.xlu0 0
        %1461 = vperm.xlu0 %1460, %v447
        %v1462 = vpop.permute.xlu0 %1461
        %1465 = vset.pattern.permute.xlu0 0
        %1466 = vperm.xlu0 %1465, %v448
        %v1467 = vpop.permute.xlu0 %1466
        %1470 = vset.pattern.permute.xlu0 0
        %1471 = vperm.xlu0 %1470, %v449
        %v1472 = vpop.permute.xlu0 %1471
        %1475 = vset.pattern.permute.xlu0 0
        %1476 = vperm.xlu0 %1475, %v450
        %v1477 = vpop.permute.xlu0 %1476
        %1480 = vset.pattern.permute.xlu0 0
        %1481 = vperm.xlu0 %1480, %v451
        %v1482 = vpop.permute.xlu0 %1481
        %1485 = vset.pattern.permute.xlu0 0
        %1486 = vperm.xlu0 %1485, %v452
        %v1487 = vpop.permute.xlu0 %1486
        %1490 = vset.pattern.permute.xlu0 0
        %1491 = vperm.xlu0 %1490, %v453
        %v1492 = vpop.permute.xlu0 %1491
        %1495 = vset.pattern.permute.xlu0 0
        %1496 = vperm.xlu0 %1495, %v454
        %v1497 = vpop.permute.xlu0 %1496
        %1500 = vset.pattern.permute.xlu0 0
        %1501 = vperm.xlu0 %1500, %v455
        %v1502 = vpop.permute.xlu0 %1501
        %1505 = vset.pattern.permute.xlu0 0
        %1506 = vperm.xlu0 %1505, %v456
        %v1507 = vpop.permute.xlu0 %1506
        %1510 = vset.pattern.permute.xlu0 0
        %1511 = vperm.xlu0 %1510, %v457
        %v1512 = vpop.permute.xlu0 %1511
        %1515 = vset.pattern.permute.xlu0 0
        %1516 = vperm.xlu0 %1515, %v458
        %v1517 = vpop.permute.xlu0 %1516
        %1520 = vset.pattern.permute.xlu0 0
        %1521 = vperm.xlu0 %1520, %v459
        %v1522 = vpop.permute.xlu0 %1521
        %1525 = vset.pattern.permute.xlu0 0
        %1526 = vperm.xlu0 %1525, %v460
        %v1527 = vpop.permute.xlu0 %1526
        %1530 = vset.pattern.permute.xlu0 0
        %1531 = vperm.xlu0 %1530, %v461
        %v1532 = vpop.permute.xlu0 %1531
        %1535 = vset.pattern.permute.xlu0 0
        %1536 = vperm.xlu0 %1535, %v462
        %v1537 = vpop.permute.xlu0 %1536
        %1540 = vset.pattern.permute.xlu0 0
        %1541 = vperm.xlu0 %1540, %v463
        %v1542 = vpop.permute.xlu0 %1541
        %1545 = vset.pattern.permute.xlu0 0
        %1546 = vperm.xlu0 %1545, %v464
        %v1547 = vpop.permute.xlu0 %1546
        %1550 = vset.pattern.permute.xlu0 0
        %1551 = vperm.xlu0 %1550, %v465
        %v1552 = vpop.permute.xlu0 %1551
        %1555 = vset.pattern.permute.xlu0 0
        %1556 = vperm.xlu0 %1555, %v466
        %v1557 = vpop.permute.xlu0 %1556
        %1560 = vset.pattern.permute.xlu0 0
        %1561 = vperm.xlu0 %1560, %v467
        %v1562 = vpop.permute.xlu0 %1561
        %1565 = vset.pattern.permute.xlu0 0
        %1566 = vperm.xlu0 %1565, %v468
        %v1567 = vpop.permute.xlu0 %1566
        %1570 = vset.pattern.permute.xlu0 0
        %1571 = vperm.xlu0 %1570, %v469
        %v1572 = vpop.permute.xlu0 %1571
        %1575 = vset.pattern.permute.xlu0 0
        %1576 = vperm.xlu0 %1575, %v470
        %v1577 = vpop.permute.xlu0 %1576
        %1580 = vset.pattern.permute.xlu0 0
        %1581 = vperm.xlu0 %1580, %v471
        %v1582 = vpop.permute.xlu0 %1581
        %1585 = vset.pattern.permute.xlu0 0
        %1586 = vperm.xlu0 %1585, %v472
        %v1587 = vpop.permute.xlu0 %1586
        %1590 = vset.pattern.permute.xlu0 0
        %1591 = vperm.xlu0 %1590, %v473
        %v1592 = vpop.permute.xlu0 %1591
        %1595 = vset.pattern.permute.xlu0 0
        %1596 = vperm.xlu0 %1595, %v474
        %v1597 = vpop.permute.xlu0 %1596
        %1600 = vset.pattern.permute.xlu0 0
        %1601 = vperm.xlu0 %1600, %v475
        %v1602 = vpop.permute.xlu0 %1601
        %1605 = vset.pattern.permute.xlu0 0
        %1606 = vperm.xlu0 %1605, %v476
        %v1607 = vpop.permute.xlu0 %1606
        %1610 = vset.pattern.permute.xlu0 0
        %1611 = vperm.xlu0 %1610, %v477
        %v1612 = vpop.permute.xlu0 %1611
        %1615 = vset.pattern.permute.xlu0 0
        %1616 = vperm.xlu0 %1615, %v478
        %v1617 = vpop.permute.xlu0 %1616
        %1620 = vset.pattern.permute.xlu0 0
        %1621 = vperm.xlu0 %1620, %v479
        %v1622 = vpop.permute.xlu0 %1621
        %1625 = vset.pattern.permute.xlu0 0
        %1626 = vperm.xlu0 %1625, %v480
        %v1627 = vpop.permute.xlu0 %1626
        %1630 = vset.pattern.permute.xlu0 0
        %1631 = vperm.xlu0 %1630, %v481
        %v1632 = vpop.permute.xlu0 %1631
        %1635 = vset.pattern.permute.xlu0 0
        %1636 = vperm.xlu0 %1635, %v482
        %v1637 = vpop.permute.xlu0 %1636
        %1640 = vset.pattern.permute.xlu0 0
        %1641 = vperm.xlu0 %1640, %v483
        %v1642 = vpop.permute.xlu0 %1641
        %1645 = vset.pattern.permute.xlu0 0
        %1646 = vperm.xlu0 %1645, %v484
        %v1647 = vpop.permute.xlu0 %1646
        %1650 = vset.pattern.permute.xlu0 0
        %1651 = vperm.xlu0 %1650, %v485
        %v1652 = vpop.permute.xlu0 %1651
        %1655 = vset.pattern.permute.xlu0 0
        %1656 = vperm.xlu0 %1655, %v486
        %v1657 = vpop.permute.xlu0 %1656
        %1660 = vset.pattern.permute.xlu0 0
        %1661 = vperm.xlu0 %1660, %v487
        %v1662 = vpop.permute.xlu0 %1661
        %1665 = vset.pattern.permute.xlu0 0
        %1666 = vperm.xlu0 %1665, %v488
        %v1667 = vpop.permute.xlu0 %1666
        %1670 = vset.pattern.permute.xlu0 0
        %1671 = vperm.xlu0 %1670, %v489
        %v1672 = vpop.permute.xlu0 %1671
        %1675 = vset.pattern.permute.xlu0 0
        %1676 = vperm.xlu0 %1675, %v490
        %v1677 = vpop.permute.xlu0 %1676
        %1680 = vset.pattern.permute.xlu0 0
        %1681 = vperm.xlu0 %1680, %v491
        %v1682 = vpop.permute.xlu0 %1681
        %1685 = vset.pattern.permute.xlu0 0
        %1686 = vperm.xlu0 %1685, %v492
        %v1687 = vpop.permute.xlu0 %1686
        %1690 = vset.pattern.permute.xlu0 0
        %1691 = vperm.xlu0 %1690, %v493
        %v1692 = vpop.permute.xlu0 %1691
        %1695 = vset.pattern.permute.xlu0 0
        %1696 = vperm.xlu0 %1695, %v494
        %v1697 = vpop.permute.xlu0 %1696
        %1700 = vset.pattern.permute.xlu0 0
        %1701 = vperm.xlu0 %1700, %v495
        %v1702 = vpop.permute.xlu0 %1701
        %1705 = vset.pattern.permute.xlu0 0
        %1706 = vperm.xlu0 %1705, %v496
        %v1707 = vpop.permute.xlu0 %1706
        %1710 = vset.pattern.permute.xlu0 0
        %1711 = vperm.xlu0 %1710, %v497
        %v1712 = vpop.permute.xlu0 %1711
        %1715 = vset.pattern.permute.xlu0 0
        %1716 = vperm.xlu0 %1715, %v498
        %v1717 = vpop.permute.xlu0 %1716
        %1720 = vset.pattern.permute.xlu0 0
        %1721 = vperm.xlu0 %1720, %v499
        %v1722 = vpop.permute.xlu0 %1721
        %1725 = vset.pattern.permute.xlu0 0
        %1726 = vperm.xlu0 %1725, %v500
        %v1727 = vpop.permute.xlu0 %1726
        %1730 = vset.pattern.permute.xlu0 0
        %1731 = vperm.xlu0 %1730, %v501
        %v1732 = vpop.permute.xlu0 %1731
        %1735 = vset.pattern.permute.xlu0 0
        %1736 = vperm.xlu0 %1735, %v502
        %v1737 = vpop.permute.xlu0 %1736
        %1740 = vset.pattern.permute.xlu0 0
        %1741 = vperm.xlu0 %1740, %v503
        %v1742 = vpop.permute.xlu0 %1741
        %1745 = vset.pattern.permute.xlu0 0
        %1746 = vperm.xlu0 %1745, %v504
        %v1747 = vpop.permute.xlu0 %1746
        %1750 = vset.pattern.permute.xlu0 0
        %1751 = vperm.xlu0 %1750, %v505
        %v1752 = vpop.permute.xlu0 %1751
        %1755 = vset.pattern.permute.xlu0 0
        %1756 = vperm.xlu0 %1755, %v506
        %v1757 = vpop.permute.xlu0 %1756
        %1760 = vset.pattern.permute.xlu0 0
        %1761 = vperm.xlu0 %1760, %v507
        %v1762 = vpop.permute.xlu0 %1761
        %1765 = vset.pattern.permute.xlu0 0
        %1766 = vperm.xlu0 %1765, %v508
        %v1767 = vpop.permute.xlu0 %1766
        %1770 = vset.pattern.permute.xlu0 0
        %1771 = vperm.xlu0 %1770, %v509
        %v1772 = vpop.permute.xlu0 %1771
        %1775 = vset.pattern.permute.xlu0 0
        %1776 = vperm.xlu0 %1775, %v510
        %v1777 = vpop.permute.xlu0 %1776
        %1780 = vset.pattern.permute.xlu0 0
        %1781 = vperm.xlu0 %1780, %v511
        %v1782 = vpop.permute.xlu0 %1781
        %1785 = vset.pattern.permute.xlu0 0
        %1786 = vperm.xlu0 %1785, %v512
        %v1787 = vpop.permute.xlu0 %1786
        %1790 = vset.pattern.permute.xlu0 0
        %1791 = vperm.xlu0 %1790, %v513
        %v1792 = vpop.permute.xlu0 %1791
        %v1795 = vlaneseq
        %v1796 = vshrl.u32 %v1795, 7
        %v1797 = vsub.s32 0, %v1796
        %v1798 = vrot.slane %v255, %v1797
        %v1799 = vlaneseq
        %v1800 = vshrl.u32 %v1799, 7
        %v1801 = vsub.s32 1, %v1800
        %v1802 = vrot.slane %v255, %v1801
        %v1805 = vmul.f32 %v517, %v1798
        %v1806 = vmul.f32 %v517, %v1802
        %v1807 = vmul.f32 %v522, %v1798
        %v1808 = vmul.f32 %v522, %v1802
        %v1809 = vmul.f32 %v527, %v1798
        %v1810 = vmul.f32 %v527, %v1802
        %v1811 = vmul.f32 %v532, %v1798
        %v1812 = vmul.f32 %v532, %v1802
        %v1813 = vmul.f32 %v537, %v1798
        %v1814 = vmul.f32 %v537, %v1802
        %v1815 = vmul.f32 %v542, %v1798
        %v1816 = vmul.f32 %v542, %v1802
        %v1817 = vmul.f32 %v547, %v1798
        %v1818 = vmul.f32 %v547, %v1802
        %v1819 = vmul.f32 %v552, %v1798
        %v1820 = vmul.f32 %v552, %v1802
        %v1821 = vmul.f32 %v557, %v1798
        %v1822 = vmul.f32 %v557, %v1802
        %v1823 = vmul.f32 %v562, %v1798
        %v1824 = vmul.f32 %v562, %v1802
        %v1825 = vmul.f32 %v567, %v1798
        %v1826 = vmul.f32 %v567, %v1802
        %v1827 = vmul.f32 %v572, %v1798
        %v1828 = vmul.f32 %v572, %v1802
        %v1829 = vmul.f32 %v577, %v1798
        %v1830 = vmul.f32 %v577, %v1802
        %v1831 = vmul.f32 %v582, %v1798
        %v1832 = vmul.f32 %v582, %v1802
        %v1833 = vmul.f32 %v587, %v1798
        %v1834 = vmul.f32 %v587, %v1802
        %v1835 = vmul.f32 %v592, %v1798
        %v1836 = vmul.f32 %v592, %v1802
        %v1837 = vmul.f32 %v597, %v1798
        %v1838 = vmul.f32 %v597, %v1802
        %v1839 = vmul.f32 %v602, %v1798
        %v1840 = vmul.f32 %v602, %v1802
        %v1841 = vmul.f32 %v607, %v1798
        %v1842 = vmul.f32 %v607, %v1802
        %v1843 = vmul.f32 %v612, %v1798
        %v1844 = vmul.f32 %v612, %v1802
        %v1845 = vmul.f32 %v617, %v1798
        %v1846 = vmul.f32 %v617, %v1802
        %v1847 = vmul.f32 %v622, %v1798
        %v1848 = vmul.f32 %v622, %v1802
        %v1849 = vmul.f32 %v627, %v1798
        %v1850 = vmul.f32 %v627, %v1802
        %v1851 = vmul.f32 %v632, %v1798
        %v1852 = vmul.f32 %v632, %v1802
        %v1853 = vmul.f32 %v637, %v1798
        %v1854 = vmul.f32 %v637, %v1802
        %v1855 = vmul.f32 %v642, %v1798
        %v1856 = vmul.f32 %v642, %v1802
        %v1857 = vmul.f32 %v647, %v1798
        %v1858 = vmul.f32 %v647, %v1802
        %v1859 = vmul.f32 %v652, %v1798
        %v1860 = vmul.f32 %v652, %v1802
        %v1861 = vmul.f32 %v657, %v1798
        %v1862 = vmul.f32 %v657, %v1802
        %v1863 = vmul.f32 %v662, %v1798
        %v1864 = vmul.f32 %v662, %v1802
        %v1865 = vmul.f32 %v667, %v1798
        %v1866 = vmul.f32 %v667, %v1802
        %v1867 = vmul.f32 %v672, %v1798
        %v1868 = vmul.f32 %v672, %v1802
        %v1869 = vmul.f32 %v677, %v1798
        %v1870 = vmul.f32 %v677, %v1802
        %v1871 = vmul.f32 %v682, %v1798
        %v1872 = vmul.f32 %v682, %v1802
        %v1873 = vmul.f32 %v687, %v1798
        %v1874 = vmul.f32 %v687, %v1802
        %v1875 = vmul.f32 %v692, %v1798
        %v1876 = vmul.f32 %v692, %v1802
        %v1877 = vmul.f32 %v697, %v1798
        %v1878 = vmul.f32 %v697, %v1802
        %v1879 = vmul.f32 %v702, %v1798
        %v1880 = vmul.f32 %v702, %v1802
        %v1881 = vmul.f32 %v707, %v1798
        %v1882 = vmul.f32 %v707, %v1802
        %v1883 = vmul.f32 %v712, %v1798
        %v1884 = vmul.f32 %v712, %v1802
        %v1885 = vmul.f32 %v717, %v1798
        %v1886 = vmul.f32 %v717, %v1802
        %v1887 = vmul.f32 %v722, %v1798
        %v1888 = vmul.f32 %v722, %v1802
        %v1889 = vmul.f32 %v727, %v1798
        %v1890 = vmul.f32 %v727, %v1802
        %v1891 = vmul.f32 %v732, %v1798
        %v1892 = vmul.f32 %v732, %v1802
        %v1893 = vmul.f32 %v737, %v1798
        %v1894 = vmul.f32 %v737, %v1802
        %v1895 = vmul.f32 %v742, %v1798
        %v1896 = vmul.f32 %v742, %v1802
        %v1897 = vmul.f32 %v747, %v1798
        %v1898 = vmul.f32 %v747, %v1802
        %v1899 = vmul.f32 %v752, %v1798
        %v1900 = vmul.f32 %v752, %v1802
        %v1901 = vmul.f32 %v757, %v1798
        %v1902 = vmul.f32 %v757, %v1802
        %v1903 = vmul.f32 %v762, %v1798
        %v1904 = vmul.f32 %v762, %v1802
        %v1905 = vmul.f32 %v767, %v1798
        %v1906 = vmul.f32 %v767, %v1802
        %v1907 = vmul.f32 %v772, %v1798
        %v1908 = vmul.f32 %v772, %v1802
        %v1909 = vmul.f32 %v777, %v1798
        %v1910 = vmul.f32 %v777, %v1802
        %v1911 = vmul.f32 %v782, %v1798
        %v1912 = vmul.f32 %v782, %v1802
        %v1913 = vmul.f32 %v787, %v1798
        %v1914 = vmul.f32 %v787, %v1802
        %v1915 = vmul.f32 %v792, %v1798
        %v1916 = vmul.f32 %v792, %v1802
        %v1917 = vmul.f32 %v797, %v1798
        %v1918 = vmul.f32 %v797, %v1802
        %v1919 = vmul.f32 %v802, %v1798
        %v1920 = vmul.f32 %v802, %v1802
        %v1921 = vmul.f32 %v807, %v1798
        %v1922 = vmul.f32 %v807, %v1802
        %v1923 = vmul.f32 %v812, %v1798
        %v1924 = vmul.f32 %v812, %v1802
        %v1925 = vmul.f32 %v817, %v1798
        %v1926 = vmul.f32 %v817, %v1802
        %v1927 = vmul.f32 %v822, %v1798
        %v1928 = vmul.f32 %v822, %v1802
        %v1929 = vmul.f32 %v827, %v1798
        %v1930 = vmul.f32 %v827, %v1802
        %v1931 = vmul.f32 %v832, %v1798
        %v1932 = vmul.f32 %v832, %v1802
        %v1933 = vmul.f32 %v837, %v1798
        %v1934 = vmul.f32 %v837, %v1802
        %v1935 = vmul.f32 %v842, %v1798
        %v1936 = vmul.f32 %v842, %v1802
        %v1937 = vmul.f32 %v847, %v1798
        %v1938 = vmul.f32 %v847, %v1802
        %v1939 = vmul.f32 %v852, %v1798
        %v1940 = vmul.f32 %v852, %v1802
        %v1941 = vmul.f32 %v857, %v1798
        %v1942 = vmul.f32 %v857, %v1802
        %v1943 = vmul.f32 %v862, %v1798
        %v1944 = vmul.f32 %v862, %v1802
        %v1945 = vmul.f32 %v867, %v1798
        %v1946 = vmul.f32 %v867, %v1802
        %v1947 = vmul.f32 %v872, %v1798
        %v1948 = vmul.f32 %v872, %v1802
        %v1949 = vmul.f32 %v877, %v1798
        %v1950 = vmul.f32 %v877, %v1802
        %v1951 = vmul.f32 %v882, %v1798
        %v1952 = vmul.f32 %v882, %v1802
        %v1953 = vmul.f32 %v887, %v1798
        %v1954 = vmul.f32 %v887, %v1802
        %v1955 = vmul.f32 %v892, %v1798
        %v1956 = vmul.f32 %v892, %v1802
        %v1957 = vmul.f32 %v897, %v1798
        %v1958 = vmul.f32 %v897, %v1802
        %v1959 = vmul.f32 %v902, %v1798
        %v1960 = vmul.f32 %v902, %v1802
        %v1961 = vmul.f32 %v907, %v1798
        %v1962 = vmul.f32 %v907, %v1802
        %v1963 = vmul.f32 %v912, %v1798
        %v1964 = vmul.f32 %v912, %v1802
        %v1965 = vmul.f32 %v917, %v1798
        %v1966 = vmul.f32 %v917, %v1802
        %v1967 = vmul.f32 %v922, %v1798
        %v1968 = vmul.f32 %v922, %v1802
        %v1969 = vmul.f32 %v927, %v1798
        %v1970 = vmul.f32 %v927, %v1802
        %v1971 = vmul.f32 %v932, %v1798
        %v1972 = vmul.f32 %v932, %v1802
        %v1973 = vmul.f32 %v937, %v1798
        %v1974 = vmul.f32 %v937, %v1802
        %v1975 = vmul.f32 %v942, %v1798
        %v1976 = vmul.f32 %v942, %v1802
        %v1977 = vmul.f32 %v947, %v1798
        %v1978 = vmul.f32 %v947, %v1802
        %v1979 = vmul.f32 %v952, %v1798
        %v1980 = vmul.f32 %v952, %v1802
        %v1981 = vmul.f32 %v957, %v1798
        %v1982 = vmul.f32 %v957, %v1802
        %v1983 = vmul.f32 %v962, %v1798
        %v1984 = vmul.f32 %v962, %v1802
        %v1985 = vmul.f32 %v967, %v1798
        %v1986 = vmul.f32 %v967, %v1802
        %v1987 = vmul.f32 %v972, %v1798
        %v1988 = vmul.f32 %v972, %v1802
        %v1989 = vmul.f32 %v977, %v1798
        %v1990 = vmul.f32 %v977, %v1802
        %v1991 = vmul.f32 %v982, %v1798
        %v1992 = vmul.f32 %v982, %v1802
        %v1993 = vmul.f32 %v987, %v1798
        %v1994 = vmul.f32 %v987, %v1802
        %v1995 = vmul.f32 %v992, %v1798
        %v1996 = vmul.f32 %v992, %v1802
        %v1997 = vmul.f32 %v997, %v1798
        %v1998 = vmul.f32 %v997, %v1802
        %v1999 = vmul.f32 %v1002, %v1798
        %v2000 = vmul.f32 %v1002, %v1802
        %v2001 = vmul.f32 %v1007, %v1798
        %v2002 = vmul.f32 %v1007, %v1802
        %v2003 = vmul.f32 %v1012, %v1798
        %v2004 = vmul.f32 %v1012, %v1802
        %v2005 = vmul.f32 %v1017, %v1798
        %v2006 = vmul.f32 %v1017, %v1802
        %v2007 = vmul.f32 %v1022, %v1798
        %v2008 = vmul.f32 %v1022, %v1802
        %v2009 = vmul.f32 %v1027, %v1798
        %v2010 = vmul.f32 %v1027, %v1802
        %v2011 = vmul.f32 %v1032, %v1798
        %v2012 = vmul.f32 %v1032, %v1802
        %v2013 = vmul.f32 %v1037, %v1798
        %v2014 = vmul.f32 %v1037, %v1802
        %v2015 = vmul.f32 %v1042, %v1798
        %v2016 = vmul.f32 %v1042, %v1802
        %v2017 = vmul.f32 %v1047, %v1798
        %v2018 = vmul.f32 %v1047, %v1802
        %v2019 = vmul.f32 %v1052, %v1798
        %v2020 = vmul.f32 %v1052, %v1802
        %v2021 = vmul.f32 %v1057, %v1798
        %v2022 = vmul.f32 %v1057, %v1802
        %v2023 = vmul.f32 %v1062, %v1798
        %v2024 = vmul.f32 %v1062, %v1802
        %v2025 = vmul.f32 %v1067, %v1798
        %v2026 = vmul.f32 %v1067, %v1802
        %v2027 = vmul.f32 %v1072, %v1798
        %v2028 = vmul.f32 %v1072, %v1802
        %v2029 = vmul.f32 %v1077, %v1798
        %v2030 = vmul.f32 %v1077, %v1802
        %v2031 = vmul.f32 %v1082, %v1798
        %v2032 = vmul.f32 %v1082, %v1802
        %v2033 = vmul.f32 %v1087, %v1798
        %v2034 = vmul.f32 %v1087, %v1802
        %v2035 = vmul.f32 %v1092, %v1798
        %v2036 = vmul.f32 %v1092, %v1802
        %v2037 = vmul.f32 %v1097, %v1798
        %v2038 = vmul.f32 %v1097, %v1802
        %v2039 = vmul.f32 %v1102, %v1798
        %v2040 = vmul.f32 %v1102, %v1802
        %v2041 = vmul.f32 %v1107, %v1798
        %v2042 = vmul.f32 %v1107, %v1802
        %v2043 = vmul.f32 %v1112, %v1798
        %v2044 = vmul.f32 %v1112, %v1802
        %v2045 = vmul.f32 %v1117, %v1798
        %v2046 = vmul.f32 %v1117, %v1802
        %v2047 = vmul.f32 %v1122, %v1798
        %v2048 = vmul.f32 %v1122, %v1802
        %v2049 = vmul.f32 %v1127, %v1798
        %v2050 = vmul.f32 %v1127, %v1802
        %v2051 = vmul.f32 %v1132, %v1798
        %v2052 = vmul.f32 %v1132, %v1802
        %v2053 = vmul.f32 %v1137, %v1798
        %v2054 = vmul.f32 %v1137, %v1802
        %v2055 = vmul.f32 %v1142, %v1798
        %v2056 = vmul.f32 %v1142, %v1802
        %v2057 = vmul.f32 %v1147, %v1798
        %v2058 = vmul.f32 %v1147, %v1802
        %v2059 = vmul.f32 %v1152, %v1798
        %v2060 = vmul.f32 %v1152, %v1802
        %v2061 = vmul.f32 %v1157, %v1798
        %v2062 = vmul.f32 %v1157, %v1802
        %v2063 = vmul.f32 %v1162, %v1798
        %v2064 = vmul.f32 %v1162, %v1802
        %v2065 = vmul.f32 %v1167, %v1798
        %v2066 = vmul.f32 %v1167, %v1802
        %v2067 = vmul.f32 %v1172, %v1798
        %v2068 = vmul.f32 %v1172, %v1802
        %v2069 = vmul.f32 %v1177, %v1798
        %v2070 = vmul.f32 %v1177, %v1802
        %v2071 = vmul.f32 %v1182, %v1798
        %v2072 = vmul.f32 %v1182, %v1802
        %v2073 = vmul.f32 %v1187, %v1798
        %v2074 = vmul.f32 %v1187, %v1802
        %v2075 = vmul.f32 %v1192, %v1798
        %v2076 = vmul.f32 %v1192, %v1802
        %v2077 = vmul.f32 %v1197, %v1798
        %v2078 = vmul.f32 %v1197, %v1802
        %v2079 = vmul.f32 %v1202, %v1798
        %v2080 = vmul.f32 %v1202, %v1802
        %v2081 = vmul.f32 %v1207, %v1798
        %v2082 = vmul.f32 %v1207, %v1802
        %v2083 = vmul.f32 %v1212, %v1798
        %v2084 = vmul.f32 %v1212, %v1802
        %v2085 = vmul.f32 %v1217, %v1798
        %v2086 = vmul.f32 %v1217, %v1802
        %v2087 = vmul.f32 %v1222, %v1798
        %v2088 = vmul.f32 %v1222, %v1802
        %v2089 = vmul.f32 %v1227, %v1798
        %v2090 = vmul.f32 %v1227, %v1802
        %v2091 = vmul.f32 %v1232, %v1798
        %v2092 = vmul.f32 %v1232, %v1802
        %v2093 = vmul.f32 %v1237, %v1798
        %v2094 = vmul.f32 %v1237, %v1802
        %v2095 = vmul.f32 %v1242, %v1798
        %v2096 = vmul.f32 %v1242, %v1802
        %v2097 = vmul.f32 %v1247, %v1798
        %v2098 = vmul.f32 %v1247, %v1802
        %v2099 = vmul.f32 %v1252, %v1798
        %v2100 = vmul.f32 %v1252, %v1802
        %v2101 = vmul.f32 %v1257, %v1798
        %v2102 = vmul.f32 %v1257, %v1802
        %v2103 = vmul.f32 %v1262, %v1798
        %v2104 = vmul.f32 %v1262, %v1802
        %v2105 = vmul.f32 %v1267, %v1798
        %v2106 = vmul.f32 %v1267, %v1802
        %v2107 = vmul.f32 %v1272, %v1798
        %v2108 = vmul.f32 %v1272, %v1802
        %v2109 = vmul.f32 %v1277, %v1798
        %v2110 = vmul.f32 %v1277, %v1802
        %v2111 = vmul.f32 %v1282, %v1798
        %v2112 = vmul.f32 %v1282, %v1802
        %v2113 = vmul.f32 %v1287, %v1798
        %v2114 = vmul.f32 %v1287, %v1802
        %v2115 = vmul.f32 %v1292, %v1798
        %v2116 = vmul.f32 %v1292, %v1802
        %v2117 = vmul.f32 %v1297, %v1798
        %v2118 = vmul.f32 %v1297, %v1802
        %v2119 = vmul.f32 %v1302, %v1798
        %v2120 = vmul.f32 %v1302, %v1802
        %v2121 = vmul.f32 %v1307, %v1798
        %v2122 = vmul.f32 %v1307, %v1802
        %v2123 = vmul.f32 %v1312, %v1798
        %v2124 = vmul.f32 %v1312, %v1802
        %v2125 = vmul.f32 %v1317, %v1798
        %v2126 = vmul.f32 %v1317, %v1802
        %v2127 = vmul.f32 %v1322, %v1798
        %v2128 = vmul.f32 %v1322, %v1802
        %v2129 = vmul.f32 %v1327, %v1798
        %v2130 = vmul.f32 %v1327, %v1802
        %v2131 = vmul.f32 %v1332, %v1798
        %v2132 = vmul.f32 %v1332, %v1802
        %v2133 = vmul.f32 %v1337, %v1798
        %v2134 = vmul.f32 %v1337, %v1802
        %v2135 = vmul.f32 %v1342, %v1798
        %v2136 = vmul.f32 %v1342, %v1802
        %v2137 = vmul.f32 %v1347, %v1798
        %v2138 = vmul.f32 %v1347, %v1802
        %v2139 = vmul.f32 %v1352, %v1798
        %v2140 = vmul.f32 %v1352, %v1802
        %v2141 = vmul.f32 %v1357, %v1798
        %v2142 = vmul.f32 %v1357, %v1802
        %v2143 = vmul.f32 %v1362, %v1798
        %v2144 = vmul.f32 %v1362, %v1802
        %v2145 = vmul.f32 %v1367, %v1798
        %v2146 = vmul.f32 %v1367, %v1802
        %v2147 = vmul.f32 %v1372, %v1798
        %v2148 = vmul.f32 %v1372, %v1802
        %v2149 = vmul.f32 %v1377, %v1798
        %v2150 = vmul.f32 %v1377, %v1802
        %v2151 = vmul.f32 %v1382, %v1798
        %v2152 = vmul.f32 %v1382, %v1802
        %v2153 = vmul.f32 %v1387, %v1798
        %v2154 = vmul.f32 %v1387, %v1802
        %v2155 = vmul.f32 %v1392, %v1798
        %v2156 = vmul.f32 %v1392, %v1802
        %v2157 = vmul.f32 %v1397, %v1798
        %v2158 = vmul.f32 %v1397, %v1802
        %v2159 = vmul.f32 %v1402, %v1798
        %v2160 = vmul.f32 %v1402, %v1802
        %v2161 = vmul.f32 %v1407, %v1798
        %v2162 = vmul.f32 %v1407, %v1802
        %v2163 = vmul.f32 %v1412, %v1798
        %v2164 = vmul.f32 %v1412, %v1802
        %v2165 = vmul.f32 %v1417, %v1798
        %v2166 = vmul.f32 %v1417, %v1802
        %v2167 = vmul.f32 %v1422, %v1798
        %v2168 = vmul.f32 %v1422, %v1802
        %v2169 = vmul.f32 %v1427, %v1798
        %v2170 = vmul.f32 %v1427, %v1802
        %v2171 = vmul.f32 %v1432, %v1798
        %v2172 = vmul.f32 %v1432, %v1802
        %v2173 = vmul.f32 %v1437, %v1798
        %v2174 = vmul.f32 %v1437, %v1802
        %v2175 = vmul.f32 %v1442, %v1798
        %v2176 = vmul.f32 %v1442, %v1802
        %v2177 = vmul.f32 %v1447, %v1798
        %v2178 = vmul.f32 %v1447, %v1802
        %v2179 = vmul.f32 %v1452, %v1798
        %v2180 = vmul.f32 %v1452, %v1802
        %v2181 = vmul.f32 %v1457, %v1798
        %v2182 = vmul.f32 %v1457, %v1802
        %v2183 = vmul.f32 %v1462, %v1798
        %v2184 = vmul.f32 %v1462, %v1802
        %v2185 = vmul.f32 %v1467, %v1798
        %v2186 = vmul.f32 %v1467, %v1802
        %v2187 = vmul.f32 %v1472, %v1798
        %v2188 = vmul.f32 %v1472, %v1802
        %v2189 = vmul.f32 %v1477, %v1798
        %v2190 = vmul.f32 %v1477, %v1802
        %v2191 = vmul.f32 %v1482, %v1798
        %v2192 = vmul.f32 %v1482, %v1802
        %v2193 = vmul.f32 %v1487, %v1798
        %v2194 = vmul.f32 %v1487, %v1802
        %v2195 = vmul.f32 %v1492, %v1798
        %v2196 = vmul.f32 %v1492, %v1802
        %v2197 = vmul.f32 %v1497, %v1798
        %v2198 = vmul.f32 %v1497, %v1802
        %v2199 = vmul.f32 %v1502, %v1798
        %v2200 = vmul.f32 %v1502, %v1802
        %v2201 = vmul.f32 %v1507, %v1798
        %v2202 = vmul.f32 %v1507, %v1802
        %v2203 = vmul.f32 %v1512, %v1798
        %v2204 = vmul.f32 %v1512, %v1802
        %v2205 = vmul.f32 %v1517, %v1798
        %v2206 = vmul.f32 %v1517, %v1802
        %v2207 = vmul.f32 %v1522, %v1798
        %v2208 = vmul.f32 %v1522, %v1802
        %v2209 = vmul.f32 %v1527, %v1798
        %v2210 = vmul.f32 %v1527, %v1802
        %v2211 = vmul.f32 %v1532, %v1798
        %v2212 = vmul.f32 %v1532, %v1802
        %v2213 = vmul.f32 %v1537, %v1798
        %v2214 = vmul.f32 %v1537, %v1802
        %v2215 = vmul.f32 %v1542, %v1798
        %v2216 = vmul.f32 %v1542, %v1802
        %v2217 = vmul.f32 %v1547, %v1798
        %v2218 = vmul.f32 %v1547, %v1802
        %v2219 = vmul.f32 %v1552, %v1798
        %v2220 = vmul.f32 %v1552, %v1802
        %v2221 = vmul.f32 %v1557, %v1798
        %v2222 = vmul.f32 %v1557, %v1802
        %v2223 = vmul.f32 %v1562, %v1798
        %v2224 = vmul.f32 %v1562, %v1802
        %v2225 = vmul.f32 %v1567, %v1798
        %v2226 = vmul.f32 %v1567, %v1802
        %v2227 = vmul.f32 %v1572, %v1798
        %v2228 = vmul.f32 %v1572, %v1802
        %v2229 = vmul.f32 %v1577, %v1798
        %v2230 = vmul.f32 %v1577, %v1802
        %v2231 = vmul.f32 %v1582, %v1798
        %v2232 = vmul.f32 %v1582, %v1802
        %v2233 = vmul.f32 %v1587, %v1798
        %v2234 = vmul.f32 %v1587, %v1802
        %v2235 = vmul.f32 %v1592, %v1798
        %v2236 = vmul.f32 %v1592, %v1802
        %v2237 = vmul.f32 %v1597, %v1798
        %v2238 = vmul.f32 %v1597, %v1802
        %v2239 = vmul.f32 %v1602, %v1798
        %v2240 = vmul.f32 %v1602, %v1802
        %v2241 = vmul.f32 %v1607, %v1798
        %v2242 = vmul.f32 %v1607, %v1802
        %v2243 = vmul.f32 %v1612, %v1798
        %v2244 = vmul.f32 %v1612, %v1802
        %v2245 = vmul.f32 %v1617, %v1798
        %v2246 = vmul.f32 %v1617, %v1802
        %v2247 = vmul.f32 %v1622, %v1798
        %v2248 = vmul.f32 %v1622, %v1802
        %v2249 = vmul.f32 %v1627, %v1798
        %v2250 = vmul.f32 %v1627, %v1802
        %v2251 = vmul.f32 %v1632, %v1798
        %v2252 = vmul.f32 %v1632, %v1802
        %v2253 = vmul.f32 %v1637, %v1798
        %v2254 = vmul.f32 %v1637, %v1802
        %v2255 = vmul.f32 %v1642, %v1798
        %v2256 = vmul.f32 %v1642, %v1802
        %v2257 = vmul.f32 %v1647, %v1798
        %v2258 = vmul.f32 %v1647, %v1802
        %v2259 = vmul.f32 %v1652, %v1798
        %v2260 = vmul.f32 %v1652, %v1802
        %v2261 = vmul.f32 %v1657, %v1798
        %v2262 = vmul.f32 %v1657, %v1802
        %v2263 = vmul.f32 %v1662, %v1798
        %v2264 = vmul.f32 %v1662, %v1802
        %v2265 = vmul.f32 %v1667, %v1798
        %v2266 = vmul.f32 %v1667, %v1802
        %v2267 = vmul.f32 %v1672, %v1798
        %v2268 = vmul.f32 %v1672, %v1802
        %v2269 = vmul.f32 %v1677, %v1798
        %v2270 = vmul.f32 %v1677, %v1802
        %v2271 = vmul.f32 %v1682, %v1798
        %v2272 = vmul.f32 %v1682, %v1802
        %v2273 = vmul.f32 %v1687, %v1798
        %v2274 = vmul.f32 %v1687, %v1802
        %v2275 = vmul.f32 %v1692, %v1798
        %v2276 = vmul.f32 %v1692, %v1802
        %v2277 = vmul.f32 %v1697, %v1798
        %v2278 = vmul.f32 %v1697, %v1802
        %v2279 = vmul.f32 %v1702, %v1798
        %v2280 = vmul.f32 %v1702, %v1802
        %v2281 = vmul.f32 %v1707, %v1798
        %v2282 = vmul.f32 %v1707, %v1802
        %v2283 = vmul.f32 %v1712, %v1798
        %v2284 = vmul.f32 %v1712, %v1802
        %v2285 = vmul.f32 %v1717, %v1798
        %v2286 = vmul.f32 %v1717, %v1802
        %v2287 = vmul.f32 %v1722, %v1798
        %v2288 = vmul.f32 %v1722, %v1802
        %v2289 = vmul.f32 %v1727, %v1798
        %v2290 = vmul.f32 %v1727, %v1802
        %v2291 = vmul.f32 %v1732, %v1798
        %v2292 = vmul.f32 %v1732, %v1802
        %v2293 = vmul.f32 %v1737, %v1798
        %v2294 = vmul.f32 %v1737, %v1802
        %v2295 = vmul.f32 %v1742, %v1798
        %v2296 = vmul.f32 %v1742, %v1802
        %v2297 = vmul.f32 %v1747, %v1798
        %v2298 = vmul.f32 %v1747, %v1802
        %v2299 = vmul.f32 %v1752, %v1798
        %v2300 = vmul.f32 %v1752, %v1802
        %v2301 = vmul.f32 %v1757, %v1798
        %v2302 = vmul.f32 %v1757, %v1802
        %v2303 = vmul.f32 %v1762, %v1798
        %v2304 = vmul.f32 %v1762, %v1802
        %v2305 = vmul.f32 %v1767, %v1798
        %v2306 = vmul.f32 %v1767, %v1802
        %v2307 = vmul.f32 %v1772, %v1798
        %v2308 = vmul.f32 %v1772, %v1802
        %v2309 = vmul.f32 %v1777, %v1798
        %v2310 = vmul.f32 %v1777, %v1802
        %v2311 = vmul.f32 %v1782, %v1798
        %v2312 = vmul.f32 %v1782, %v1802
        %v2313 = vmul.f32 %v1787, %v1798
        %v2314 = vmul.f32 %v1787, %v1802
        %v2315 = vmul.f32 %v1792, %v1798
        %v2316 = vmul.f32 %v1792, %v1802
        %v2317 = vld [vmem:[%s2] sm:$0xff]
        %v2318 = vld [vmem:[%s2 + $0x8] sm:$0xff]
        %v2319 = vld [vmem:[%s2 + $0x10] sm:$0xff]
        %v2320 = vld [vmem:[%s2 + $0x18] sm:$0xff]
        %v2321 = vld [vmem:[%s2 + $0x20] sm:$0xff]
        %v2322 = vld [vmem:[%s2 + $0x28] sm:$0xff]
        %v2323 = vld [vmem:[%s2 + $0x30] sm:$0xff]
        %v2324 = vld [vmem:[%s2 + $0x38] sm:$0xff]
        %v2325 = vld [vmem:[%s2 + $0x40] sm:$0xff]
        %v2326 = vld [vmem:[%s2 + $0x48] sm:$0xff]
        %v2327 = vld [vmem:[%s2 + $0x50] sm:$0xff]
        %v2328 = vld [vmem:[%s2 + $0x58] sm:$0xff]
        %v2329 = vld [vmem:[%s2 + $0x60] sm:$0xff]
        %v2330 = vld [vmem:[%s2 + $0x68] sm:$0xff]
        %v2331 = vld [vmem:[%s2 + $0x70] sm:$0xff]
        %v2332 = vld [vmem:[%s2 + $0x78] sm:$0xff]
        %v2333 = vld [vmem:[%s2 + $0x80] sm:$0xff]
        %v2334 = vld [vmem:[%s2 + $0x88] sm:$0xff]
        %v2335 = vld [vmem:[%s2 + $0x90] sm:$0xff]
        %v2336 = vld [vmem:[%s2 + $0x98] sm:$0xff]
        %v2337 = vld [vmem:[%s2 + $0xa0] sm:$0xff]
        %v2338 = vld [vmem:[%s2 + $0xa8] sm:$0xff]
        %v2339 = vld [vmem:[%s2 + $0xb0] sm:$0xff]
        %v2340 = vld [vmem:[%s2 + $0xb8] sm:$0xff]
        %v2341 = vld [vmem:[%s2 + $0xc0] sm:$0xff]
        %v2342 = vld [vmem:[%s2 + $0xc8] sm:$0xff]
        %v2343 = vld [vmem:[%s2 + $0xd0] sm:$0xff]
        %v2344 = vld [vmem:[%s2 + $0xd8] sm:$0xff]
        %v2345 = vld [vmem:[%s2 + $0xe0] sm:$0xff]
        %v2346 = vld [vmem:[%s2 + $0xe8] sm:$0xff]
        %v2347 = vld [vmem:[%s2 + $0xf0] sm:$0xff]
        %v2348 = vld [vmem:[%s2 + $0xf8] sm:$0xff]
        %v2349 = vld [vmem:[%s2 + $0x100] sm:$0xff]
        %v2350 = vld [vmem:[%s2 + $0x108] sm:$0xff]
        %v2351 = vld [vmem:[%s2 + $0x110] sm:$0xff]
        %v2352 = vld [vmem:[%s2 + $0x118] sm:$0xff]
        %v2353 = vld [vmem:[%s2 + $0x120] sm:$0xff]
        %v2354 = vld [vmem:[%s2 + $0x128] sm:$0xff]
        %v2355 = vld [vmem:[%s2 + $0x130] sm:$0xff]
        %v2356 = vld [vmem:[%s2 + $0x138] sm:$0xff]
        %v2357 = vld [vmem:[%s2 + $0x140] sm:$0xff]
        %v2358 = vld [vmem:[%s2 + $0x148] sm:$0xff]
        %v2359 = vld [vmem:[%s2 + $0x150] sm:$0xff]
        %v2360 = vld [vmem:[%s2 + $0x158] sm:$0xff]
        %v2361 = vld [vmem:[%s2 + $0x160] sm:$0xff]
        %v2362 = vld [vmem:[%s2 + $0x168] sm:$0xff]
        %v2363 = vld [vmem:[%s2 + $0x170] sm:$0xff]
        %v2364 = vld [vmem:[%s2 + $0x178] sm:$0xff]
        %v2365 = vld [vmem:[%s2 + $0x180] sm:$0xff]
        %v2366 = vld [vmem:[%s2 + $0x188] sm:$0xff]
        %v2367 = vld [vmem:[%s2 + $0x190] sm:$0xff]
        %v2368 = vld [vmem:[%s2 + $0x198] sm:$0xff]
        %v2369 = vld [vmem:[%s2 + $0x1a0] sm:$0xff]
        %v2370 = vld [vmem:[%s2 + $0x1a8] sm:$0xff]
        %v2371 = vld [vmem:[%s2 + $0x1b0] sm:$0xff]
        %v2372 = vld [vmem:[%s2 + $0x1b8] sm:$0xff]
        %v2373 = vld [vmem:[%s2 + $0x1c0] sm:$0xff]
        %v2374 = vld [vmem:[%s2 + $0x1c8] sm:$0xff]
        %v2375 = vld [vmem:[%s2 + $0x1d0] sm:$0xff]
        %v2376 = vld [vmem:[%s2 + $0x1d8] sm:$0xff]
        %v2377 = vld [vmem:[%s2 + $0x1e0] sm:$0xff]
        %v2378 = vld [vmem:[%s2 + $0x1e8] sm:$0xff]
        %v2379 = vld [vmem:[%s2 + $0x1f0] sm:$0xff]
        %v2380 = vld [vmem:[%s2 + $0x1f8] sm:$0xff]
        %v2381 = vld [vmem:[%s2 + $0x200] sm:$0xff]
        %v2382 = vld [vmem:[%s2 + $0x208] sm:$0xff]
        %v2383 = vld [vmem:[%s2 + $0x210] sm:$0xff]
        %v2384 = vld [vmem:[%s2 + $0x218] sm:$0xff]
        %v2385 = vld [vmem:[%s2 + $0x220] sm:$0xff]
        %v2386 = vld [vmem:[%s2 + $0x228] sm:$0xff]
        %v2387 = vld [vmem:[%s2 + $0x230] sm:$0xff]
        %v2388 = vld [vmem:[%s2 + $0x238] sm:$0xff]
        %v2389 = vld [vmem:[%s2 + $0x240] sm:$0xff]
        %v2390 = vld [vmem:[%s2 + $0x248] sm:$0xff]
        %v2391 = vld [vmem:[%s2 + $0x250] sm:$0xff]
        %v2392 = vld [vmem:[%s2 + $0x258] sm:$0xff]
        %v2393 = vld [vmem:[%s2 + $0x260] sm:$0xff]
        %v2394 = vld [vmem:[%s2 + $0x268] sm:$0xff]
        %v2395 = vld [vmem:[%s2 + $0x270] sm:$0xff]
        %v2396 = vld [vmem:[%s2 + $0x278] sm:$0xff]
        %v2397 = vld [vmem:[%s2 + $0x280] sm:$0xff]
        %v2398 = vld [vmem:[%s2 + $0x288] sm:$0xff]
        %v2399 = vld [vmem:[%s2 + $0x290] sm:$0xff]
        %v2400 = vld [vmem:[%s2 + $0x298] sm:$0xff]
        %v2401 = vld [vmem:[%s2 + $0x2a0] sm:$0xff]
        %v2402 = vld [vmem:[%s2 + $0x2a8] sm:$0xff]
        %v2403 = vld [vmem:[%s2 + $0x2b0] sm:$0xff]
        %v2404 = vld [vmem:[%s2 + $0x2b8] sm:$0xff]
        %v2405 = vld [vmem:[%s2 + $0x2c0] sm:$0xff]
        %v2406 = vld [vmem:[%s2 + $0x2c8] sm:$0xff]
        %v2407 = vld [vmem:[%s2 + $0x2d0] sm:$0xff]
        %v2408 = vld [vmem:[%s2 + $0x2d8] sm:$0xff]
        %v2409 = vld [vmem:[%s2 + $0x2e0] sm:$0xff]
        %v2410 = vld [vmem:[%s2 + $0x2e8] sm:$0xff]
        %v2411 = vld [vmem:[%s2 + $0x2f0] sm:$0xff]
        %v2412 = vld [vmem:[%s2 + $0x2f8] sm:$0xff]
        %v2413 = vld [vmem:[%s2 + $0x300] sm:$0xff]
        %v2414 = vld [vmem:[%s2 + $0x308] sm:$0xff]
        %v2415 = vld [vmem:[%s2 + $0x310] sm:$0xff]
        %v2416 = vld [vmem:[%s2 + $0x318] sm:$0xff]
        %v2417 = vld [vmem:[%s2 + $0x320] sm:$0xff]
        %v2418 = vld [vmem:[%s2 + $0x328] sm:$0xff]
        %v2419 = vld [vmem:[%s2 + $0x330] sm:$0xff]
        %v2420 = vld [vmem:[%s2 + $0x338] sm:$0xff]
        %v2421 = vld [vmem:[%s2 + $0x340] sm:$0xff]
        %v2422 = vld [vmem:[%s2 + $0x348] sm:$0xff]
        %v2423 = vld [vmem:[%s2 + $0x350] sm:$0xff]
        %v2424 = vld [vmem:[%s2 + $0x358] sm:$0xff]
        %v2425 = vld [vmem:[%s2 + $0x360] sm:$0xff]
        %v2426 = vld [vmem:[%s2 + $0x368] sm:$0xff]
        %v2427 = vld [vmem:[%s2 + $0x370] sm:$0xff]
        %v2428 = vld [vmem:[%s2 + $0x378] sm:$0xff]
        %v2429 = vld [vmem:[%s2 + $0x380] sm:$0xff]
        %v2430 = vld [vmem:[%s2 + $0x388] sm:$0xff]
        %v2431 = vld [vmem:[%s2 + $0x390] sm:$0xff]
        %v2432 = vld [vmem:[%s2 + $0x398] sm:$0xff]
        %v2433 = vld [vmem:[%s2 + $0x3a0] sm:$0xff]
        %v2434 = vld [vmem:[%s2 + $0x3a8] sm:$0xff]
        %v2435 = vld [vmem:[%s2 + $0x3b0] sm:$0xff]
        %v2436 = vld [vmem:[%s2 + $0x3b8] sm:$0xff]
        %v2437 = vld [vmem:[%s2 + $0x3c0] sm:$0xff]
        %v2438 = vld [vmem:[%s2 + $0x3c8] sm:$0xff]
        %v2439 = vld [vmem:[%s2 + $0x3d0] sm:$0xff]
        %v2440 = vld [vmem:[%s2 + $0x3d8] sm:$0xff]
        %v2441 = vld [vmem:[%s2 + $0x3e0] sm:$0xff]
        %v2442 = vld [vmem:[%s2 + $0x3e8] sm:$0xff]
        %v2443 = vld [vmem:[%s2 + $0x3f0] sm:$0xff]
        %v2444 = vld [vmem:[%s2 + $0x3f8] sm:$0xff]
        %v2445 = vld [vmem:[%s2 + $0x400] sm:$0xff]
        %v2446 = vld [vmem:[%s2 + $0x408] sm:$0xff]
        %v2447 = vld [vmem:[%s2 + $0x410] sm:$0xff]
        %v2448 = vld [vmem:[%s2 + $0x418] sm:$0xff]
        %v2449 = vld [vmem:[%s2 + $0x420] sm:$0xff]
        %v2450 = vld [vmem:[%s2 + $0x428] sm:$0xff]
        %v2451 = vld [vmem:[%s2 + $0x430] sm:$0xff]
        %v2452 = vld [vmem:[%s2 + $0x438] sm:$0xff]
        %v2453 = vld [vmem:[%s2 + $0x440] sm:$0xff]
        %v2454 = vld [vmem:[%s2 + $0x448] sm:$0xff]
        %v2455 = vld [vmem:[%s2 + $0x450] sm:$0xff]
        %v2456 = vld [vmem:[%s2 + $0x458] sm:$0xff]
        %v2457 = vld [vmem:[%s2 + $0x460] sm:$0xff]
        %v2458 = vld [vmem:[%s2 + $0x468] sm:$0xff]
        %v2459 = vld [vmem:[%s2 + $0x470] sm:$0xff]
        %v2460 = vld [vmem:[%s2 + $0x478] sm:$0xff]
        %v2461 = vld [vmem:[%s2 + $0x480] sm:$0xff]
        %v2462 = vld [vmem:[%s2 + $0x488] sm:$0xff]
        %v2463 = vld [vmem:[%s2 + $0x490] sm:$0xff]
        %v2464 = vld [vmem:[%s2 + $0x498] sm:$0xff]
        %v2465 = vld [vmem:[%s2 + $0x4a0] sm:$0xff]
        %v2466 = vld [vmem:[%s2 + $0x4a8] sm:$0xff]
        %v2467 = vld [vmem:[%s2 + $0x4b0] sm:$0xff]
        %v2468 = vld [vmem:[%s2 + $0x4b8] sm:$0xff]
        %v2469 = vld [vmem:[%s2 + $0x4c0] sm:$0xff]
        %v2470 = vld [vmem:[%s2 + $0x4c8] sm:$0xff]
        %v2471 = vld [vmem:[%s2 + $0x4d0] sm:$0xff]
        %v2472 = vld [vmem:[%s2 + $0x4d8] sm:$0xff]
        %v2473 = vld [vmem:[%s2 + $0x4e0] sm:$0xff]
        %v2474 = vld [vmem:[%s2 + $0x4e8] sm:$0xff]
        %v2475 = vld [vmem:[%s2 + $0x4f0] sm:$0xff]
        %v2476 = vld [vmem:[%s2 + $0x4f8] sm:$0xff]
        %v2477 = vld [vmem:[%s2 + $0x500] sm:$0xff]
        %v2478 = vld [vmem:[%s2 + $0x508] sm:$0xff]
        %v2479 = vld [vmem:[%s2 + $0x510] sm:$0xff]
        %v2480 = vld [vmem:[%s2 + $0x518] sm:$0xff]
        %v2481 = vld [vmem:[%s2 + $0x520] sm:$0xff]
        %v2482 = vld [vmem:[%s2 + $0x528] sm:$0xff]
        %v2483 = vld [vmem:[%s2 + $0x530] sm:$0xff]
        %v2484 = vld [vmem:[%s2 + $0x538] sm:$0xff]
        %v2485 = vld [vmem:[%s2 + $0x540] sm:$0xff]
        %v2486 = vld [vmem:[%s2 + $0x548] sm:$0xff]
        %v2487 = vld [vmem:[%s2 + $0x550] sm:$0xff]
        %v2488 = vld [vmem:[%s2 + $0x558] sm:$0xff]
        %v2489 = vld [vmem:[%s2 + $0x560] sm:$0xff]
        %v2490 = vld [vmem:[%s2 + $0x568] sm:$0xff]
        %v2491 = vld [vmem:[%s2 + $0x570] sm:$0xff]
        %v2492 = vld [vmem:[%s2 + $0x578] sm:$0xff]
        %v2493 = vld [vmem:[%s2 + $0x580] sm:$0xff]
        %v2494 = vld [vmem:[%s2 + $0x588] sm:$0xff]
        %v2495 = vld [vmem:[%s2 + $0x590] sm:$0xff]
        %v2496 = vld [vmem:[%s2 + $0x598] sm:$0xff]
        %v2497 = vld [vmem:[%s2 + $0x5a0] sm:$0xff]
        %v2498 = vld [vmem:[%s2 + $0x5a8] sm:$0xff]
        %v2499 = vld [vmem:[%s2 + $0x5b0] sm:$0xff]
        %v2500 = vld [vmem:[%s2 + $0x5b8] sm:$0xff]
        %v2501 = vld [vmem:[%s2 + $0x5c0] sm:$0xff]
        %v2502 = vld [vmem:[%s2 + $0x5c8] sm:$0xff]
        %v2503 = vld [vmem:[%s2 + $0x5d0] sm:$0xff]
        %v2504 = vld [vmem:[%s2 + $0x5d8] sm:$0xff]
        %v2505 = vld [vmem:[%s2 + $0x5e0] sm:$0xff]
        %v2506 = vld [vmem:[%s2 + $0x5e8] sm:$0xff]
        %v2507 = vld [vmem:[%s2 + $0x5f0] sm:$0xff]
        %v2508 = vld [vmem:[%s2 + $0x5f8] sm:$0xff]
        %v2509 = vld [vmem:[%s2 + $0x600] sm:$0xff]
        %v2510 = vld [vmem:[%s2 + $0x608] sm:$0xff]
        %v2511 = vld [vmem:[%s2 + $0x610] sm:$0xff]
        %v2512 = vld [vmem:[%s2 + $0x618] sm:$0xff]
        %v2513 = vld [vmem:[%s2 + $0x620] sm:$0xff]
        %v2514 = vld [vmem:[%s2 + $0x628] sm:$0xff]
        %v2515 = vld [vmem:[%s2 + $0x630] sm:$0xff]
        %v2516 = vld [vmem:[%s2 + $0x638] sm:$0xff]
        %v2517 = vld [vmem:[%s2 + $0x640] sm:$0xff]
        %v2518 = vld [vmem:[%s2 + $0x648] sm:$0xff]
        %v2519 = vld [vmem:[%s2 + $0x650] sm:$0xff]
        %v2520 = vld [vmem:[%s2 + $0x658] sm:$0xff]
        %v2521 = vld [vmem:[%s2 + $0x660] sm:$0xff]
        %v2522 = vld [vmem:[%s2 + $0x668] sm:$0xff]
        %v2523 = vld [vmem:[%s2 + $0x670] sm:$0xff]
        %v2524 = vld [vmem:[%s2 + $0x678] sm:$0xff]
        %v2525 = vld [vmem:[%s2 + $0x680] sm:$0xff]
        %v2526 = vld [vmem:[%s2 + $0x688] sm:$0xff]
        %v2527 = vld [vmem:[%s2 + $0x690] sm:$0xff]
        %v2528 = vld [vmem:[%s2 + $0x698] sm:$0xff]
        %v2529 = vld [vmem:[%s2 + $0x6a0] sm:$0xff]
        %v2530 = vld [vmem:[%s2 + $0x6a8] sm:$0xff]
        %v2531 = vld [vmem:[%s2 + $0x6b0] sm:$0xff]
        %v2532 = vld [vmem:[%s2 + $0x6b8] sm:$0xff]
        %v2533 = vld [vmem:[%s2 + $0x6c0] sm:$0xff]
        %v2534 = vld [vmem:[%s2 + $0x6c8] sm:$0xff]
        %v2535 = vld [vmem:[%s2 + $0x6d0] sm:$0xff]
        %v2536 = vld [vmem:[%s2 + $0x6d8] sm:$0xff]
        %v2537 = vld [vmem:[%s2 + $0x6e0] sm:$0xff]
        %v2538 = vld [vmem:[%s2 + $0x6e8] sm:$0xff]
        %v2539 = vld [vmem:[%s2 + $0x6f0] sm:$0xff]
        %v2540 = vld [vmem:[%s2 + $0x6f8] sm:$0xff]
        %v2541 = vld [vmem:[%s2 + $0x700] sm:$0xff]
        %v2542 = vld [vmem:[%s2 + $0x708] sm:$0xff]
        %v2543 = vld [vmem:[%s2 + $0x710] sm:$0xff]
        %v2544 = vld [vmem:[%s2 + $0x718] sm:$0xff]
        %v2545 = vld [vmem:[%s2 + $0x720] sm:$0xff]
        %v2546 = vld [vmem:[%s2 + $0x728] sm:$0xff]
        %v2547 = vld [vmem:[%s2 + $0x730] sm:$0xff]
        %v2548 = vld [vmem:[%s2 + $0x738] sm:$0xff]
        %v2549 = vld [vmem:[%s2 + $0x740] sm:$0xff]
        %v2550 = vld [vmem:[%s2 + $0x748] sm:$0xff]
        %v2551 = vld [vmem:[%s2 + $0x750] sm:$0xff]
        %v2552 = vld [vmem:[%s2 + $0x758] sm:$0xff]
        %v2553 = vld [vmem:[%s2 + $0x760] sm:$0xff]
        %v2554 = vld [vmem:[%s2 + $0x768] sm:$0xff]
        %v2555 = vld [vmem:[%s2 + $0x770] sm:$0xff]
        %v2556 = vld [vmem:[%s2 + $0x778] sm:$0xff]
        %v2557 = vld [vmem:[%s2 + $0x780] sm:$0xff]
        %v2558 = vld [vmem:[%s2 + $0x788] sm:$0xff]
        %v2559 = vld [vmem:[%s2 + $0x790] sm:$0xff]
        %v2560 = vld [vmem:[%s2 + $0x798] sm:$0xff]
        %v2561 = vld [vmem:[%s2 + $0x7a0] sm:$0xff]
        %v2562 = vld [vmem:[%s2 + $0x7a8] sm:$0xff]
        %v2563 = vld [vmem:[%s2 + $0x7b0] sm:$0xff]
        %v2564 = vld [vmem:[%s2 + $0x7b8] sm:$0xff]
        %v2565 = vld [vmem:[%s2 + $0x7c0] sm:$0xff]
        %v2566 = vld [vmem:[%s2 + $0x7c8] sm:$0xff]
        %v2567 = vld [vmem:[%s2 + $0x7d0] sm:$0xff]
        %v2568 = vld [vmem:[%s2 + $0x7d8] sm:$0xff]
        %v2569 = vld [vmem:[%s2 + $0x7e0] sm:$0xff]
        %v2570 = vld [vmem:[%s2 + $0x7e8] sm:$0xff]
        %v2571 = vld [vmem:[%s2 + $0x7f0] sm:$0xff]
        %v2572 = vld [vmem:[%s2 + $0x7f8] sm:$0xff]
        %2574 = vset.pattern.permute.xlu0 0
        %2575 = vperm.xlu0 %2574, %v2317
        %v2576 = vpop.permute.xlu0 %2575
        %2579 = vset.pattern.permute.xlu0 0
        %2580 = vperm.xlu0 %2579, %v2318
        %v2581 = vpop.permute.xlu0 %2580
        %2584 = vset.pattern.permute.xlu0 0
        %2585 = vperm.xlu0 %2584, %v2319
        %v2586 = vpop.permute.xlu0 %2585
        %2589 = vset.pattern.permute.xlu0 0
        %2590 = vperm.xlu0 %2589, %v2320
        %v2591 = vpop.permute.xlu0 %2590
        %2594 = vset.pattern.permute.xlu0 0
        %2595 = vperm.xlu0 %2594, %v2321
        %v2596 = vpop.permute.xlu0 %2595
        %2599 = vset.pattern.permute.xlu0 0
        %2600 = vperm.xlu0 %2599, %v2322
        %v2601 = vpop.permute.xlu0 %2600
        %2604 = vset.pattern.permute.xlu0 0
        %2605 = vperm.xlu0 %2604, %v2323
        %v2606 = vpop.permute.xlu0 %2605
        %2609 = vset.pattern.permute.xlu0 0
        %2610 = vperm.xlu0 %2609, %v2324
        %v2611 = vpop.permute.xlu0 %2610
        %2614 = vset.pattern.permute.xlu0 0
        %2615 = vperm.xlu0 %2614, %v2325
        %v2616 = vpop.permute.xlu0 %2615
        %2619 = vset.pattern.permute.xlu0 0
        %2620 = vperm.xlu0 %2619, %v2326
        %v2621 = vpop.permute.xlu0 %2620
        %2624 = vset.pattern.permute.xlu0 0
        %2625 = vperm.xlu0 %2624, %v2327
        %v2626 = vpop.permute.xlu0 %2625
        %2629 = vset.pattern.permute.xlu0 0
        %2630 = vperm.xlu0 %2629, %v2328
        %v2631 = vpop.permute.xlu0 %2630
        %2634 = vset.pattern.permute.xlu0 0
        %2635 = vperm.xlu0 %2634, %v2329
        %v2636 = vpop.permute.xlu0 %2635
        %2639 = vset.pattern.permute.xlu0 0
        %2640 = vperm.xlu0 %2639, %v2330
        %v2641 = vpop.permute.xlu0 %2640
        %2644 = vset.pattern.permute.xlu0 0
        %2645 = vperm.xlu0 %2644, %v2331
        %v2646 = vpop.permute.xlu0 %2645
        %2649 = vset.pattern.permute.xlu0 0
        %2650 = vperm.xlu0 %2649, %v2332
        %v2651 = vpop.permute.xlu0 %2650
        %2654 = vset.pattern.permute.xlu0 0
        %2655 = vperm.xlu0 %2654, %v2333
        %v2656 = vpop.permute.xlu0 %2655
        %2659 = vset.pattern.permute.xlu0 0
        %2660 = vperm.xlu0 %2659, %v2334
        %v2661 = vpop.permute.xlu0 %2660
        %2664 = vset.pattern.permute.xlu0 0
        %2665 = vperm.xlu0 %2664, %v2335
        %v2666 = vpop.permute.xlu0 %2665
        %2669 = vset.pattern.permute.xlu0 0
        %2670 = vperm.xlu0 %2669, %v2336
        %v2671 = vpop.permute.xlu0 %2670
        %2674 = vset.pattern.permute.xlu0 0
        %2675 = vperm.xlu0 %2674, %v2337
        %v2676 = vpop.permute.xlu0 %2675
        %2679 = vset.pattern.permute.xlu0 0
        %2680 = vperm.xlu0 %2679, %v2338
        %v2681 = vpop.permute.xlu0 %2680
        %2684 = vset.pattern.permute.xlu0 0
        %2685 = vperm.xlu0 %2684, %v2339
        %v2686 = vpop.permute.xlu0 %2685
        %2689 = vset.pattern.permute.xlu0 0
        %2690 = vperm.xlu0 %2689, %v2340
        %v2691 = vpop.permute.xlu0 %2690
        %2694 = vset.pattern.permute.xlu0 0
        %2695 = vperm.xlu0 %2694, %v2341
        %v2696 = vpop.permute.xlu0 %2695
        %2699 = vset.pattern.permute.xlu0 0
        %2700 = vperm.xlu0 %2699, %v2342
        %v2701 = vpop.permute.xlu0 %2700
        %2704 = vset.pattern.permute.xlu0 0
        %2705 = vperm.xlu0 %2704, %v2343
        %v2706 = vpop.permute.xlu0 %2705
        %2709 = vset.pattern.permute.xlu0 0
        %2710 = vperm.xlu0 %2709, %v2344
        %v2711 = vpop.permute.xlu0 %2710
        %2714 = vset.pattern.permute.xlu0 0
        %2715 = vperm.xlu0 %2714, %v2345
        %v2716 = vpop.permute.xlu0 %2715
        %2719 = vset.pattern.permute.xlu0 0
        %2720 = vperm.xlu0 %2719, %v2346
        %v2721 = vpop.permute.xlu0 %2720
        %2724 = vset.pattern.permute.xlu0 0
        %2725 = vperm.xlu0 %2724, %v2347
        %v2726 = vpop.permute.xlu0 %2725
        %2729 = vset.pattern.permute.xlu0 0
        %2730 = vperm.xlu0 %2729, %v2348
        %v2731 = vpop.permute.xlu0 %2730
        %2734 = vset.pattern.permute.xlu0 0
        %2735 = vperm.xlu0 %2734, %v2349
        %v2736 = vpop.permute.xlu0 %2735
        %2739 = vset.pattern.permute.xlu0 0
        %2740 = vperm.xlu0 %2739, %v2350
        %v2741 = vpop.permute.xlu0 %2740
        %2744 = vset.pattern.permute.xlu0 0
        %2745 = vperm.xlu0 %2744, %v2351
        %v2746 = vpop.permute.xlu0 %2745
        %2749 = vset.pattern.permute.xlu0 0
        %2750 = vperm.xlu0 %2749, %v2352
        %v2751 = vpop.permute.xlu0 %2750
        %2754 = vset.pattern.permute.xlu0 0
        %2755 = vperm.xlu0 %2754, %v2353
        %v2756 = vpop.permute.xlu0 %2755
        %2759 = vset.pattern.permute.xlu0 0
        %2760 = vperm.xlu0 %2759, %v2354
        %v2761 = vpop.permute.xlu0 %2760
        %2764 = vset.pattern.permute.xlu0 0
        %2765 = vperm.xlu0 %2764, %v2355
        %v2766 = vpop.permute.xlu0 %2765
        %2769 = vset.pattern.permute.xlu0 0
        %2770 = vperm.xlu0 %2769, %v2356
        %v2771 = vpop.permute.xlu0 %2770
        %2774 = vset.pattern.permute.xlu0 0
        %2775 = vperm.xlu0 %2774, %v2357
        %v2776 = vpop.permute.xlu0 %2775
        %2779 = vset.pattern.permute.xlu0 0
        %2780 = vperm.xlu0 %2779, %v2358
        %v2781 = vpop.permute.xlu0 %2780
        %2784 = vset.pattern.permute.xlu0 0
        %2785 = vperm.xlu0 %2784, %v2359
        %v2786 = vpop.permute.xlu0 %2785
        %2789 = vset.pattern.permute.xlu0 0
        %2790 = vperm.xlu0 %2789, %v2360
        %v2791 = vpop.permute.xlu0 %2790
        %2794 = vset.pattern.permute.xlu0 0
        %2795 = vperm.xlu0 %2794, %v2361
        %v2796 = vpop.permute.xlu0 %2795
        %2799 = vset.pattern.permute.xlu0 0
        %2800 = vperm.xlu0 %2799, %v2362
        %v2801 = vpop.permute.xlu0 %2800
        %2804 = vset.pattern.permute.xlu0 0
        %2805 = vperm.xlu0 %2804, %v2363
        %v2806 = vpop.permute.xlu0 %2805
        %2809 = vset.pattern.permute.xlu0 0
        %2810 = vperm.xlu0 %2809, %v2364
        %v2811 = vpop.permute.xlu0 %2810
        %2814 = vset.pattern.permute.xlu0 0
        %2815 = vperm.xlu0 %2814, %v2365
        %v2816 = vpop.permute.xlu0 %2815
        %2819 = vset.pattern.permute.xlu0 0
        %2820 = vperm.xlu0 %2819, %v2366
        %v2821 = vpop.permute.xlu0 %2820
        %2824 = vset.pattern.permute.xlu0 0
        %2825 = vperm.xlu0 %2824, %v2367
        %v2826 = vpop.permute.xlu0 %2825
        %2829 = vset.pattern.permute.xlu0 0
        %2830 = vperm.xlu0 %2829, %v2368
        %v2831 = vpop.permute.xlu0 %2830
        %2834 = vset.pattern.permute.xlu0 0
        %2835 = vperm.xlu0 %2834, %v2369
        %v2836 = vpop.permute.xlu0 %2835
        %2839 = vset.pattern.permute.xlu0 0
        %2840 = vperm.xlu0 %2839, %v2370
        %v2841 = vpop.permute.xlu0 %2840
        %2844 = vset.pattern.permute.xlu0 0
        %2845 = vperm.xlu0 %2844, %v2371
        %v2846 = vpop.permute.xlu0 %2845
        %2849 = vset.pattern.permute.xlu0 0
        %2850 = vperm.xlu0 %2849, %v2372
        %v2851 = vpop.permute.xlu0 %2850
        %2854 = vset.pattern.permute.xlu0 0
        %2855 = vperm.xlu0 %2854, %v2373
        %v2856 = vpop.permute.xlu0 %2855
        %2859 = vset.pattern.permute.xlu0 0
        %2860 = vperm.xlu0 %2859, %v2374
        %v2861 = vpop.permute.xlu0 %2860
        %2864 = vset.pattern.permute.xlu0 0
        %2865 = vperm.xlu0 %2864, %v2375
        %v2866 = vpop.permute.xlu0 %2865
        %2869 = vset.pattern.permute.xlu0 0
        %2870 = vperm.xlu0 %2869, %v2376
        %v2871 = vpop.permute.xlu0 %2870
        %2874 = vset.pattern.permute.xlu0 0
        %2875 = vperm.xlu0 %2874, %v2377
        %v2876 = vpop.permute.xlu0 %2875
        %2879 = vset.pattern.permute.xlu0 0
        %2880 = vperm.xlu0 %2879, %v2378
        %v2881 = vpop.permute.xlu0 %2880
        %2884 = vset.pattern.permute.xlu0 0
        %2885 = vperm.xlu0 %2884, %v2379
        %v2886 = vpop.permute.xlu0 %2885
        %2889 = vset.pattern.permute.xlu0 0
        %2890 = vperm.xlu0 %2889, %v2380
        %v2891 = vpop.permute.xlu0 %2890
        %2894 = vset.pattern.permute.xlu0 0
        %2895 = vperm.xlu0 %2894, %v2381
        %v2896 = vpop.permute.xlu0 %2895
        %2899 = vset.pattern.permute.xlu0 0
        %2900 = vperm.xlu0 %2899, %v2382
        %v2901 = vpop.permute.xlu0 %2900
        %2904 = vset.pattern.permute.xlu0 0
        %2905 = vperm.xlu0 %2904, %v2383
        %v2906 = vpop.permute.xlu0 %2905
        %2909 = vset.pattern.permute.xlu0 0
        %2910 = vperm.xlu0 %2909, %v2384
        %v2911 = vpop.permute.xlu0 %2910
        %2914 = vset.pattern.permute.xlu0 0
        %2915 = vperm.xlu0 %2914, %v2385
        %v2916 = vpop.permute.xlu0 %2915
        %2919 = vset.pattern.permute.xlu0 0
        %2920 = vperm.xlu0 %2919, %v2386
        %v2921 = vpop.permute.xlu0 %2920
        %2924 = vset.pattern.permute.xlu0 0
        %2925 = vperm.xlu0 %2924, %v2387
        %v2926 = vpop.permute.xlu0 %2925
        %2929 = vset.pattern.permute.xlu0 0
        %2930 = vperm.xlu0 %2929, %v2388
        %v2931 = vpop.permute.xlu0 %2930
        %2934 = vset.pattern.permute.xlu0 0
        %2935 = vperm.xlu0 %2934, %v2389
        %v2936 = vpop.permute.xlu0 %2935
        %2939 = vset.pattern.permute.xlu0 0
        %2940 = vperm.xlu0 %2939, %v2390
        %v2941 = vpop.permute.xlu0 %2940
        %2944 = vset.pattern.permute.xlu0 0
        %2945 = vperm.xlu0 %2944, %v2391
        %v2946 = vpop.permute.xlu0 %2945
        %2949 = vset.pattern.permute.xlu0 0
        %2950 = vperm.xlu0 %2949, %v2392
        %v2951 = vpop.permute.xlu0 %2950
        %2954 = vset.pattern.permute.xlu0 0
        %2955 = vperm.xlu0 %2954, %v2393
        %v2956 = vpop.permute.xlu0 %2955
        %2959 = vset.pattern.permute.xlu0 0
        %2960 = vperm.xlu0 %2959, %v2394
        %v2961 = vpop.permute.xlu0 %2960
        %2964 = vset.pattern.permute.xlu0 0
        %2965 = vperm.xlu0 %2964, %v2395
        %v2966 = vpop.permute.xlu0 %2965
        %2969 = vset.pattern.permute.xlu0 0
        %2970 = vperm.xlu0 %2969, %v2396
        %v2971 = vpop.permute.xlu0 %2970
        %2974 = vset.pattern.permute.xlu0 0
        %2975 = vperm.xlu0 %2974, %v2397
        %v2976 = vpop.permute.xlu0 %2975
        %2979 = vset.pattern.permute.xlu0 0
        %2980 = vperm.xlu0 %2979, %v2398
        %v2981 = vpop.permute.xlu0 %2980
        %2984 = vset.pattern.permute.xlu0 0
        %2985 = vperm.xlu0 %2984, %v2399
        %v2986 = vpop.permute.xlu0 %2985
        %2989 = vset.pattern.permute.xlu0 0
        %2990 = vperm.xlu0 %2989, %v2400
        %v2991 = vpop.permute.xlu0 %2990
        %2994 = vset.pattern.permute.xlu0 0
        %2995 = vperm.xlu0 %2994, %v2401
        %v2996 = vpop.permute.xlu0 %2995
        %2999 = vset.pattern.permute.xlu0 0
        %3000 = vperm.xlu0 %2999, %v2402
        %v3001 = vpop.permute.xlu0 %3000
        %3004 = vset.pattern.permute.xlu0 0
        %3005 = vperm.xlu0 %3004, %v2403
        %v3006 = vpop.permute.xlu0 %3005
        %3009 = vset.pattern.permute.xlu0 0
        %3010 = vperm.xlu0 %3009, %v2404
        %v3011 = vpop.permute.xlu0 %3010
        %3014 = vset.pattern.permute.xlu0 0
        %3015 = vperm.xlu0 %3014, %v2405
        %v3016 = vpop.permute.xlu0 %3015
        %3019 = vset.pattern.permute.xlu0 0
        %3020 = vperm.xlu0 %3019, %v2406
        %v3021 = vpop.permute.xlu0 %3020
        %3024 = vset.pattern.permute.xlu0 0
        %3025 = vperm.xlu0 %3024, %v2407
        %v3026 = vpop.permute.xlu0 %3025
        %3029 = vset.pattern.permute.xlu0 0
        %3030 = vperm.xlu0 %3029, %v2408
        %v3031 = vpop.permute.xlu0 %3030
        %3034 = vset.pattern.permute.xlu0 0
        %3035 = vperm.xlu0 %3034, %v2409
        %v3036 = vpop.permute.xlu0 %3035
        %3039 = vset.pattern.permute.xlu0 0
        %3040 = vperm.xlu0 %3039, %v2410
        %v3041 = vpop.permute.xlu0 %3040
        %3044 = vset.pattern.permute.xlu0 0
        %3045 = vperm.xlu0 %3044, %v2411
        %v3046 = vpop.permute.xlu0 %3045
        %3049 = vset.pattern.permute.xlu0 0
        %3050 = vperm.xlu0 %3049, %v2412
        %v3051 = vpop.permute.xlu0 %3050
        %3054 = vset.pattern.permute.xlu0 0
        %3055 = vperm.xlu0 %3054, %v2413
        %v3056 = vpop.permute.xlu0 %3055
        %3059 = vset.pattern.permute.xlu0 0
        %3060 = vperm.xlu0 %3059, %v2414
        %v3061 = vpop.permute.xlu0 %3060
        %3064 = vset.pattern.permute.xlu0 0
        %3065 = vperm.xlu0 %3064, %v2415
        %v3066 = vpop.permute.xlu0 %3065
        %3069 = vset.pattern.permute.xlu0 0
        %3070 = vperm.xlu0 %3069, %v2416
        %v3071 = vpop.permute.xlu0 %3070
        %3074 = vset.pattern.permute.xlu0 0
        %3075 = vperm.xlu0 %3074, %v2417
        %v3076 = vpop.permute.xlu0 %3075
        %3079 = vset.pattern.permute.xlu0 0
        %3080 = vperm.xlu0 %3079, %v2418
        %v3081 = vpop.permute.xlu0 %3080
        %3084 = vset.pattern.permute.xlu0 0
        %3085 = vperm.xlu0 %3084, %v2419
        %v3086 = vpop.permute.xlu0 %3085
        %3089 = vset.pattern.permute.xlu0 0
        %3090 = vperm.xlu0 %3089, %v2420
        %v3091 = vpop.permute.xlu0 %3090
        %3094 = vset.pattern.permute.xlu0 0
        %3095 = vperm.xlu0 %3094, %v2421
        %v3096 = vpop.permute.xlu0 %3095
        %3099 = vset.pattern.permute.xlu0 0
        %3100 = vperm.xlu0 %3099, %v2422
        %v3101 = vpop.permute.xlu0 %3100
        %3104 = vset.pattern.permute.xlu0 0
        %3105 = vperm.xlu0 %3104, %v2423
        %v3106 = vpop.permute.xlu0 %3105
        %3109 = vset.pattern.permute.xlu0 0
        %3110 = vperm.xlu0 %3109, %v2424
        %v3111 = vpop.permute.xlu0 %3110
        %3114 = vset.pattern.permute.xlu0 0
        %3115 = vperm.xlu0 %3114, %v2425
        %v3116 = vpop.permute.xlu0 %3115
        %3119 = vset.pattern.permute.xlu0 0
        %3120 = vperm.xlu0 %3119, %v2426
        %v3121 = vpop.permute.xlu0 %3120
        %3124 = vset.pattern.permute.xlu0 0
        %3125 = vperm.xlu0 %3124, %v2427
        %v3126 = vpop.permute.xlu0 %3125
        %3129 = vset.pattern.permute.xlu0 0
        %3130 = vperm.xlu0 %3129, %v2428
        %v3131 = vpop.permute.xlu0 %3130
        %3134 = vset.pattern.permute.xlu0 0
        %3135 = vperm.xlu0 %3134, %v2429
        %v3136 = vpop.permute.xlu0 %3135
        %3139 = vset.pattern.permute.xlu0 0
        %3140 = vperm.xlu0 %3139, %v2430
        %v3141 = vpop.permute.xlu0 %3140
        %3144 = vset.pattern.permute.xlu0 0
        %3145 = vperm.xlu0 %3144, %v2431
        %v3146 = vpop.permute.xlu0 %3145
        %3149 = vset.pattern.permute.xlu0 0
        %3150 = vperm.xlu0 %3149, %v2432
        %v3151 = vpop.permute.xlu0 %3150
        %3154 = vset.pattern.permute.xlu0 0
        %3155 = vperm.xlu0 %3154, %v2433
        %v3156 = vpop.permute.xlu0 %3155
        %3159 = vset.pattern.permute.xlu0 0
        %3160 = vperm.xlu0 %3159, %v2434
        %v3161 = vpop.permute.xlu0 %3160
        %3164 = vset.pattern.permute.xlu0 0
        %3165 = vperm.xlu0 %3164, %v2435
        %v3166 = vpop.permute.xlu0 %3165
        %3169 = vset.pattern.permute.xlu0 0
        %3170 = vperm.xlu0 %3169, %v2436
        %v3171 = vpop.permute.xlu0 %3170
        %3174 = vset.pattern.permute.xlu0 0
        %3175 = vperm.xlu0 %3174, %v2437
        %v3176 = vpop.permute.xlu0 %3175
        %3179 = vset.pattern.permute.xlu0 0
        %3180 = vperm.xlu0 %3179, %v2438
        %v3181 = vpop.permute.xlu0 %3180
        %3184 = vset.pattern.permute.xlu0 0
        %3185 = vperm.xlu0 %3184, %v2439
        %v3186 = vpop.permute.xlu0 %3185
        %3189 = vset.pattern.permute.xlu0 0
        %3190 = vperm.xlu0 %3189, %v2440
        %v3191 = vpop.permute.xlu0 %3190
        %3194 = vset.pattern.permute.xlu0 0
        %3195 = vperm.xlu0 %3194, %v2441
        %v3196 = vpop.permute.xlu0 %3195
        %3199 = vset.pattern.permute.xlu0 0
        %3200 = vperm.xlu0 %3199, %v2442
        %v3201 = vpop.permute.xlu0 %3200
        %3204 = vset.pattern.permute.xlu0 0
        %3205 = vperm.xlu0 %3204, %v2443
        %v3206 = vpop.permute.xlu0 %3205
        %3209 = vset.pattern.permute.xlu0 0
        %3210 = vperm.xlu0 %3209, %v2444
        %v3211 = vpop.permute.xlu0 %3210
        %3214 = vset.pattern.permute.xlu0 0
        %3215 = vperm.xlu0 %3214, %v2445
        %v3216 = vpop.permute.xlu0 %3215
        %3219 = vset.pattern.permute.xlu0 0
        %3220 = vperm.xlu0 %3219, %v2446
        %v3221 = vpop.permute.xlu0 %3220
        %3224 = vset.pattern.permute.xlu0 0
        %3225 = vperm.xlu0 %3224, %v2447
        %v3226 = vpop.permute.xlu0 %3225
        %3229 = vset.pattern.permute.xlu0 0
        %3230 = vperm.xlu0 %3229, %v2448
        %v3231 = vpop.permute.xlu0 %3230
        %3234 = vset.pattern.permute.xlu0 0
        %3235 = vperm.xlu0 %3234, %v2449
        %v3236 = vpop.permute.xlu0 %3235
        %3239 = vset.pattern.permute.xlu0 0
        %3240 = vperm.xlu0 %3239, %v2450
        %v3241 = vpop.permute.xlu0 %3240
        %3244 = vset.pattern.permute.xlu0 0
        %3245 = vperm.xlu0 %3244, %v2451
        %v3246 = vpop.permute.xlu0 %3245
        %3249 = vset.pattern.permute.xlu0 0
        %3250 = vperm.xlu0 %3249, %v2452
        %v3251 = vpop.permute.xlu0 %3250
        %3254 = vset.pattern.permute.xlu0 0
        %3255 = vperm.xlu0 %3254, %v2453
        %v3256 = vpop.permute.xlu0 %3255
        %3259 = vset.pattern.permute.xlu0 0
        %3260 = vperm.xlu0 %3259, %v2454
        %v3261 = vpop.permute.xlu0 %3260
        %3264 = vset.pattern.permute.xlu0 0
        %3265 = vperm.xlu0 %3264, %v2455
        %v3266 = vpop.permute.xlu0 %3265
        %3269 = vset.pattern.permute.xlu0 0
        %3270 = vperm.xlu0 %3269, %v2456
        %v3271 = vpop.permute.xlu0 %3270
        %3274 = vset.pattern.permute.xlu0 0
        %3275 = vperm.xlu0 %3274, %v2457
        %v3276 = vpop.permute.xlu0 %3275
        %3279 = vset.pattern.permute.xlu0 0
        %3280 = vperm.xlu0 %3279, %v2458
        %v3281 = vpop.permute.xlu0 %3280
        %3284 = vset.pattern.permute.xlu0 0
        %3285 = vperm.xlu0 %3284, %v2459
        %v3286 = vpop.permute.xlu0 %3285
        %3289 = vset.pattern.permute.xlu0 0
        %3290 = vperm.xlu0 %3289, %v2460
        %v3291 = vpop.permute.xlu0 %3290
        %3294 = vset.pattern.permute.xlu0 0
        %3295 = vperm.xlu0 %3294, %v2461
        %v3296 = vpop.permute.xlu0 %3295
        %3299 = vset.pattern.permute.xlu0 0
        %3300 = vperm.xlu0 %3299, %v2462
        %v3301 = vpop.permute.xlu0 %3300
        %3304 = vset.pattern.permute.xlu0 0
        %3305 = vperm.xlu0 %3304, %v2463
        %v3306 = vpop.permute.xlu0 %3305
        %3309 = vset.pattern.permute.xlu0 0
        %3310 = vperm.xlu0 %3309, %v2464
        %v3311 = vpop.permute.xlu0 %3310
        %3314 = vset.pattern.permute.xlu0 0
        %3315 = vperm.xlu0 %3314, %v2465
        %v3316 = vpop.permute.xlu0 %3315
        %3319 = vset.pattern.permute.xlu0 0
        %3320 = vperm.xlu0 %3319, %v2466
        %v3321 = vpop.permute.xlu0 %3320
        %3324 = vset.pattern.permute.xlu0 0
        %3325 = vperm.xlu0 %3324, %v2467
        %v3326 = vpop.permute.xlu0 %3325
        %3329 = vset.pattern.permute.xlu0 0
        %3330 = vperm.xlu0 %3329, %v2468
        %v3331 = vpop.permute.xlu0 %3330
        %3334 = vset.pattern.permute.xlu0 0
        %3335 = vperm.xlu0 %3334, %v2469
        %v3336 = vpop.permute.xlu0 %3335
        %3339 = vset.pattern.permute.xlu0 0
        %3340 = vperm.xlu0 %3339, %v2470
        %v3341 = vpop.permute.xlu0 %3340
        %3344 = vset.pattern.permute.xlu0 0
        %3345 = vperm.xlu0 %3344, %v2471
        %v3346 = vpop.permute.xlu0 %3345
        %3349 = vset.pattern.permute.xlu0 0
        %3350 = vperm.xlu0 %3349, %v2472
        %v3351 = vpop.permute.xlu0 %3350
        %3354 = vset.pattern.permute.xlu0 0
        %3355 = vperm.xlu0 %3354, %v2473
        %v3356 = vpop.permute.xlu0 %3355
        %3359 = vset.pattern.permute.xlu0 0
        %3360 = vperm.xlu0 %3359, %v2474
        %v3361 = vpop.permute.xlu0 %3360
        %3364 = vset.pattern.permute.xlu0 0
        %3365 = vperm.xlu0 %3364, %v2475
        %v3366 = vpop.permute.xlu0 %3365
        %3369 = vset.pattern.permute.xlu0 0
        %3370 = vperm.xlu0 %3369, %v2476
        %v3371 = vpop.permute.xlu0 %3370
        %3374 = vset.pattern.permute.xlu0 0
        %3375 = vperm.xlu0 %3374, %v2477
        %v3376 = vpop.permute.xlu0 %3375
        %3379 = vset.pattern.permute.xlu0 0
        %3380 = vperm.xlu0 %3379, %v2478
        %v3381 = vpop.permute.xlu0 %3380
        %3384 = vset.pattern.permute.xlu0 0
        %3385 = vperm.xlu0 %3384, %v2479
        %v3386 = vpop.permute.xlu0 %3385
        %3389 = vset.pattern.permute.xlu0 0
        %3390 = vperm.xlu0 %3389, %v2480
        %v3391 = vpop.permute.xlu0 %3390
        %3394 = vset.pattern.permute.xlu0 0
        %3395 = vperm.xlu0 %3394, %v2481
        %v3396 = vpop.permute.xlu0 %3395
        %3399 = vset.pattern.permute.xlu0 0
        %3400 = vperm.xlu0 %3399, %v2482
        %v3401 = vpop.permute.xlu0 %3400
        %3404 = vset.pattern.permute.xlu0 0
        %3405 = vperm.xlu0 %3404, %v2483
        %v3406 = vpop.permute.xlu0 %3405
        %3409 = vset.pattern.permute.xlu0 0
        %3410 = vperm.xlu0 %3409, %v2484
        %v3411 = vpop.permute.xlu0 %3410
        %3414 = vset.pattern.permute.xlu0 0
        %3415 = vperm.xlu0 %3414, %v2485
        %v3416 = vpop.permute.xlu0 %3415
        %3419 = vset.pattern.permute.xlu0 0
        %3420 = vperm.xlu0 %3419, %v2486
        %v3421 = vpop.permute.xlu0 %3420
        %3424 = vset.pattern.permute.xlu0 0
        %3425 = vperm.xlu0 %3424, %v2487
        %v3426 = vpop.permute.xlu0 %3425
        %3429 = vset.pattern.permute.xlu0 0
        %3430 = vperm.xlu0 %3429, %v2488
        %v3431 = vpop.permute.xlu0 %3430
        %3434 = vset.pattern.permute.xlu0 0
        %3435 = vperm.xlu0 %3434, %v2489
        %v3436 = vpop.permute.xlu0 %3435
        %3439 = vset.pattern.permute.xlu0 0
        %3440 = vperm.xlu0 %3439, %v2490
        %v3441 = vpop.permute.xlu0 %3440
        %3444 = vset.pattern.permute.xlu0 0
        %3445 = vperm.xlu0 %3444, %v2491
        %v3446 = vpop.permute.xlu0 %3445
        %3449 = vset.pattern.permute.xlu0 0
        %3450 = vperm.xlu0 %3449, %v2492
        %v3451 = vpop.permute.xlu0 %3450
        %3454 = vset.pattern.permute.xlu0 0
        %3455 = vperm.xlu0 %3454, %v2493
        %v3456 = vpop.permute.xlu0 %3455
        %3459 = vset.pattern.permute.xlu0 0
        %3460 = vperm.xlu0 %3459, %v2494
        %v3461 = vpop.permute.xlu0 %3460
        %3464 = vset.pattern.permute.xlu0 0
        %3465 = vperm.xlu0 %3464, %v2495
        %v3466 = vpop.permute.xlu0 %3465
        %3469 = vset.pattern.permute.xlu0 0
        %3470 = vperm.xlu0 %3469, %v2496
        %v3471 = vpop.permute.xlu0 %3470
        %3474 = vset.pattern.permute.xlu0 0
        %3475 = vperm.xlu0 %3474, %v2497
        %v3476 = vpop.permute.xlu0 %3475
        %3479 = vset.pattern.permute.xlu0 0
        %3480 = vperm.xlu0 %3479, %v2498
        %v3481 = vpop.permute.xlu0 %3480
        %3484 = vset.pattern.permute.xlu0 0
        %3485 = vperm.xlu0 %3484, %v2499
        %v3486 = vpop.permute.xlu0 %3485
        %3489 = vset.pattern.permute.xlu0 0
        %3490 = vperm.xlu0 %3489, %v2500
        %v3491 = vpop.permute.xlu0 %3490
        %3494 = vset.pattern.permute.xlu0 0
        %3495 = vperm.xlu0 %3494, %v2501
        %v3496 = vpop.permute.xlu0 %3495
        %3499 = vset.pattern.permute.xlu0 0
        %3500 = vperm.xlu0 %3499, %v2502
        %v3501 = vpop.permute.xlu0 %3500
        %3504 = vset.pattern.permute.xlu0 0
        %3505 = vperm.xlu0 %3504, %v2503
        %v3506 = vpop.permute.xlu0 %3505
        %3509 = vset.pattern.permute.xlu0 0
        %3510 = vperm.xlu0 %3509, %v2504
        %v3511 = vpop.permute.xlu0 %3510
        %3514 = vset.pattern.permute.xlu0 0
        %3515 = vperm.xlu0 %3514, %v2505
        %v3516 = vpop.permute.xlu0 %3515
        %3519 = vset.pattern.permute.xlu0 0
        %3520 = vperm.xlu0 %3519, %v2506
        %v3521 = vpop.permute.xlu0 %3520
        %3524 = vset.pattern.permute.xlu0 0
        %3525 = vperm.xlu0 %3524, %v2507
        %v3526 = vpop.permute.xlu0 %3525
        %3529 = vset.pattern.permute.xlu0 0
        %3530 = vperm.xlu0 %3529, %v2508
        %v3531 = vpop.permute.xlu0 %3530
        %3534 = vset.pattern.permute.xlu0 0
        %3535 = vperm.xlu0 %3534, %v2509
        %v3536 = vpop.permute.xlu0 %3535
        %3539 = vset.pattern.permute.xlu0 0
        %3540 = vperm.xlu0 %3539, %v2510
        %v3541 = vpop.permute.xlu0 %3540
        %3544 = vset.pattern.permute.xlu0 0
        %3545 = vperm.xlu0 %3544, %v2511
        %v3546 = vpop.permute.xlu0 %3545
        %3549 = vset.pattern.permute.xlu0 0
        %3550 = vperm.xlu0 %3549, %v2512
        %v3551 = vpop.permute.xlu0 %3550
        %3554 = vset.pattern.permute.xlu0 0
        %3555 = vperm.xlu0 %3554, %v2513
        %v3556 = vpop.permute.xlu0 %3555
        %3559 = vset.pattern.permute.xlu0 0
        %3560 = vperm.xlu0 %3559, %v2514
        %v3561 = vpop.permute.xlu0 %3560
        %3564 = vset.pattern.permute.xlu0 0
        %3565 = vperm.xlu0 %3564, %v2515
        %v3566 = vpop.permute.xlu0 %3565
        %3569 = vset.pattern.permute.xlu0 0
        %3570 = vperm.xlu0 %3569, %v2516
        %v3571 = vpop.permute.xlu0 %3570
        %3574 = vset.pattern.permute.xlu0 0
        %3575 = vperm.xlu0 %3574, %v2517
        %v3576 = vpop.permute.xlu0 %3575
        %3579 = vset.pattern.permute.xlu0 0
        %3580 = vperm.xlu0 %3579, %v2518
        %v3581 = vpop.permute.xlu0 %3580
        %3584 = vset.pattern.permute.xlu0 0
        %3585 = vperm.xlu0 %3584, %v2519
        %v3586 = vpop.permute.xlu0 %3585
        %3589 = vset.pattern.permute.xlu0 0
        %3590 = vperm.xlu0 %3589, %v2520
        %v3591 = vpop.permute.xlu0 %3590
        %3594 = vset.pattern.permute.xlu0 0
        %3595 = vperm.xlu0 %3594, %v2521
        %v3596 = vpop.permute.xlu0 %3595
        %3599 = vset.pattern.permute.xlu0 0
        %3600 = vperm.xlu0 %3599, %v2522
        %v3601 = vpop.permute.xlu0 %3600
        %3604 = vset.pattern.permute.xlu0 0
        %3605 = vperm.xlu0 %3604, %v2523
        %v3606 = vpop.permute.xlu0 %3605
        %3609 = vset.pattern.permute.xlu0 0
        %3610 = vperm.xlu0 %3609, %v2524
        %v3611 = vpop.permute.xlu0 %3610
        %3614 = vset.pattern.permute.xlu0 0
        %3615 = vperm.xlu0 %3614, %v2525
        %v3616 = vpop.permute.xlu0 %3615
        %3619 = vset.pattern.permute.xlu0 0
        %3620 = vperm.xlu0 %3619, %v2526
        %v3621 = vpop.permute.xlu0 %3620
        %3624 = vset.pattern.permute.xlu0 0
        %3625 = vperm.xlu0 %3624, %v2527
        %v3626 = vpop.permute.xlu0 %3625
        %3629 = vset.pattern.permute.xlu0 0
        %3630 = vperm.xlu0 %3629, %v2528
        %v3631 = vpop.permute.xlu0 %3630
        %3634 = vset.pattern.permute.xlu0 0
        %3635 = vperm.xlu0 %3634, %v2529
        %v3636 = vpop.permute.xlu0 %3635
        %3639 = vset.pattern.permute.xlu0 0
        %3640 = vperm.xlu0 %3639, %v2530
        %v3641 = vpop.permute.xlu0 %3640
        %3644 = vset.pattern.permute.xlu0 0
        %3645 = vperm.xlu0 %3644, %v2531
        %v3646 = vpop.permute.xlu0 %3645
        %3649 = vset.pattern.permute.xlu0 0
        %3650 = vperm.xlu0 %3649, %v2532
        %v3651 = vpop.permute.xlu0 %3650
        %3654 = vset.pattern.permute.xlu0 0
        %3655 = vperm.xlu0 %3654, %v2533
        %v3656 = vpop.permute.xlu0 %3655
        %3659 = vset.pattern.permute.xlu0 0
        %3660 = vperm.xlu0 %3659, %v2534
        %v3661 = vpop.permute.xlu0 %3660
        %3664 = vset.pattern.permute.xlu0 0
        %3665 = vperm.xlu0 %3664, %v2535
        %v3666 = vpop.permute.xlu0 %3665
        %3669 = vset.pattern.permute.xlu0 0
        %3670 = vperm.xlu0 %3669, %v2536
        %v3671 = vpop.permute.xlu0 %3670
        %3674 = vset.pattern.permute.xlu0 0
        %3675 = vperm.xlu0 %3674, %v2537
        %v3676 = vpop.permute.xlu0 %3675
        %3679 = vset.pattern.permute.xlu0 0
        %3680 = vperm.xlu0 %3679, %v2538
        %v3681 = vpop.permute.xlu0 %3680
        %3684 = vset.pattern.permute.xlu0 0
        %3685 = vperm.xlu0 %3684, %v2539
        %v3686 = vpop.permute.xlu0 %3685
        %3689 = vset.pattern.permute.xlu0 0
        %3690 = vperm.xlu0 %3689, %v2540
        %v3691 = vpop.permute.xlu0 %3690
        %3694 = vset.pattern.permute.xlu0 0
        %3695 = vperm.xlu0 %3694, %v2541
        %v3696 = vpop.permute.xlu0 %3695
        %3699 = vset.pattern.permute.xlu0 0
        %3700 = vperm.xlu0 %3699, %v2542
        %v3701 = vpop.permute.xlu0 %3700
        %3704 = vset.pattern.permute.xlu0 0
        %3705 = vperm.xlu0 %3704, %v2543
        %v3706 = vpop.permute.xlu0 %3705
        %3709 = vset.pattern.permute.xlu0 0
        %3710 = vperm.xlu0 %3709, %v2544
        %v3711 = vpop.permute.xlu0 %3710
        %3714 = vset.pattern.permute.xlu0 0
        %3715 = vperm.xlu0 %3714, %v2545
        %v3716 = vpop.permute.xlu0 %3715
        %3719 = vset.pattern.permute.xlu0 0
        %3720 = vperm.xlu0 %3719, %v2546
        %v3721 = vpop.permute.xlu0 %3720
        %3724 = vset.pattern.permute.xlu0 0
        %3725 = vperm.xlu0 %3724, %v2547
        %v3726 = vpop.permute.xlu0 %3725
        %3729 = vset.pattern.permute.xlu0 0
        %3730 = vperm.xlu0 %3729, %v2548
        %v3731 = vpop.permute.xlu0 %3730
        %3734 = vset.pattern.permute.xlu0 0
        %3735 = vperm.xlu0 %3734, %v2549
        %v3736 = vpop.permute.xlu0 %3735
        %3739 = vset.pattern.permute.xlu0 0
        %3740 = vperm.xlu0 %3739, %v2550
        %v3741 = vpop.permute.xlu0 %3740
        %3744 = vset.pattern.permute.xlu0 0
        %3745 = vperm.xlu0 %3744, %v2551
        %v3746 = vpop.permute.xlu0 %3745
        %3749 = vset.pattern.permute.xlu0 0
        %3750 = vperm.xlu0 %3749, %v2552
        %v3751 = vpop.permute.xlu0 %3750
        %3754 = vset.pattern.permute.xlu0 0
        %3755 = vperm.xlu0 %3754, %v2553
        %v3756 = vpop.permute.xlu0 %3755
        %3759 = vset.pattern.permute.xlu0 0
        %3760 = vperm.xlu0 %3759, %v2554
        %v3761 = vpop.permute.xlu0 %3760
        %3764 = vset.pattern.permute.xlu0 0
        %3765 = vperm.xlu0 %3764, %v2555
        %v3766 = vpop.permute.xlu0 %3765
        %3769 = vset.pattern.permute.xlu0 0
        %3770 = vperm.xlu0 %3769, %v2556
        %v3771 = vpop.permute.xlu0 %3770
        %3774 = vset.pattern.permute.xlu0 0
        %3775 = vperm.xlu0 %3774, %v2557
        %v3776 = vpop.permute.xlu0 %3775
        %3779 = vset.pattern.permute.xlu0 0
        %3780 = vperm.xlu0 %3779, %v2558
        %v3781 = vpop.permute.xlu0 %3780
        %3784 = vset.pattern.permute.xlu0 0
        %3785 = vperm.xlu0 %3784, %v2559
        %v3786 = vpop.permute.xlu0 %3785
        %3789 = vset.pattern.permute.xlu0 0
        %3790 = vperm.xlu0 %3789, %v2560
        %v3791 = vpop.permute.xlu0 %3790
        %3794 = vset.pattern.permute.xlu0 0
        %3795 = vperm.xlu0 %3794, %v2561
        %v3796 = vpop.permute.xlu0 %3795
        %3799 = vset.pattern.permute.xlu0 0
        %3800 = vperm.xlu0 %3799, %v2562
        %v3801 = vpop.permute.xlu0 %3800
        %3804 = vset.pattern.permute.xlu0 0
        %3805 = vperm.xlu0 %3804, %v2563
        %v3806 = vpop.permute.xlu0 %3805
        %3809 = vset.pattern.permute.xlu0 0
        %3810 = vperm.xlu0 %3809, %v2564
        %v3811 = vpop.permute.xlu0 %3810
        %3814 = vset.pattern.permute.xlu0 0
        %3815 = vperm.xlu0 %3814, %v2565
        %v3816 = vpop.permute.xlu0 %3815
        %3819 = vset.pattern.permute.xlu0 0
        %3820 = vperm.xlu0 %3819, %v2566
        %v3821 = vpop.permute.xlu0 %3820
        %3824 = vset.pattern.permute.xlu0 0
        %3825 = vperm.xlu0 %3824, %v2567
        %v3826 = vpop.permute.xlu0 %3825
        %3829 = vset.pattern.permute.xlu0 0
        %3830 = vperm.xlu0 %3829, %v2568
        %v3831 = vpop.permute.xlu0 %3830
        %3834 = vset.pattern.permute.xlu0 0
        %3835 = vperm.xlu0 %3834, %v2569
        %v3836 = vpop.permute.xlu0 %3835
        %3839 = vset.pattern.permute.xlu0 0
        %3840 = vperm.xlu0 %3839, %v2570
        %v3841 = vpop.permute.xlu0 %3840
        %3844 = vset.pattern.permute.xlu0 0
        %3845 = vperm.xlu0 %3844, %v2571
        %v3846 = vpop.permute.xlu0 %3845
        %3849 = vset.pattern.permute.xlu0 0
        %3850 = vperm.xlu0 %3849, %v2572
        %v3851 = vpop.permute.xlu0 %3850
        %v3854 = vlaneseq
        %v3855 = vshrl.u32 %v3854, 7
        %v3856 = vsub.s32 0, %v3855
        %v3857 = vrot.slane %v257, %v3856
        %v3858 = vlaneseq
        %v3859 = vshrl.u32 %v3858, 7
        %v3860 = vsub.s32 1, %v3859
        %v3861 = vrot.slane %v257, %v3860
        %v3864 = vmul.f32 %v2576, %v3857
        %v3865 = vmul.f32 %v2576, %v3861
        %v3866 = vmul.f32 %v2581, %v3857
        %v3867 = vmul.f32 %v2581, %v3861
        %v3868 = vmul.f32 %v2586, %v3857
        %v3869 = vmul.f32 %v2586, %v3861
        %v3870 = vmul.f32 %v2591, %v3857
        %v3871 = vmul.f32 %v2591, %v3861
        %v3872 = vmul.f32 %v2596, %v3857
        %v3873 = vmul.f32 %v2596, %v3861
        %v3874 = vmul.f32 %v2601, %v3857
        %v3875 = vmul.f32 %v2601, %v3861
        %v3876 = vmul.f32 %v2606, %v3857
        %v3877 = vmul.f32 %v2606, %v3861
        %v3878 = vmul.f32 %v2611, %v3857
        %v3879 = vmul.f32 %v2611, %v3861
        %v3880 = vmul.f32 %v2616, %v3857
        %v3881 = vmul.f32 %v2616, %v3861
        %v3882 = vmul.f32 %v2621, %v3857
        %v3883 = vmul.f32 %v2621, %v3861
        %v3884 = vmul.f32 %v2626, %v3857
        %v3885 = vmul.f32 %v2626, %v3861
        %v3886 = vmul.f32 %v2631, %v3857
        %v3887 = vmul.f32 %v2631, %v3861
        %v3888 = vmul.f32 %v2636, %v3857
        %v3889 = vmul.f32 %v2636, %v3861
        %v3890 = vmul.f32 %v2641, %v3857
        %v3891 = vmul.f32 %v2641, %v3861
        %v3892 = vmul.f32 %v2646, %v3857
        %v3893 = vmul.f32 %v2646, %v3861
        %v3894 = vmul.f32 %v2651, %v3857
        %v3895 = vmul.f32 %v2651, %v3861
        %v3896 = vmul.f32 %v2656, %v3857
        %v3897 = vmul.f32 %v2656, %v3861
        %v3898 = vmul.f32 %v2661, %v3857
        %v3899 = vmul.f32 %v2661, %v3861
        %v3900 = vmul.f32 %v2666, %v3857
        %v3901 = vmul.f32 %v2666, %v3861
        %v3902 = vmul.f32 %v2671, %v3857
        %v3903 = vmul.f32 %v2671, %v3861
        %v3904 = vmul.f32 %v2676, %v3857
        %v3905 = vmul.f32 %v2676, %v3861
        %v3906 = vmul.f32 %v2681, %v3857
        %v3907 = vmul.f32 %v2681, %v3861
        %v3908 = vmul.f32 %v2686, %v3857
        %v3909 = vmul.f32 %v2686, %v3861
        %v3910 = vmul.f32 %v2691, %v3857
        %v3911 = vmul.f32 %v2691, %v3861
        %v3912 = vmul.f32 %v2696, %v3857
        %v3913 = vmul.f32 %v2696, %v3861
        %v3914 = vmul.f32 %v2701, %v3857
        %v3915 = vmul.f32 %v2701, %v3861
        %v3916 = vmul.f32 %v2706, %v3857
        %v3917 = vmul.f32 %v2706, %v3861
        %v3918 = vmul.f32 %v2711, %v3857
        %v3919 = vmul.f32 %v2711, %v3861
        %v3920 = vmul.f32 %v2716, %v3857
        %v3921 = vmul.f32 %v2716, %v3861
        %v3922 = vmul.f32 %v2721, %v3857
        %v3923 = vmul.f32 %v2721, %v3861
        %v3924 = vmul.f32 %v2726, %v3857
        %v3925 = vmul.f32 %v2726, %v3861
        %v3926 = vmul.f32 %v2731, %v3857
        %v3927 = vmul.f32 %v2731, %v3861
        %v3928 = vmul.f32 %v2736, %v3857
        %v3929 = vmul.f32 %v2736, %v3861
        %v3930 = vmul.f32 %v2741, %v3857
        %v3931 = vmul.f32 %v2741, %v3861
        %v3932 = vmul.f32 %v2746, %v3857
        %v3933 = vmul.f32 %v2746, %v3861
        %v3934 = vmul.f32 %v2751, %v3857
        %v3935 = vmul.f32 %v2751, %v3861
        %v3936 = vmul.f32 %v2756, %v3857
        %v3937 = vmul.f32 %v2756, %v3861
        %v3938 = vmul.f32 %v2761, %v3857
        %v3939 = vmul.f32 %v2761, %v3861
        %v3940 = vmul.f32 %v2766, %v3857
        %v3941 = vmul.f32 %v2766, %v3861
        %v3942 = vmul.f32 %v2771, %v3857
        %v3943 = vmul.f32 %v2771, %v3861
        %v3944 = vmul.f32 %v2776, %v3857
        %v3945 = vmul.f32 %v2776, %v3861
        %v3946 = vmul.f32 %v2781, %v3857
        %v3947 = vmul.f32 %v2781, %v3861
        %v3948 = vmul.f32 %v2786, %v3857
        %v3949 = vmul.f32 %v2786, %v3861
        %v3950 = vmul.f32 %v2791, %v3857
        %v3951 = vmul.f32 %v2791, %v3861
        %v3952 = vmul.f32 %v2796, %v3857
        %v3953 = vmul.f32 %v2796, %v3861
        %v3954 = vmul.f32 %v2801, %v3857
        %v3955 = vmul.f32 %v2801, %v3861
        %v3956 = vmul.f32 %v2806, %v3857
        %v3957 = vmul.f32 %v2806, %v3861
        %v3958 = vmul.f32 %v2811, %v3857
        %v3959 = vmul.f32 %v2811, %v3861
        %v3960 = vmul.f32 %v2816, %v3857
        %v3961 = vmul.f32 %v2816, %v3861
        %v3962 = vmul.f32 %v2821, %v3857
        %v3963 = vmul.f32 %v2821, %v3861
        %v3964 = vmul.f32 %v2826, %v3857
        %v3965 = vmul.f32 %v2826, %v3861
        %v3966 = vmul.f32 %v2831, %v3857
        %v3967 = vmul.f32 %v2831, %v3861
        %v3968 = vmul.f32 %v2836, %v3857
        %v3969 = vmul.f32 %v2836, %v3861
        %v3970 = vmul.f32 %v2841, %v3857
        %v3971 = vmul.f32 %v2841, %v3861
        %v3972 = vmul.f32 %v2846, %v3857
        %v3973 = vmul.f32 %v2846, %v3861
        %v3974 = vmul.f32 %v2851, %v3857
        %v3975 = vmul.f32 %v2851, %v3861
        %v3976 = vmul.f32 %v2856, %v3857
        %v3977 = vmul.f32 %v2856, %v3861
        %v3978 = vmul.f32 %v2861, %v3857
        %v3979 = vmul.f32 %v2861, %v3861
        %v3980 = vmul.f32 %v2866, %v3857
        %v3981 = vmul.f32 %v2866, %v3861
        %v3982 = vmul.f32 %v2871, %v3857
        %v3983 = vmul.f32 %v2871, %v3861
        %v3984 = vmul.f32 %v2876, %v3857
        %v3985 = vmul.f32 %v2876, %v3861
        %v3986 = vmul.f32 %v2881, %v3857
        %v3987 = vmul.f32 %v2881, %v3861
        %v3988 = vmul.f32 %v2886, %v3857
        %v3989 = vmul.f32 %v2886, %v3861
        %v3990 = vmul.f32 %v2891, %v3857
        %v3991 = vmul.f32 %v2891, %v3861
        %v3992 = vmul.f32 %v2896, %v3857
        %v3993 = vmul.f32 %v2896, %v3861
        %v3994 = vmul.f32 %v2901, %v3857
        %v3995 = vmul.f32 %v2901, %v3861
        %v3996 = vmul.f32 %v2906, %v3857
        %v3997 = vmul.f32 %v2906, %v3861
        %v3998 = vmul.f32 %v2911, %v3857
        %v3999 = vmul.f32 %v2911, %v3861
        %v4000 = vmul.f32 %v2916, %v3857
        %v4001 = vmul.f32 %v2916, %v3861
        %v4002 = vmul.f32 %v2921, %v3857
        %v4003 = vmul.f32 %v2921, %v3861
        %v4004 = vmul.f32 %v2926, %v3857
        %v4005 = vmul.f32 %v2926, %v3861
        %v4006 = vmul.f32 %v2931, %v3857
        %v4007 = vmul.f32 %v2931, %v3861
        %v4008 = vmul.f32 %v2936, %v3857
        %v4009 = vmul.f32 %v2936, %v3861
        %v4010 = vmul.f32 %v2941, %v3857
        %v4011 = vmul.f32 %v2941, %v3861
        %v4012 = vmul.f32 %v2946, %v3857
        %v4013 = vmul.f32 %v2946, %v3861
        %v4014 = vmul.f32 %v2951, %v3857
        %v4015 = vmul.f32 %v2951, %v3861
        %v4016 = vmul.f32 %v2956, %v3857
        %v4017 = vmul.f32 %v2956, %v3861
        %v4018 = vmul.f32 %v2961, %v3857
        %v4019 = vmul.f32 %v2961, %v3861
        %v4020 = vmul.f32 %v2966, %v3857
        %v4021 = vmul.f32 %v2966, %v3861
        %v4022 = vmul.f32 %v2971, %v3857
        %v4023 = vmul.f32 %v2971, %v3861
        %v4024 = vmul.f32 %v2976, %v3857
        %v4025 = vmul.f32 %v2976, %v3861
        %v4026 = vmul.f32 %v2981, %v3857
        %v4027 = vmul.f32 %v2981, %v3861
        %v4028 = vmul.f32 %v2986, %v3857
        %v4029 = vmul.f32 %v2986, %v3861
        %v4030 = vmul.f32 %v2991, %v3857
        %v4031 = vmul.f32 %v2991, %v3861
        %v4032 = vmul.f32 %v2996, %v3857
        %v4033 = vmul.f32 %v2996, %v3861
        %v4034 = vmul.f32 %v3001, %v3857
        %v4035 = vmul.f32 %v3001, %v3861
        %v4036 = vmul.f32 %v3006, %v3857
        %v4037 = vmul.f32 %v3006, %v3861
        %v4038 = vmul.f32 %v3011, %v3857
        %v4039 = vmul.f32 %v3011, %v3861
        %v4040 = vmul.f32 %v3016, %v3857
        %v4041 = vmul.f32 %v3016, %v3861
        %v4042 = vmul.f32 %v3021, %v3857
        %v4043 = vmul.f32 %v3021, %v3861
        %v4044 = vmul.f32 %v3026, %v3857
        %v4045 = vmul.f32 %v3026, %v3861
        %v4046 = vmul.f32 %v3031, %v3857
        %v4047 = vmul.f32 %v3031, %v3861
        %v4048 = vmul.f32 %v3036, %v3857
        %v4049 = vmul.f32 %v3036, %v3861
        %v4050 = vmul.f32 %v3041, %v3857
        %v4051 = vmul.f32 %v3041, %v3861
        %v4052 = vmul.f32 %v3046, %v3857
        %v4053 = vmul.f32 %v3046, %v3861
        %v4054 = vmul.f32 %v3051, %v3857
        %v4055 = vmul.f32 %v3051, %v3861
        %v4056 = vmul.f32 %v3056, %v3857
        %v4057 = vmul.f32 %v3056, %v3861
        %v4058 = vmul.f32 %v3061, %v3857
        %v4059 = vmul.f32 %v3061, %v3861
        %v4060 = vmul.f32 %v3066, %v3857
        %v4061 = vmul.f32 %v3066, %v3861
        %v4062 = vmul.f32 %v3071, %v3857
        %v4063 = vmul.f32 %v3071, %v3861
        %v4064 = vmul.f32 %v3076, %v3857
        %v4065 = vmul.f32 %v3076, %v3861
        %v4066 = vmul.f32 %v3081, %v3857
        %v4067 = vmul.f32 %v3081, %v3861
        %v4068 = vmul.f32 %v3086, %v3857
        %v4069 = vmul.f32 %v3086, %v3861
        %v4070 = vmul.f32 %v3091, %v3857
        %v4071 = vmul.f32 %v3091, %v3861
        %v4072 = vmul.f32 %v3096, %v3857
        %v4073 = vmul.f32 %v3096, %v3861
        %v4074 = vmul.f32 %v3101, %v3857
        %v4075 = vmul.f32 %v3101, %v3861
        %v4076 = vmul.f32 %v3106, %v3857
        %v4077 = vmul.f32 %v3106, %v3861
        %v4078 = vmul.f32 %v3111, %v3857
        %v4079 = vmul.f32 %v3111, %v3861
        %v4080 = vmul.f32 %v3116, %v3857
        %v4081 = vmul.f32 %v3116, %v3861
        %v4082 = vmul.f32 %v3121, %v3857
        %v4083 = vmul.f32 %v3121, %v3861
        %v4084 = vmul.f32 %v3126, %v3857
        %v4085 = vmul.f32 %v3126, %v3861
        %v4086 = vmul.f32 %v3131, %v3857
        %v4087 = vmul.f32 %v3131, %v3861
        %v4088 = vmul.f32 %v3136, %v3857
        %v4089 = vmul.f32 %v3136, %v3861
        %v4090 = vmul.f32 %v3141, %v3857
        %v4091 = vmul.f32 %v3141, %v3861
        %v4092 = vmul.f32 %v3146, %v3857
        %v4093 = vmul.f32 %v3146, %v3861
        %v4094 = vmul.f32 %v3151, %v3857
        %v4095 = vmul.f32 %v3151, %v3861
        %v4096 = vmul.f32 %v3156, %v3857
        %v4097 = vmul.f32 %v3156, %v3861
        %v4098 = vmul.f32 %v3161, %v3857
        %v4099 = vmul.f32 %v3161, %v3861
        %v4100 = vmul.f32 %v3166, %v3857
        %v4101 = vmul.f32 %v3166, %v3861
        %v4102 = vmul.f32 %v3171, %v3857
        %v4103 = vmul.f32 %v3171, %v3861
        %v4104 = vmul.f32 %v3176, %v3857
        %v4105 = vmul.f32 %v3176, %v3861
        %v4106 = vmul.f32 %v3181, %v3857
        %v4107 = vmul.f32 %v3181, %v3861
        %v4108 = vmul.f32 %v3186, %v3857
        %v4109 = vmul.f32 %v3186, %v3861
        %v4110 = vmul.f32 %v3191, %v3857
        %v4111 = vmul.f32 %v3191, %v3861
        %v4112 = vmul.f32 %v3196, %v3857
        %v4113 = vmul.f32 %v3196, %v3861
        %v4114 = vmul.f32 %v3201, %v3857
        %v4115 = vmul.f32 %v3201, %v3861
        %v4116 = vmul.f32 %v3206, %v3857
        %v4117 = vmul.f32 %v3206, %v3861
        %v4118 = vmul.f32 %v3211, %v3857
        %v4119 = vmul.f32 %v3211, %v3861
        %v4120 = vmul.f32 %v3216, %v3857
        %v4121 = vmul.f32 %v3216, %v3861
        %v4122 = vmul.f32 %v3221, %v3857
        %v4123 = vmul.f32 %v3221, %v3861
        %v4124 = vmul.f32 %v3226, %v3857
        %v4125 = vmul.f32 %v3226, %v3861
        %v4126 = vmul.f32 %v3231, %v3857
        %v4127 = vmul.f32 %v3231, %v3861
        %v4128 = vmul.f32 %v3236, %v3857
        %v4129 = vmul.f32 %v3236, %v3861
        %v4130 = vmul.f32 %v3241, %v3857
        %v4131 = vmul.f32 %v3241, %v3861
        %v4132 = vmul.f32 %v3246, %v3857
        %v4133 = vmul.f32 %v3246, %v3861
        %v4134 = vmul.f32 %v3251, %v3857
        %v4135 = vmul.f32 %v3251, %v3861
        %v4136 = vmul.f32 %v3256, %v3857
        %v4137 = vmul.f32 %v3256, %v3861
        %v4138 = vmul.f32 %v3261, %v3857
        %v4139 = vmul.f32 %v3261, %v3861
        %v4140 = vmul.f32 %v3266, %v3857
        %v4141 = vmul.f32 %v3266, %v3861
        %v4142 = vmul.f32 %v3271, %v3857
        %v4143 = vmul.f32 %v3271, %v3861
        %v4144 = vmul.f32 %v3276, %v3857
        %v4145 = vmul.f32 %v3276, %v3861
        %v4146 = vmul.f32 %v3281, %v3857
        %v4147 = vmul.f32 %v3281, %v3861
        %v4148 = vmul.f32 %v3286, %v3857
        %v4149 = vmul.f32 %v3286, %v3861
        %v4150 = vmul.f32 %v3291, %v3857
        %v4151 = vmul.f32 %v3291, %v3861
        %v4152 = vmul.f32 %v3296, %v3857
        %v4153 = vmul.f32 %v3296, %v3861
        %v4154 = vmul.f32 %v3301, %v3857
        %v4155 = vmul.f32 %v3301, %v3861
        %v4156 = vmul.f32 %v3306, %v3857
        %v4157 = vmul.f32 %v3306, %v3861
        %v4158 = vmul.f32 %v3311, %v3857
        %v4159 = vmul.f32 %v3311, %v3861
        %v4160 = vmul.f32 %v3316, %v3857
        %v4161 = vmul.f32 %v3316, %v3861
        %v4162 = vmul.f32 %v3321, %v3857
        %v4163 = vmul.f32 %v3321, %v3861
        %v4164 = vmul.f32 %v3326, %v3857
        %v4165 = vmul.f32 %v3326, %v3861
        %v4166 = vmul.f32 %v3331, %v3857
        %v4167 = vmul.f32 %v3331, %v3861
        %v4168 = vmul.f32 %v3336, %v3857
        %v4169 = vmul.f32 %v3336, %v3861
        %v4170 = vmul.f32 %v3341, %v3857
        %v4171 = vmul.f32 %v3341, %v3861
        %v4172 = vmul.f32 %v3346, %v3857
        %v4173 = vmul.f32 %v3346, %v3861
        %v4174 = vmul.f32 %v3351, %v3857
        %v4175 = vmul.f32 %v3351, %v3861
        %v4176 = vmul.f32 %v3356, %v3857
        %v4177 = vmul.f32 %v3356, %v3861
        %v4178 = vmul.f32 %v3361, %v3857
        %v4179 = vmul.f32 %v3361, %v3861
        %v4180 = vmul.f32 %v3366, %v3857
        %v4181 = vmul.f32 %v3366, %v3861
        %v4182 = vmul.f32 %v3371, %v3857
        %v4183 = vmul.f32 %v3371, %v3861
        %v4184 = vmul.f32 %v3376, %v3857
        %v4185 = vmul.f32 %v3376, %v3861
        %v4186 = vmul.f32 %v3381, %v3857
        %v4187 = vmul.f32 %v3381, %v3861
        %v4188 = vmul.f32 %v3386, %v3857
        %v4189 = vmul.f32 %v3386, %v3861
        %v4190 = vmul.f32 %v3391, %v3857
        %v4191 = vmul.f32 %v3391, %v3861
        %v4192 = vmul.f32 %v3396, %v3857
        %v4193 = vmul.f32 %v3396, %v3861
        %v4194 = vmul.f32 %v3401, %v3857
        %v4195 = vmul.f32 %v3401, %v3861
        %v4196 = vmul.f32 %v3406, %v3857
        %v4197 = vmul.f32 %v3406, %v3861
        %v4198 = vmul.f32 %v3411, %v3857
        %v4199 = vmul.f32 %v3411, %v3861
        %v4200 = vmul.f32 %v3416, %v3857
        %v4201 = vmul.f32 %v3416, %v3861
        %v4202 = vmul.f32 %v3421, %v3857
        %v4203 = vmul.f32 %v3421, %v3861
        %v4204 = vmul.f32 %v3426, %v3857
        %v4205 = vmul.f32 %v3426, %v3861
        %v4206 = vmul.f32 %v3431, %v3857
        %v4207 = vmul.f32 %v3431, %v3861
        %v4208 = vmul.f32 %v3436, %v3857
        %v4209 = vmul.f32 %v3436, %v3861
        %v4210 = vmul.f32 %v3441, %v3857
        %v4211 = vmul.f32 %v3441, %v3861
        %v4212 = vmul.f32 %v3446, %v3857
        %v4213 = vmul.f32 %v3446, %v3861
        %v4214 = vmul.f32 %v3451, %v3857
        %v4215 = vmul.f32 %v3451, %v3861
        %v4216 = vmul.f32 %v3456, %v3857
        %v4217 = vmul.f32 %v3456, %v3861
        %v4218 = vmul.f32 %v3461, %v3857
        %v4219 = vmul.f32 %v3461, %v3861
        %v4220 = vmul.f32 %v3466, %v3857
        %v4221 = vmul.f32 %v3466, %v3861
        %v4222 = vmul.f32 %v3471, %v3857
        %v4223 = vmul.f32 %v3471, %v3861
        %v4224 = vmul.f32 %v3476, %v3857
        %v4225 = vmul.f32 %v3476, %v3861
        %v4226 = vmul.f32 %v3481, %v3857
        %v4227 = vmul.f32 %v3481, %v3861
        %v4228 = vmul.f32 %v3486, %v3857
        %v4229 = vmul.f32 %v3486, %v3861
        %v4230 = vmul.f32 %v3491, %v3857
        %v4231 = vmul.f32 %v3491, %v3861
        %v4232 = vmul.f32 %v3496, %v3857
        %v4233 = vmul.f32 %v3496, %v3861
        %v4234 = vmul.f32 %v3501, %v3857
        %v4235 = vmul.f32 %v3501, %v3861
        %v4236 = vmul.f32 %v3506, %v3857
        %v4237 = vmul.f32 %v3506, %v3861
        %v4238 = vmul.f32 %v3511, %v3857
        %v4239 = vmul.f32 %v3511, %v3861
        %v4240 = vmul.f32 %v3516, %v3857
        %v4241 = vmul.f32 %v3516, %v3861
        %v4242 = vmul.f32 %v3521, %v3857
        %v4243 = vmul.f32 %v3521, %v3861
        %v4244 = vmul.f32 %v3526, %v3857
        %v4245 = vmul.f32 %v3526, %v3861
        %v4246 = vmul.f32 %v3531, %v3857
        %v4247 = vmul.f32 %v3531, %v3861
        %v4248 = vmul.f32 %v3536, %v3857
        %v4249 = vmul.f32 %v3536, %v3861
        %v4250 = vmul.f32 %v3541, %v3857
        %v4251 = vmul.f32 %v3541, %v3861
        %v4252 = vmul.f32 %v3546, %v3857
        %v4253 = vmul.f32 %v3546, %v3861
        %v4254 = vmul.f32 %v3551, %v3857
        %v4255 = vmul.f32 %v3551, %v3861
        %v4256 = vmul.f32 %v3556, %v3857
        %v4257 = vmul.f32 %v3556, %v3861
        %v4258 = vmul.f32 %v3561, %v3857
        %v4259 = vmul.f32 %v3561, %v3861
        %v4260 = vmul.f32 %v3566, %v3857
        %v4261 = vmul.f32 %v3566, %v3861
        %v4262 = vmul.f32 %v3571, %v3857
        %v4263 = vmul.f32 %v3571, %v3861
        %v4264 = vmul.f32 %v3576, %v3857
        %v4265 = vmul.f32 %v3576, %v3861
        %v4266 = vmul.f32 %v3581, %v3857
        %v4267 = vmul.f32 %v3581, %v3861
        %v4268 = vmul.f32 %v3586, %v3857
        %v4269 = vmul.f32 %v3586, %v3861
        %v4270 = vmul.f32 %v3591, %v3857
        %v4271 = vmul.f32 %v3591, %v3861
        %v4272 = vmul.f32 %v3596, %v3857
        %v4273 = vmul.f32 %v3596, %v3861
        %v4274 = vmul.f32 %v3601, %v3857
        %v4275 = vmul.f32 %v3601, %v3861
        %v4276 = vmul.f32 %v3606, %v3857
        %v4277 = vmul.f32 %v3606, %v3861
        %v4278 = vmul.f32 %v3611, %v3857
        %v4279 = vmul.f32 %v3611, %v3861
        %v4280 = vmul.f32 %v3616, %v3857
        %v4281 = vmul.f32 %v3616, %v3861
        %v4282 = vmul.f32 %v3621, %v3857
        %v4283 = vmul.f32 %v3621, %v3861
        %v4284 = vmul.f32 %v3626, %v3857
        %v4285 = vmul.f32 %v3626, %v3861
        %v4286 = vmul.f32 %v3631, %v3857
        %v4287 = vmul.f32 %v3631, %v3861
        %v4288 = vmul.f32 %v3636, %v3857
        %v4289 = vmul.f32 %v3636, %v3861
        %v4290 = vmul.f32 %v3641, %v3857
        %v4291 = vmul.f32 %v3641, %v3861
        %v4292 = vmul.f32 %v3646, %v3857
        %v4293 = vmul.f32 %v3646, %v3861
        %v4294 = vmul.f32 %v3651, %v3857
        %v4295 = vmul.f32 %v3651, %v3861
        %v4296 = vmul.f32 %v3656, %v3857
        %v4297 = vmul.f32 %v3656, %v3861
        %v4298 = vmul.f32 %v3661, %v3857
        %v4299 = vmul.f32 %v3661, %v3861
        %v4300 = vmul.f32 %v3666, %v3857
        %v4301 = vmul.f32 %v3666, %v3861
        %v4302 = vmul.f32 %v3671, %v3857
        %v4303 = vmul.f32 %v3671, %v3861
        %v4304 = vmul.f32 %v3676, %v3857
        %v4305 = vmul.f32 %v3676, %v3861
        %v4306 = vmul.f32 %v3681, %v3857
        %v4307 = vmul.f32 %v3681, %v3861
        %v4308 = vmul.f32 %v3686, %v3857
        %v4309 = vmul.f32 %v3686, %v3861
        %v4310 = vmul.f32 %v3691, %v3857
        %v4311 = vmul.f32 %v3691, %v3861
        %v4312 = vmul.f32 %v3696, %v3857
        %v4313 = vmul.f32 %v3696, %v3861
        %v4314 = vmul.f32 %v3701, %v3857
        %v4315 = vmul.f32 %v3701, %v3861
        %v4316 = vmul.f32 %v3706, %v3857
        %v4317 = vmul.f32 %v3706, %v3861
        %v4318 = vmul.f32 %v3711, %v3857
        %v4319 = vmul.f32 %v3711, %v3861
        %v4320 = vmul.f32 %v3716, %v3857
        %v4321 = vmul.f32 %v3716, %v3861
        %v4322 = vmul.f32 %v3721, %v3857
        %v4323 = vmul.f32 %v3721, %v3861
        %v4324 = vmul.f32 %v3726, %v3857
        %v4325 = vmul.f32 %v3726, %v3861
        %v4326 = vmul.f32 %v3731, %v3857
        %v4327 = vmul.f32 %v3731, %v3861
        %v4328 = vmul.f32 %v3736, %v3857
        %v4329 = vmul.f32 %v3736, %v3861
        %v4330 = vmul.f32 %v3741, %v3857
        %v4331 = vmul.f32 %v3741, %v3861
        %v4332 = vmul.f32 %v3746, %v3857
        %v4333 = vmul.f32 %v3746, %v3861
        %v4334 = vmul.f32 %v3751, %v3857
        %v4335 = vmul.f32 %v3751, %v3861
        %v4336 = vmul.f32 %v3756, %v3857
        %v4337 = vmul.f32 %v3756, %v3861
        %v4338 = vmul.f32 %v3761, %v3857
        %v4339 = vmul.f32 %v3761, %v3861
        %v4340 = vmul.f32 %v3766, %v3857
        %v4341 = vmul.f32 %v3766, %v3861
        %v4342 = vmul.f32 %v3771, %v3857
        %v4343 = vmul.f32 %v3771, %v3861
        %v4344 = vmul.f32 %v3776, %v3857
        %v4345 = vmul.f32 %v3776, %v3861
        %v4346 = vmul.f32 %v3781, %v3857
        %v4347 = vmul.f32 %v3781, %v3861
        %v4348 = vmul.f32 %v3786, %v3857
        %v4349 = vmul.f32 %v3786, %v3861
        %v4350 = vmul.f32 %v3791, %v3857
        %v4351 = vmul.f32 %v3791, %v3861
        %v4352 = vmul.f32 %v3796, %v3857
        %v4353 = vmul.f32 %v3796, %v3861
        %v4354 = vmul.f32 %v3801, %v3857
        %v4355 = vmul.f32 %v3801, %v3861
        %v4356 = vmul.f32 %v3806, %v3857
        %v4357 = vmul.f32 %v3806, %v3861
        %v4358 = vmul.f32 %v3811, %v3857
        %v4359 = vmul.f32 %v3811, %v3861
        %v4360 = vmul.f32 %v3816, %v3857
        %v4361 = vmul.f32 %v3816, %v3861
        %v4362 = vmul.f32 %v3821, %v3857
        %v4363 = vmul.f32 %v3821, %v3861
        %v4364 = vmul.f32 %v3826, %v3857
        %v4365 = vmul.f32 %v3826, %v3861
        %v4366 = vmul.f32 %v3831, %v3857
        %v4367 = vmul.f32 %v3831, %v3861
        %v4368 = vmul.f32 %v3836, %v3857
        %v4369 = vmul.f32 %v3836, %v3861
        %v4370 = vmul.f32 %v3841, %v3857
        %v4371 = vmul.f32 %v3841, %v3861
        %v4372 = vmul.f32 %v3846, %v3857
        %v4373 = vmul.f32 %v3846, %v3861
        %v4374 = vmul.f32 %v3851, %v3857
        %v4375 = vmul.f32 %v3851, %v3861
        %v4376 = vadd.f32 %v1805, %v3864
        %v4377 = vadd.f32 %v1806, %v3865
        %v4378 = vadd.f32 %v1807, %v3866
        %v4379 = vadd.f32 %v1808, %v3867
        %v4380 = vadd.f32 %v1809, %v3868
        %v4381 = vadd.f32 %v1810, %v3869
        %v4382 = vadd.f32 %v1811, %v3870
        %v4383 = vadd.f32 %v1812, %v3871
        %v4384 = vadd.f32 %v1813, %v3872
        %v4385 = vadd.f32 %v1814, %v3873
        %v4386 = vadd.f32 %v1815, %v3874
        %v4387 = vadd.f32 %v1816, %v3875
        %v4388 = vadd.f32 %v1817, %v3876
        %v4389 = vadd.f32 %v1818, %v3877
        %v4390 = vadd.f32 %v1819, %v3878
        %v4391 = vadd.f32 %v1820, %v3879
        %v4392 = vadd.f32 %v1821, %v3880
        %v4393 = vadd.f32 %v1822, %v3881
        %v4394 = vadd.f32 %v1823, %v3882
        %v4395 = vadd.f32 %v1824, %v3883
        %v4396 = vadd.f32 %v1825, %v3884
        %v4397 = vadd.f32 %v1826, %v3885
        %v4398 = vadd.f32 %v1827, %v3886
        %v4399 = vadd.f32 %v1828, %v3887
        %v4400 = vadd.f32 %v1829, %v3888
        %v4401 = vadd.f32 %v1830, %v3889
        %v4402 = vadd.f32 %v1831, %v3890
        %v4403 = vadd.f32 %v1832, %v3891
        %v4404 = vadd.f32 %v1833, %v3892
        %v4405 = vadd.f32 %v1834, %v3893
        %v4406 = vadd.f32 %v1835, %v3894
        %v4407 = vadd.f32 %v1836, %v3895
        %v4408 = vadd.f32 %v1837, %v3896
        %v4409 = vadd.f32 %v1838, %v3897
        %v4410 = vadd.f32 %v1839, %v3898
        %v4411 = vadd.f32 %v1840, %v3899
        %v4412 = vadd.f32 %v1841, %v3900
        %v4413 = vadd.f32 %v1842, %v3901
        %v4414 = vadd.f32 %v1843, %v3902
        %v4415 = vadd.f32 %v1844, %v3903
        %v4416 = vadd.f32 %v1845, %v3904
        %v4417 = vadd.f32 %v1846, %v3905
        %v4418 = vadd.f32 %v1847, %v3906
        %v4419 = vadd.f32 %v1848, %v3907
        %v4420 = vadd.f32 %v1849, %v3908
        %v4421 = vadd.f32 %v1850, %v3909
        %v4422 = vadd.f32 %v1851, %v3910
        %v4423 = vadd.f32 %v1852, %v3911
        %v4424 = vadd.f32 %v1853, %v3912
        %v4425 = vadd.f32 %v1854, %v3913
        %v4426 = vadd.f32 %v1855, %v3914
        %v4427 = vadd.f32 %v1856, %v3915
        %v4428 = vadd.f32 %v1857, %v3916
        %v4429 = vadd.f32 %v1858, %v3917
        %v4430 = vadd.f32 %v1859, %v3918
        %v4431 = vadd.f32 %v1860, %v3919
        %v4432 = vadd.f32 %v1861, %v3920
        %v4433 = vadd.f32 %v1862, %v3921
        %v4434 = vadd.f32 %v1863, %v3922
        %v4435 = vadd.f32 %v1864, %v3923
        %v4436 = vadd.f32 %v1865, %v3924
        %v4437 = vadd.f32 %v1866, %v3925
        %v4438 = vadd.f32 %v1867, %v3926
        %v4439 = vadd.f32 %v1868, %v3927
        %v4440 = vadd.f32 %v1869, %v3928
        %v4441 = vadd.f32 %v1870, %v3929
        %v4442 = vadd.f32 %v1871, %v3930
        %v4443 = vadd.f32 %v1872, %v3931
        %v4444 = vadd.f32 %v1873, %v3932
        %v4445 = vadd.f32 %v1874, %v3933
        %v4446 = vadd.f32 %v1875, %v3934
        %v4447 = vadd.f32 %v1876, %v3935
        %v4448 = vadd.f32 %v1877, %v3936
        %v4449 = vadd.f32 %v1878, %v3937
        %v4450 = vadd.f32 %v1879, %v3938
        %v4451 = vadd.f32 %v1880, %v3939
        %v4452 = vadd.f32 %v1881, %v3940
        %v4453 = vadd.f32 %v1882, %v3941
        %v4454 = vadd.f32 %v1883, %v3942
        %v4455 = vadd.f32 %v1884, %v3943
        %v4456 = vadd.f32 %v1885, %v3944
        %v4457 = vadd.f32 %v1886, %v3945
        %v4458 = vadd.f32 %v1887, %v3946
        %v4459 = vadd.f32 %v1888, %v3947
        %v4460 = vadd.f32 %v1889, %v3948
        %v4461 = vadd.f32 %v1890, %v3949
        %v4462 = vadd.f32 %v1891, %v3950
        %v4463 = vadd.f32 %v1892, %v3951
        %v4464 = vadd.f32 %v1893, %v3952
        %v4465 = vadd.f32 %v1894, %v3953
        %v4466 = vadd.f32 %v1895, %v3954
        %v4467 = vadd.f32 %v1896, %v3955
        %v4468 = vadd.f32 %v1897, %v3956
        %v4469 = vadd.f32 %v1898, %v3957
        %v4470 = vadd.f32 %v1899, %v3958
        %v4471 = vadd.f32 %v1900, %v3959
        %v4472 = vadd.f32 %v1901, %v3960
        %v4473 = vadd.f32 %v1902, %v3961
        %v4474 = vadd.f32 %v1903, %v3962
        %v4475 = vadd.f32 %v1904, %v3963
        %v4476 = vadd.f32 %v1905, %v3964
        %v4477 = vadd.f32 %v1906, %v3965
        %v4478 = vadd.f32 %v1907, %v3966
        %v4479 = vadd.f32 %v1908, %v3967
        %v4480 = vadd.f32 %v1909, %v3968
        %v4481 = vadd.f32 %v1910, %v3969
        %v4482 = vadd.f32 %v1911, %v3970
        %v4483 = vadd.f32 %v1912, %v3971
        %v4484 = vadd.f32 %v1913, %v3972
        %v4485 = vadd.f32 %v1914, %v3973
        %v4486 = vadd.f32 %v1915, %v3974
        %v4487 = vadd.f32 %v1916, %v3975
        %v4488 = vadd.f32 %v1917, %v3976
        %v4489 = vadd.f32 %v1918, %v3977
        %v4490 = vadd.f32 %v1919, %v3978
        %v4491 = vadd.f32 %v1920, %v3979
        %v4492 = vadd.f32 %v1921, %v3980
        %v4493 = vadd.f32 %v1922, %v3981
        %v4494 = vadd.f32 %v1923, %v3982
        %v4495 = vadd.f32 %v1924, %v3983
        %v4496 = vadd.f32 %v1925, %v3984
        %v4497 = vadd.f32 %v1926, %v3985
        %v4498 = vadd.f32 %v1927, %v3986
        %v4499 = vadd.f32 %v1928, %v3987
        %v4500 = vadd.f32 %v1929, %v3988
        %v4501 = vadd.f32 %v1930, %v3989
        %v4502 = vadd.f32 %v1931, %v3990
        %v4503 = vadd.f32 %v1932, %v3991
        %v4504 = vadd.f32 %v1933, %v3992
        %v4505 = vadd.f32 %v1934, %v3993
        %v4506 = vadd.f32 %v1935, %v3994
        %v4507 = vadd.f32 %v1936, %v3995
        %v4508 = vadd.f32 %v1937, %v3996
        %v4509 = vadd.f32 %v1938, %v3997
        %v4510 = vadd.f32 %v1939, %v3998
        %v4511 = vadd.f32 %v1940, %v3999
        %v4512 = vadd.f32 %v1941, %v4000
        %v4513 = vadd.f32 %v1942, %v4001
        %v4514 = vadd.f32 %v1943, %v4002
        %v4515 = vadd.f32 %v1944, %v4003
        %v4516 = vadd.f32 %v1945, %v4004
        %v4517 = vadd.f32 %v1946, %v4005
        %v4518 = vadd.f32 %v1947, %v4006
        %v4519 = vadd.f32 %v1948, %v4007
        %v4520 = vadd.f32 %v1949, %v4008
        %v4521 = vadd.f32 %v1950, %v4009
        %v4522 = vadd.f32 %v1951, %v4010
        %v4523 = vadd.f32 %v1952, %v4011
        %v4524 = vadd.f32 %v1953, %v4012
        %v4525 = vadd.f32 %v1954, %v4013
        %v4526 = vadd.f32 %v1955, %v4014
        %v4527 = vadd.f32 %v1956, %v4015
        %v4528 = vadd.f32 %v1957, %v4016
        %v4529 = vadd.f32 %v1958, %v4017
        %v4530 = vadd.f32 %v1959, %v4018
        %v4531 = vadd.f32 %v1960, %v4019
        %v4532 = vadd.f32 %v1961, %v4020
        %v4533 = vadd.f32 %v1962, %v4021
        %v4534 = vadd.f32 %v1963, %v4022
        %v4535 = vadd.f32 %v1964, %v4023
        %v4536 = vadd.f32 %v1965, %v4024
        %v4537 = vadd.f32 %v1966, %v4025
        %v4538 = vadd.f32 %v1967, %v4026
        %v4539 = vadd.f32 %v1968, %v4027
        %v4540 = vadd.f32 %v1969, %v4028
        %v4541 = vadd.f32 %v1970, %v4029
        %v4542 = vadd.f32 %v1971, %v4030
        %v4543 = vadd.f32 %v1972, %v4031
        %v4544 = vadd.f32 %v1973, %v4032
        %v4545 = vadd.f32 %v1974, %v4033
        %v4546 = vadd.f32 %v1975, %v4034
        %v4547 = vadd.f32 %v1976, %v4035
        %v4548 = vadd.f32 %v1977, %v4036
        %v4549 = vadd.f32 %v1978, %v4037
        %v4550 = vadd.f32 %v1979, %v4038
        %v4551 = vadd.f32 %v1980, %v4039
        %v4552 = vadd.f32 %v1981, %v4040
        %v4553 = vadd.f32 %v1982, %v4041
        %v4554 = vadd.f32 %v1983, %v4042
        %v4555 = vadd.f32 %v1984, %v4043
        %v4556 = vadd.f32 %v1985, %v4044
        %v4557 = vadd.f32 %v1986, %v4045
        %v4558 = vadd.f32 %v1987, %v4046
        %v4559 = vadd.f32 %v1988, %v4047
        %v4560 = vadd.f32 %v1989, %v4048
        %v4561 = vadd.f32 %v1990, %v4049
        %v4562 = vadd.f32 %v1991, %v4050
        %v4563 = vadd.f32 %v1992, %v4051
        %v4564 = vadd.f32 %v1993, %v4052
        %v4565 = vadd.f32 %v1994, %v4053
        %v4566 = vadd.f32 %v1995, %v4054
        %v4567 = vadd.f32 %v1996, %v4055
        %v4568 = vadd.f32 %v1997, %v4056
        %v4569 = vadd.f32 %v1998, %v4057
        %v4570 = vadd.f32 %v1999, %v4058
        %v4571 = vadd.f32 %v2000, %v4059
        %v4572 = vadd.f32 %v2001, %v4060
        %v4573 = vadd.f32 %v2002, %v4061
        %v4574 = vadd.f32 %v2003, %v4062
        %v4575 = vadd.f32 %v2004, %v4063
        %v4576 = vadd.f32 %v2005, %v4064
        %v4577 = vadd.f32 %v2006, %v4065
        %v4578 = vadd.f32 %v2007, %v4066
        %v4579 = vadd.f32 %v2008, %v4067
        %v4580 = vadd.f32 %v2009, %v4068
        %v4581 = vadd.f32 %v2010, %v4069
        %v4582 = vadd.f32 %v2011, %v4070
        %v4583 = vadd.f32 %v2012, %v4071
        %v4584 = vadd.f32 %v2013, %v4072
        %v4585 = vadd.f32 %v2014, %v4073
        %v4586 = vadd.f32 %v2015, %v4074
        %v4587 = vadd.f32 %v2016, %v4075
        %v4588 = vadd.f32 %v2017, %v4076
        %v4589 = vadd.f32 %v2018, %v4077
        %v4590 = vadd.f32 %v2019, %v4078
        %v4591 = vadd.f32 %v2020, %v4079
        %v4592 = vadd.f32 %v2021, %v4080
        %v4593 = vadd.f32 %v2022, %v4081
        %v4594 = vadd.f32 %v2023, %v4082
        %v4595 = vadd.f32 %v2024, %v4083
        %v4596 = vadd.f32 %v2025, %v4084
        %v4597 = vadd.f32 %v2026, %v4085
        %v4598 = vadd.f32 %v2027, %v4086
        %v4599 = vadd.f32 %v2028, %v4087
        %v4600 = vadd.f32 %v2029, %v4088
        %v4601 = vadd.f32 %v2030, %v4089
        %v4602 = vadd.f32 %v2031, %v4090
        %v4603 = vadd.f32 %v2032, %v4091
        %v4604 = vadd.f32 %v2033, %v4092
        %v4605 = vadd.f32 %v2034, %v4093
        %v4606 = vadd.f32 %v2035, %v4094
        %v4607 = vadd.f32 %v2036, %v4095
        %v4608 = vadd.f32 %v2037, %v4096
        %v4609 = vadd.f32 %v2038, %v4097
        %v4610 = vadd.f32 %v2039, %v4098
        %v4611 = vadd.f32 %v2040, %v4099
        %v4612 = vadd.f32 %v2041, %v4100
        %v4613 = vadd.f32 %v2042, %v4101
        %v4614 = vadd.f32 %v2043, %v4102
        %v4615 = vadd.f32 %v2044, %v4103
        %v4616 = vadd.f32 %v2045, %v4104
        %v4617 = vadd.f32 %v2046, %v4105
        %v4618 = vadd.f32 %v2047, %v4106
        %v4619 = vadd.f32 %v2048, %v4107
        %v4620 = vadd.f32 %v2049, %v4108
        %v4621 = vadd.f32 %v2050, %v4109
        %v4622 = vadd.f32 %v2051, %v4110
        %v4623 = vadd.f32 %v2052, %v4111
        %v4624 = vadd.f32 %v2053, %v4112
        %v4625 = vadd.f32 %v2054, %v4113
        %v4626 = vadd.f32 %v2055, %v4114
        %v4627 = vadd.f32 %v2056, %v4115
        %v4628 = vadd.f32 %v2057, %v4116
        %v4629 = vadd.f32 %v2058, %v4117
        %v4630 = vadd.f32 %v2059, %v4118
        %v4631 = vadd.f32 %v2060, %v4119
        %v4632 = vadd.f32 %v2061, %v4120
        %v4633 = vadd.f32 %v2062, %v4121
        %v4634 = vadd.f32 %v2063, %v4122
        %v4635 = vadd.f32 %v2064, %v4123
        %v4636 = vadd.f32 %v2065, %v4124
        %v4637 = vadd.f32 %v2066, %v4125
        %v4638 = vadd.f32 %v2067, %v4126
        %v4639 = vadd.f32 %v2068, %v4127
        %v4640 = vadd.f32 %v2069, %v4128
        %v4641 = vadd.f32 %v2070, %v4129
        %v4642 = vadd.f32 %v2071, %v4130
        %v4643 = vadd.f32 %v2072, %v4131
        %v4644 = vadd.f32 %v2073, %v4132
        %v4645 = vadd.f32 %v2074, %v4133
        %v4646 = vadd.f32 %v2075, %v4134
        %v4647 = vadd.f32 %v2076, %v4135
        %v4648 = vadd.f32 %v2077, %v4136
        %v4649 = vadd.f32 %v2078, %v4137
        %v4650 = vadd.f32 %v2079, %v4138
        %v4651 = vadd.f32 %v2080, %v4139
        %v4652 = vadd.f32 %v2081, %v4140
        %v4653 = vadd.f32 %v2082, %v4141
        %v4654 = vadd.f32 %v2083, %v4142
        %v4655 = vadd.f32 %v2084, %v4143
        %v4656 = vadd.f32 %v2085, %v4144
        %v4657 = vadd.f32 %v2086, %v4145
        %v4658 = vadd.f32 %v2087, %v4146
        %v4659 = vadd.f32 %v2088, %v4147
        %v4660 = vadd.f32 %v2089, %v4148
        %v4661 = vadd.f32 %v2090, %v4149
        %v4662 = vadd.f32 %v2091, %v4150
        %v4663 = vadd.f32 %v2092, %v4151
        %v4664 = vadd.f32 %v2093, %v4152
        %v4665 = vadd.f32 %v2094, %v4153
        %v4666 = vadd.f32 %v2095, %v4154
        %v4667 = vadd.f32 %v2096, %v4155
        %v4668 = vadd.f32 %v2097, %v4156
        %v4669 = vadd.f32 %v2098, %v4157
        %v4670 = vadd.f32 %v2099, %v4158
        %v4671 = vadd.f32 %v2100, %v4159
        %v4672 = vadd.f32 %v2101, %v4160
        %v4673 = vadd.f32 %v2102, %v4161
        %v4674 = vadd.f32 %v2103, %v4162
        %v4675 = vadd.f32 %v2104, %v4163
        %v4676 = vadd.f32 %v2105, %v4164
        %v4677 = vadd.f32 %v2106, %v4165
        %v4678 = vadd.f32 %v2107, %v4166
        %v4679 = vadd.f32 %v2108, %v4167
        %v4680 = vadd.f32 %v2109, %v4168
        %v4681 = vadd.f32 %v2110, %v4169
        %v4682 = vadd.f32 %v2111, %v4170
        %v4683 = vadd.f32 %v2112, %v4171
        %v4684 = vadd.f32 %v2113, %v4172
        %v4685 = vadd.f32 %v2114, %v4173
        %v4686 = vadd.f32 %v2115, %v4174
        %v4687 = vadd.f32 %v2116, %v4175
        %v4688 = vadd.f32 %v2117, %v4176
        %v4689 = vadd.f32 %v2118, %v4177
        %v4690 = vadd.f32 %v2119, %v4178
        %v4691 = vadd.f32 %v2120, %v4179
        %v4692 = vadd.f32 %v2121, %v4180
        %v4693 = vadd.f32 %v2122, %v4181
        %v4694 = vadd.f32 %v2123, %v4182
        %v4695 = vadd.f32 %v2124, %v4183
        %v4696 = vadd.f32 %v2125, %v4184
        %v4697 = vadd.f32 %v2126, %v4185
        %v4698 = vadd.f32 %v2127, %v4186
        %v4699 = vadd.f32 %v2128, %v4187
        %v4700 = vadd.f32 %v2129, %v4188
        %v4701 = vadd.f32 %v2130, %v4189
        %v4702 = vadd.f32 %v2131, %v4190
        %v4703 = vadd.f32 %v2132, %v4191
        %v4704 = vadd.f32 %v2133, %v4192
        %v4705 = vadd.f32 %v2134, %v4193
        %v4706 = vadd.f32 %v2135, %v4194
        %v4707 = vadd.f32 %v2136, %v4195
        %v4708 = vadd.f32 %v2137, %v4196
        %v4709 = vadd.f32 %v2138, %v4197
        %v4710 = vadd.f32 %v2139, %v4198
        %v4711 = vadd.f32 %v2140, %v4199
        %v4712 = vadd.f32 %v2141, %v4200
        %v4713 = vadd.f32 %v2142, %v4201
        %v4714 = vadd.f32 %v2143, %v4202
        %v4715 = vadd.f32 %v2144, %v4203
        %v4716 = vadd.f32 %v2145, %v4204
        %v4717 = vadd.f32 %v2146, %v4205
        %v4718 = vadd.f32 %v2147, %v4206
        %v4719 = vadd.f32 %v2148, %v4207
        %v4720 = vadd.f32 %v2149, %v4208
        %v4721 = vadd.f32 %v2150, %v4209
        %v4722 = vadd.f32 %v2151, %v4210
        %v4723 = vadd.f32 %v2152, %v4211
        %v4724 = vadd.f32 %v2153, %v4212
        %v4725 = vadd.f32 %v2154, %v4213
        %v4726 = vadd.f32 %v2155, %v4214
        %v4727 = vadd.f32 %v2156, %v4215
        %v4728 = vadd.f32 %v2157, %v4216
        %v4729 = vadd.f32 %v2158, %v4217
        %v4730 = vadd.f32 %v2159, %v4218
        %v4731 = vadd.f32 %v2160, %v4219
        %v4732 = vadd.f32 %v2161, %v4220
        %v4733 = vadd.f32 %v2162, %v4221
        %v4734 = vadd.f32 %v2163, %v4222
        %v4735 = vadd.f32 %v2164, %v4223
        %v4736 = vadd.f32 %v2165, %v4224
        %v4737 = vadd.f32 %v2166, %v4225
        %v4738 = vadd.f32 %v2167, %v4226
        %v4739 = vadd.f32 %v2168, %v4227
        %v4740 = vadd.f32 %v2169, %v4228
        %v4741 = vadd.f32 %v2170, %v4229
        %v4742 = vadd.f32 %v2171, %v4230
        %v4743 = vadd.f32 %v2172, %v4231
        %v4744 = vadd.f32 %v2173, %v4232
        %v4745 = vadd.f32 %v2174, %v4233
        %v4746 = vadd.f32 %v2175, %v4234
        %v4747 = vadd.f32 %v2176, %v4235
        %v4748 = vadd.f32 %v2177, %v4236
        %v4749 = vadd.f32 %v2178, %v4237
        %v4750 = vadd.f32 %v2179, %v4238
        %v4751 = vadd.f32 %v2180, %v4239
        %v4752 = vadd.f32 %v2181, %v4240
        %v4753 = vadd.f32 %v2182, %v4241
        %v4754 = vadd.f32 %v2183, %v4242
        %v4755 = vadd.f32 %v2184, %v4243
        %v4756 = vadd.f32 %v2185, %v4244
        %v4757 = vadd.f32 %v2186, %v4245
        %v4758 = vadd.f32 %v2187, %v4246
        %v4759 = vadd.f32 %v2188, %v4247
        %v4760 = vadd.f32 %v2189, %v4248
        %v4761 = vadd.f32 %v2190, %v4249
        %v4762 = vadd.f32 %v2191, %v4250
        %v4763 = vadd.f32 %v2192, %v4251
        %v4764 = vadd.f32 %v2193, %v4252
        %v4765 = vadd.f32 %v2194, %v4253
        %v4766 = vadd.f32 %v2195, %v4254
        %v4767 = vadd.f32 %v2196, %v4255
        %v4768 = vadd.f32 %v2197, %v4256
        %v4769 = vadd.f32 %v2198, %v4257
        %v4770 = vadd.f32 %v2199, %v4258
        %v4771 = vadd.f32 %v2200, %v4259
        %v4772 = vadd.f32 %v2201, %v4260
        %v4773 = vadd.f32 %v2202, %v4261
        %v4774 = vadd.f32 %v2203, %v4262
        %v4775 = vadd.f32 %v2204, %v4263
        %v4776 = vadd.f32 %v2205, %v4264
        %v4777 = vadd.f32 %v2206, %v4265
        %v4778 = vadd.f32 %v2207, %v4266
        %v4779 = vadd.f32 %v2208, %v4267
        %v4780 = vadd.f32 %v2209, %v4268
        %v4781 = vadd.f32 %v2210, %v4269
        %v4782 = vadd.f32 %v2211, %v4270
        %v4783 = vadd.f32 %v2212, %v4271
        %v4784 = vadd.f32 %v2213, %v4272
        %v4785 = vadd.f32 %v2214, %v4273
        %v4786 = vadd.f32 %v2215, %v4274
        %v4787 = vadd.f32 %v2216, %v4275
        %v4788 = vadd.f32 %v2217, %v4276
        %v4789 = vadd.f32 %v2218, %v4277
        %v4790 = vadd.f32 %v2219, %v4278
        %v4791 = vadd.f32 %v2220, %v4279
        %v4792 = vadd.f32 %v2221, %v4280
        %v4793 = vadd.f32 %v2222, %v4281
        %v4794 = vadd.f32 %v2223, %v4282
        %v4795 = vadd.f32 %v2224, %v4283
        %v4796 = vadd.f32 %v2225, %v4284
        %v4797 = vadd.f32 %v2226, %v4285
        %v4798 = vadd.f32 %v2227, %v4286
        %v4799 = vadd.f32 %v2228, %v4287
        %v4800 = vadd.f32 %v2229, %v4288
        %v4801 = vadd.f32 %v2230, %v4289
        %v4802 = vadd.f32 %v2231, %v4290
        %v4803 = vadd.f32 %v2232, %v4291
        %v4804 = vadd.f32 %v2233, %v4292
        %v4805 = vadd.f32 %v2234, %v4293
        %v4806 = vadd.f32 %v2235, %v4294
        %v4807 = vadd.f32 %v2236, %v4295
        %v4808 = vadd.f32 %v2237, %v4296
        %v4809 = vadd.f32 %v2238, %v4297
        %v4810 = vadd.f32 %v2239, %v4298
        %v4811 = vadd.f32 %v2240, %v4299
        %v4812 = vadd.f32 %v2241, %v4300
        %v4813 = vadd.f32 %v2242, %v4301
        %v4814 = vadd.f32 %v2243, %v4302
        %v4815 = vadd.f32 %v2244, %v4303
        %v4816 = vadd.f32 %v2245, %v4304
        %v4817 = vadd.f32 %v2246, %v4305
        %v4818 = vadd.f32 %v2247, %v4306
        %v4819 = vadd.f32 %v2248, %v4307
        %v4820 = vadd.f32 %v2249, %v4308
        %v4821 = vadd.f32 %v2250, %v4309
        %v4822 = vadd.f32 %v2251, %v4310
        %v4823 = vadd.f32 %v2252, %v4311
        %v4824 = vadd.f32 %v2253, %v4312
        %v4825 = vadd.f32 %v2254, %v4313
        %v4826 = vadd.f32 %v2255, %v4314
        %v4827 = vadd.f32 %v2256, %v4315
        %v4828 = vadd.f32 %v2257, %v4316
        %v4829 = vadd.f32 %v2258, %v4317
        %v4830 = vadd.f32 %v2259, %v4318
        %v4831 = vadd.f32 %v2260, %v4319
        %v4832 = vadd.f32 %v2261, %v4320
        %v4833 = vadd.f32 %v2262, %v4321
        %v4834 = vadd.f32 %v2263, %v4322
        %v4835 = vadd.f32 %v2264, %v4323
        %v4836 = vadd.f32 %v2265, %v4324
        %v4837 = vadd.f32 %v2266, %v4325
        %v4838 = vadd.f32 %v2267, %v4326
        %v4839 = vadd.f32 %v2268, %v4327
        %v4840 = vadd.f32 %v2269, %v4328
        %v4841 = vadd.f32 %v2270, %v4329
        %v4842 = vadd.f32 %v2271, %v4330
        %v4843 = vadd.f32 %v2272, %v4331
        %v4844 = vadd.f32 %v2273, %v4332
        %v4845 = vadd.f32 %v2274, %v4333
        %v4846 = vadd.f32 %v2275, %v4334
        %v4847 = vadd.f32 %v2276, %v4335
        %v4848 = vadd.f32 %v2277, %v4336
        %v4849 = vadd.f32 %v2278, %v4337
        %v4850 = vadd.f32 %v2279, %v4338
        %v4851 = vadd.f32 %v2280, %v4339
        %v4852 = vadd.f32 %v2281, %v4340
        %v4853 = vadd.f32 %v2282, %v4341
        %v4854 = vadd.f32 %v2283, %v4342
        %v4855 = vadd.f32 %v2284, %v4343
        %v4856 = vadd.f32 %v2285, %v4344
        %v4857 = vadd.f32 %v2286, %v4345
        %v4858 = vadd.f32 %v2287, %v4346
        %v4859 = vadd.f32 %v2288, %v4347
        %v4860 = vadd.f32 %v2289, %v4348
        %v4861 = vadd.f32 %v2290, %v4349
        %v4862 = vadd.f32 %v2291, %v4350
        %v4863 = vadd.f32 %v2292, %v4351
        %v4864 = vadd.f32 %v2293, %v4352
        %v4865 = vadd.f32 %v2294, %v4353
        %v4866 = vadd.f32 %v2295, %v4354
        %v4867 = vadd.f32 %v2296, %v4355
        %v4868 = vadd.f32 %v2297, %v4356
        %v4869 = vadd.f32 %v2298, %v4357
        %v4870 = vadd.f32 %v2299, %v4358
        %v4871 = vadd.f32 %v2300, %v4359
        %v4872 = vadd.f32 %v2301, %v4360
        %v4873 = vadd.f32 %v2302, %v4361
        %v4874 = vadd.f32 %v2303, %v4362
        %v4875 = vadd.f32 %v2304, %v4363
        %v4876 = vadd.f32 %v2305, %v4364
        %v4877 = vadd.f32 %v2306, %v4365
        %v4878 = vadd.f32 %v2307, %v4366
        %v4879 = vadd.f32 %v2308, %v4367
        %v4880 = vadd.f32 %v2309, %v4368
        %v4881 = vadd.f32 %v2310, %v4369
        %v4882 = vadd.f32 %v2311, %v4370
        %v4883 = vadd.f32 %v2312, %v4371
        %v4884 = vadd.f32 %v2313, %v4372
        %v4885 = vadd.f32 %v2314, %v4373
        %v4886 = vadd.f32 %v2315, %v4374
        %v4887 = vadd.f32 %v2316, %v4375
        %v4888 = vld [vmem:[%s3] sm:$0xff]
        %v4889 = vld [vmem:[%s3 + $0x8] sm:$0xff]
        %v4890 = vld [vmem:[%s3 + $0x10] sm:$0xff]
        %v4891 = vld [vmem:[%s3 + $0x18] sm:$0xff]
        %v4892 = vld [vmem:[%s3 + $0x20] sm:$0xff]
        %v4893 = vld [vmem:[%s3 + $0x28] sm:$0xff]
        %v4894 = vld [vmem:[%s3 + $0x30] sm:$0xff]
        %v4895 = vld [vmem:[%s3 + $0x38] sm:$0xff]
        %v4896 = vld [vmem:[%s3 + $0x40] sm:$0xff]
        %v4897 = vld [vmem:[%s3 + $0x48] sm:$0xff]
        %v4898 = vld [vmem:[%s3 + $0x50] sm:$0xff]
        %v4899 = vld [vmem:[%s3 + $0x58] sm:$0xff]
        %v4900 = vld [vmem:[%s3 + $0x60] sm:$0xff]
        %v4901 = vld [vmem:[%s3 + $0x68] sm:$0xff]
        %v4902 = vld [vmem:[%s3 + $0x70] sm:$0xff]
        %v4903 = vld [vmem:[%s3 + $0x78] sm:$0xff]
        %v4904 = vld [vmem:[%s3 + $0x80] sm:$0xff]
        %v4905 = vld [vmem:[%s3 + $0x88] sm:$0xff]
        %v4906 = vld [vmem:[%s3 + $0x90] sm:$0xff]
        %v4907 = vld [vmem:[%s3 + $0x98] sm:$0xff]
        %v4908 = vld [vmem:[%s3 + $0xa0] sm:$0xff]
        %v4909 = vld [vmem:[%s3 + $0xa8] sm:$0xff]
        %v4910 = vld [vmem:[%s3 + $0xb0] sm:$0xff]
        %v4911 = vld [vmem:[%s3 + $0xb8] sm:$0xff]
        %v4912 = vld [vmem:[%s3 + $0xc0] sm:$0xff]
        %v4913 = vld [vmem:[%s3 + $0xc8] sm:$0xff]
        %v4914 = vld [vmem:[%s3 + $0xd0] sm:$0xff]
        %v4915 = vld [vmem:[%s3 + $0xd8] sm:$0xff]
        %v4916 = vld [vmem:[%s3 + $0xe0] sm:$0xff]
        %v4917 = vld [vmem:[%s3 + $0xe8] sm:$0xff]
        %v4918 = vld [vmem:[%s3 + $0xf0] sm:$0xff]
        %v4919 = vld [vmem:[%s3 + $0xf8] sm:$0xff]
        %v4920 = vld [vmem:[%s3 + $0x100] sm:$0xff]
        %v4921 = vld [vmem:[%s3 + $0x108] sm:$0xff]
        %v4922 = vld [vmem:[%s3 + $0x110] sm:$0xff]
        %v4923 = vld [vmem:[%s3 + $0x118] sm:$0xff]
        %v4924 = vld [vmem:[%s3 + $0x120] sm:$0xff]
        %v4925 = vld [vmem:[%s3 + $0x128] sm:$0xff]
        %v4926 = vld [vmem:[%s3 + $0x130] sm:$0xff]
        %v4927 = vld [vmem:[%s3 + $0x138] sm:$0xff]
        %v4928 = vld [vmem:[%s3 + $0x140] sm:$0xff]
        %v4929 = vld [vmem:[%s3 + $0x148] sm:$0xff]
        %v4930 = vld [vmem:[%s3 + $0x150] sm:$0xff]
        %v4931 = vld [vmem:[%s3 + $0x158] sm:$0xff]
        %v4932 = vld [vmem:[%s3 + $0x160] sm:$0xff]
        %v4933 = vld [vmem:[%s3 + $0x168] sm:$0xff]
        %v4934 = vld [vmem:[%s3 + $0x170] sm:$0xff]
        %v4935 = vld [vmem:[%s3 + $0x178] sm:$0xff]
        %v4936 = vld [vmem:[%s3 + $0x180] sm:$0xff]
        %v4937 = vld [vmem:[%s3 + $0x188] sm:$0xff]
        %v4938 = vld [vmem:[%s3 + $0x190] sm:$0xff]
        %v4939 = vld [vmem:[%s3 + $0x198] sm:$0xff]
        %v4940 = vld [vmem:[%s3 + $0x1a0] sm:$0xff]
        %v4941 = vld [vmem:[%s3 + $0x1a8] sm:$0xff]
        %v4942 = vld [vmem:[%s3 + $0x1b0] sm:$0xff]
        %v4943 = vld [vmem:[%s3 + $0x1b8] sm:$0xff]
        %v4944 = vld [vmem:[%s3 + $0x1c0] sm:$0xff]
        %v4945 = vld [vmem:[%s3 + $0x1c8] sm:$0xff]
        %v4946 = vld [vmem:[%s3 + $0x1d0] sm:$0xff]
        %v4947 = vld [vmem:[%s3 + $0x1d8] sm:$0xff]
        %v4948 = vld [vmem:[%s3 + $0x1e0] sm:$0xff]
        %v4949 = vld [vmem:[%s3 + $0x1e8] sm:$0xff]
        %v4950 = vld [vmem:[%s3 + $0x1f0] sm:$0xff]
        %v4951 = vld [vmem:[%s3 + $0x1f8] sm:$0xff]
        %v4952 = vld [vmem:[%s3 + $0x200] sm:$0xff]
        %v4953 = vld [vmem:[%s3 + $0x208] sm:$0xff]
        %v4954 = vld [vmem:[%s3 + $0x210] sm:$0xff]
        %v4955 = vld [vmem:[%s3 + $0x218] sm:$0xff]
        %v4956 = vld [vmem:[%s3 + $0x220] sm:$0xff]
        %v4957 = vld [vmem:[%s3 + $0x228] sm:$0xff]
        %v4958 = vld [vmem:[%s3 + $0x230] sm:$0xff]
        %v4959 = vld [vmem:[%s3 + $0x238] sm:$0xff]
        %v4960 = vld [vmem:[%s3 + $0x240] sm:$0xff]
        %v4961 = vld [vmem:[%s3 + $0x248] sm:$0xff]
        %v4962 = vld [vmem:[%s3 + $0x250] sm:$0xff]
        %v4963 = vld [vmem:[%s3 + $0x258] sm:$0xff]
        %v4964 = vld [vmem:[%s3 + $0x260] sm:$0xff]
        %v4965 = vld [vmem:[%s3 + $0x268] sm:$0xff]
        %v4966 = vld [vmem:[%s3 + $0x270] sm:$0xff]
        %v4967 = vld [vmem:[%s3 + $0x278] sm:$0xff]
        %v4968 = vld [vmem:[%s3 + $0x280] sm:$0xff]
        %v4969 = vld [vmem:[%s3 + $0x288] sm:$0xff]
        %v4970 = vld [vmem:[%s3 + $0x290] sm:$0xff]
        %v4971 = vld [vmem:[%s3 + $0x298] sm:$0xff]
        %v4972 = vld [vmem:[%s3 + $0x2a0] sm:$0xff]
        %v4973 = vld [vmem:[%s3 + $0x2a8] sm:$0xff]
        %v4974 = vld [vmem:[%s3 + $0x2b0] sm:$0xff]
        %v4975 = vld [vmem:[%s3 + $0x2b8] sm:$0xff]
        %v4976 = vld [vmem:[%s3 + $0x2c0] sm:$0xff]
        %v4977 = vld [vmem:[%s3 + $0x2c8] sm:$0xff]
        %v4978 = vld [vmem:[%s3 + $0x2d0] sm:$0xff]
        %v4979 = vld [vmem:[%s3 + $0x2d8] sm:$0xff]
        %v4980 = vld [vmem:[%s3 + $0x2e0] sm:$0xff]
        %v4981 = vld [vmem:[%s3 + $0x2e8] sm:$0xff]
        %v4982 = vld [vmem:[%s3 + $0x2f0] sm:$0xff]
        %v4983 = vld [vmem:[%s3 + $0x2f8] sm:$0xff]
        %v4984 = vld [vmem:[%s3 + $0x300] sm:$0xff]
        %v4985 = vld [vmem:[%s3 + $0x308] sm:$0xff]
        %v4986 = vld [vmem:[%s3 + $0x310] sm:$0xff]
        %v4987 = vld [vmem:[%s3 + $0x318] sm:$0xff]
        %v4988 = vld [vmem:[%s3 + $0x320] sm:$0xff]
        %v4989 = vld [vmem:[%s3 + $0x328] sm:$0xff]
        %v4990 = vld [vmem:[%s3 + $0x330] sm:$0xff]
        %v4991 = vld [vmem:[%s3 + $0x338] sm:$0xff]
        %v4992 = vld [vmem:[%s3 + $0x340] sm:$0xff]
        %v4993 = vld [vmem:[%s3 + $0x348] sm:$0xff]
        %v4994 = vld [vmem:[%s3 + $0x350] sm:$0xff]
        %v4995 = vld [vmem:[%s3 + $0x358] sm:$0xff]
        %v4996 = vld [vmem:[%s3 + $0x360] sm:$0xff]
        %v4997 = vld [vmem:[%s3 + $0x368] sm:$0xff]
        %v4998 = vld [vmem:[%s3 + $0x370] sm:$0xff]
        %v4999 = vld [vmem:[%s3 + $0x378] sm:$0xff]
        %v5000 = vld [vmem:[%s3 + $0x380] sm:$0xff]
        %v5001 = vld [vmem:[%s3 + $0x388] sm:$0xff]
        %v5002 = vld [vmem:[%s3 + $0x390] sm:$0xff]
        %v5003 = vld [vmem:[%s3 + $0x398] sm:$0xff]
        %v5004 = vld [vmem:[%s3 + $0x3a0] sm:$0xff]
        %v5005 = vld [vmem:[%s3 + $0x3a8] sm:$0xff]
        %v5006 = vld [vmem:[%s3 + $0x3b0] sm:$0xff]
        %v5007 = vld [vmem:[%s3 + $0x3b8] sm:$0xff]
        %v5008 = vld [vmem:[%s3 + $0x3c0] sm:$0xff]
        %v5009 = vld [vmem:[%s3 + $0x3c8] sm:$0xff]
        %v5010 = vld [vmem:[%s3 + $0x3d0] sm:$0xff]
        %v5011 = vld [vmem:[%s3 + $0x3d8] sm:$0xff]
        %v5012 = vld [vmem:[%s3 + $0x3e0] sm:$0xff]
        %v5013 = vld [vmem:[%s3 + $0x3e8] sm:$0xff]
        %v5014 = vld [vmem:[%s3 + $0x3f0] sm:$0xff]
        %v5015 = vld [vmem:[%s3 + $0x3f8] sm:$0xff]
        %v5016 = vld [vmem:[%s3 + $0x400] sm:$0xff]
        %v5017 = vld [vmem:[%s3 + $0x408] sm:$0xff]
        %v5018 = vld [vmem:[%s3 + $0x410] sm:$0xff]
        %v5019 = vld [vmem:[%s3 + $0x418] sm:$0xff]
        %v5020 = vld [vmem:[%s3 + $0x420] sm:$0xff]
        %v5021 = vld [vmem:[%s3 + $0x428] sm:$0xff]
        %v5022 = vld [vmem:[%s3 + $0x430] sm:$0xff]
        %v5023 = vld [vmem:[%s3 + $0x438] sm:$0xff]
        %v5024 = vld [vmem:[%s3 + $0x440] sm:$0xff]
        %v5025 = vld [vmem:[%s3 + $0x448] sm:$0xff]
        %v5026 = vld [vmem:[%s3 + $0x450] sm:$0xff]
        %v5027 = vld [vmem:[%s3 + $0x458] sm:$0xff]
        %v5028 = vld [vmem:[%s3 + $0x460] sm:$0xff]
        %v5029 = vld [vmem:[%s3 + $0x468] sm:$0xff]
        %v5030 = vld [vmem:[%s3 + $0x470] sm:$0xff]
        %v5031 = vld [vmem:[%s3 + $0x478] sm:$0xff]
        %v5032 = vld [vmem:[%s3 + $0x480] sm:$0xff]
        %v5033 = vld [vmem:[%s3 + $0x488] sm:$0xff]
        %v5034 = vld [vmem:[%s3 + $0x490] sm:$0xff]
        %v5035 = vld [vmem:[%s3 + $0x498] sm:$0xff]
        %v5036 = vld [vmem:[%s3 + $0x4a0] sm:$0xff]
        %v5037 = vld [vmem:[%s3 + $0x4a8] sm:$0xff]
        %v5038 = vld [vmem:[%s3 + $0x4b0] sm:$0xff]
        %v5039 = vld [vmem:[%s3 + $0x4b8] sm:$0xff]
        %v5040 = vld [vmem:[%s3 + $0x4c0] sm:$0xff]
        %v5041 = vld [vmem:[%s3 + $0x4c8] sm:$0xff]
        %v5042 = vld [vmem:[%s3 + $0x4d0] sm:$0xff]
        %v5043 = vld [vmem:[%s3 + $0x4d8] sm:$0xff]
        %v5044 = vld [vmem:[%s3 + $0x4e0] sm:$0xff]
        %v5045 = vld [vmem:[%s3 + $0x4e8] sm:$0xff]
        %v5046 = vld [vmem:[%s3 + $0x4f0] sm:$0xff]
        %v5047 = vld [vmem:[%s3 + $0x4f8] sm:$0xff]
        %v5048 = vld [vmem:[%s3 + $0x500] sm:$0xff]
        %v5049 = vld [vmem:[%s3 + $0x508] sm:$0xff]
        %v5050 = vld [vmem:[%s3 + $0x510] sm:$0xff]
        %v5051 = vld [vmem:[%s3 + $0x518] sm:$0xff]
        %v5052 = vld [vmem:[%s3 + $0x520] sm:$0xff]
        %v5053 = vld [vmem:[%s3 + $0x528] sm:$0xff]
        %v5054 = vld [vmem:[%s3 + $0x530] sm:$0xff]
        %v5055 = vld [vmem:[%s3 + $0x538] sm:$0xff]
        %v5056 = vld [vmem:[%s3 + $0x540] sm:$0xff]
        %v5057 = vld [vmem:[%s3 + $0x548] sm:$0xff]
        %v5058 = vld [vmem:[%s3 + $0x550] sm:$0xff]
        %v5059 = vld [vmem:[%s3 + $0x558] sm:$0xff]
        %v5060 = vld [vmem:[%s3 + $0x560] sm:$0xff]
        %v5061 = vld [vmem:[%s3 + $0x568] sm:$0xff]
        %v5062 = vld [vmem:[%s3 + $0x570] sm:$0xff]
        %v5063 = vld [vmem:[%s3 + $0x578] sm:$0xff]
        %v5064 = vld [vmem:[%s3 + $0x580] sm:$0xff]
        %v5065 = vld [vmem:[%s3 + $0x588] sm:$0xff]
        %v5066 = vld [vmem:[%s3 + $0x590] sm:$0xff]
        %v5067 = vld [vmem:[%s3 + $0x598] sm:$0xff]
        %v5068 = vld [vmem:[%s3 + $0x5a0] sm:$0xff]
        %v5069 = vld [vmem:[%s3 + $0x5a8] sm:$0xff]
        %v5070 = vld [vmem:[%s3 + $0x5b0] sm:$0xff]
        %v5071 = vld [vmem:[%s3 + $0x5b8] sm:$0xff]
        %v5072 = vld [vmem:[%s3 + $0x5c0] sm:$0xff]
        %v5073 = vld [vmem:[%s3 + $0x5c8] sm:$0xff]
        %v5074 = vld [vmem:[%s3 + $0x5d0] sm:$0xff]
        %v5075 = vld [vmem:[%s3 + $0x5d8] sm:$0xff]
        %v5076 = vld [vmem:[%s3 + $0x5e0] sm:$0xff]
        %v5077 = vld [vmem:[%s3 + $0x5e8] sm:$0xff]
        %v5078 = vld [vmem:[%s3 + $0x5f0] sm:$0xff]
        %v5079 = vld [vmem:[%s3 + $0x5f8] sm:$0xff]
        %v5080 = vld [vmem:[%s3 + $0x600] sm:$0xff]
        %v5081 = vld [vmem:[%s3 + $0x608] sm:$0xff]
        %v5082 = vld [vmem:[%s3 + $0x610] sm:$0xff]
        %v5083 = vld [vmem:[%s3 + $0x618] sm:$0xff]
        %v5084 = vld [vmem:[%s3 + $0x620] sm:$0xff]
        %v5085 = vld [vmem:[%s3 + $0x628] sm:$0xff]
        %v5086 = vld [vmem:[%s3 + $0x630] sm:$0xff]
        %v5087 = vld [vmem:[%s3 + $0x638] sm:$0xff]
        %v5088 = vld [vmem:[%s3 + $0x640] sm:$0xff]
        %v5089 = vld [vmem:[%s3 + $0x648] sm:$0xff]
        %v5090 = vld [vmem:[%s3 + $0x650] sm:$0xff]
        %v5091 = vld [vmem:[%s3 + $0x658] sm:$0xff]
        %v5092 = vld [vmem:[%s3 + $0x660] sm:$0xff]
        %v5093 = vld [vmem:[%s3 + $0x668] sm:$0xff]
        %v5094 = vld [vmem:[%s3 + $0x670] sm:$0xff]
        %v5095 = vld [vmem:[%s3 + $0x678] sm:$0xff]
        %v5096 = vld [vmem:[%s3 + $0x680] sm:$0xff]
        %v5097 = vld [vmem:[%s3 + $0x688] sm:$0xff]
        %v5098 = vld [vmem:[%s3 + $0x690] sm:$0xff]
        %v5099 = vld [vmem:[%s3 + $0x698] sm:$0xff]
        %v5100 = vld [vmem:[%s3 + $0x6a0] sm:$0xff]
        %v5101 = vld [vmem:[%s3 + $0x6a8] sm:$0xff]
        %v5102 = vld [vmem:[%s3 + $0x6b0] sm:$0xff]
        %v5103 = vld [vmem:[%s3 + $0x6b8] sm:$0xff]
        %v5104 = vld [vmem:[%s3 + $0x6c0] sm:$0xff]
        %v5105 = vld [vmem:[%s3 + $0x6c8] sm:$0xff]
        %v5106 = vld [vmem:[%s3 + $0x6d0] sm:$0xff]
        %v5107 = vld [vmem:[%s3 + $0x6d8] sm:$0xff]
        %v5108 = vld [vmem:[%s3 + $0x6e0] sm:$0xff]
        %v5109 = vld [vmem:[%s3 + $0x6e8] sm:$0xff]
        %v5110 = vld [vmem:[%s3 + $0x6f0] sm:$0xff]
        %v5111 = vld [vmem:[%s3 + $0x6f8] sm:$0xff]
        %v5112 = vld [vmem:[%s3 + $0x700] sm:$0xff]
        %v5113 = vld [vmem:[%s3 + $0x708] sm:$0xff]
        %v5114 = vld [vmem:[%s3 + $0x710] sm:$0xff]
        %v5115 = vld [vmem:[%s3 + $0x718] sm:$0xff]
        %v5116 = vld [vmem:[%s3 + $0x720] sm:$0xff]
        %v5117 = vld [vmem:[%s3 + $0x728] sm:$0xff]
        %v5118 = vld [vmem:[%s3 + $0x730] sm:$0xff]
        %v5119 = vld [vmem:[%s3 + $0x738] sm:$0xff]
        %v5120 = vld [vmem:[%s3 + $0x740] sm:$0xff]
        %v5121 = vld [vmem:[%s3 + $0x748] sm:$0xff]
        %v5122 = vld [vmem:[%s3 + $0x750] sm:$0xff]
        %v5123 = vld [vmem:[%s3 + $0x758] sm:$0xff]
        %v5124 = vld [vmem:[%s3 + $0x760] sm:$0xff]
        %v5125 = vld [vmem:[%s3 + $0x768] sm:$0xff]
        %v5126 = vld [vmem:[%s3 + $0x770] sm:$0xff]
        %v5127 = vld [vmem:[%s3 + $0x778] sm:$0xff]
        %v5128 = vld [vmem:[%s3 + $0x780] sm:$0xff]
        %v5129 = vld [vmem:[%s3 + $0x788] sm:$0xff]
        %v5130 = vld [vmem:[%s3 + $0x790] sm:$0xff]
        %v5131 = vld [vmem:[%s3 + $0x798] sm:$0xff]
        %v5132 = vld [vmem:[%s3 + $0x7a0] sm:$0xff]
        %v5133 = vld [vmem:[%s3 + $0x7a8] sm:$0xff]
        %v5134 = vld [vmem:[%s3 + $0x7b0] sm:$0xff]
        %v5135 = vld [vmem:[%s3 + $0x7b8] sm:$0xff]
        %v5136 = vld [vmem:[%s3 + $0x7c0] sm:$0xff]
        %v5137 = vld [vmem:[%s3 + $0x7c8] sm:$0xff]
        %v5138 = vld [vmem:[%s3 + $0x7d0] sm:$0xff]
        %v5139 = vld [vmem:[%s3 + $0x7d8] sm:$0xff]
        %v5140 = vld [vmem:[%s3 + $0x7e0] sm:$0xff]
        %v5141 = vld [vmem:[%s3 + $0x7e8] sm:$0xff]
        %v5142 = vld [vmem:[%s3 + $0x7f0] sm:$0xff]
        %v5143 = vld [vmem:[%s3 + $0x7f8] sm:$0xff]
        %5145 = vset.pattern.permute.xlu0 0
        %5146 = vperm.xlu0 %5145, %v4888
        %v5147 = vpop.permute.xlu0 %5146
        %5150 = vset.pattern.permute.xlu0 0
        %5151 = vperm.xlu0 %5150, %v4889
        %v5152 = vpop.permute.xlu0 %5151
        %5155 = vset.pattern.permute.xlu0 0
        %5156 = vperm.xlu0 %5155, %v4890
        %v5157 = vpop.permute.xlu0 %5156
        %5160 = vset.pattern.permute.xlu0 0
        %5161 = vperm.xlu0 %5160, %v4891
        %v5162 = vpop.permute.xlu0 %5161
        %5165 = vset.pattern.permute.xlu0 0
        %5166 = vperm.xlu0 %5165, %v4892
        %v5167 = vpop.permute.xlu0 %5166
        %5170 = vset.pattern.permute.xlu0 0
        %5171 = vperm.xlu0 %5170, %v4893
        %v5172 = vpop.permute.xlu0 %5171
        %5175 = vset.pattern.permute.xlu0 0
        %5176 = vperm.xlu0 %5175, %v4894
        %v5177 = vpop.permute.xlu0 %5176
        %5180 = vset.pattern.permute.xlu0 0
        %5181 = vperm.xlu0 %5180, %v4895
        %v5182 = vpop.permute.xlu0 %5181
        %5185 = vset.pattern.permute.xlu0 0
        %5186 = vperm.xlu0 %5185, %v4896
        %v5187 = vpop.permute.xlu0 %5186
        %5190 = vset.pattern.permute.xlu0 0
        %5191 = vperm.xlu0 %5190, %v4897
        %v5192 = vpop.permute.xlu0 %5191
        %5195 = vset.pattern.permute.xlu0 0
        %5196 = vperm.xlu0 %5195, %v4898
        %v5197 = vpop.permute.xlu0 %5196
        %5200 = vset.pattern.permute.xlu0 0
        %5201 = vperm.xlu0 %5200, %v4899
        %v5202 = vpop.permute.xlu0 %5201
        %5205 = vset.pattern.permute.xlu0 0
        %5206 = vperm.xlu0 %5205, %v4900
        %v5207 = vpop.permute.xlu0 %5206
        %5210 = vset.pattern.permute.xlu0 0
        %5211 = vperm.xlu0 %5210, %v4901
        %v5212 = vpop.permute.xlu0 %5211
        %5215 = vset.pattern.permute.xlu0 0
        %5216 = vperm.xlu0 %5215, %v4902
        %v5217 = vpop.permute.xlu0 %5216
        %5220 = vset.pattern.permute.xlu0 0
        %5221 = vperm.xlu0 %5220, %v4903
        %v5222 = vpop.permute.xlu0 %5221
        %5225 = vset.pattern.permute.xlu0 0
        %5226 = vperm.xlu0 %5225, %v4904
        %v5227 = vpop.permute.xlu0 %5226
        %5230 = vset.pattern.permute.xlu0 0
        %5231 = vperm.xlu0 %5230, %v4905
        %v5232 = vpop.permute.xlu0 %5231
        %5235 = vset.pattern.permute.xlu0 0
        %5236 = vperm.xlu0 %5235, %v4906
        %v5237 = vpop.permute.xlu0 %5236
        %5240 = vset.pattern.permute.xlu0 0
        %5241 = vperm.xlu0 %5240, %v4907
        %v5242 = vpop.permute.xlu0 %5241
        %5245 = vset.pattern.permute.xlu0 0
        %5246 = vperm.xlu0 %5245, %v4908
        %v5247 = vpop.permute.xlu0 %5246
        %5250 = vset.pattern.permute.xlu0 0
        %5251 = vperm.xlu0 %5250, %v4909
        %v5252 = vpop.permute.xlu0 %5251
        %5255 = vset.pattern.permute.xlu0 0
        %5256 = vperm.xlu0 %5255, %v4910
        %v5257 = vpop.permute.xlu0 %5256
        %5260 = vset.pattern.permute.xlu0 0
        %5261 = vperm.xlu0 %5260, %v4911
        %v5262 = vpop.permute.xlu0 %5261
        %5265 = vset.pattern.permute.xlu0 0
        %5266 = vperm.xlu0 %5265, %v4912
        %v5267 = vpop.permute.xlu0 %5266
        %5270 = vset.pattern.permute.xlu0 0
        %5271 = vperm.xlu0 %5270, %v4913
        %v5272 = vpop.permute.xlu0 %5271
        %5275 = vset.pattern.permute.xlu0 0
        %5276 = vperm.xlu0 %5275, %v4914
        %v5277 = vpop.permute.xlu0 %5276
        %5280 = vset.pattern.permute.xlu0 0
        %5281 = vperm.xlu0 %5280, %v4915
        %v5282 = vpop.permute.xlu0 %5281
        %5285 = vset.pattern.permute.xlu0 0
        %5286 = vperm.xlu0 %5285, %v4916
        %v5287 = vpop.permute.xlu0 %5286
        %5290 = vset.pattern.permute.xlu0 0
        %5291 = vperm.xlu0 %5290, %v4917
        %v5292 = vpop.permute.xlu0 %5291
        %5295 = vset.pattern.permute.xlu0 0
        %5296 = vperm.xlu0 %5295, %v4918
        %v5297 = vpop.permute.xlu0 %5296
        %5300 = vset.pattern.permute.xlu0 0
        %5301 = vperm.xlu0 %5300, %v4919
        %v5302 = vpop.permute.xlu0 %5301
        %5305 = vset.pattern.permute.xlu0 0
        %5306 = vperm.xlu0 %5305, %v4920
        %v5307 = vpop.permute.xlu0 %5306
        %5310 = vset.pattern.permute.xlu0 0
        %5311 = vperm.xlu0 %5310, %v4921
        %v5312 = vpop.permute.xlu0 %5311
        %5315 = vset.pattern.permute.xlu0 0
        %5316 = vperm.xlu0 %5315, %v4922
        %v5317 = vpop.permute.xlu0 %5316
        %5320 = vset.pattern.permute.xlu0 0
        %5321 = vperm.xlu0 %5320, %v4923
        %v5322 = vpop.permute.xlu0 %5321
        %5325 = vset.pattern.permute.xlu0 0
        %5326 = vperm.xlu0 %5325, %v4924
        %v5327 = vpop.permute.xlu0 %5326
        %5330 = vset.pattern.permute.xlu0 0
        %5331 = vperm.xlu0 %5330, %v4925
        %v5332 = vpop.permute.xlu0 %5331
        %5335 = vset.pattern.permute.xlu0 0
        %5336 = vperm.xlu0 %5335, %v4926
        %v5337 = vpop.permute.xlu0 %5336
        %5340 = vset.pattern.permute.xlu0 0
        %5341 = vperm.xlu0 %5340, %v4927
        %v5342 = vpop.permute.xlu0 %5341
        %5345 = vset.pattern.permute.xlu0 0
        %5346 = vperm.xlu0 %5345, %v4928
        %v5347 = vpop.permute.xlu0 %5346
        %5350 = vset.pattern.permute.xlu0 0
        %5351 = vperm.xlu0 %5350, %v4929
        %v5352 = vpop.permute.xlu0 %5351
        %5355 = vset.pattern.permute.xlu0 0
        %5356 = vperm.xlu0 %5355, %v4930
        %v5357 = vpop.permute.xlu0 %5356
        %5360 = vset.pattern.permute.xlu0 0
        %5361 = vperm.xlu0 %5360, %v4931
        %v5362 = vpop.permute.xlu0 %5361
        %5365 = vset.pattern.permute.xlu0 0
        %5366 = vperm.xlu0 %5365, %v4932
        %v5367 = vpop.permute.xlu0 %5366
        %5370 = vset.pattern.permute.xlu0 0
        %5371 = vperm.xlu0 %5370, %v4933
        %v5372 = vpop.permute.xlu0 %5371
        %5375 = vset.pattern.permute.xlu0 0
        %5376 = vperm.xlu0 %5375, %v4934
        %v5377 = vpop.permute.xlu0 %5376
        %5380 = vset.pattern.permute.xlu0 0
        %5381 = vperm.xlu0 %5380, %v4935
        %v5382 = vpop.permute.xlu0 %5381
        %5385 = vset.pattern.permute.xlu0 0
        %5386 = vperm.xlu0 %5385, %v4936
        %v5387 = vpop.permute.xlu0 %5386
        %5390 = vset.pattern.permute.xlu0 0
        %5391 = vperm.xlu0 %5390, %v4937
        %v5392 = vpop.permute.xlu0 %5391
        %5395 = vset.pattern.permute.xlu0 0
        %5396 = vperm.xlu0 %5395, %v4938
        %v5397 = vpop.permute.xlu0 %5396
        %5400 = vset.pattern.permute.xlu0 0
        %5401 = vperm.xlu0 %5400, %v4939
        %v5402 = vpop.permute.xlu0 %5401
        %5405 = vset.pattern.permute.xlu0 0
        %5406 = vperm.xlu0 %5405, %v4940
        %v5407 = vpop.permute.xlu0 %5406
        %5410 = vset.pattern.permute.xlu0 0
        %5411 = vperm.xlu0 %5410, %v4941
        %v5412 = vpop.permute.xlu0 %5411
        %5415 = vset.pattern.permute.xlu0 0
        %5416 = vperm.xlu0 %5415, %v4942
        %v5417 = vpop.permute.xlu0 %5416
        %5420 = vset.pattern.permute.xlu0 0
        %5421 = vperm.xlu0 %5420, %v4943
        %v5422 = vpop.permute.xlu0 %5421
        %5425 = vset.pattern.permute.xlu0 0
        %5426 = vperm.xlu0 %5425, %v4944
        %v5427 = vpop.permute.xlu0 %5426
        %5430 = vset.pattern.permute.xlu0 0
        %5431 = vperm.xlu0 %5430, %v4945
        %v5432 = vpop.permute.xlu0 %5431
        %5435 = vset.pattern.permute.xlu0 0
        %5436 = vperm.xlu0 %5435, %v4946
        %v5437 = vpop.permute.xlu0 %5436
        %5440 = vset.pattern.permute.xlu0 0
        %5441 = vperm.xlu0 %5440, %v4947
        %v5442 = vpop.permute.xlu0 %5441
        %5445 = vset.pattern.permute.xlu0 0
        %5446 = vperm.xlu0 %5445, %v4948
        %v5447 = vpop.permute.xlu0 %5446
        %5450 = vset.pattern.permute.xlu0 0
        %5451 = vperm.xlu0 %5450, %v4949
        %v5452 = vpop.permute.xlu0 %5451
        %5455 = vset.pattern.permute.xlu0 0
        %5456 = vperm.xlu0 %5455, %v4950
        %v5457 = vpop.permute.xlu0 %5456
        %5460 = vset.pattern.permute.xlu0 0
        %5461 = vperm.xlu0 %5460, %v4951
        %v5462 = vpop.permute.xlu0 %5461
        %5465 = vset.pattern.permute.xlu0 0
        %5466 = vperm.xlu0 %5465, %v4952
        %v5467 = vpop.permute.xlu0 %5466
        %5470 = vset.pattern.permute.xlu0 0
        %5471 = vperm.xlu0 %5470, %v4953
        %v5472 = vpop.permute.xlu0 %5471
        %5475 = vset.pattern.permute.xlu0 0
        %5476 = vperm.xlu0 %5475, %v4954
        %v5477 = vpop.permute.xlu0 %5476
        %5480 = vset.pattern.permute.xlu0 0
        %5481 = vperm.xlu0 %5480, %v4955
        %v5482 = vpop.permute.xlu0 %5481
        %5485 = vset.pattern.permute.xlu0 0
        %5486 = vperm.xlu0 %5485, %v4956
        %v5487 = vpop.permute.xlu0 %5486
        %5490 = vset.pattern.permute.xlu0 0
        %5491 = vperm.xlu0 %5490, %v4957
        %v5492 = vpop.permute.xlu0 %5491
        %5495 = vset.pattern.permute.xlu0 0
        %5496 = vperm.xlu0 %5495, %v4958
        %v5497 = vpop.permute.xlu0 %5496
        %5500 = vset.pattern.permute.xlu0 0
        %5501 = vperm.xlu0 %5500, %v4959
        %v5502 = vpop.permute.xlu0 %5501
        %5505 = vset.pattern.permute.xlu0 0
        %5506 = vperm.xlu0 %5505, %v4960
        %v5507 = vpop.permute.xlu0 %5506
        %5510 = vset.pattern.permute.xlu0 0
        %5511 = vperm.xlu0 %5510, %v4961
        %v5512 = vpop.permute.xlu0 %5511
        %5515 = vset.pattern.permute.xlu0 0
        %5516 = vperm.xlu0 %5515, %v4962
        %v5517 = vpop.permute.xlu0 %5516
        %5520 = vset.pattern.permute.xlu0 0
        %5521 = vperm.xlu0 %5520, %v4963
        %v5522 = vpop.permute.xlu0 %5521
        %5525 = vset.pattern.permute.xlu0 0
        %5526 = vperm.xlu0 %5525, %v4964
        %v5527 = vpop.permute.xlu0 %5526
        %5530 = vset.pattern.permute.xlu0 0
        %5531 = vperm.xlu0 %5530, %v4965
        %v5532 = vpop.permute.xlu0 %5531
        %5535 = vset.pattern.permute.xlu0 0
        %5536 = vperm.xlu0 %5535, %v4966
        %v5537 = vpop.permute.xlu0 %5536
        %5540 = vset.pattern.permute.xlu0 0
        %5541 = vperm.xlu0 %5540, %v4967
        %v5542 = vpop.permute.xlu0 %5541
        %5545 = vset.pattern.permute.xlu0 0
        %5546 = vperm.xlu0 %5545, %v4968
        %v5547 = vpop.permute.xlu0 %5546
        %5550 = vset.pattern.permute.xlu0 0
        %5551 = vperm.xlu0 %5550, %v4969
        %v5552 = vpop.permute.xlu0 %5551
        %5555 = vset.pattern.permute.xlu0 0
        %5556 = vperm.xlu0 %5555, %v4970
        %v5557 = vpop.permute.xlu0 %5556
        %5560 = vset.pattern.permute.xlu0 0
        %5561 = vperm.xlu0 %5560, %v4971
        %v5562 = vpop.permute.xlu0 %5561
        %5565 = vset.pattern.permute.xlu0 0
        %5566 = vperm.xlu0 %5565, %v4972
        %v5567 = vpop.permute.xlu0 %5566
        %5570 = vset.pattern.permute.xlu0 0
        %5571 = vperm.xlu0 %5570, %v4973
        %v5572 = vpop.permute.xlu0 %5571
        %5575 = vset.pattern.permute.xlu0 0
        %5576 = vperm.xlu0 %5575, %v4974
        %v5577 = vpop.permute.xlu0 %5576
        %5580 = vset.pattern.permute.xlu0 0
        %5581 = vperm.xlu0 %5580, %v4975
        %v5582 = vpop.permute.xlu0 %5581
        %5585 = vset.pattern.permute.xlu0 0
        %5586 = vperm.xlu0 %5585, %v4976
        %v5587 = vpop.permute.xlu0 %5586
        %5590 = vset.pattern.permute.xlu0 0
        %5591 = vperm.xlu0 %5590, %v4977
        %v5592 = vpop.permute.xlu0 %5591
        %5595 = vset.pattern.permute.xlu0 0
        %5596 = vperm.xlu0 %5595, %v4978
        %v5597 = vpop.permute.xlu0 %5596
        %5600 = vset.pattern.permute.xlu0 0
        %5601 = vperm.xlu0 %5600, %v4979
        %v5602 = vpop.permute.xlu0 %5601
        %5605 = vset.pattern.permute.xlu0 0
        %5606 = vperm.xlu0 %5605, %v4980
        %v5607 = vpop.permute.xlu0 %5606
        %5610 = vset.pattern.permute.xlu0 0
        %5611 = vperm.xlu0 %5610, %v4981
        %v5612 = vpop.permute.xlu0 %5611
        %5615 = vset.pattern.permute.xlu0 0
        %5616 = vperm.xlu0 %5615, %v4982
        %v5617 = vpop.permute.xlu0 %5616
        %5620 = vset.pattern.permute.xlu0 0
        %5621 = vperm.xlu0 %5620, %v4983
        %v5622 = vpop.permute.xlu0 %5621
        %5625 = vset.pattern.permute.xlu0 0
        %5626 = vperm.xlu0 %5625, %v4984
        %v5627 = vpop.permute.xlu0 %5626
        %5630 = vset.pattern.permute.xlu0 0
        %5631 = vperm.xlu0 %5630, %v4985
        %v5632 = vpop.permute.xlu0 %5631
        %5635 = vset.pattern.permute.xlu0 0
        %5636 = vperm.xlu0 %5635, %v4986
        %v5637 = vpop.permute.xlu0 %5636
        %5640 = vset.pattern.permute.xlu0 0
        %5641 = vperm.xlu0 %5640, %v4987
        %v5642 = vpop.permute.xlu0 %5641
        %5645 = vset.pattern.permute.xlu0 0
        %5646 = vperm.xlu0 %5645, %v4988
        %v5647 = vpop.permute.xlu0 %5646
        %5650 = vset.pattern.permute.xlu0 0
        %5651 = vperm.xlu0 %5650, %v4989
        %v5652 = vpop.permute.xlu0 %5651
        %5655 = vset.pattern.permute.xlu0 0
        %5656 = vperm.xlu0 %5655, %v4990
        %v5657 = vpop.permute.xlu0 %5656
        %5660 = vset.pattern.permute.xlu0 0
        %5661 = vperm.xlu0 %5660, %v4991
        %v5662 = vpop.permute.xlu0 %5661
        %5665 = vset.pattern.permute.xlu0 0
        %5666 = vperm.xlu0 %5665, %v4992
        %v5667 = vpop.permute.xlu0 %5666
        %5670 = vset.pattern.permute.xlu0 0
        %5671 = vperm.xlu0 %5670, %v4993
        %v5672 = vpop.permute.xlu0 %5671
        %5675 = vset.pattern.permute.xlu0 0
        %5676 = vperm.xlu0 %5675, %v4994
        %v5677 = vpop.permute.xlu0 %5676
        %5680 = vset.pattern.permute.xlu0 0
        %5681 = vperm.xlu0 %5680, %v4995
        %v5682 = vpop.permute.xlu0 %5681
        %5685 = vset.pattern.permute.xlu0 0
        %5686 = vperm.xlu0 %5685, %v4996
        %v5687 = vpop.permute.xlu0 %5686
        %5690 = vset.pattern.permute.xlu0 0
        %5691 = vperm.xlu0 %5690, %v4997
        %v5692 = vpop.permute.xlu0 %5691
        %5695 = vset.pattern.permute.xlu0 0
        %5696 = vperm.xlu0 %5695, %v4998
        %v5697 = vpop.permute.xlu0 %5696
        %5700 = vset.pattern.permute.xlu0 0
        %5701 = vperm.xlu0 %5700, %v4999
        %v5702 = vpop.permute.xlu0 %5701
        %5705 = vset.pattern.permute.xlu0 0
        %5706 = vperm.xlu0 %5705, %v5000
        %v5707 = vpop.permute.xlu0 %5706
        %5710 = vset.pattern.permute.xlu0 0
        %5711 = vperm.xlu0 %5710, %v5001
        %v5712 = vpop.permute.xlu0 %5711
        %5715 = vset.pattern.permute.xlu0 0
        %5716 = vperm.xlu0 %5715, %v5002
        %v5717 = vpop.permute.xlu0 %5716
        %5720 = vset.pattern.permute.xlu0 0
        %5721 = vperm.xlu0 %5720, %v5003
        %v5722 = vpop.permute.xlu0 %5721
        %5725 = vset.pattern.permute.xlu0 0
        %5726 = vperm.xlu0 %5725, %v5004
        %v5727 = vpop.permute.xlu0 %5726
        %5730 = vset.pattern.permute.xlu0 0
        %5731 = vperm.xlu0 %5730, %v5005
        %v5732 = vpop.permute.xlu0 %5731
        %5735 = vset.pattern.permute.xlu0 0
        %5736 = vperm.xlu0 %5735, %v5006
        %v5737 = vpop.permute.xlu0 %5736
        %5740 = vset.pattern.permute.xlu0 0
        %5741 = vperm.xlu0 %5740, %v5007
        %v5742 = vpop.permute.xlu0 %5741
        %5745 = vset.pattern.permute.xlu0 0
        %5746 = vperm.xlu0 %5745, %v5008
        %v5747 = vpop.permute.xlu0 %5746
        %5750 = vset.pattern.permute.xlu0 0
        %5751 = vperm.xlu0 %5750, %v5009
        %v5752 = vpop.permute.xlu0 %5751
        %5755 = vset.pattern.permute.xlu0 0
        %5756 = vperm.xlu0 %5755, %v5010
        %v5757 = vpop.permute.xlu0 %5756
        %5760 = vset.pattern.permute.xlu0 0
        %5761 = vperm.xlu0 %5760, %v5011
        %v5762 = vpop.permute.xlu0 %5761
        %5765 = vset.pattern.permute.xlu0 0
        %5766 = vperm.xlu0 %5765, %v5012
        %v5767 = vpop.permute.xlu0 %5766
        %5770 = vset.pattern.permute.xlu0 0
        %5771 = vperm.xlu0 %5770, %v5013
        %v5772 = vpop.permute.xlu0 %5771
        %5775 = vset.pattern.permute.xlu0 0
        %5776 = vperm.xlu0 %5775, %v5014
        %v5777 = vpop.permute.xlu0 %5776
        %5780 = vset.pattern.permute.xlu0 0
        %5781 = vperm.xlu0 %5780, %v5015
        %v5782 = vpop.permute.xlu0 %5781
        %5785 = vset.pattern.permute.xlu0 0
        %5786 = vperm.xlu0 %5785, %v5016
        %v5787 = vpop.permute.xlu0 %5786
        %5790 = vset.pattern.permute.xlu0 0
        %5791 = vperm.xlu0 %5790, %v5017
        %v5792 = vpop.permute.xlu0 %5791
        %5795 = vset.pattern.permute.xlu0 0
        %5796 = vperm.xlu0 %5795, %v5018
        %v5797 = vpop.permute.xlu0 %5796
        %5800 = vset.pattern.permute.xlu0 0
        %5801 = vperm.xlu0 %5800, %v5019
        %v5802 = vpop.permute.xlu0 %5801
        %5805 = vset.pattern.permute.xlu0 0
        %5806 = vperm.xlu0 %5805, %v5020
        %v5807 = vpop.permute.xlu0 %5806
        %5810 = vset.pattern.permute.xlu0 0
        %5811 = vperm.xlu0 %5810, %v5021
        %v5812 = vpop.permute.xlu0 %5811
        %5815 = vset.pattern.permute.xlu0 0
        %5816 = vperm.xlu0 %5815, %v5022
        %v5817 = vpop.permute.xlu0 %5816
        %5820 = vset.pattern.permute.xlu0 0
        %5821 = vperm.xlu0 %5820, %v5023
        %v5822 = vpop.permute.xlu0 %5821
        %5825 = vset.pattern.permute.xlu0 0
        %5826 = vperm.xlu0 %5825, %v5024
        %v5827 = vpop.permute.xlu0 %5826
        %5830 = vset.pattern.permute.xlu0 0
        %5831 = vperm.xlu0 %5830, %v5025
        %v5832 = vpop.permute.xlu0 %5831
        %5835 = vset.pattern.permute.xlu0 0
        %5836 = vperm.xlu0 %5835, %v5026
        %v5837 = vpop.permute.xlu0 %5836
        %5840 = vset.pattern.permute.xlu0 0
        %5841 = vperm.xlu0 %5840, %v5027
        %v5842 = vpop.permute.xlu0 %5841
        %5845 = vset.pattern.permute.xlu0 0
        %5846 = vperm.xlu0 %5845, %v5028
        %v5847 = vpop.permute.xlu0 %5846
        %5850 = vset.pattern.permute.xlu0 0
        %5851 = vperm.xlu0 %5850, %v5029
        %v5852 = vpop.permute.xlu0 %5851
        %5855 = vset.pattern.permute.xlu0 0
        %5856 = vperm.xlu0 %5855, %v5030
        %v5857 = vpop.permute.xlu0 %5856
        %5860 = vset.pattern.permute.xlu0 0
        %5861 = vperm.xlu0 %5860, %v5031
        %v5862 = vpop.permute.xlu0 %5861
        %5865 = vset.pattern.permute.xlu0 0
        %5866 = vperm.xlu0 %5865, %v5032
        %v5867 = vpop.permute.xlu0 %5866
        %5870 = vset.pattern.permute.xlu0 0
        %5871 = vperm.xlu0 %5870, %v5033
        %v5872 = vpop.permute.xlu0 %5871
        %5875 = vset.pattern.permute.xlu0 0
        %5876 = vperm.xlu0 %5875, %v5034
        %v5877 = vpop.permute.xlu0 %5876
        %5880 = vset.pattern.permute.xlu0 0
        %5881 = vperm.xlu0 %5880, %v5035
        %v5882 = vpop.permute.xlu0 %5881
        %5885 = vset.pattern.permute.xlu0 0
        %5886 = vperm.xlu0 %5885, %v5036
        %v5887 = vpop.permute.xlu0 %5886
        %5890 = vset.pattern.permute.xlu0 0
        %5891 = vperm.xlu0 %5890, %v5037
        %v5892 = vpop.permute.xlu0 %5891
        %5895 = vset.pattern.permute.xlu0 0
        %5896 = vperm.xlu0 %5895, %v5038
        %v5897 = vpop.permute.xlu0 %5896
        %5900 = vset.pattern.permute.xlu0 0
        %5901 = vperm.xlu0 %5900, %v5039
        %v5902 = vpop.permute.xlu0 %5901
        %5905 = vset.pattern.permute.xlu0 0
        %5906 = vperm.xlu0 %5905, %v5040
        %v5907 = vpop.permute.xlu0 %5906
        %5910 = vset.pattern.permute.xlu0 0
        %5911 = vperm.xlu0 %5910, %v5041
        %v5912 = vpop.permute.xlu0 %5911
        %5915 = vset.pattern.permute.xlu0 0
        %5916 = vperm.xlu0 %5915, %v5042
        %v5917 = vpop.permute.xlu0 %5916
        %5920 = vset.pattern.permute.xlu0 0
        %5921 = vperm.xlu0 %5920, %v5043
        %v5922 = vpop.permute.xlu0 %5921
        %5925 = vset.pattern.permute.xlu0 0
        %5926 = vperm.xlu0 %5925, %v5044
        %v5927 = vpop.permute.xlu0 %5926
        %5930 = vset.pattern.permute.xlu0 0
        %5931 = vperm.xlu0 %5930, %v5045
        %v5932 = vpop.permute.xlu0 %5931
        %5935 = vset.pattern.permute.xlu0 0
        %5936 = vperm.xlu0 %5935, %v5046
        %v5937 = vpop.permute.xlu0 %5936
        %5940 = vset.pattern.permute.xlu0 0
        %5941 = vperm.xlu0 %5940, %v5047
        %v5942 = vpop.permute.xlu0 %5941
        %5945 = vset.pattern.permute.xlu0 0
        %5946 = vperm.xlu0 %5945, %v5048
        %v5947 = vpop.permute.xlu0 %5946
        %5950 = vset.pattern.permute.xlu0 0
        %5951 = vperm.xlu0 %5950, %v5049
        %v5952 = vpop.permute.xlu0 %5951
        %5955 = vset.pattern.permute.xlu0 0
        %5956 = vperm.xlu0 %5955, %v5050
        %v5957 = vpop.permute.xlu0 %5956
        %5960 = vset.pattern.permute.xlu0 0
        %5961 = vperm.xlu0 %5960, %v5051
        %v5962 = vpop.permute.xlu0 %5961
        %5965 = vset.pattern.permute.xlu0 0
        %5966 = vperm.xlu0 %5965, %v5052
        %v5967 = vpop.permute.xlu0 %5966
        %5970 = vset.pattern.permute.xlu0 0
        %5971 = vperm.xlu0 %5970, %v5053
        %v5972 = vpop.permute.xlu0 %5971
        %5975 = vset.pattern.permute.xlu0 0
        %5976 = vperm.xlu0 %5975, %v5054
        %v5977 = vpop.permute.xlu0 %5976
        %5980 = vset.pattern.permute.xlu0 0
        %5981 = vperm.xlu0 %5980, %v5055
        %v5982 = vpop.permute.xlu0 %5981
        %5985 = vset.pattern.permute.xlu0 0
        %5986 = vperm.xlu0 %5985, %v5056
        %v5987 = vpop.permute.xlu0 %5986
        %5990 = vset.pattern.permute.xlu0 0
        %5991 = vperm.xlu0 %5990, %v5057
        %v5992 = vpop.permute.xlu0 %5991
        %5995 = vset.pattern.permute.xlu0 0
        %5996 = vperm.xlu0 %5995, %v5058
        %v5997 = vpop.permute.xlu0 %5996
        %6000 = vset.pattern.permute.xlu0 0
        %6001 = vperm.xlu0 %6000, %v5059
        %v6002 = vpop.permute.xlu0 %6001
        %6005 = vset.pattern.permute.xlu0 0
        %6006 = vperm.xlu0 %6005, %v5060
        %v6007 = vpop.permute.xlu0 %6006
        %6010 = vset.pattern.permute.xlu0 0
        %6011 = vperm.xlu0 %6010, %v5061
        %v6012 = vpop.permute.xlu0 %6011
        %6015 = vset.pattern.permute.xlu0 0
        %6016 = vperm.xlu0 %6015, %v5062
        %v6017 = vpop.permute.xlu0 %6016
        %6020 = vset.pattern.permute.xlu0 0
        %6021 = vperm.xlu0 %6020, %v5063
        %v6022 = vpop.permute.xlu0 %6021
        %6025 = vset.pattern.permute.xlu0 0
        %6026 = vperm.xlu0 %6025, %v5064
        %v6027 = vpop.permute.xlu0 %6026
        %6030 = vset.pattern.permute.xlu0 0
        %6031 = vperm.xlu0 %6030, %v5065
        %v6032 = vpop.permute.xlu0 %6031
        %6035 = vset.pattern.permute.xlu0 0
        %6036 = vperm.xlu0 %6035, %v5066
        %v6037 = vpop.permute.xlu0 %6036
        %6040 = vset.pattern.permute.xlu0 0
        %6041 = vperm.xlu0 %6040, %v5067
        %v6042 = vpop.permute.xlu0 %6041
        %6045 = vset.pattern.permute.xlu0 0
        %6046 = vperm.xlu0 %6045, %v5068
        %v6047 = vpop.permute.xlu0 %6046
        %6050 = vset.pattern.permute.xlu0 0
        %6051 = vperm.xlu0 %6050, %v5069
        %v6052 = vpop.permute.xlu0 %6051
        %6055 = vset.pattern.permute.xlu0 0
        %6056 = vperm.xlu0 %6055, %v5070
        %v6057 = vpop.permute.xlu0 %6056
        %6060 = vset.pattern.permute.xlu0 0
        %6061 = vperm.xlu0 %6060, %v5071
        %v6062 = vpop.permute.xlu0 %6061
        %6065 = vset.pattern.permute.xlu0 0
        %6066 = vperm.xlu0 %6065, %v5072
        %v6067 = vpop.permute.xlu0 %6066
        %6070 = vset.pattern.permute.xlu0 0
        %6071 = vperm.xlu0 %6070, %v5073
        %v6072 = vpop.permute.xlu0 %6071
        %6075 = vset.pattern.permute.xlu0 0
        %6076 = vperm.xlu0 %6075, %v5074
        %v6077 = vpop.permute.xlu0 %6076
        %6080 = vset.pattern.permute.xlu0 0
        %6081 = vperm.xlu0 %6080, %v5075
        %v6082 = vpop.permute.xlu0 %6081
        %6085 = vset.pattern.permute.xlu0 0
        %6086 = vperm.xlu0 %6085, %v5076
        %v6087 = vpop.permute.xlu0 %6086
        %6090 = vset.pattern.permute.xlu0 0
        %6091 = vperm.xlu0 %6090, %v5077
        %v6092 = vpop.permute.xlu0 %6091
        %6095 = vset.pattern.permute.xlu0 0
        %6096 = vperm.xlu0 %6095, %v5078
        %v6097 = vpop.permute.xlu0 %6096
        %6100 = vset.pattern.permute.xlu0 0
        %6101 = vperm.xlu0 %6100, %v5079
        %v6102 = vpop.permute.xlu0 %6101
        %6105 = vset.pattern.permute.xlu0 0
        %6106 = vperm.xlu0 %6105, %v5080
        %v6107 = vpop.permute.xlu0 %6106
        %6110 = vset.pattern.permute.xlu0 0
        %6111 = vperm.xlu0 %6110, %v5081
        %v6112 = vpop.permute.xlu0 %6111
        %6115 = vset.pattern.permute.xlu0 0
        %6116 = vperm.xlu0 %6115, %v5082
        %v6117 = vpop.permute.xlu0 %6116
        %6120 = vset.pattern.permute.xlu0 0
        %6121 = vperm.xlu0 %6120, %v5083
        %v6122 = vpop.permute.xlu0 %6121
        %6125 = vset.pattern.permute.xlu0 0
        %6126 = vperm.xlu0 %6125, %v5084
        %v6127 = vpop.permute.xlu0 %6126
        %6130 = vset.pattern.permute.xlu0 0
        %6131 = vperm.xlu0 %6130, %v5085
        %v6132 = vpop.permute.xlu0 %6131
        %6135 = vset.pattern.permute.xlu0 0
        %6136 = vperm.xlu0 %6135, %v5086
        %v6137 = vpop.permute.xlu0 %6136
        %6140 = vset.pattern.permute.xlu0 0
        %6141 = vperm.xlu0 %6140, %v5087
        %v6142 = vpop.permute.xlu0 %6141
        %6145 = vset.pattern.permute.xlu0 0
        %6146 = vperm.xlu0 %6145, %v5088
        %v6147 = vpop.permute.xlu0 %6146
        %6150 = vset.pattern.permute.xlu0 0
        %6151 = vperm.xlu0 %6150, %v5089
        %v6152 = vpop.permute.xlu0 %6151
        %6155 = vset.pattern.permute.xlu0 0
        %6156 = vperm.xlu0 %6155, %v5090
        %v6157 = vpop.permute.xlu0 %6156
        %6160 = vset.pattern.permute.xlu0 0
        %6161 = vperm.xlu0 %6160, %v5091
        %v6162 = vpop.permute.xlu0 %6161
        %6165 = vset.pattern.permute.xlu0 0
        %6166 = vperm.xlu0 %6165, %v5092
        %v6167 = vpop.permute.xlu0 %6166
        %6170 = vset.pattern.permute.xlu0 0
        %6171 = vperm.xlu0 %6170, %v5093
        %v6172 = vpop.permute.xlu0 %6171
        %6175 = vset.pattern.permute.xlu0 0
        %6176 = vperm.xlu0 %6175, %v5094
        %v6177 = vpop.permute.xlu0 %6176
        %6180 = vset.pattern.permute.xlu0 0
        %6181 = vperm.xlu0 %6180, %v5095
        %v6182 = vpop.permute.xlu0 %6181
        %6185 = vset.pattern.permute.xlu0 0
        %6186 = vperm.xlu0 %6185, %v5096
        %v6187 = vpop.permute.xlu0 %6186
        %6190 = vset.pattern.permute.xlu0 0
        %6191 = vperm.xlu0 %6190, %v5097
        %v6192 = vpop.permute.xlu0 %6191
        %6195 = vset.pattern.permute.xlu0 0
        %6196 = vperm.xlu0 %6195, %v5098
        %v6197 = vpop.permute.xlu0 %6196
        %6200 = vset.pattern.permute.xlu0 0
        %6201 = vperm.xlu0 %6200, %v5099
        %v6202 = vpop.permute.xlu0 %6201
        %6205 = vset.pattern.permute.xlu0 0
        %6206 = vperm.xlu0 %6205, %v5100
        %v6207 = vpop.permute.xlu0 %6206
        %6210 = vset.pattern.permute.xlu0 0
        %6211 = vperm.xlu0 %6210, %v5101
        %v6212 = vpop.permute.xlu0 %6211
        %6215 = vset.pattern.permute.xlu0 0
        %6216 = vperm.xlu0 %6215, %v5102
        %v6217 = vpop.permute.xlu0 %6216
        %6220 = vset.pattern.permute.xlu0 0
        %6221 = vperm.xlu0 %6220, %v5103
        %v6222 = vpop.permute.xlu0 %6221
        %6225 = vset.pattern.permute.xlu0 0
        %6226 = vperm.xlu0 %6225, %v5104
        %v6227 = vpop.permute.xlu0 %6226
        %6230 = vset.pattern.permute.xlu0 0
        %6231 = vperm.xlu0 %6230, %v5105
        %v6232 = vpop.permute.xlu0 %6231
        %6235 = vset.pattern.permute.xlu0 0
        %6236 = vperm.xlu0 %6235, %v5106
        %v6237 = vpop.permute.xlu0 %6236
        %6240 = vset.pattern.permute.xlu0 0
        %6241 = vperm.xlu0 %6240, %v5107
        %v6242 = vpop.permute.xlu0 %6241
        %6245 = vset.pattern.permute.xlu0 0
        %6246 = vperm.xlu0 %6245, %v5108
        %v6247 = vpop.permute.xlu0 %6246
        %6250 = vset.pattern.permute.xlu0 0
        %6251 = vperm.xlu0 %6250, %v5109
        %v6252 = vpop.permute.xlu0 %6251
        %6255 = vset.pattern.permute.xlu0 0
        %6256 = vperm.xlu0 %6255, %v5110
        %v6257 = vpop.permute.xlu0 %6256
        %6260 = vset.pattern.permute.xlu0 0
        %6261 = vperm.xlu0 %6260, %v5111
        %v6262 = vpop.permute.xlu0 %6261
        %6265 = vset.pattern.permute.xlu0 0
        %6266 = vperm.xlu0 %6265, %v5112
        %v6267 = vpop.permute.xlu0 %6266
        %6270 = vset.pattern.permute.xlu0 0
        %6271 = vperm.xlu0 %6270, %v5113
        %v6272 = vpop.permute.xlu0 %6271
        %6275 = vset.pattern.permute.xlu0 0
        %6276 = vperm.xlu0 %6275, %v5114
        %v6277 = vpop.permute.xlu0 %6276
        %6280 = vset.pattern.permute.xlu0 0
        %6281 = vperm.xlu0 %6280, %v5115
        %v6282 = vpop.permute.xlu0 %6281
        %6285 = vset.pattern.permute.xlu0 0
        %6286 = vperm.xlu0 %6285, %v5116
        %v6287 = vpop.permute.xlu0 %6286
        %6290 = vset.pattern.permute.xlu0 0
        %6291 = vperm.xlu0 %6290, %v5117
        %v6292 = vpop.permute.xlu0 %6291
        %6295 = vset.pattern.permute.xlu0 0
        %6296 = vperm.xlu0 %6295, %v5118
        %v6297 = vpop.permute.xlu0 %6296
        %6300 = vset.pattern.permute.xlu0 0
        %6301 = vperm.xlu0 %6300, %v5119
        %v6302 = vpop.permute.xlu0 %6301
        %6305 = vset.pattern.permute.xlu0 0
        %6306 = vperm.xlu0 %6305, %v5120
        %v6307 = vpop.permute.xlu0 %6306
        %6310 = vset.pattern.permute.xlu0 0
        %6311 = vperm.xlu0 %6310, %v5121
        %v6312 = vpop.permute.xlu0 %6311
        %6315 = vset.pattern.permute.xlu0 0
        %6316 = vperm.xlu0 %6315, %v5122
        %v6317 = vpop.permute.xlu0 %6316
        %6320 = vset.pattern.permute.xlu0 0
        %6321 = vperm.xlu0 %6320, %v5123
        %v6322 = vpop.permute.xlu0 %6321
        %6325 = vset.pattern.permute.xlu0 0
        %6326 = vperm.xlu0 %6325, %v5124
        %v6327 = vpop.permute.xlu0 %6326
        %6330 = vset.pattern.permute.xlu0 0
        %6331 = vperm.xlu0 %6330, %v5125
        %v6332 = vpop.permute.xlu0 %6331
        %6335 = vset.pattern.permute.xlu0 0
        %6336 = vperm.xlu0 %6335, %v5126
        %v6337 = vpop.permute.xlu0 %6336
        %6340 = vset.pattern.permute.xlu0 0
        %6341 = vperm.xlu0 %6340, %v5127
        %v6342 = vpop.permute.xlu0 %6341
        %6345 = vset.pattern.permute.xlu0 0
        %6346 = vperm.xlu0 %6345, %v5128
        %v6347 = vpop.permute.xlu0 %6346
        %6350 = vset.pattern.permute.xlu0 0
        %6351 = vperm.xlu0 %6350, %v5129
        %v6352 = vpop.permute.xlu0 %6351
        %6355 = vset.pattern.permute.xlu0 0
        %6356 = vperm.xlu0 %6355, %v5130
        %v6357 = vpop.permute.xlu0 %6356
        %6360 = vset.pattern.permute.xlu0 0
        %6361 = vperm.xlu0 %6360, %v5131
        %v6362 = vpop.permute.xlu0 %6361
        %6365 = vset.pattern.permute.xlu0 0
        %6366 = vperm.xlu0 %6365, %v5132
        %v6367 = vpop.permute.xlu0 %6366
        %6370 = vset.pattern.permute.xlu0 0
        %6371 = vperm.xlu0 %6370, %v5133
        %v6372 = vpop.permute.xlu0 %6371
        %6375 = vset.pattern.permute.xlu0 0
        %6376 = vperm.xlu0 %6375, %v5134
        %v6377 = vpop.permute.xlu0 %6376
        %6380 = vset.pattern.permute.xlu0 0
        %6381 = vperm.xlu0 %6380, %v5135
        %v6382 = vpop.permute.xlu0 %6381
        %6385 = vset.pattern.permute.xlu0 0
        %6386 = vperm.xlu0 %6385, %v5136
        %v6387 = vpop.permute.xlu0 %6386
        %6390 = vset.pattern.permute.xlu0 0
        %6391 = vperm.xlu0 %6390, %v5137
        %v6392 = vpop.permute.xlu0 %6391
        %6395 = vset.pattern.permute.xlu0 0
        %6396 = vperm.xlu0 %6395, %v5138
        %v6397 = vpop.permute.xlu0 %6396
        %6400 = vset.pattern.permute.xlu0 0
        %6401 = vperm.xlu0 %6400, %v5139
        %v6402 = vpop.permute.xlu0 %6401
        %6405 = vset.pattern.permute.xlu0 0
        %6406 = vperm.xlu0 %6405, %v5140
        %v6407 = vpop.permute.xlu0 %6406
        %6410 = vset.pattern.permute.xlu0 0
        %6411 = vperm.xlu0 %6410, %v5141
        %v6412 = vpop.permute.xlu0 %6411
        %6415 = vset.pattern.permute.xlu0 0
        %6416 = vperm.xlu0 %6415, %v5142
        %v6417 = vpop.permute.xlu0 %6416
        %6420 = vset.pattern.permute.xlu0 0
        %6421 = vperm.xlu0 %6420, %v5143
        %v6422 = vpop.permute.xlu0 %6421
        %v6424 = vadd.f32 %v4376, %v5147
        %v6425 = vadd.f32 %v4377, %v5147
        %v6426 = vadd.f32 %v4378, %v5152
        %v6427 = vadd.f32 %v4379, %v5152
        %v6428 = vadd.f32 %v4380, %v5157
        %v6429 = vadd.f32 %v4381, %v5157
        %v6430 = vadd.f32 %v4382, %v5162
        %v6431 = vadd.f32 %v4383, %v5162
        %v6432 = vadd.f32 %v4384, %v5167
        %v6433 = vadd.f32 %v4385, %v5167
        %v6434 = vadd.f32 %v4386, %v5172
        %v6435 = vadd.f32 %v4387, %v5172
        %v6436 = vadd.f32 %v4388, %v5177
        %v6437 = vadd.f32 %v4389, %v5177
        %v6438 = vadd.f32 %v4390, %v5182
        %v6439 = vadd.f32 %v4391, %v5182
        %v6440 = vadd.f32 %v4392, %v5187
        %v6441 = vadd.f32 %v4393, %v5187
        %v6442 = vadd.f32 %v4394, %v5192
        %v6443 = vadd.f32 %v4395, %v5192
        %v6444 = vadd.f32 %v4396, %v5197
        %v6445 = vadd.f32 %v4397, %v5197
        %v6446 = vadd.f32 %v4398, %v5202
        %v6447 = vadd.f32 %v4399, %v5202
        %v6448 = vadd.f32 %v4400, %v5207
        %v6449 = vadd.f32 %v4401, %v5207
        %v6450 = vadd.f32 %v4402, %v5212
        %v6451 = vadd.f32 %v4403, %v5212
        %v6452 = vadd.f32 %v4404, %v5217
        %v6453 = vadd.f32 %v4405, %v5217
        %v6454 = vadd.f32 %v4406, %v5222
        %v6455 = vadd.f32 %v4407, %v5222
        %v6456 = vadd.f32 %v4408, %v5227
        %v6457 = vadd.f32 %v4409, %v5227
        %v6458 = vadd.f32 %v4410, %v5232
        %v6459 = vadd.f32 %v4411, %v5232
        %v6460 = vadd.f32 %v4412, %v5237
        %v6461 = vadd.f32 %v4413, %v5237
        %v6462 = vadd.f32 %v4414, %v5242
        %v6463 = vadd.f32 %v4415, %v5242
        %v6464 = vadd.f32 %v4416, %v5247
        %v6465 = vadd.f32 %v4417, %v5247
        %v6466 = vadd.f32 %v4418, %v5252
        %v6467 = vadd.f32 %v4419, %v5252
        %v6468 = vadd.f32 %v4420, %v5257
        %v6469 = vadd.f32 %v4421, %v5257
        %v6470 = vadd.f32 %v4422, %v5262
        %v6471 = vadd.f32 %v4423, %v5262
        %v6472 = vadd.f32 %v4424, %v5267
        %v6473 = vadd.f32 %v4425, %v5267
        %v6474 = vadd.f32 %v4426, %v5272
        %v6475 = vadd.f32 %v4427, %v5272
        %v6476 = vadd.f32 %v4428, %v5277
        %v6477 = vadd.f32 %v4429, %v5277
        %v6478 = vadd.f32 %v4430, %v5282
        %v6479 = vadd.f32 %v4431, %v5282
        %v6480 = vadd.f32 %v4432, %v5287
        %v6481 = vadd.f32 %v4433, %v5287
        %v6482 = vadd.f32 %v4434, %v5292
        %v6483 = vadd.f32 %v4435, %v5292
        %v6484 = vadd.f32 %v4436, %v5297
        %v6485 = vadd.f32 %v4437, %v5297
        %v6486 = vadd.f32 %v4438, %v5302
        %v6487 = vadd.f32 %v4439, %v5302
        %v6488 = vadd.f32 %v4440, %v5307
        %v6489 = vadd.f32 %v4441, %v5307
        %v6490 = vadd.f32 %v4442, %v5312
        %v6491 = vadd.f32 %v4443, %v5312
        %v6492 = vadd.f32 %v4444, %v5317
        %v6493 = vadd.f32 %v4445, %v5317
        %v6494 = vadd.f32 %v4446, %v5322
        %v6495 = vadd.f32 %v4447, %v5322
        %v6496 = vadd.f32 %v4448, %v5327
        %v6497 = vadd.f32 %v4449, %v5327
        %v6498 = vadd.f32 %v4450, %v5332
        %v6499 = vadd.f32 %v4451, %v5332
        %v6500 = vadd.f32 %v4452, %v5337
        %v6501 = vadd.f32 %v4453, %v5337
        %v6502 = vadd.f32 %v4454, %v5342
        %v6503 = vadd.f32 %v4455, %v5342
        %v6504 = vadd.f32 %v4456, %v5347
        %v6505 = vadd.f32 %v4457, %v5347
        %v6506 = vadd.f32 %v4458, %v5352
        %v6507 = vadd.f32 %v4459, %v5352
        %v6508 = vadd.f32 %v4460, %v5357
        %v6509 = vadd.f32 %v4461, %v5357
        %v6510 = vadd.f32 %v4462, %v5362
        %v6511 = vadd.f32 %v4463, %v5362
        %v6512 = vadd.f32 %v4464, %v5367
        %v6513 = vadd.f32 %v4465, %v5367
        %v6514 = vadd.f32 %v4466, %v5372
        %v6515 = vadd.f32 %v4467, %v5372
        %v6516 = vadd.f32 %v4468, %v5377
        %v6517 = vadd.f32 %v4469, %v5377
        %v6518 = vadd.f32 %v4470, %v5382
        %v6519 = vadd.f32 %v4471, %v5382
        %v6520 = vadd.f32 %v4472, %v5387
        %v6521 = vadd.f32 %v4473, %v5387
        %v6522 = vadd.f32 %v4474, %v5392
        %v6523 = vadd.f32 %v4475, %v5392
        %v6524 = vadd.f32 %v4476, %v5397
        %v6525 = vadd.f32 %v4477, %v5397
        %v6526 = vadd.f32 %v4478, %v5402
        %v6527 = vadd.f32 %v4479, %v5402
        %v6528 = vadd.f32 %v4480, %v5407
        %v6529 = vadd.f32 %v4481, %v5407
        %v6530 = vadd.f32 %v4482, %v5412
        %v6531 = vadd.f32 %v4483, %v5412
        %v6532 = vadd.f32 %v4484, %v5417
        %v6533 = vadd.f32 %v4485, %v5417
        %v6534 = vadd.f32 %v4486, %v5422
        %v6535 = vadd.f32 %v4487, %v5422
        %v6536 = vadd.f32 %v4488, %v5427
        %v6537 = vadd.f32 %v4489, %v5427
        %v6538 = vadd.f32 %v4490, %v5432
        %v6539 = vadd.f32 %v4491, %v5432
        %v6540 = vadd.f32 %v4492, %v5437
        %v6541 = vadd.f32 %v4493, %v5437
        %v6542 = vadd.f32 %v4494, %v5442
        %v6543 = vadd.f32 %v4495, %v5442
        %v6544 = vadd.f32 %v4496, %v5447
        %v6545 = vadd.f32 %v4497, %v5447
        %v6546 = vadd.f32 %v4498, %v5452
        %v6547 = vadd.f32 %v4499, %v5452
        %v6548 = vadd.f32 %v4500, %v5457
        %v6549 = vadd.f32 %v4501, %v5457
        %v6550 = vadd.f32 %v4502, %v5462
        %v6551 = vadd.f32 %v4503, %v5462
        %v6552 = vadd.f32 %v4504, %v5467
        %v6553 = vadd.f32 %v4505, %v5467
        %v6554 = vadd.f32 %v4506, %v5472
        %v6555 = vadd.f32 %v4507, %v5472
        %v6556 = vadd.f32 %v4508, %v5477
        %v6557 = vadd.f32 %v4509, %v5477
        %v6558 = vadd.f32 %v4510, %v5482
        %v6559 = vadd.f32 %v4511, %v5482
        %v6560 = vadd.f32 %v4512, %v5487
        %v6561 = vadd.f32 %v4513, %v5487
        %v6562 = vadd.f32 %v4514, %v5492
        %v6563 = vadd.f32 %v4515, %v5492
        %v6564 = vadd.f32 %v4516, %v5497
        %v6565 = vadd.f32 %v4517, %v5497
        %v6566 = vadd.f32 %v4518, %v5502
        %v6567 = vadd.f32 %v4519, %v5502
        %v6568 = vadd.f32 %v4520, %v5507
        %v6569 = vadd.f32 %v4521, %v5507
        %v6570 = vadd.f32 %v4522, %v5512
        %v6571 = vadd.f32 %v4523, %v5512
        %v6572 = vadd.f32 %v4524, %v5517
        %v6573 = vadd.f32 %v4525, %v5517
        %v6574 = vadd.f32 %v4526, %v5522
        %v6575 = vadd.f32 %v4527, %v5522
        %v6576 = vadd.f32 %v4528, %v5527
        %v6577 = vadd.f32 %v4529, %v5527
        %v6578 = vadd.f32 %v4530, %v5532
        %v6579 = vadd.f32 %v4531, %v5532
        %v6580 = vadd.f32 %v4532, %v5537
        %v6581 = vadd.f32 %v4533, %v5537
        %v6582 = vadd.f32 %v4534, %v5542
        %v6583 = vadd.f32 %v4535, %v5542
        %v6584 = vadd.f32 %v4536, %v5547
        %v6585 = vadd.f32 %v4537, %v5547
        %v6586 = vadd.f32 %v4538, %v5552
        %v6587 = vadd.f32 %v4539, %v5552
        %v6588 = vadd.f32 %v4540, %v5557
        %v6589 = vadd.f32 %v4541, %v5557
        %v6590 = vadd.f32 %v4542, %v5562
        %v6591 = vadd.f32 %v4543, %v5562
        %v6592 = vadd.f32 %v4544, %v5567
        %v6593 = vadd.f32 %v4545, %v5567
        %v6594 = vadd.f32 %v4546, %v5572
        %v6595 = vadd.f32 %v4547, %v5572
        %v6596 = vadd.f32 %v4548, %v5577
        %v6597 = vadd.f32 %v4549, %v5577
        %v6598 = vadd.f32 %v4550, %v5582
        %v6599 = vadd.f32 %v4551, %v5582
        %v6600 = vadd.f32 %v4552, %v5587
        %v6601 = vadd.f32 %v4553, %v5587
        %v6602 = vadd.f32 %v4554, %v5592
        %v6603 = vadd.f32 %v4555, %v5592
        %v6604 = vadd.f32 %v4556, %v5597
        %v6605 = vadd.f32 %v4557, %v5597
        %v6606 = vadd.f32 %v4558, %v5602
        %v6607 = vadd.f32 %v4559, %v5602
        %v6608 = vadd.f32 %v4560, %v5607
        %v6609 = vadd.f32 %v4561, %v5607
        %v6610 = vadd.f32 %v4562, %v5612
        %v6611 = vadd.f32 %v4563, %v5612
        %v6612 = vadd.f32 %v4564, %v5617
        %v6613 = vadd.f32 %v4565, %v5617
        %v6614 = vadd.f32 %v4566, %v5622
        %v6615 = vadd.f32 %v4567, %v5622
        %v6616 = vadd.f32 %v4568, %v5627
        %v6617 = vadd.f32 %v4569, %v5627
        %v6618 = vadd.f32 %v4570, %v5632
        %v6619 = vadd.f32 %v4571, %v5632
        %v6620 = vadd.f32 %v4572, %v5637
        %v6621 = vadd.f32 %v4573, %v5637
        %v6622 = vadd.f32 %v4574, %v5642
        %v6623 = vadd.f32 %v4575, %v5642
        %v6624 = vadd.f32 %v4576, %v5647
        %v6625 = vadd.f32 %v4577, %v5647
        %v6626 = vadd.f32 %v4578, %v5652
        %v6627 = vadd.f32 %v4579, %v5652
        %v6628 = vadd.f32 %v4580, %v5657
        %v6629 = vadd.f32 %v4581, %v5657
        %v6630 = vadd.f32 %v4582, %v5662
        %v6631 = vadd.f32 %v4583, %v5662
        %v6632 = vadd.f32 %v4584, %v5667
        %v6633 = vadd.f32 %v4585, %v5667
        %v6634 = vadd.f32 %v4586, %v5672
        %v6635 = vadd.f32 %v4587, %v5672
        %v6636 = vadd.f32 %v4588, %v5677
        %v6637 = vadd.f32 %v4589, %v5677
        %v6638 = vadd.f32 %v4590, %v5682
        %v6639 = vadd.f32 %v4591, %v5682
        %v6640 = vadd.f32 %v4592, %v5687
        %v6641 = vadd.f32 %v4593, %v5687
        %v6642 = vadd.f32 %v4594, %v5692
        %v6643 = vadd.f32 %v4595, %v5692
        %v6644 = vadd.f32 %v4596, %v5697
        %v6645 = vadd.f32 %v4597, %v5697
        %v6646 = vadd.f32 %v4598, %v5702
        %v6647 = vadd.f32 %v4599, %v5702
        %v6648 = vadd.f32 %v4600, %v5707
        %v6649 = vadd.f32 %v4601, %v5707
        %v6650 = vadd.f32 %v4602, %v5712
        %v6651 = vadd.f32 %v4603, %v5712
        %v6652 = vadd.f32 %v4604, %v5717
        %v6653 = vadd.f32 %v4605, %v5717
        %v6654 = vadd.f32 %v4606, %v5722
        %v6655 = vadd.f32 %v4607, %v5722
        %v6656 = vadd.f32 %v4608, %v5727
        %v6657 = vadd.f32 %v4609, %v5727
        %v6658 = vadd.f32 %v4610, %v5732
        %v6659 = vadd.f32 %v4611, %v5732
        %v6660 = vadd.f32 %v4612, %v5737
        %v6661 = vadd.f32 %v4613, %v5737
        %v6662 = vadd.f32 %v4614, %v5742
        %v6663 = vadd.f32 %v4615, %v5742
        %v6664 = vadd.f32 %v4616, %v5747
        %v6665 = vadd.f32 %v4617, %v5747
        %v6666 = vadd.f32 %v4618, %v5752
        %v6667 = vadd.f32 %v4619, %v5752
        %v6668 = vadd.f32 %v4620, %v5757
        %v6669 = vadd.f32 %v4621, %v5757
        %v6670 = vadd.f32 %v4622, %v5762
        %v6671 = vadd.f32 %v4623, %v5762
        %v6672 = vadd.f32 %v4624, %v5767
        %v6673 = vadd.f32 %v4625, %v5767
        %v6674 = vadd.f32 %v4626, %v5772
        %v6675 = vadd.f32 %v4627, %v5772
        %v6676 = vadd.f32 %v4628, %v5777
        %v6677 = vadd.f32 %v4629, %v5777
        %v6678 = vadd.f32 %v4630, %v5782
        %v6679 = vadd.f32 %v4631, %v5782
        %v6680 = vadd.f32 %v4632, %v5787
        %v6681 = vadd.f32 %v4633, %v5787
        %v6682 = vadd.f32 %v4634, %v5792
        %v6683 = vadd.f32 %v4635, %v5792
        %v6684 = vadd.f32 %v4636, %v5797
        %v6685 = vadd.f32 %v4637, %v5797
        %v6686 = vadd.f32 %v4638, %v5802
        %v6687 = vadd.f32 %v4639, %v5802
        %v6688 = vadd.f32 %v4640, %v5807
        %v6689 = vadd.f32 %v4641, %v5807
        %v6690 = vadd.f32 %v4642, %v5812
        %v6691 = vadd.f32 %v4643, %v5812
        %v6692 = vadd.f32 %v4644, %v5817
        %v6693 = vadd.f32 %v4645, %v5817
        %v6694 = vadd.f32 %v4646, %v5822
        %v6695 = vadd.f32 %v4647, %v5822
        %v6696 = vadd.f32 %v4648, %v5827
        %v6697 = vadd.f32 %v4649, %v5827
        %v6698 = vadd.f32 %v4650, %v5832
        %v6699 = vadd.f32 %v4651, %v5832
        %v6700 = vadd.f32 %v4652, %v5837
        %v6701 = vadd.f32 %v4653, %v5837
        %v6702 = vadd.f32 %v4654, %v5842
        %v6703 = vadd.f32 %v4655, %v5842
        %v6704 = vadd.f32 %v4656, %v5847
        %v6705 = vadd.f32 %v4657, %v5847
        %v6706 = vadd.f32 %v4658, %v5852
        %v6707 = vadd.f32 %v4659, %v5852
        %v6708 = vadd.f32 %v4660, %v5857
        %v6709 = vadd.f32 %v4661, %v5857
        %v6710 = vadd.f32 %v4662, %v5862
        %v6711 = vadd.f32 %v4663, %v5862
        %v6712 = vadd.f32 %v4664, %v5867
        %v6713 = vadd.f32 %v4665, %v5867
        %v6714 = vadd.f32 %v4666, %v5872
        %v6715 = vadd.f32 %v4667, %v5872
        %v6716 = vadd.f32 %v4668, %v5877
        %v6717 = vadd.f32 %v4669, %v5877
        %v6718 = vadd.f32 %v4670, %v5882
        %v6719 = vadd.f32 %v4671, %v5882
        %v6720 = vadd.f32 %v4672, %v5887
        %v6721 = vadd.f32 %v4673, %v5887
        %v6722 = vadd.f32 %v4674, %v5892
        %v6723 = vadd.f32 %v4675, %v5892
        %v6724 = vadd.f32 %v4676, %v5897
        %v6725 = vadd.f32 %v4677, %v5897
        %v6726 = vadd.f32 %v4678, %v5902
        %v6727 = vadd.f32 %v4679, %v5902
        %v6728 = vadd.f32 %v4680, %v5907
        %v6729 = vadd.f32 %v4681, %v5907
        %v6730 = vadd.f32 %v4682, %v5912
        %v6731 = vadd.f32 %v4683, %v5912
        %v6732 = vadd.f32 %v4684, %v5917
        %v6733 = vadd.f32 %v4685, %v5917
        %v6734 = vadd.f32 %v4686, %v5922
        %v6735 = vadd.f32 %v4687, %v5922
        %v6736 = vadd.f32 %v4688, %v5927
        %v6737 = vadd.f32 %v4689, %v5927
        %v6738 = vadd.f32 %v4690, %v5932
        %v6739 = vadd.f32 %v4691, %v5932
        %v6740 = vadd.f32 %v4692, %v5937
        %v6741 = vadd.f32 %v4693, %v5937
        %v6742 = vadd.f32 %v4694, %v5942
        %v6743 = vadd.f32 %v4695, %v5942
        %v6744 = vadd.f32 %v4696, %v5947
        %v6745 = vadd.f32 %v4697, %v5947
        %v6746 = vadd.f32 %v4698, %v5952
        %v6747 = vadd.f32 %v4699, %v5952
        %v6748 = vadd.f32 %v4700, %v5957
        %v6749 = vadd.f32 %v4701, %v5957
        %v6750 = vadd.f32 %v4702, %v5962
        %v6751 = vadd.f32 %v4703, %v5962
        %v6752 = vadd.f32 %v4704, %v5967
        %v6753 = vadd.f32 %v4705, %v5967
        %v6754 = vadd.f32 %v4706, %v5972
        %v6755 = vadd.f32 %v4707, %v5972
        %v6756 = vadd.f32 %v4708, %v5977
        %v6757 = vadd.f32 %v4709, %v5977
        %v6758 = vadd.f32 %v4710, %v5982
        %v6759 = vadd.f32 %v4711, %v5982
        %v6760 = vadd.f32 %v4712, %v5987
        %v6761 = vadd.f32 %v4713, %v5987
        %v6762 = vadd.f32 %v4714, %v5992
        %v6763 = vadd.f32 %v4715, %v5992
        %v6764 = vadd.f32 %v4716, %v5997
        %v6765 = vadd.f32 %v4717, %v5997
        %v6766 = vadd.f32 %v4718, %v6002
        %v6767 = vadd.f32 %v4719, %v6002
        %v6768 = vadd.f32 %v4720, %v6007
        %v6769 = vadd.f32 %v4721, %v6007
        %v6770 = vadd.f32 %v4722, %v6012
        %v6771 = vadd.f32 %v4723, %v6012
        %v6772 = vadd.f32 %v4724, %v6017
        %v6773 = vadd.f32 %v4725, %v6017
        %v6774 = vadd.f32 %v4726, %v6022
        %v6775 = vadd.f32 %v4727, %v6022
        %v6776 = vadd.f32 %v4728, %v6027
        %v6777 = vadd.f32 %v4729, %v6027
        %v6778 = vadd.f32 %v4730, %v6032
        %v6779 = vadd.f32 %v4731, %v6032
        %v6780 = vadd.f32 %v4732, %v6037
        %v6781 = vadd.f32 %v4733, %v6037
        %v6782 = vadd.f32 %v4734, %v6042
        %v6783 = vadd.f32 %v4735, %v6042
        %v6784 = vadd.f32 %v4736, %v6047
        %v6785 = vadd.f32 %v4737, %v6047
        %v6786 = vadd.f32 %v4738, %v6052
        %v6787 = vadd.f32 %v4739, %v6052
        %v6788 = vadd.f32 %v4740, %v6057
        %v6789 = vadd.f32 %v4741, %v6057
        %v6790 = vadd.f32 %v4742, %v6062
        %v6791 = vadd.f32 %v4743, %v6062
        %v6792 = vadd.f32 %v4744, %v6067
        %v6793 = vadd.f32 %v4745, %v6067
        %v6794 = vadd.f32 %v4746, %v6072
        %v6795 = vadd.f32 %v4747, %v6072
        %v6796 = vadd.f32 %v4748, %v6077
        %v6797 = vadd.f32 %v4749, %v6077
        %v6798 = vadd.f32 %v4750, %v6082
        %v6799 = vadd.f32 %v4751, %v6082
        %v6800 = vadd.f32 %v4752, %v6087
        %v6801 = vadd.f32 %v4753, %v6087
        %v6802 = vadd.f32 %v4754, %v6092
        %v6803 = vadd.f32 %v4755, %v6092
        %v6804 = vadd.f32 %v4756, %v6097
        %v6805 = vadd.f32 %v4757, %v6097
        %v6806 = vadd.f32 %v4758, %v6102
        %v6807 = vadd.f32 %v4759, %v6102
        %v6808 = vadd.f32 %v4760, %v6107
        %v6809 = vadd.f32 %v4761, %v6107
        %v6810 = vadd.f32 %v4762, %v6112
        %v6811 = vadd.f32 %v4763, %v6112
        %v6812 = vadd.f32 %v4764, %v6117
        %v6813 = vadd.f32 %v4765, %v6117
        %v6814 = vadd.f32 %v4766, %v6122
        %v6815 = vadd.f32 %v4767, %v6122
        %v6816 = vadd.f32 %v4768, %v6127
        %v6817 = vadd.f32 %v4769, %v6127
        %v6818 = vadd.f32 %v4770, %v6132
        %v6819 = vadd.f32 %v4771, %v6132
        %v6820 = vadd.f32 %v4772, %v6137
        %v6821 = vadd.f32 %v4773, %v6137
        %v6822 = vadd.f32 %v4774, %v6142
        %v6823 = vadd.f32 %v4775, %v6142
        %v6824 = vadd.f32 %v4776, %v6147
        %v6825 = vadd.f32 %v4777, %v6147
        %v6826 = vadd.f32 %v4778, %v6152
        %v6827 = vadd.f32 %v4779, %v6152
        %v6828 = vadd.f32 %v4780, %v6157
        %v6829 = vadd.f32 %v4781, %v6157
        %v6830 = vadd.f32 %v4782, %v6162
        %v6831 = vadd.f32 %v4783, %v6162
        %v6832 = vadd.f32 %v4784, %v6167
        %v6833 = vadd.f32 %v4785, %v6167
        %v6834 = vadd.f32 %v4786, %v6172
        %v6835 = vadd.f32 %v4787, %v6172
        %v6836 = vadd.f32 %v4788, %v6177
        %v6837 = vadd.f32 %v4789, %v6177
        %v6838 = vadd.f32 %v4790, %v6182
        %v6839 = vadd.f32 %v4791, %v6182
        %v6840 = vadd.f32 %v4792, %v6187
        %v6841 = vadd.f32 %v4793, %v6187
        %v6842 = vadd.f32 %v4794, %v6192
        %v6843 = vadd.f32 %v4795, %v6192
        %v6844 = vadd.f32 %v4796, %v6197
        %v6845 = vadd.f32 %v4797, %v6197
        %v6846 = vadd.f32 %v4798, %v6202
        %v6847 = vadd.f32 %v4799, %v6202
        %v6848 = vadd.f32 %v4800, %v6207
        %v6849 = vadd.f32 %v4801, %v6207
        %v6850 = vadd.f32 %v4802, %v6212
        %v6851 = vadd.f32 %v4803, %v6212
        %v6852 = vadd.f32 %v4804, %v6217
        %v6853 = vadd.f32 %v4805, %v6217
        %v6854 = vadd.f32 %v4806, %v6222
        %v6855 = vadd.f32 %v4807, %v6222
        %v6856 = vadd.f32 %v4808, %v6227
        %v6857 = vadd.f32 %v4809, %v6227
        %v6858 = vadd.f32 %v4810, %v6232
        %v6859 = vadd.f32 %v4811, %v6232
        %v6860 = vadd.f32 %v4812, %v6237
        %v6861 = vadd.f32 %v4813, %v6237
        %v6862 = vadd.f32 %v4814, %v6242
        %v6863 = vadd.f32 %v4815, %v6242
        %v6864 = vadd.f32 %v4816, %v6247
        %v6865 = vadd.f32 %v4817, %v6247
        %v6866 = vadd.f32 %v4818, %v6252
        %v6867 = vadd.f32 %v4819, %v6252
        %v6868 = vadd.f32 %v4820, %v6257
        %v6869 = vadd.f32 %v4821, %v6257
        %v6870 = vadd.f32 %v4822, %v6262
        %v6871 = vadd.f32 %v4823, %v6262
        %v6872 = vadd.f32 %v4824, %v6267
        %v6873 = vadd.f32 %v4825, %v6267
        %v6874 = vadd.f32 %v4826, %v6272
        %v6875 = vadd.f32 %v4827, %v6272
        %v6876 = vadd.f32 %v4828, %v6277
        %v6877 = vadd.f32 %v4829, %v6277
        %v6878 = vadd.f32 %v4830, %v6282
        %v6879 = vadd.f32 %v4831, %v6282
        %v6880 = vadd.f32 %v4832, %v6287
        %v6881 = vadd.f32 %v4833, %v6287
        %v6882 = vadd.f32 %v4834, %v6292
        %v6883 = vadd.f32 %v4835, %v6292
        %v6884 = vadd.f32 %v4836, %v6297
        %v6885 = vadd.f32 %v4837, %v6297
        %v6886 = vadd.f32 %v4838, %v6302
        %v6887 = vadd.f32 %v4839, %v6302
        %v6888 = vadd.f32 %v4840, %v6307
        %v6889 = vadd.f32 %v4841, %v6307
        %v6890 = vadd.f32 %v4842, %v6312
        %v6891 = vadd.f32 %v4843, %v6312
        %v6892 = vadd.f32 %v4844, %v6317
        %v6893 = vadd.f32 %v4845, %v6317
        %v6894 = vadd.f32 %v4846, %v6322
        %v6895 = vadd.f32 %v4847, %v6322
        %v6896 = vadd.f32 %v4848, %v6327
        %v6897 = vadd.f32 %v4849, %v6327
        %v6898 = vadd.f32 %v4850, %v6332
        %v6899 = vadd.f32 %v4851, %v6332
        %v6900 = vadd.f32 %v4852, %v6337
        %v6901 = vadd.f32 %v4853, %v6337
        %v6902 = vadd.f32 %v4854, %v6342
        %v6903 = vadd.f32 %v4855, %v6342
        %v6904 = vadd.f32 %v4856, %v6347
        %v6905 = vadd.f32 %v4857, %v6347
        %v6906 = vadd.f32 %v4858, %v6352
        %v6907 = vadd.f32 %v4859, %v6352
        %v6908 = vadd.f32 %v4860, %v6357
        %v6909 = vadd.f32 %v4861, %v6357
        %v6910 = vadd.f32 %v4862, %v6362
        %v6911 = vadd.f32 %v4863, %v6362
        %v6912 = vadd.f32 %v4864, %v6367
        %v6913 = vadd.f32 %v4865, %v6367
        %v6914 = vadd.f32 %v4866, %v6372
        %v6915 = vadd.f32 %v4867, %v6372
        %v6916 = vadd.f32 %v4868, %v6377
        %v6917 = vadd.f32 %v4869, %v6377
        %v6918 = vadd.f32 %v4870, %v6382
        %v6919 = vadd.f32 %v4871, %v6382
        %v6920 = vadd.f32 %v4872, %v6387
        %v6921 = vadd.f32 %v4873, %v6387
        %v6922 = vadd.f32 %v4874, %v6392
        %v6923 = vadd.f32 %v4875, %v6392
        %v6924 = vadd.f32 %v4876, %v6397
        %v6925 = vadd.f32 %v4877, %v6397
        %v6926 = vadd.f32 %v4878, %v6402
        %v6927 = vadd.f32 %v4879, %v6402
        %v6928 = vadd.f32 %v4880, %v6407
        %v6929 = vadd.f32 %v4881, %v6407
        %v6930 = vadd.f32 %v4882, %v6412
        %v6931 = vadd.f32 %v4883, %v6412
        %v6932 = vadd.f32 %v4884, %v6417
        %v6933 = vadd.f32 %v4885, %v6417
        %v6934 = vadd.f32 %v4886, %v6422
        %v6935 = vadd.f32 %v4887, %v6422
        %v6936 = vmax.f32 %v6424, 0.0
        %v6937 = vmax.f32 %v6425, 0.0
        %v6938 = vmax.f32 %v6426, 0.0
        %v6939 = vmax.f32 %v6427, 0.0
        %v6940 = vmax.f32 %v6428, 0.0
        %v6941 = vmax.f32 %v6429, 0.0
        %v6942 = vmax.f32 %v6430, 0.0
        %v6943 = vmax.f32 %v6431, 0.0
        %v6944 = vmax.f32 %v6432, 0.0
        %v6945 = vmax.f32 %v6433, 0.0
        %v6946 = vmax.f32 %v6434, 0.0
        %v6947 = vmax.f32 %v6435, 0.0
        %v6948 = vmax.f32 %v6436, 0.0
        %v6949 = vmax.f32 %v6437, 0.0
        %v6950 = vmax.f32 %v6438, 0.0
        %v6951 = vmax.f32 %v6439, 0.0
        %v6952 = vmax.f32 %v6440, 0.0
        %v6953 = vmax.f32 %v6441, 0.0
        %v6954 = vmax.f32 %v6442, 0.0
        %v6955 = vmax.f32 %v6443, 0.0
        %v6956 = vmax.f32 %v6444, 0.0
        %v6957 = vmax.f32 %v6445, 0.0
        %v6958 = vmax.f32 %v6446, 0.0
        %v6959 = vmax.f32 %v6447, 0.0
        %v6960 = vmax.f32 %v6448, 0.0
        %v6961 = vmax.f32 %v6449, 0.0
        %v6962 = vmax.f32 %v6450, 0.0
        %v6963 = vmax.f32 %v6451, 0.0
        %v6964 = vmax.f32 %v6452, 0.0
        %v6965 = vmax.f32 %v6453, 0.0
        %v6966 = vmax.f32 %v6454, 0.0
        %v6967 = vmax.f32 %v6455, 0.0
        %v6968 = vmax.f32 %v6456, 0.0
        %v6969 = vmax.f32 %v6457, 0.0
        %v6970 = vmax.f32 %v6458, 0.0
        %v6971 = vmax.f32 %v6459, 0.0
        %v6972 = vmax.f32 %v6460, 0.0
        %v6973 = vmax.f32 %v6461, 0.0
        %v6974 = vmax.f32 %v6462, 0.0
        %v6975 = vmax.f32 %v6463, 0.0
        %v6976 = vmax.f32 %v6464, 0.0
        %v6977 = vmax.f32 %v6465, 0.0
        %v6978 = vmax.f32 %v6466, 0.0
        %v6979 = vmax.f32 %v6467, 0.0
        %v6980 = vmax.f32 %v6468, 0.0
        %v6981 = vmax.f32 %v6469, 0.0
        %v6982 = vmax.f32 %v6470, 0.0
        %v6983 = vmax.f32 %v6471, 0.0
        %v6984 = vmax.f32 %v6472, 0.0
        %v6985 = vmax.f32 %v6473, 0.0
        %v6986 = vmax.f32 %v6474, 0.0
        %v6987 = vmax.f32 %v6475, 0.0
        %v6988 = vmax.f32 %v6476, 0.0
        %v6989 = vmax.f32 %v6477, 0.0
        %v6990 = vmax.f32 %v6478, 0.0
        %v6991 = vmax.f32 %v6479, 0.0
        %v6992 = vmax.f32 %v6480, 0.0
        %v6993 = vmax.f32 %v6481, 0.0
        %v6994 = vmax.f32 %v6482, 0.0
        %v6995 = vmax.f32 %v6483, 0.0
        %v6996 = vmax.f32 %v6484, 0.0
        %v6997 = vmax.f32 %v6485, 0.0
        %v6998 = vmax.f32 %v6486, 0.0
        %v6999 = vmax.f32 %v6487, 0.0
        %v7000 = vmax.f32 %v6488, 0.0
        %v7001 = vmax.f32 %v6489, 0.0
        %v7002 = vmax.f32 %v6490, 0.0
        %v7003 = vmax.f32 %v6491, 0.0
        %v7004 = vmax.f32 %v6492, 0.0
        %v7005 = vmax.f32 %v6493, 0.0
        %v7006 = vmax.f32 %v6494, 0.0
        %v7007 = vmax.f32 %v6495, 0.0
        %v7008 = vmax.f32 %v6496, 0.0
        %v7009 = vmax.f32 %v6497, 0.0
        %v7010 = vmax.f32 %v6498, 0.0
        %v7011 = vmax.f32 %v6499, 0.0
        %v7012 = vmax.f32 %v6500, 0.0
        %v7013 = vmax.f32 %v6501, 0.0
        %v7014 = vmax.f32 %v6502, 0.0
        %v7015 = vmax.f32 %v6503, 0.0
        %v7016 = vmax.f32 %v6504, 0.0
        %v7017 = vmax.f32 %v6505, 0.0
        %v7018 = vmax.f32 %v6506, 0.0
        %v7019 = vmax.f32 %v6507, 0.0
        %v7020 = vmax.f32 %v6508, 0.0
        %v7021 = vmax.f32 %v6509, 0.0
        %v7022 = vmax.f32 %v6510, 0.0
        %v7023 = vmax.f32 %v6511, 0.0
        %v7024 = vmax.f32 %v6512, 0.0
        %v7025 = vmax.f32 %v6513, 0.0
        %v7026 = vmax.f32 %v6514, 0.0
        %v7027 = vmax.f32 %v6515, 0.0
        %v7028 = vmax.f32 %v6516, 0.0
        %v7029 = vmax.f32 %v6517, 0.0
        %v7030 = vmax.f32 %v6518, 0.0
        %v7031 = vmax.f32 %v6519, 0.0
        %v7032 = vmax.f32 %v6520, 0.0
        %v7033 = vmax.f32 %v6521, 0.0
        %v7034 = vmax.f32 %v6522, 0.0
        %v7035 = vmax.f32 %v6523, 0.0
        %v7036 = vmax.f32 %v6524, 0.0
        %v7037 = vmax.f32 %v6525, 0.0
        %v7038 = vmax.f32 %v6526, 0.0
        %v7039 = vmax.f32 %v6527, 0.0
        %v7040 = vmax.f32 %v6528, 0.0
        %v7041 = vmax.f32 %v6529, 0.0
        %v7042 = vmax.f32 %v6530, 0.0
        %v7043 = vmax.f32 %v6531, 0.0
        %v7044 = vmax.f32 %v6532, 0.0
        %v7045 = vmax.f32 %v6533, 0.0
        %v7046 = vmax.f32 %v6534, 0.0
        %v7047 = vmax.f32 %v6535, 0.0
        %v7048 = vmax.f32 %v6536, 0.0
        %v7049 = vmax.f32 %v6537, 0.0
        %v7050 = vmax.f32 %v6538, 0.0
        %v7051 = vmax.f32 %v6539, 0.0
        %v7052 = vmax.f32 %v6540, 0.0
        %v7053 = vmax.f32 %v6541, 0.0
        %v7054 = vmax.f32 %v6542, 0.0
        %v7055 = vmax.f32 %v6543, 0.0
        %v7056 = vmax.f32 %v6544, 0.0
        %v7057 = vmax.f32 %v6545, 0.0
        %v7058 = vmax.f32 %v6546, 0.0
        %v7059 = vmax.f32 %v6547, 0.0
        %v7060 = vmax.f32 %v6548, 0.0
        %v7061 = vmax.f32 %v6549, 0.0
        %v7062 = vmax.f32 %v6550, 0.0
        %v7063 = vmax.f32 %v6551, 0.0
        %v7064 = vmax.f32 %v6552, 0.0
        %v7065 = vmax.f32 %v6553, 0.0
        %v7066 = vmax.f32 %v6554, 0.0
        %v7067 = vmax.f32 %v6555, 0.0
        %v7068 = vmax.f32 %v6556, 0.0
        %v7069 = vmax.f32 %v6557, 0.0
        %v7070 = vmax.f32 %v6558, 0.0
        %v7071 = vmax.f32 %v6559, 0.0
        %v7072 = vmax.f32 %v6560, 0.0
        %v7073 = vmax.f32 %v6561, 0.0
        %v7074 = vmax.f32 %v6562, 0.0
        %v7075 = vmax.f32 %v6563, 0.0
        %v7076 = vmax.f32 %v6564, 0.0
        %v7077 = vmax.f32 %v6565, 0.0
        %v7078 = vmax.f32 %v6566, 0.0
        %v7079 = vmax.f32 %v6567, 0.0
        %v7080 = vmax.f32 %v6568, 0.0
        %v7081 = vmax.f32 %v6569, 0.0
        %v7082 = vmax.f32 %v6570, 0.0
        %v7083 = vmax.f32 %v6571, 0.0
        %v7084 = vmax.f32 %v6572, 0.0
        %v7085 = vmax.f32 %v6573, 0.0
        %v7086 = vmax.f32 %v6574, 0.0
        %v7087 = vmax.f32 %v6575, 0.0
        %v7088 = vmax.f32 %v6576, 0.0
        %v7089 = vmax.f32 %v6577, 0.0
        %v7090 = vmax.f32 %v6578, 0.0
        %v7091 = vmax.f32 %v6579, 0.0
        %v7092 = vmax.f32 %v6580, 0.0
        %v7093 = vmax.f32 %v6581, 0.0
        %v7094 = vmax.f32 %v6582, 0.0
        %v7095 = vmax.f32 %v6583, 0.0
        %v7096 = vmax.f32 %v6584, 0.0
        %v7097 = vmax.f32 %v6585, 0.0
        %v7098 = vmax.f32 %v6586, 0.0
        %v7099 = vmax.f32 %v6587, 0.0
        %v7100 = vmax.f32 %v6588, 0.0
        %v7101 = vmax.f32 %v6589, 0.0
        %v7102 = vmax.f32 %v6590, 0.0
        %v7103 = vmax.f32 %v6591, 0.0
        %v7104 = vmax.f32 %v6592, 0.0
        %v7105 = vmax.f32 %v6593, 0.0
        %v7106 = vmax.f32 %v6594, 0.0
        %v7107 = vmax.f32 %v6595, 0.0
        %v7108 = vmax.f32 %v6596, 0.0
        %v7109 = vmax.f32 %v6597, 0.0
        %v7110 = vmax.f32 %v6598, 0.0
        %v7111 = vmax.f32 %v6599, 0.0
        %v7112 = vmax.f32 %v6600, 0.0
        %v7113 = vmax.f32 %v6601, 0.0
        %v7114 = vmax.f32 %v6602, 0.0
        %v7115 = vmax.f32 %v6603, 0.0
        %v7116 = vmax.f32 %v6604, 0.0
        %v7117 = vmax.f32 %v6605, 0.0
        %v7118 = vmax.f32 %v6606, 0.0
        %v7119 = vmax.f32 %v6607, 0.0
        %v7120 = vmax.f32 %v6608, 0.0
        %v7121 = vmax.f32 %v6609, 0.0
        %v7122 = vmax.f32 %v6610, 0.0
        %v7123 = vmax.f32 %v6611, 0.0
        %v7124 = vmax.f32 %v6612, 0.0
        %v7125 = vmax.f32 %v6613, 0.0
        %v7126 = vmax.f32 %v6614, 0.0
        %v7127 = vmax.f32 %v6615, 0.0
        %v7128 = vmax.f32 %v6616, 0.0
        %v7129 = vmax.f32 %v6617, 0.0
        %v7130 = vmax.f32 %v6618, 0.0
        %v7131 = vmax.f32 %v6619, 0.0
        %v7132 = vmax.f32 %v6620, 0.0
        %v7133 = vmax.f32 %v6621, 0.0
        %v7134 = vmax.f32 %v6622, 0.0
        %v7135 = vmax.f32 %v6623, 0.0
        %v7136 = vmax.f32 %v6624, 0.0
        %v7137 = vmax.f32 %v6625, 0.0
        %v7138 = vmax.f32 %v6626, 0.0
        %v7139 = vmax.f32 %v6627, 0.0
        %v7140 = vmax.f32 %v6628, 0.0
        %v7141 = vmax.f32 %v6629, 0.0
        %v7142 = vmax.f32 %v6630, 0.0
        %v7143 = vmax.f32 %v6631, 0.0
        %v7144 = vmax.f32 %v6632, 0.0
        %v7145 = vmax.f32 %v6633, 0.0
        %v7146 = vmax.f32 %v6634, 0.0
        %v7147 = vmax.f32 %v6635, 0.0
        %v7148 = vmax.f32 %v6636, 0.0
        %v7149 = vmax.f32 %v6637, 0.0
        %v7150 = vmax.f32 %v6638, 0.0
        %v7151 = vmax.f32 %v6639, 0.0
        %v7152 = vmax.f32 %v6640, 0.0
        %v7153 = vmax.f32 %v6641, 0.0
        %v7154 = vmax.f32 %v6642, 0.0
        %v7155 = vmax.f32 %v6643, 0.0
        %v7156 = vmax.f32 %v6644, 0.0
        %v7157 = vmax.f32 %v6645, 0.0
        %v7158 = vmax.f32 %v6646, 0.0
        %v7159 = vmax.f32 %v6647, 0.0
        %v7160 = vmax.f32 %v6648, 0.0
        %v7161 = vmax.f32 %v6649, 0.0
        %v7162 = vmax.f32 %v6650, 0.0
        %v7163 = vmax.f32 %v6651, 0.0
        %v7164 = vmax.f32 %v6652, 0.0
        %v7165 = vmax.f32 %v6653, 0.0
        %v7166 = vmax.f32 %v6654, 0.0
        %v7167 = vmax.f32 %v6655, 0.0
        %v7168 = vmax.f32 %v6656, 0.0
        %v7169 = vmax.f32 %v6657, 0.0
        %v7170 = vmax.f32 %v6658, 0.0
        %v7171 = vmax.f32 %v6659, 0.0
        %v7172 = vmax.f32 %v6660, 0.0
        %v7173 = vmax.f32 %v6661, 0.0
        %v7174 = vmax.f32 %v6662, 0.0
        %v7175 = vmax.f32 %v6663, 0.0
        %v7176 = vmax.f32 %v6664, 0.0
        %v7177 = vmax.f32 %v6665, 0.0
        %v7178 = vmax.f32 %v6666, 0.0
        %v7179 = vmax.f32 %v6667, 0.0
        %v7180 = vmax.f32 %v6668, 0.0
        %v7181 = vmax.f32 %v6669, 0.0
        %v7182 = vmax.f32 %v6670, 0.0
        %v7183 = vmax.f32 %v6671, 0.0
        %v7184 = vmax.f32 %v6672, 0.0
        %v7185 = vmax.f32 %v6673, 0.0
        %v7186 = vmax.f32 %v6674, 0.0
        %v7187 = vmax.f32 %v6675, 0.0
        %v7188 = vmax.f32 %v6676, 0.0
        %v7189 = vmax.f32 %v6677, 0.0
        %v7190 = vmax.f32 %v6678, 0.0
        %v7191 = vmax.f32 %v6679, 0.0
        %v7192 = vmax.f32 %v6680, 0.0
        %v7193 = vmax.f32 %v6681, 0.0
        %v7194 = vmax.f32 %v6682, 0.0
        %v7195 = vmax.f32 %v6683, 0.0
        %v7196 = vmax.f32 %v6684, 0.0
        %v7197 = vmax.f32 %v6685, 0.0
        %v7198 = vmax.f32 %v6686, 0.0
        %v7199 = vmax.f32 %v6687, 0.0
        %v7200 = vmax.f32 %v6688, 0.0
        %v7201 = vmax.f32 %v6689, 0.0
        %v7202 = vmax.f32 %v6690, 0.0
        %v7203 = vmax.f32 %v6691, 0.0
        %v7204 = vmax.f32 %v6692, 0.0
        %v7205 = vmax.f32 %v6693, 0.0
        %v7206 = vmax.f32 %v6694, 0.0
        %v7207 = vmax.f32 %v6695, 0.0
        %v7208 = vmax.f32 %v6696, 0.0
        %v7209 = vmax.f32 %v6697, 0.0
        %v7210 = vmax.f32 %v6698, 0.0
        %v7211 = vmax.f32 %v6699, 0.0
        %v7212 = vmax.f32 %v6700, 0.0
        %v7213 = vmax.f32 %v6701, 0.0
        %v7214 = vmax.f32 %v6702, 0.0
        %v7215 = vmax.f32 %v6703, 0.0
        %v7216 = vmax.f32 %v6704, 0.0
        %v7217 = vmax.f32 %v6705, 0.0
        %v7218 = vmax.f32 %v6706, 0.0
        %v7219 = vmax.f32 %v6707, 0.0
        %v7220 = vmax.f32 %v6708, 0.0
        %v7221 = vmax.f32 %v6709, 0.0
        %v7222 = vmax.f32 %v6710, 0.0
        %v7223 = vmax.f32 %v6711, 0.0
        %v7224 = vmax.f32 %v6712, 0.0
        %v7225 = vmax.f32 %v6713, 0.0
        %v7226 = vmax.f32 %v6714, 0.0
        %v7227 = vmax.f32 %v6715, 0.0
        %v7228 = vmax.f32 %v6716, 0.0
        %v7229 = vmax.f32 %v6717, 0.0
        %v7230 = vmax.f32 %v6718, 0.0
        %v7231 = vmax.f32 %v6719, 0.0
        %v7232 = vmax.f32 %v6720, 0.0
        %v7233 = vmax.f32 %v6721, 0.0
        %v7234 = vmax.f32 %v6722, 0.0
        %v7235 = vmax.f32 %v6723, 0.0
        %v7236 = vmax.f32 %v6724, 0.0
        %v7237 = vmax.f32 %v6725, 0.0
        %v7238 = vmax.f32 %v6726, 0.0
        %v7239 = vmax.f32 %v6727, 0.0
        %v7240 = vmax.f32 %v6728, 0.0
        %v7241 = vmax.f32 %v6729, 0.0
        %v7242 = vmax.f32 %v6730, 0.0
        %v7243 = vmax.f32 %v6731, 0.0
        %v7244 = vmax.f32 %v6732, 0.0
        %v7245 = vmax.f32 %v6733, 0.0
        %v7246 = vmax.f32 %v6734, 0.0
        %v7247 = vmax.f32 %v6735, 0.0
        %v7248 = vmax.f32 %v6736, 0.0
        %v7249 = vmax.f32 %v6737, 0.0
        %v7250 = vmax.f32 %v6738, 0.0
        %v7251 = vmax.f32 %v6739, 0.0
        %v7252 = vmax.f32 %v6740, 0.0
        %v7253 = vmax.f32 %v6741, 0.0
        %v7254 = vmax.f32 %v6742, 0.0
        %v7255 = vmax.f32 %v6743, 0.0
        %v7256 = vmax.f32 %v6744, 0.0
        %v7257 = vmax.f32 %v6745, 0.0
        %v7258 = vmax.f32 %v6746, 0.0
        %v7259 = vmax.f32 %v6747, 0.0
        %v7260 = vmax.f32 %v6748, 0.0
        %v7261 = vmax.f32 %v6749, 0.0
        %v7262 = vmax.f32 %v6750, 0.0
        %v7263 = vmax.f32 %v6751, 0.0
        %v7264 = vmax.f32 %v6752, 0.0
        %v7265 = vmax.f32 %v6753, 0.0
        %v7266 = vmax.f32 %v6754, 0.0
        %v7267 = vmax.f32 %v6755, 0.0
        %v7268 = vmax.f32 %v6756, 0.0
        %v7269 = vmax.f32 %v6757, 0.0
        %v7270 = vmax.f32 %v6758, 0.0
        %v7271 = vmax.f32 %v6759, 0.0
        %v7272 = vmax.f32 %v6760, 0.0
        %v7273 = vmax.f32 %v6761, 0.0
        %v7274 = vmax.f32 %v6762, 0.0
        %v7275 = vmax.f32 %v6763, 0.0
        %v7276 = vmax.f32 %v6764, 0.0
        %v7277 = vmax.f32 %v6765, 0.0
        %v7278 = vmax.f32 %v6766, 0.0
        %v7279 = vmax.f32 %v6767, 0.0
        %v7280 = vmax.f32 %v6768, 0.0
        %v7281 = vmax.f32 %v6769, 0.0
        %v7282 = vmax.f32 %v6770, 0.0
        %v7283 = vmax.f32 %v6771, 0.0
        %v7284 = vmax.f32 %v6772, 0.0
        %v7285 = vmax.f32 %v6773, 0.0
        %v7286 = vmax.f32 %v6774, 0.0
        %v7287 = vmax.f32 %v6775, 0.0
        %v7288 = vmax.f32 %v6776, 0.0
        %v7289 = vmax.f32 %v6777, 0.0
        %v7290 = vmax.f32 %v6778, 0.0
        %v7291 = vmax.f32 %v6779, 0.0
        %v7292 = vmax.f32 %v6780, 0.0
        %v7293 = vmax.f32 %v6781, 0.0
        %v7294 = vmax.f32 %v6782, 0.0
        %v7295 = vmax.f32 %v6783, 0.0
        %v7296 = vmax.f32 %v6784, 0.0
        %v7297 = vmax.f32 %v6785, 0.0
        %v7298 = vmax.f32 %v6786, 0.0
        %v7299 = vmax.f32 %v6787, 0.0
        %v7300 = vmax.f32 %v6788, 0.0
        %v7301 = vmax.f32 %v6789, 0.0
        %v7302 = vmax.f32 %v6790, 0.0
        %v7303 = vmax.f32 %v6791, 0.0
        %v7304 = vmax.f32 %v6792, 0.0
        %v7305 = vmax.f32 %v6793, 0.0
        %v7306 = vmax.f32 %v6794, 0.0
        %v7307 = vmax.f32 %v6795, 0.0
        %v7308 = vmax.f32 %v6796, 0.0
        %v7309 = vmax.f32 %v6797, 0.0
        %v7310 = vmax.f32 %v6798, 0.0
        %v7311 = vmax.f32 %v6799, 0.0
        %v7312 = vmax.f32 %v6800, 0.0
        %v7313 = vmax.f32 %v6801, 0.0
        %v7314 = vmax.f32 %v6802, 0.0
        %v7315 = vmax.f32 %v6803, 0.0
        %v7316 = vmax.f32 %v6804, 0.0
        %v7317 = vmax.f32 %v6805, 0.0
        %v7318 = vmax.f32 %v6806, 0.0
        %v7319 = vmax.f32 %v6807, 0.0
        %v7320 = vmax.f32 %v6808, 0.0
        %v7321 = vmax.f32 %v6809, 0.0
        %v7322 = vmax.f32 %v6810, 0.0
        %v7323 = vmax.f32 %v6811, 0.0
        %v7324 = vmax.f32 %v6812, 0.0
        %v7325 = vmax.f32 %v6813, 0.0
        %v7326 = vmax.f32 %v6814, 0.0
        %v7327 = vmax.f32 %v6815, 0.0
        %v7328 = vmax.f32 %v6816, 0.0
        %v7329 = vmax.f32 %v6817, 0.0
        %v7330 = vmax.f32 %v6818, 0.0
        %v7331 = vmax.f32 %v6819, 0.0
        %v7332 = vmax.f32 %v6820, 0.0
        %v7333 = vmax.f32 %v6821, 0.0
        %v7334 = vmax.f32 %v6822, 0.0
        %v7335 = vmax.f32 %v6823, 0.0
        %v7336 = vmax.f32 %v6824, 0.0
        %v7337 = vmax.f32 %v6825, 0.0
        %v7338 = vmax.f32 %v6826, 0.0
        %v7339 = vmax.f32 %v6827, 0.0
        %v7340 = vmax.f32 %v6828, 0.0
        %v7341 = vmax.f32 %v6829, 0.0
        %v7342 = vmax.f32 %v6830, 0.0
        %v7343 = vmax.f32 %v6831, 0.0
        %v7344 = vmax.f32 %v6832, 0.0
        %v7345 = vmax.f32 %v6833, 0.0
        %v7346 = vmax.f32 %v6834, 0.0
        %v7347 = vmax.f32 %v6835, 0.0
        %v7348 = vmax.f32 %v6836, 0.0
        %v7349 = vmax.f32 %v6837, 0.0
        %v7350 = vmax.f32 %v6838, 0.0
        %v7351 = vmax.f32 %v6839, 0.0
        %v7352 = vmax.f32 %v6840, 0.0
        %v7353 = vmax.f32 %v6841, 0.0
        %v7354 = vmax.f32 %v6842, 0.0
        %v7355 = vmax.f32 %v6843, 0.0
        %v7356 = vmax.f32 %v6844, 0.0
        %v7357 = vmax.f32 %v6845, 0.0
        %v7358 = vmax.f32 %v6846, 0.0
        %v7359 = vmax.f32 %v6847, 0.0
        %v7360 = vmax.f32 %v6848, 0.0
        %v7361 = vmax.f32 %v6849, 0.0
        %v7362 = vmax.f32 %v6850, 0.0
        %v7363 = vmax.f32 %v6851, 0.0
        %v7364 = vmax.f32 %v6852, 0.0
        %v7365 = vmax.f32 %v6853, 0.0
        %v7366 = vmax.f32 %v6854, 0.0
        %v7367 = vmax.f32 %v6855, 0.0
        %v7368 = vmax.f32 %v6856, 0.0
        %v7369 = vmax.f32 %v6857, 0.0
        %v7370 = vmax.f32 %v6858, 0.0
        %v7371 = vmax.f32 %v6859, 0.0
        %v7372 = vmax.f32 %v6860, 0.0
        %v7373 = vmax.f32 %v6861, 0.0
        %v7374 = vmax.f32 %v6862, 0.0
        %v7375 = vmax.f32 %v6863, 0.0
        %v7376 = vmax.f32 %v6864, 0.0
        %v7377 = vmax.f32 %v6865, 0.0
        %v7378 = vmax.f32 %v6866, 0.0
        %v7379 = vmax.f32 %v6867, 0.0
        %v7380 = vmax.f32 %v6868, 0.0
        %v7381 = vmax.f32 %v6869, 0.0
        %v7382 = vmax.f32 %v6870, 0.0
        %v7383 = vmax.f32 %v6871, 0.0
        %v7384 = vmax.f32 %v6872, 0.0
        %v7385 = vmax.f32 %v6873, 0.0
        %v7386 = vmax.f32 %v6874, 0.0
        %v7387 = vmax.f32 %v6875, 0.0
        %v7388 = vmax.f32 %v6876, 0.0
        %v7389 = vmax.f32 %v6877, 0.0
        %v7390 = vmax.f32 %v6878, 0.0
        %v7391 = vmax.f32 %v6879, 0.0
        %v7392 = vmax.f32 %v6880, 0.0
        %v7393 = vmax.f32 %v6881, 0.0
        %v7394 = vmax.f32 %v6882, 0.0
        %v7395 = vmax.f32 %v6883, 0.0
        %v7396 = vmax.f32 %v6884, 0.0
        %v7397 = vmax.f32 %v6885, 0.0
        %v7398 = vmax.f32 %v6886, 0.0
        %v7399 = vmax.f32 %v6887, 0.0
        %v7400 = vmax.f32 %v6888, 0.0
        %v7401 = vmax.f32 %v6889, 0.0
        %v7402 = vmax.f32 %v6890, 0.0
        %v7403 = vmax.f32 %v6891, 0.0
        %v7404 = vmax.f32 %v6892, 0.0
        %v7405 = vmax.f32 %v6893, 0.0
        %v7406 = vmax.f32 %v6894, 0.0
        %v7407 = vmax.f32 %v6895, 0.0
        %v7408 = vmax.f32 %v6896, 0.0
        %v7409 = vmax.f32 %v6897, 0.0
        %v7410 = vmax.f32 %v6898, 0.0
        %v7411 = vmax.f32 %v6899, 0.0
        %v7412 = vmax.f32 %v6900, 0.0
        %v7413 = vmax.f32 %v6901, 0.0
        %v7414 = vmax.f32 %v6902, 0.0
        %v7415 = vmax.f32 %v6903, 0.0
        %v7416 = vmax.f32 %v6904, 0.0
        %v7417 = vmax.f32 %v6905, 0.0
        %v7418 = vmax.f32 %v6906, 0.0
        %v7419 = vmax.f32 %v6907, 0.0
        %v7420 = vmax.f32 %v6908, 0.0
        %v7421 = vmax.f32 %v6909, 0.0
        %v7422 = vmax.f32 %v6910, 0.0
        %v7423 = vmax.f32 %v6911, 0.0
        %v7424 = vmax.f32 %v6912, 0.0
        %v7425 = vmax.f32 %v6913, 0.0
        %v7426 = vmax.f32 %v6914, 0.0
        %v7427 = vmax.f32 %v6915, 0.0
        %v7428 = vmax.f32 %v6916, 0.0
        %v7429 = vmax.f32 %v6917, 0.0
        %v7430 = vmax.f32 %v6918, 0.0
        %v7431 = vmax.f32 %v6919, 0.0
        %v7432 = vmax.f32 %v6920, 0.0
        %v7433 = vmax.f32 %v6921, 0.0
        %v7434 = vmax.f32 %v6922, 0.0
        %v7435 = vmax.f32 %v6923, 0.0
        %v7436 = vmax.f32 %v6924, 0.0
        %v7437 = vmax.f32 %v6925, 0.0
        %v7438 = vmax.f32 %v6926, 0.0
        %v7439 = vmax.f32 %v6927, 0.0
        %v7440 = vmax.f32 %v6928, 0.0
        %v7441 = vmax.f32 %v6929, 0.0
        %v7442 = vmax.f32 %v6930, 0.0
        %v7443 = vmax.f32 %v6931, 0.0
        %v7444 = vmax.f32 %v6932, 0.0
        %v7445 = vmax.f32 %v6933, 0.0
        %v7446 = vmax.f32 %v6934, 0.0
        %v7447 = vmax.f32 %v6935, 0.0
        %v7448 = vld [vmem:[%s4] sm:$0xff]
        %v7449 = vld [vmem:[%s4 + $0x8] sm:$0xff]
        %v7450 = vld [vmem:[%s4 + $0x10] sm:$0xff]
        %v7451 = vld [vmem:[%s4 + $0x18] sm:$0xff]
        %v7452 = vld [vmem:[%s4 + $0x20] sm:$0xff]
        %v7453 = vld [vmem:[%s4 + $0x28] sm:$0xff]
        %v7454 = vld [vmem:[%s4 + $0x30] sm:$0xff]
        %v7455 = vld [vmem:[%s4 + $0x38] sm:$0xff]
        %v7456 = vld [vmem:[%s4 + $0x40] sm:$0xff]
        %v7457 = vld [vmem:[%s4 + $0x48] sm:$0xff]
        %v7458 = vld [vmem:[%s4 + $0x50] sm:$0xff]
        %v7459 = vld [vmem:[%s4 + $0x58] sm:$0xff]
        %v7460 = vld [vmem:[%s4 + $0x60] sm:$0xff]
        %v7461 = vld [vmem:[%s4 + $0x68] sm:$0xff]
        %v7462 = vld [vmem:[%s4 + $0x70] sm:$0xff]
        %v7463 = vld [vmem:[%s4 + $0x78] sm:$0xff]
        %v7464 = vld [vmem:[%s4 + $0x80] sm:$0xff]
        %v7465 = vld [vmem:[%s4 + $0x88] sm:$0xff]
        %v7466 = vld [vmem:[%s4 + $0x90] sm:$0xff]
        %v7467 = vld [vmem:[%s4 + $0x98] sm:$0xff]
        %v7468 = vld [vmem:[%s4 + $0xa0] sm:$0xff]
        %v7469 = vld [vmem:[%s4 + $0xa8] sm:$0xff]
        %v7470 = vld [vmem:[%s4 + $0xb0] sm:$0xff]
        %v7471 = vld [vmem:[%s4 + $0xb8] sm:$0xff]
        %v7472 = vld [vmem:[%s4 + $0xc0] sm:$0xff]
        %v7473 = vld [vmem:[%s4 + $0xc8] sm:$0xff]
        %v7474 = vld [vmem:[%s4 + $0xd0] sm:$0xff]
        %v7475 = vld [vmem:[%s4 + $0xd8] sm:$0xff]
        %v7476 = vld [vmem:[%s4 + $0xe0] sm:$0xff]
        %v7477 = vld [vmem:[%s4 + $0xe8] sm:$0xff]
        %v7478 = vld [vmem:[%s4 + $0xf0] sm:$0xff]
        %v7479 = vld [vmem:[%s4 + $0xf8] sm:$0xff]
        %v7480 = vld [vmem:[%s4 + $0x100] sm:$0xff]
        %v7481 = vld [vmem:[%s4 + $0x108] sm:$0xff]
        %v7482 = vld [vmem:[%s4 + $0x110] sm:$0xff]
        %v7483 = vld [vmem:[%s4 + $0x118] sm:$0xff]
        %v7484 = vld [vmem:[%s4 + $0x120] sm:$0xff]
        %v7485 = vld [vmem:[%s4 + $0x128] sm:$0xff]
        %v7486 = vld [vmem:[%s4 + $0x130] sm:$0xff]
        %v7487 = vld [vmem:[%s4 + $0x138] sm:$0xff]
        %v7488 = vld [vmem:[%s4 + $0x140] sm:$0xff]
        %v7489 = vld [vmem:[%s4 + $0x148] sm:$0xff]
        %v7490 = vld [vmem:[%s4 + $0x150] sm:$0xff]
        %v7491 = vld [vmem:[%s4 + $0x158] sm:$0xff]
        %v7492 = vld [vmem:[%s4 + $0x160] sm:$0xff]
        %v7493 = vld [vmem:[%s4 + $0x168] sm:$0xff]
        %v7494 = vld [vmem:[%s4 + $0x170] sm:$0xff]
        %v7495 = vld [vmem:[%s4 + $0x178] sm:$0xff]
        %v7496 = vld [vmem:[%s4 + $0x180] sm:$0xff]
        %v7497 = vld [vmem:[%s4 + $0x188] sm:$0xff]
        %v7498 = vld [vmem:[%s4 + $0x190] sm:$0xff]
        %v7499 = vld [vmem:[%s4 + $0x198] sm:$0xff]
        %v7500 = vld [vmem:[%s4 + $0x1a0] sm:$0xff]
        %v7501 = vld [vmem:[%s4 + $0x1a8] sm:$0xff]
        %v7502 = vld [vmem:[%s4 + $0x1b0] sm:$0xff]
        %v7503 = vld [vmem:[%s4 + $0x1b8] sm:$0xff]
        %v7504 = vld [vmem:[%s4 + $0x1c0] sm:$0xff]
        %v7505 = vld [vmem:[%s4 + $0x1c8] sm:$0xff]
        %v7506 = vld [vmem:[%s4 + $0x1d0] sm:$0xff]
        %v7507 = vld [vmem:[%s4 + $0x1d8] sm:$0xff]
        %v7508 = vld [vmem:[%s4 + $0x1e0] sm:$0xff]
        %v7509 = vld [vmem:[%s4 + $0x1e8] sm:$0xff]
        %v7510 = vld [vmem:[%s4 + $0x1f0] sm:$0xff]
        %v7511 = vld [vmem:[%s4 + $0x1f8] sm:$0xff]
        %v7512 = vld [vmem:[%s4 + $0x200] sm:$0xff]
        %v7513 = vld [vmem:[%s4 + $0x208] sm:$0xff]
        %v7514 = vld [vmem:[%s4 + $0x210] sm:$0xff]
        %v7515 = vld [vmem:[%s4 + $0x218] sm:$0xff]
        %v7516 = vld [vmem:[%s4 + $0x220] sm:$0xff]
        %v7517 = vld [vmem:[%s4 + $0x228] sm:$0xff]
        %v7518 = vld [vmem:[%s4 + $0x230] sm:$0xff]
        %v7519 = vld [vmem:[%s4 + $0x238] sm:$0xff]
        %v7520 = vld [vmem:[%s4 + $0x240] sm:$0xff]
        %v7521 = vld [vmem:[%s4 + $0x248] sm:$0xff]
        %v7522 = vld [vmem:[%s4 + $0x250] sm:$0xff]
        %v7523 = vld [vmem:[%s4 + $0x258] sm:$0xff]
        %v7524 = vld [vmem:[%s4 + $0x260] sm:$0xff]
        %v7525 = vld [vmem:[%s4 + $0x268] sm:$0xff]
        %v7526 = vld [vmem:[%s4 + $0x270] sm:$0xff]
        %v7527 = vld [vmem:[%s4 + $0x278] sm:$0xff]
        %v7528 = vld [vmem:[%s4 + $0x280] sm:$0xff]
        %v7529 = vld [vmem:[%s4 + $0x288] sm:$0xff]
        %v7530 = vld [vmem:[%s4 + $0x290] sm:$0xff]
        %v7531 = vld [vmem:[%s4 + $0x298] sm:$0xff]
        %v7532 = vld [vmem:[%s4 + $0x2a0] sm:$0xff]
        %v7533 = vld [vmem:[%s4 + $0x2a8] sm:$0xff]
        %v7534 = vld [vmem:[%s4 + $0x2b0] sm:$0xff]
        %v7535 = vld [vmem:[%s4 + $0x2b8] sm:$0xff]
        %v7536 = vld [vmem:[%s4 + $0x2c0] sm:$0xff]
        %v7537 = vld [vmem:[%s4 + $0x2c8] sm:$0xff]
        %v7538 = vld [vmem:[%s4 + $0x2d0] sm:$0xff]
        %v7539 = vld [vmem:[%s4 + $0x2d8] sm:$0xff]
        %v7540 = vld [vmem:[%s4 + $0x2e0] sm:$0xff]
        %v7541 = vld [vmem:[%s4 + $0x2e8] sm:$0xff]
        %v7542 = vld [vmem:[%s4 + $0x2f0] sm:$0xff]
        %v7543 = vld [vmem:[%s4 + $0x2f8] sm:$0xff]
        %v7544 = vld [vmem:[%s4 + $0x300] sm:$0xff]
        %v7545 = vld [vmem:[%s4 + $0x308] sm:$0xff]
        %v7546 = vld [vmem:[%s4 + $0x310] sm:$0xff]
        %v7547 = vld [vmem:[%s4 + $0x318] sm:$0xff]
        %v7548 = vld [vmem:[%s4 + $0x320] sm:$0xff]
        %v7549 = vld [vmem:[%s4 + $0x328] sm:$0xff]
        %v7550 = vld [vmem:[%s4 + $0x330] sm:$0xff]
        %v7551 = vld [vmem:[%s4 + $0x338] sm:$0xff]
        %v7552 = vld [vmem:[%s4 + $0x340] sm:$0xff]
        %v7553 = vld [vmem:[%s4 + $0x348] sm:$0xff]
        %v7554 = vld [vmem:[%s4 + $0x350] sm:$0xff]
        %v7555 = vld [vmem:[%s4 + $0x358] sm:$0xff]
        %v7556 = vld [vmem:[%s4 + $0x360] sm:$0xff]
        %v7557 = vld [vmem:[%s4 + $0x368] sm:$0xff]
        %v7558 = vld [vmem:[%s4 + $0x370] sm:$0xff]
        %v7559 = vld [vmem:[%s4 + $0x378] sm:$0xff]
        %v7560 = vld [vmem:[%s4 + $0x380] sm:$0xff]
        %v7561 = vld [vmem:[%s4 + $0x388] sm:$0xff]
        %v7562 = vld [vmem:[%s4 + $0x390] sm:$0xff]
        %v7563 = vld [vmem:[%s4 + $0x398] sm:$0xff]
        %v7564 = vld [vmem:[%s4 + $0x3a0] sm:$0xff]
        %v7565 = vld [vmem:[%s4 + $0x3a8] sm:$0xff]
        %v7566 = vld [vmem:[%s4 + $0x3b0] sm:$0xff]
        %v7567 = vld [vmem:[%s4 + $0x3b8] sm:$0xff]
        %v7568 = vld [vmem:[%s4 + $0x3c0] sm:$0xff]
        %v7569 = vld [vmem:[%s4 + $0x3c8] sm:$0xff]
        %v7570 = vld [vmem:[%s4 + $0x3d0] sm:$0xff]
        %v7571 = vld [vmem:[%s4 + $0x3d8] sm:$0xff]
        %v7572 = vld [vmem:[%s4 + $0x3e0] sm:$0xff]
        %v7573 = vld [vmem:[%s4 + $0x3e8] sm:$0xff]
        %v7574 = vld [vmem:[%s4 + $0x3f0] sm:$0xff]
        %v7575 = vld [vmem:[%s4 + $0x3f8] sm:$0xff]
        %v7576 = vld [vmem:[%s4 + $0x400] sm:$0xff]
        %v7577 = vld [vmem:[%s4 + $0x408] sm:$0xff]
        %v7578 = vld [vmem:[%s4 + $0x410] sm:$0xff]
        %v7579 = vld [vmem:[%s4 + $0x418] sm:$0xff]
        %v7580 = vld [vmem:[%s4 + $0x420] sm:$0xff]
        %v7581 = vld [vmem:[%s4 + $0x428] sm:$0xff]
        %v7582 = vld [vmem:[%s4 + $0x430] sm:$0xff]
        %v7583 = vld [vmem:[%s4 + $0x438] sm:$0xff]
        %v7584 = vld [vmem:[%s4 + $0x440] sm:$0xff]
        %v7585 = vld [vmem:[%s4 + $0x448] sm:$0xff]
        %v7586 = vld [vmem:[%s4 + $0x450] sm:$0xff]
        %v7587 = vld [vmem:[%s4 + $0x458] sm:$0xff]
        %v7588 = vld [vmem:[%s4 + $0x460] sm:$0xff]
        %v7589 = vld [vmem:[%s4 + $0x468] sm:$0xff]
        %v7590 = vld [vmem:[%s4 + $0x470] sm:$0xff]
        %v7591 = vld [vmem:[%s4 + $0x478] sm:$0xff]
        %v7592 = vld [vmem:[%s4 + $0x480] sm:$0xff]
        %v7593 = vld [vmem:[%s4 + $0x488] sm:$0xff]
        %v7594 = vld [vmem:[%s4 + $0x490] sm:$0xff]
        %v7595 = vld [vmem:[%s4 + $0x498] sm:$0xff]
        %v7596 = vld [vmem:[%s4 + $0x4a0] sm:$0xff]
        %v7597 = vld [vmem:[%s4 + $0x4a8] sm:$0xff]
        %v7598 = vld [vmem:[%s4 + $0x4b0] sm:$0xff]
        %v7599 = vld [vmem:[%s4 + $0x4b8] sm:$0xff]
        %v7600 = vld [vmem:[%s4 + $0x4c0] sm:$0xff]
        %v7601 = vld [vmem:[%s4 + $0x4c8] sm:$0xff]
        %v7602 = vld [vmem:[%s4 + $0x4d0] sm:$0xff]
        %v7603 = vld [vmem:[%s4 + $0x4d8] sm:$0xff]
        %v7604 = vld [vmem:[%s4 + $0x4e0] sm:$0xff]
        %v7605 = vld [vmem:[%s4 + $0x4e8] sm:$0xff]
        %v7606 = vld [vmem:[%s4 + $0x4f0] sm:$0xff]
        %v7607 = vld [vmem:[%s4 + $0x4f8] sm:$0xff]
        %v7608 = vld [vmem:[%s4 + $0x500] sm:$0xff]
        %v7609 = vld [vmem:[%s4 + $0x508] sm:$0xff]
        %v7610 = vld [vmem:[%s4 + $0x510] sm:$0xff]
        %v7611 = vld [vmem:[%s4 + $0x518] sm:$0xff]
        %v7612 = vld [vmem:[%s4 + $0x520] sm:$0xff]
        %v7613 = vld [vmem:[%s4 + $0x528] sm:$0xff]
        %v7614 = vld [vmem:[%s4 + $0x530] sm:$0xff]
        %v7615 = vld [vmem:[%s4 + $0x538] sm:$0xff]
        %v7616 = vld [vmem:[%s4 + $0x540] sm:$0xff]
        %v7617 = vld [vmem:[%s4 + $0x548] sm:$0xff]
        %v7618 = vld [vmem:[%s4 + $0x550] sm:$0xff]
        %v7619 = vld [vmem:[%s4 + $0x558] sm:$0xff]
        %v7620 = vld [vmem:[%s4 + $0x560] sm:$0xff]
        %v7621 = vld [vmem:[%s4 + $0x568] sm:$0xff]
        %v7622 = vld [vmem:[%s4 + $0x570] sm:$0xff]
        %v7623 = vld [vmem:[%s4 + $0x578] sm:$0xff]
        %v7624 = vld [vmem:[%s4 + $0x580] sm:$0xff]
        %v7625 = vld [vmem:[%s4 + $0x588] sm:$0xff]
        %v7626 = vld [vmem:[%s4 + $0x590] sm:$0xff]
        %v7627 = vld [vmem:[%s4 + $0x598] sm:$0xff]
        %v7628 = vld [vmem:[%s4 + $0x5a0] sm:$0xff]
        %v7629 = vld [vmem:[%s4 + $0x5a8] sm:$0xff]
        %v7630 = vld [vmem:[%s4 + $0x5b0] sm:$0xff]
        %v7631 = vld [vmem:[%s4 + $0x5b8] sm:$0xff]
        %v7632 = vld [vmem:[%s4 + $0x5c0] sm:$0xff]
        %v7633 = vld [vmem:[%s4 + $0x5c8] sm:$0xff]
        %v7634 = vld [vmem:[%s4 + $0x5d0] sm:$0xff]
        %v7635 = vld [vmem:[%s4 + $0x5d8] sm:$0xff]
        %v7636 = vld [vmem:[%s4 + $0x5e0] sm:$0xff]
        %v7637 = vld [vmem:[%s4 + $0x5e8] sm:$0xff]
        %v7638 = vld [vmem:[%s4 + $0x5f0] sm:$0xff]
        %v7639 = vld [vmem:[%s4 + $0x5f8] sm:$0xff]
        %v7640 = vld [vmem:[%s4 + $0x600] sm:$0xff]
        %v7641 = vld [vmem:[%s4 + $0x608] sm:$0xff]
        %v7642 = vld [vmem:[%s4 + $0x610] sm:$0xff]
        %v7643 = vld [vmem:[%s4 + $0x618] sm:$0xff]
        %v7644 = vld [vmem:[%s4 + $0x620] sm:$0xff]
        %v7645 = vld [vmem:[%s4 + $0x628] sm:$0xff]
        %v7646 = vld [vmem:[%s4 + $0x630] sm:$0xff]
        %v7647 = vld [vmem:[%s4 + $0x638] sm:$0xff]
        %v7648 = vld [vmem:[%s4 + $0x640] sm:$0xff]
        %v7649 = vld [vmem:[%s4 + $0x648] sm:$0xff]
        %v7650 = vld [vmem:[%s4 + $0x650] sm:$0xff]
        %v7651 = vld [vmem:[%s4 + $0x658] sm:$0xff]
        %v7652 = vld [vmem:[%s4 + $0x660] sm:$0xff]
        %v7653 = vld [vmem:[%s4 + $0x668] sm:$0xff]
        %v7654 = vld [vmem:[%s4 + $0x670] sm:$0xff]
        %v7655 = vld [vmem:[%s4 + $0x678] sm:$0xff]
        %v7656 = vld [vmem:[%s4 + $0x680] sm:$0xff]
        %v7657 = vld [vmem:[%s4 + $0x688] sm:$0xff]
        %v7658 = vld [vmem:[%s4 + $0x690] sm:$0xff]
        %v7659 = vld [vmem:[%s4 + $0x698] sm:$0xff]
        %v7660 = vld [vmem:[%s4 + $0x6a0] sm:$0xff]
        %v7661 = vld [vmem:[%s4 + $0x6a8] sm:$0xff]
        %v7662 = vld [vmem:[%s4 + $0x6b0] sm:$0xff]
        %v7663 = vld [vmem:[%s4 + $0x6b8] sm:$0xff]
        %v7664 = vld [vmem:[%s4 + $0x6c0] sm:$0xff]
        %v7665 = vld [vmem:[%s4 + $0x6c8] sm:$0xff]
        %v7666 = vld [vmem:[%s4 + $0x6d0] sm:$0xff]
        %v7667 = vld [vmem:[%s4 + $0x6d8] sm:$0xff]
        %v7668 = vld [vmem:[%s4 + $0x6e0] sm:$0xff]
        %v7669 = vld [vmem:[%s4 + $0x6e8] sm:$0xff]
        %v7670 = vld [vmem:[%s4 + $0x6f0] sm:$0xff]
        %v7671 = vld [vmem:[%s4 + $0x6f8] sm:$0xff]
        %v7672 = vld [vmem:[%s4 + $0x700] sm:$0xff]
        %v7673 = vld [vmem:[%s4 + $0x708] sm:$0xff]
        %v7674 = vld [vmem:[%s4 + $0x710] sm:$0xff]
        %v7675 = vld [vmem:[%s4 + $0x718] sm:$0xff]
        %v7676 = vld [vmem:[%s4 + $0x720] sm:$0xff]
        %v7677 = vld [vmem:[%s4 + $0x728] sm:$0xff]
        %v7678 = vld [vmem:[%s4 + $0x730] sm:$0xff]
        %v7679 = vld [vmem:[%s4 + $0x738] sm:$0xff]
        %v7680 = vld [vmem:[%s4 + $0x740] sm:$0xff]
        %v7681 = vld [vmem:[%s4 + $0x748] sm:$0xff]
        %v7682 = vld [vmem:[%s4 + $0x750] sm:$0xff]
        %v7683 = vld [vmem:[%s4 + $0x758] sm:$0xff]
        %v7684 = vld [vmem:[%s4 + $0x760] sm:$0xff]
        %v7685 = vld [vmem:[%s4 + $0x768] sm:$0xff]
        %v7686 = vld [vmem:[%s4 + $0x770] sm:$0xff]
        %v7687 = vld [vmem:[%s4 + $0x778] sm:$0xff]
        %v7688 = vld [vmem:[%s4 + $0x780] sm:$0xff]
        %v7689 = vld [vmem:[%s4 + $0x788] sm:$0xff]
        %v7690 = vld [vmem:[%s4 + $0x790] sm:$0xff]
        %v7691 = vld [vmem:[%s4 + $0x798] sm:$0xff]
        %v7692 = vld [vmem:[%s4 + $0x7a0] sm:$0xff]
        %v7693 = vld [vmem:[%s4 + $0x7a8] sm:$0xff]
        %v7694 = vld [vmem:[%s4 + $0x7b0] sm:$0xff]
        %v7695 = vld [vmem:[%s4 + $0x7b8] sm:$0xff]
        %v7696 = vld [vmem:[%s4 + $0x7c0] sm:$0xff]
        %v7697 = vld [vmem:[%s4 + $0x7c8] sm:$0xff]
        %v7698 = vld [vmem:[%s4 + $0x7d0] sm:$0xff]
        %v7699 = vld [vmem:[%s4 + $0x7d8] sm:$0xff]
        %v7700 = vld [vmem:[%s4 + $0x7e0] sm:$0xff]
        %v7701 = vld [vmem:[%s4 + $0x7e8] sm:$0xff]
        %v7702 = vld [vmem:[%s4 + $0x7f0] sm:$0xff]
        %v7703 = vld [vmem:[%s4 + $0x7f8] sm:$0xff]
        %7705 = vset.pattern.permute.xlu0 0
        %7706 = vperm.xlu0 %7705, %v7448
        %v7707 = vpop.permute.xlu0 %7706
        %7710 = vset.pattern.permute.xlu0 0
        %7711 = vperm.xlu0 %7710, %v7449
        %v7712 = vpop.permute.xlu0 %7711
        %7715 = vset.pattern.permute.xlu0 0
        %7716 = vperm.xlu0 %7715, %v7450
        %v7717 = vpop.permute.xlu0 %7716
        %7720 = vset.pattern.permute.xlu0 0
        %7721 = vperm.xlu0 %7720, %v7451
        %v7722 = vpop.permute.xlu0 %7721
        %7725 = vset.pattern.permute.xlu0 0
        %7726 = vperm.xlu0 %7725, %v7452
        %v7727 = vpop.permute.xlu0 %7726
        %7730 = vset.pattern.permute.xlu0 0
        %7731 = vperm.xlu0 %7730, %v7453
        %v7732 = vpop.permute.xlu0 %7731
        %7735 = vset.pattern.permute.xlu0 0
        %7736 = vperm.xlu0 %7735, %v7454
        %v7737 = vpop.permute.xlu0 %7736
        %7740 = vset.pattern.permute.xlu0 0
        %7741 = vperm.xlu0 %7740, %v7455
        %v7742 = vpop.permute.xlu0 %7741
        %7745 = vset.pattern.permute.xlu0 0
        %7746 = vperm.xlu0 %7745, %v7456
        %v7747 = vpop.permute.xlu0 %7746
        %7750 = vset.pattern.permute.xlu0 0
        %7751 = vperm.xlu0 %7750, %v7457
        %v7752 = vpop.permute.xlu0 %7751
        %7755 = vset.pattern.permute.xlu0 0
        %7756 = vperm.xlu0 %7755, %v7458
        %v7757 = vpop.permute.xlu0 %7756
        %7760 = vset.pattern.permute.xlu0 0
        %7761 = vperm.xlu0 %7760, %v7459
        %v7762 = vpop.permute.xlu0 %7761
        %7765 = vset.pattern.permute.xlu0 0
        %7766 = vperm.xlu0 %7765, %v7460
        %v7767 = vpop.permute.xlu0 %7766
        %7770 = vset.pattern.permute.xlu0 0
        %7771 = vperm.xlu0 %7770, %v7461
        %v7772 = vpop.permute.xlu0 %7771
        %7775 = vset.pattern.permute.xlu0 0
        %7776 = vperm.xlu0 %7775, %v7462
        %v7777 = vpop.permute.xlu0 %7776
        %7780 = vset.pattern.permute.xlu0 0
        %7781 = vperm.xlu0 %7780, %v7463
        %v7782 = vpop.permute.xlu0 %7781
        %7785 = vset.pattern.permute.xlu0 0
        %7786 = vperm.xlu0 %7785, %v7464
        %v7787 = vpop.permute.xlu0 %7786
        %7790 = vset.pattern.permute.xlu0 0
        %7791 = vperm.xlu0 %7790, %v7465
        %v7792 = vpop.permute.xlu0 %7791
        %7795 = vset.pattern.permute.xlu0 0
        %7796 = vperm.xlu0 %7795, %v7466
        %v7797 = vpop.permute.xlu0 %7796
        %7800 = vset.pattern.permute.xlu0 0
        %7801 = vperm.xlu0 %7800, %v7467
        %v7802 = vpop.permute.xlu0 %7801
        %7805 = vset.pattern.permute.xlu0 0
        %7806 = vperm.xlu0 %7805, %v7468
        %v7807 = vpop.permute.xlu0 %7806
        %7810 = vset.pattern.permute.xlu0 0
        %7811 = vperm.xlu0 %7810, %v7469
        %v7812 = vpop.permute.xlu0 %7811
        %7815 = vset.pattern.permute.xlu0 0
        %7816 = vperm.xlu0 %7815, %v7470
        %v7817 = vpop.permute.xlu0 %7816
        %7820 = vset.pattern.permute.xlu0 0
        %7821 = vperm.xlu0 %7820, %v7471
        %v7822 = vpop.permute.xlu0 %7821
        %7825 = vset.pattern.permute.xlu0 0
        %7826 = vperm.xlu0 %7825, %v7472
        %v7827 = vpop.permute.xlu0 %7826
        %7830 = vset.pattern.permute.xlu0 0
        %7831 = vperm.xlu0 %7830, %v7473
        %v7832 = vpop.permute.xlu0 %7831
        %7835 = vset.pattern.permute.xlu0 0
        %7836 = vperm.xlu0 %7835, %v7474
        %v7837 = vpop.permute.xlu0 %7836
        %7840 = vset.pattern.permute.xlu0 0
        %7841 = vperm.xlu0 %7840, %v7475
        %v7842 = vpop.permute.xlu0 %7841
        %7845 = vset.pattern.permute.xlu0 0
        %7846 = vperm.xlu0 %7845, %v7476
        %v7847 = vpop.permute.xlu0 %7846
        %7850 = vset.pattern.permute.xlu0 0
        %7851 = vperm.xlu0 %7850, %v7477
        %v7852 = vpop.permute.xlu0 %7851
        %7855 = vset.pattern.permute.xlu0 0
        %7856 = vperm.xlu0 %7855, %v7478
        %v7857 = vpop.permute.xlu0 %7856
        %7860 = vset.pattern.permute.xlu0 0
        %7861 = vperm.xlu0 %7860, %v7479
        %v7862 = vpop.permute.xlu0 %7861
        %7865 = vset.pattern.permute.xlu0 0
        %7866 = vperm.xlu0 %7865, %v7480
        %v7867 = vpop.permute.xlu0 %7866
        %7870 = vset.pattern.permute.xlu0 0
        %7871 = vperm.xlu0 %7870, %v7481
        %v7872 = vpop.permute.xlu0 %7871
        %7875 = vset.pattern.permute.xlu0 0
        %7876 = vperm.xlu0 %7875, %v7482
        %v7877 = vpop.permute.xlu0 %7876
        %7880 = vset.pattern.permute.xlu0 0
        %7881 = vperm.xlu0 %7880, %v7483
        %v7882 = vpop.permute.xlu0 %7881
        %7885 = vset.pattern.permute.xlu0 0
        %7886 = vperm.xlu0 %7885, %v7484
        %v7887 = vpop.permute.xlu0 %7886
        %7890 = vset.pattern.permute.xlu0 0
        %7891 = vperm.xlu0 %7890, %v7485
        %v7892 = vpop.permute.xlu0 %7891
        %7895 = vset.pattern.permute.xlu0 0
        %7896 = vperm.xlu0 %7895, %v7486
        %v7897 = vpop.permute.xlu0 %7896
        %7900 = vset.pattern.permute.xlu0 0
        %7901 = vperm.xlu0 %7900, %v7487
        %v7902 = vpop.permute.xlu0 %7901
        %7905 = vset.pattern.permute.xlu0 0
        %7906 = vperm.xlu0 %7905, %v7488
        %v7907 = vpop.permute.xlu0 %7906
        %7910 = vset.pattern.permute.xlu0 0
        %7911 = vperm.xlu0 %7910, %v7489
        %v7912 = vpop.permute.xlu0 %7911
        %7915 = vset.pattern.permute.xlu0 0
        %7916 = vperm.xlu0 %7915, %v7490
        %v7917 = vpop.permute.xlu0 %7916
        %7920 = vset.pattern.permute.xlu0 0
        %7921 = vperm.xlu0 %7920, %v7491
        %v7922 = vpop.permute.xlu0 %7921
        %7925 = vset.pattern.permute.xlu0 0
        %7926 = vperm.xlu0 %7925, %v7492
        %v7927 = vpop.permute.xlu0 %7926
        %7930 = vset.pattern.permute.xlu0 0
        %7931 = vperm.xlu0 %7930, %v7493
        %v7932 = vpop.permute.xlu0 %7931
        %7935 = vset.pattern.permute.xlu0 0
        %7936 = vperm.xlu0 %7935, %v7494
        %v7937 = vpop.permute.xlu0 %7936
        %7940 = vset.pattern.permute.xlu0 0
        %7941 = vperm.xlu0 %7940, %v7495
        %v7942 = vpop.permute.xlu0 %7941
        %7945 = vset.pattern.permute.xlu0 0
        %7946 = vperm.xlu0 %7945, %v7496
        %v7947 = vpop.permute.xlu0 %7946
        %7950 = vset.pattern.permute.xlu0 0
        %7951 = vperm.xlu0 %7950, %v7497
        %v7952 = vpop.permute.xlu0 %7951
        %7955 = vset.pattern.permute.xlu0 0
        %7956 = vperm.xlu0 %7955, %v7498
        %v7957 = vpop.permute.xlu0 %7956
        %7960 = vset.pattern.permute.xlu0 0
        %7961 = vperm.xlu0 %7960, %v7499
        %v7962 = vpop.permute.xlu0 %7961
        %7965 = vset.pattern.permute.xlu0 0
        %7966 = vperm.xlu0 %7965, %v7500
        %v7967 = vpop.permute.xlu0 %7966
        %7970 = vset.pattern.permute.xlu0 0
        %7971 = vperm.xlu0 %7970, %v7501
        %v7972 = vpop.permute.xlu0 %7971
        %7975 = vset.pattern.permute.xlu0 0
        %7976 = vperm.xlu0 %7975, %v7502
        %v7977 = vpop.permute.xlu0 %7976
        %7980 = vset.pattern.permute.xlu0 0
        %7981 = vperm.xlu0 %7980, %v7503
        %v7982 = vpop.permute.xlu0 %7981
        %7985 = vset.pattern.permute.xlu0 0
        %7986 = vperm.xlu0 %7985, %v7504
        %v7987 = vpop.permute.xlu0 %7986
        %7990 = vset.pattern.permute.xlu0 0
        %7991 = vperm.xlu0 %7990, %v7505
        %v7992 = vpop.permute.xlu0 %7991
        %7995 = vset.pattern.permute.xlu0 0
        %7996 = vperm.xlu0 %7995, %v7506
        %v7997 = vpop.permute.xlu0 %7996
        %8000 = vset.pattern.permute.xlu0 0
        %8001 = vperm.xlu0 %8000, %v7507
        %v8002 = vpop.permute.xlu0 %8001
        %8005 = vset.pattern.permute.xlu0 0
        %8006 = vperm.xlu0 %8005, %v7508
        %v8007 = vpop.permute.xlu0 %8006
        %8010 = vset.pattern.permute.xlu0 0
        %8011 = vperm.xlu0 %8010, %v7509
        %v8012 = vpop.permute.xlu0 %8011
        %8015 = vset.pattern.permute.xlu0 0
        %8016 = vperm.xlu0 %8015, %v7510
        %v8017 = vpop.permute.xlu0 %8016
        %8020 = vset.pattern.permute.xlu0 0
        %8021 = vperm.xlu0 %8020, %v7511
        %v8022 = vpop.permute.xlu0 %8021
        %8025 = vset.pattern.permute.xlu0 0
        %8026 = vperm.xlu0 %8025, %v7512
        %v8027 = vpop.permute.xlu0 %8026
        %8030 = vset.pattern.permute.xlu0 0
        %8031 = vperm.xlu0 %8030, %v7513
        %v8032 = vpop.permute.xlu0 %8031
        %8035 = vset.pattern.permute.xlu0 0
        %8036 = vperm.xlu0 %8035, %v7514
        %v8037 = vpop.permute.xlu0 %8036
        %8040 = vset.pattern.permute.xlu0 0
        %8041 = vperm.xlu0 %8040, %v7515
        %v8042 = vpop.permute.xlu0 %8041
        %8045 = vset.pattern.permute.xlu0 0
        %8046 = vperm.xlu0 %8045, %v7516
        %v8047 = vpop.permute.xlu0 %8046
        %8050 = vset.pattern.permute.xlu0 0
        %8051 = vperm.xlu0 %8050, %v7517
        %v8052 = vpop.permute.xlu0 %8051
        %8055 = vset.pattern.permute.xlu0 0
        %8056 = vperm.xlu0 %8055, %v7518
        %v8057 = vpop.permute.xlu0 %8056
        %8060 = vset.pattern.permute.xlu0 0
        %8061 = vperm.xlu0 %8060, %v7519
        %v8062 = vpop.permute.xlu0 %8061
        %8065 = vset.pattern.permute.xlu0 0
        %8066 = vperm.xlu0 %8065, %v7520
        %v8067 = vpop.permute.xlu0 %8066
        %8070 = vset.pattern.permute.xlu0 0
        %8071 = vperm.xlu0 %8070, %v7521
        %v8072 = vpop.permute.xlu0 %8071
        %8075 = vset.pattern.permute.xlu0 0
        %8076 = vperm.xlu0 %8075, %v7522
        %v8077 = vpop.permute.xlu0 %8076
        %8080 = vset.pattern.permute.xlu0 0
        %8081 = vperm.xlu0 %8080, %v7523
        %v8082 = vpop.permute.xlu0 %8081
        %8085 = vset.pattern.permute.xlu0 0
        %8086 = vperm.xlu0 %8085, %v7524
        %v8087 = vpop.permute.xlu0 %8086
        %8090 = vset.pattern.permute.xlu0 0
        %8091 = vperm.xlu0 %8090, %v7525
        %v8092 = vpop.permute.xlu0 %8091
        %8095 = vset.pattern.permute.xlu0 0
        %8096 = vperm.xlu0 %8095, %v7526
        %v8097 = vpop.permute.xlu0 %8096
        %8100 = vset.pattern.permute.xlu0 0
        %8101 = vperm.xlu0 %8100, %v7527
        %v8102 = vpop.permute.xlu0 %8101
        %8105 = vset.pattern.permute.xlu0 0
        %8106 = vperm.xlu0 %8105, %v7528
        %v8107 = vpop.permute.xlu0 %8106
        %8110 = vset.pattern.permute.xlu0 0
        %8111 = vperm.xlu0 %8110, %v7529
        %v8112 = vpop.permute.xlu0 %8111
        %8115 = vset.pattern.permute.xlu0 0
        %8116 = vperm.xlu0 %8115, %v7530
        %v8117 = vpop.permute.xlu0 %8116
        %8120 = vset.pattern.permute.xlu0 0
        %8121 = vperm.xlu0 %8120, %v7531
        %v8122 = vpop.permute.xlu0 %8121
        %8125 = vset.pattern.permute.xlu0 0
        %8126 = vperm.xlu0 %8125, %v7532
        %v8127 = vpop.permute.xlu0 %8126
        %8130 = vset.pattern.permute.xlu0 0
        %8131 = vperm.xlu0 %8130, %v7533
        %v8132 = vpop.permute.xlu0 %8131
        %8135 = vset.pattern.permute.xlu0 0
        %8136 = vperm.xlu0 %8135, %v7534
        %v8137 = vpop.permute.xlu0 %8136
        %8140 = vset.pattern.permute.xlu0 0
        %8141 = vperm.xlu0 %8140, %v7535
        %v8142 = vpop.permute.xlu0 %8141
        %8145 = vset.pattern.permute.xlu0 0
        %8146 = vperm.xlu0 %8145, %v7536
        %v8147 = vpop.permute.xlu0 %8146
        %8150 = vset.pattern.permute.xlu0 0
        %8151 = vperm.xlu0 %8150, %v7537
        %v8152 = vpop.permute.xlu0 %8151
        %8155 = vset.pattern.permute.xlu0 0
        %8156 = vperm.xlu0 %8155, %v7538
        %v8157 = vpop.permute.xlu0 %8156
        %8160 = vset.pattern.permute.xlu0 0
        %8161 = vperm.xlu0 %8160, %v7539
        %v8162 = vpop.permute.xlu0 %8161
        %8165 = vset.pattern.permute.xlu0 0
        %8166 = vperm.xlu0 %8165, %v7540
        %v8167 = vpop.permute.xlu0 %8166
        %8170 = vset.pattern.permute.xlu0 0
        %8171 = vperm.xlu0 %8170, %v7541
        %v8172 = vpop.permute.xlu0 %8171
        %8175 = vset.pattern.permute.xlu0 0
        %8176 = vperm.xlu0 %8175, %v7542
        %v8177 = vpop.permute.xlu0 %8176
        %8180 = vset.pattern.permute.xlu0 0
        %8181 = vperm.xlu0 %8180, %v7543
        %v8182 = vpop.permute.xlu0 %8181
        %8185 = vset.pattern.permute.xlu0 0
        %8186 = vperm.xlu0 %8185, %v7544
        %v8187 = vpop.permute.xlu0 %8186
        %8190 = vset.pattern.permute.xlu0 0
        %8191 = vperm.xlu0 %8190, %v7545
        %v8192 = vpop.permute.xlu0 %8191
        %8195 = vset.pattern.permute.xlu0 0
        %8196 = vperm.xlu0 %8195, %v7546
        %v8197 = vpop.permute.xlu0 %8196
        %8200 = vset.pattern.permute.xlu0 0
        %8201 = vperm.xlu0 %8200, %v7547
        %v8202 = vpop.permute.xlu0 %8201
        %8205 = vset.pattern.permute.xlu0 0
        %8206 = vperm.xlu0 %8205, %v7548
        %v8207 = vpop.permute.xlu0 %8206
        %8210 = vset.pattern.permute.xlu0 0
        %8211 = vperm.xlu0 %8210, %v7549
        %v8212 = vpop.permute.xlu0 %8211
        %8215 = vset.pattern.permute.xlu0 0
        %8216 = vperm.xlu0 %8215, %v7550
        %v8217 = vpop.permute.xlu0 %8216
        %8220 = vset.pattern.permute.xlu0 0
        %8221 = vperm.xlu0 %8220, %v7551
        %v8222 = vpop.permute.xlu0 %8221
        %8225 = vset.pattern.permute.xlu0 0
        %8226 = vperm.xlu0 %8225, %v7552
        %v8227 = vpop.permute.xlu0 %8226
        %8230 = vset.pattern.permute.xlu0 0
        %8231 = vperm.xlu0 %8230, %v7553
        %v8232 = vpop.permute.xlu0 %8231
        %8235 = vset.pattern.permute.xlu0 0
        %8236 = vperm.xlu0 %8235, %v7554
        %v8237 = vpop.permute.xlu0 %8236
        %8240 = vset.pattern.permute.xlu0 0
        %8241 = vperm.xlu0 %8240, %v7555
        %v8242 = vpop.permute.xlu0 %8241
        %8245 = vset.pattern.permute.xlu0 0
        %8246 = vperm.xlu0 %8245, %v7556
        %v8247 = vpop.permute.xlu0 %8246
        %8250 = vset.pattern.permute.xlu0 0
        %8251 = vperm.xlu0 %8250, %v7557
        %v8252 = vpop.permute.xlu0 %8251
        %8255 = vset.pattern.permute.xlu0 0
        %8256 = vperm.xlu0 %8255, %v7558
        %v8257 = vpop.permute.xlu0 %8256
        %8260 = vset.pattern.permute.xlu0 0
        %8261 = vperm.xlu0 %8260, %v7559
        %v8262 = vpop.permute.xlu0 %8261
        %8265 = vset.pattern.permute.xlu0 0
        %8266 = vperm.xlu0 %8265, %v7560
        %v8267 = vpop.permute.xlu0 %8266
        %8270 = vset.pattern.permute.xlu0 0
        %8271 = vperm.xlu0 %8270, %v7561
        %v8272 = vpop.permute.xlu0 %8271
        %8275 = vset.pattern.permute.xlu0 0
        %8276 = vperm.xlu0 %8275, %v7562
        %v8277 = vpop.permute.xlu0 %8276
        %8280 = vset.pattern.permute.xlu0 0
        %8281 = vperm.xlu0 %8280, %v7563
        %v8282 = vpop.permute.xlu0 %8281
        %8285 = vset.pattern.permute.xlu0 0
        %8286 = vperm.xlu0 %8285, %v7564
        %v8287 = vpop.permute.xlu0 %8286
        %8290 = vset.pattern.permute.xlu0 0
        %8291 = vperm.xlu0 %8290, %v7565
        %v8292 = vpop.permute.xlu0 %8291
        %8295 = vset.pattern.permute.xlu0 0
        %8296 = vperm.xlu0 %8295, %v7566
        %v8297 = vpop.permute.xlu0 %8296
        %8300 = vset.pattern.permute.xlu0 0
        %8301 = vperm.xlu0 %8300, %v7567
        %v8302 = vpop.permute.xlu0 %8301
        %8305 = vset.pattern.permute.xlu0 0
        %8306 = vperm.xlu0 %8305, %v7568
        %v8307 = vpop.permute.xlu0 %8306
        %8310 = vset.pattern.permute.xlu0 0
        %8311 = vperm.xlu0 %8310, %v7569
        %v8312 = vpop.permute.xlu0 %8311
        %8315 = vset.pattern.permute.xlu0 0
        %8316 = vperm.xlu0 %8315, %v7570
        %v8317 = vpop.permute.xlu0 %8316
        %8320 = vset.pattern.permute.xlu0 0
        %8321 = vperm.xlu0 %8320, %v7571
        %v8322 = vpop.permute.xlu0 %8321
        %8325 = vset.pattern.permute.xlu0 0
        %8326 = vperm.xlu0 %8325, %v7572
        %v8327 = vpop.permute.xlu0 %8326
        %8330 = vset.pattern.permute.xlu0 0
        %8331 = vperm.xlu0 %8330, %v7573
        %v8332 = vpop.permute.xlu0 %8331
        %8335 = vset.pattern.permute.xlu0 0
        %8336 = vperm.xlu0 %8335, %v7574
        %v8337 = vpop.permute.xlu0 %8336
        %8340 = vset.pattern.permute.xlu0 0
        %8341 = vperm.xlu0 %8340, %v7575
        %v8342 = vpop.permute.xlu0 %8341
        %8345 = vset.pattern.permute.xlu0 0
        %8346 = vperm.xlu0 %8345, %v7576
        %v8347 = vpop.permute.xlu0 %8346
        %8350 = vset.pattern.permute.xlu0 0
        %8351 = vperm.xlu0 %8350, %v7577
        %v8352 = vpop.permute.xlu0 %8351
        %8355 = vset.pattern.permute.xlu0 0
        %8356 = vperm.xlu0 %8355, %v7578
        %v8357 = vpop.permute.xlu0 %8356
        %8360 = vset.pattern.permute.xlu0 0
        %8361 = vperm.xlu0 %8360, %v7579
        %v8362 = vpop.permute.xlu0 %8361
        %8365 = vset.pattern.permute.xlu0 0
        %8366 = vperm.xlu0 %8365, %v7580
        %v8367 = vpop.permute.xlu0 %8366
        %8370 = vset.pattern.permute.xlu0 0
        %8371 = vperm.xlu0 %8370, %v7581
        %v8372 = vpop.permute.xlu0 %8371
        %8375 = vset.pattern.permute.xlu0 0
        %8376 = vperm.xlu0 %8375, %v7582
        %v8377 = vpop.permute.xlu0 %8376
        %8380 = vset.pattern.permute.xlu0 0
        %8381 = vperm.xlu0 %8380, %v7583
        %v8382 = vpop.permute.xlu0 %8381
        %8385 = vset.pattern.permute.xlu0 0
        %8386 = vperm.xlu0 %8385, %v7584
        %v8387 = vpop.permute.xlu0 %8386
        %8390 = vset.pattern.permute.xlu0 0
        %8391 = vperm.xlu0 %8390, %v7585
        %v8392 = vpop.permute.xlu0 %8391
        %8395 = vset.pattern.permute.xlu0 0
        %8396 = vperm.xlu0 %8395, %v7586
        %v8397 = vpop.permute.xlu0 %8396
        %8400 = vset.pattern.permute.xlu0 0
        %8401 = vperm.xlu0 %8400, %v7587
        %v8402 = vpop.permute.xlu0 %8401
        %8405 = vset.pattern.permute.xlu0 0
        %8406 = vperm.xlu0 %8405, %v7588
        %v8407 = vpop.permute.xlu0 %8406
        %8410 = vset.pattern.permute.xlu0 0
        %8411 = vperm.xlu0 %8410, %v7589
        %v8412 = vpop.permute.xlu0 %8411
        %8415 = vset.pattern.permute.xlu0 0
        %8416 = vperm.xlu0 %8415, %v7590
        %v8417 = vpop.permute.xlu0 %8416
        %8420 = vset.pattern.permute.xlu0 0
        %8421 = vperm.xlu0 %8420, %v7591
        %v8422 = vpop.permute.xlu0 %8421
        %8425 = vset.pattern.permute.xlu0 0
        %8426 = vperm.xlu0 %8425, %v7592
        %v8427 = vpop.permute.xlu0 %8426
        %8430 = vset.pattern.permute.xlu0 0
        %8431 = vperm.xlu0 %8430, %v7593
        %v8432 = vpop.permute.xlu0 %8431
        %8435 = vset.pattern.permute.xlu0 0
        %8436 = vperm.xlu0 %8435, %v7594
        %v8437 = vpop.permute.xlu0 %8436
        %8440 = vset.pattern.permute.xlu0 0
        %8441 = vperm.xlu0 %8440, %v7595
        %v8442 = vpop.permute.xlu0 %8441
        %8445 = vset.pattern.permute.xlu0 0
        %8446 = vperm.xlu0 %8445, %v7596
        %v8447 = vpop.permute.xlu0 %8446
        %8450 = vset.pattern.permute.xlu0 0
        %8451 = vperm.xlu0 %8450, %v7597
        %v8452 = vpop.permute.xlu0 %8451
        %8455 = vset.pattern.permute.xlu0 0
        %8456 = vperm.xlu0 %8455, %v7598
        %v8457 = vpop.permute.xlu0 %8456
        %8460 = vset.pattern.permute.xlu0 0
        %8461 = vperm.xlu0 %8460, %v7599
        %v8462 = vpop.permute.xlu0 %8461
        %8465 = vset.pattern.permute.xlu0 0
        %8466 = vperm.xlu0 %8465, %v7600
        %v8467 = vpop.permute.xlu0 %8466
        %8470 = vset.pattern.permute.xlu0 0
        %8471 = vperm.xlu0 %8470, %v7601
        %v8472 = vpop.permute.xlu0 %8471
        %8475 = vset.pattern.permute.xlu0 0
        %8476 = vperm.xlu0 %8475, %v7602
        %v8477 = vpop.permute.xlu0 %8476
        %8480 = vset.pattern.permute.xlu0 0
        %8481 = vperm.xlu0 %8480, %v7603
        %v8482 = vpop.permute.xlu0 %8481
        %8485 = vset.pattern.permute.xlu0 0
        %8486 = vperm.xlu0 %8485, %v7604
        %v8487 = vpop.permute.xlu0 %8486
        %8490 = vset.pattern.permute.xlu0 0
        %8491 = vperm.xlu0 %8490, %v7605
        %v8492 = vpop.permute.xlu0 %8491
        %8495 = vset.pattern.permute.xlu0 0
        %8496 = vperm.xlu0 %8495, %v7606
        %v8497 = vpop.permute.xlu0 %8496
        %8500 = vset.pattern.permute.xlu0 0
        %8501 = vperm.xlu0 %8500, %v7607
        %v8502 = vpop.permute.xlu0 %8501
        %8505 = vset.pattern.permute.xlu0 0
        %8506 = vperm.xlu0 %8505, %v7608
        %v8507 = vpop.permute.xlu0 %8506
        %8510 = vset.pattern.permute.xlu0 0
        %8511 = vperm.xlu0 %8510, %v7609
        %v8512 = vpop.permute.xlu0 %8511
        %8515 = vset.pattern.permute.xlu0 0
        %8516 = vperm.xlu0 %8515, %v7610
        %v8517 = vpop.permute.xlu0 %8516
        %8520 = vset.pattern.permute.xlu0 0
        %8521 = vperm.xlu0 %8520, %v7611
        %v8522 = vpop.permute.xlu0 %8521
        %8525 = vset.pattern.permute.xlu0 0
        %8526 = vperm.xlu0 %8525, %v7612
        %v8527 = vpop.permute.xlu0 %8526
        %8530 = vset.pattern.permute.xlu0 0
        %8531 = vperm.xlu0 %8530, %v7613
        %v8532 = vpop.permute.xlu0 %8531
        %8535 = vset.pattern.permute.xlu0 0
        %8536 = vperm.xlu0 %8535, %v7614
        %v8537 = vpop.permute.xlu0 %8536
        %8540 = vset.pattern.permute.xlu0 0
        %8541 = vperm.xlu0 %8540, %v7615
        %v8542 = vpop.permute.xlu0 %8541
        %8545 = vset.pattern.permute.xlu0 0
        %8546 = vperm.xlu0 %8545, %v7616
        %v8547 = vpop.permute.xlu0 %8546
        %8550 = vset.pattern.permute.xlu0 0
        %8551 = vperm.xlu0 %8550, %v7617
        %v8552 = vpop.permute.xlu0 %8551
        %8555 = vset.pattern.permute.xlu0 0
        %8556 = vperm.xlu0 %8555, %v7618
        %v8557 = vpop.permute.xlu0 %8556
        %8560 = vset.pattern.permute.xlu0 0
        %8561 = vperm.xlu0 %8560, %v7619
        %v8562 = vpop.permute.xlu0 %8561
        %8565 = vset.pattern.permute.xlu0 0
        %8566 = vperm.xlu0 %8565, %v7620
        %v8567 = vpop.permute.xlu0 %8566
        %8570 = vset.pattern.permute.xlu0 0
        %8571 = vperm.xlu0 %8570, %v7621
        %v8572 = vpop.permute.xlu0 %8571
        %8575 = vset.pattern.permute.xlu0 0
        %8576 = vperm.xlu0 %8575, %v7622
        %v8577 = vpop.permute.xlu0 %8576
        %8580 = vset.pattern.permute.xlu0 0
        %8581 = vperm.xlu0 %8580, %v7623
        %v8582 = vpop.permute.xlu0 %8581
        %8585 = vset.pattern.permute.xlu0 0
        %8586 = vperm.xlu0 %8585, %v7624
        %v8587 = vpop.permute.xlu0 %8586
        %8590 = vset.pattern.permute.xlu0 0
        %8591 = vperm.xlu0 %8590, %v7625
        %v8592 = vpop.permute.xlu0 %8591
        %8595 = vset.pattern.permute.xlu0 0
        %8596 = vperm.xlu0 %8595, %v7626
        %v8597 = vpop.permute.xlu0 %8596
        %8600 = vset.pattern.permute.xlu0 0
        %8601 = vperm.xlu0 %8600, %v7627
        %v8602 = vpop.permute.xlu0 %8601
        %8605 = vset.pattern.permute.xlu0 0
        %8606 = vperm.xlu0 %8605, %v7628
        %v8607 = vpop.permute.xlu0 %8606
        %8610 = vset.pattern.permute.xlu0 0
        %8611 = vperm.xlu0 %8610, %v7629
        %v8612 = vpop.permute.xlu0 %8611
        %8615 = vset.pattern.permute.xlu0 0
        %8616 = vperm.xlu0 %8615, %v7630
        %v8617 = vpop.permute.xlu0 %8616
        %8620 = vset.pattern.permute.xlu0 0
        %8621 = vperm.xlu0 %8620, %v7631
        %v8622 = vpop.permute.xlu0 %8621
        %8625 = vset.pattern.permute.xlu0 0
        %8626 = vperm.xlu0 %8625, %v7632
        %v8627 = vpop.permute.xlu0 %8626
        %8630 = vset.pattern.permute.xlu0 0
        %8631 = vperm.xlu0 %8630, %v7633
        %v8632 = vpop.permute.xlu0 %8631
        %8635 = vset.pattern.permute.xlu0 0
        %8636 = vperm.xlu0 %8635, %v7634
        %v8637 = vpop.permute.xlu0 %8636
        %8640 = vset.pattern.permute.xlu0 0
        %8641 = vperm.xlu0 %8640, %v7635
        %v8642 = vpop.permute.xlu0 %8641
        %8645 = vset.pattern.permute.xlu0 0
        %8646 = vperm.xlu0 %8645, %v7636
        %v8647 = vpop.permute.xlu0 %8646
        %8650 = vset.pattern.permute.xlu0 0
        %8651 = vperm.xlu0 %8650, %v7637
        %v8652 = vpop.permute.xlu0 %8651
        %8655 = vset.pattern.permute.xlu0 0
        %8656 = vperm.xlu0 %8655, %v7638
        %v8657 = vpop.permute.xlu0 %8656
        %8660 = vset.pattern.permute.xlu0 0
        %8661 = vperm.xlu0 %8660, %v7639
        %v8662 = vpop.permute.xlu0 %8661
        %8665 = vset.pattern.permute.xlu0 0
        %8666 = vperm.xlu0 %8665, %v7640
        %v8667 = vpop.permute.xlu0 %8666
        %8670 = vset.pattern.permute.xlu0 0
        %8671 = vperm.xlu0 %8670, %v7641
        %v8672 = vpop.permute.xlu0 %8671
        %8675 = vset.pattern.permute.xlu0 0
        %8676 = vperm.xlu0 %8675, %v7642
        %v8677 = vpop.permute.xlu0 %8676
        %8680 = vset.pattern.permute.xlu0 0
        %8681 = vperm.xlu0 %8680, %v7643
        %v8682 = vpop.permute.xlu0 %8681
        %8685 = vset.pattern.permute.xlu0 0
        %8686 = vperm.xlu0 %8685, %v7644
        %v8687 = vpop.permute.xlu0 %8686
        %8690 = vset.pattern.permute.xlu0 0
        %8691 = vperm.xlu0 %8690, %v7645
        %v8692 = vpop.permute.xlu0 %8691
        %8695 = vset.pattern.permute.xlu0 0
        %8696 = vperm.xlu0 %8695, %v7646
        %v8697 = vpop.permute.xlu0 %8696
        %8700 = vset.pattern.permute.xlu0 0
        %8701 = vperm.xlu0 %8700, %v7647
        %v8702 = vpop.permute.xlu0 %8701
        %8705 = vset.pattern.permute.xlu0 0
        %8706 = vperm.xlu0 %8705, %v7648
        %v8707 = vpop.permute.xlu0 %8706
        %8710 = vset.pattern.permute.xlu0 0
        %8711 = vperm.xlu0 %8710, %v7649
        %v8712 = vpop.permute.xlu0 %8711
        %8715 = vset.pattern.permute.xlu0 0
        %8716 = vperm.xlu0 %8715, %v7650
        %v8717 = vpop.permute.xlu0 %8716
        %8720 = vset.pattern.permute.xlu0 0
        %8721 = vperm.xlu0 %8720, %v7651
        %v8722 = vpop.permute.xlu0 %8721
        %8725 = vset.pattern.permute.xlu0 0
        %8726 = vperm.xlu0 %8725, %v7652
        %v8727 = vpop.permute.xlu0 %8726
        %8730 = vset.pattern.permute.xlu0 0
        %8731 = vperm.xlu0 %8730, %v7653
        %v8732 = vpop.permute.xlu0 %8731
        %8735 = vset.pattern.permute.xlu0 0
        %8736 = vperm.xlu0 %8735, %v7654
        %v8737 = vpop.permute.xlu0 %8736
        %8740 = vset.pattern.permute.xlu0 0
        %8741 = vperm.xlu0 %8740, %v7655
        %v8742 = vpop.permute.xlu0 %8741
        %8745 = vset.pattern.permute.xlu0 0
        %8746 = vperm.xlu0 %8745, %v7656
        %v8747 = vpop.permute.xlu0 %8746
        %8750 = vset.pattern.permute.xlu0 0
        %8751 = vperm.xlu0 %8750, %v7657
        %v8752 = vpop.permute.xlu0 %8751
        %8755 = vset.pattern.permute.xlu0 0
        %8756 = vperm.xlu0 %8755, %v7658
        %v8757 = vpop.permute.xlu0 %8756
        %8760 = vset.pattern.permute.xlu0 0
        %8761 = vperm.xlu0 %8760, %v7659
        %v8762 = vpop.permute.xlu0 %8761
        %8765 = vset.pattern.permute.xlu0 0
        %8766 = vperm.xlu0 %8765, %v7660
        %v8767 = vpop.permute.xlu0 %8766
        %8770 = vset.pattern.permute.xlu0 0
        %8771 = vperm.xlu0 %8770, %v7661
        %v8772 = vpop.permute.xlu0 %8771
        %8775 = vset.pattern.permute.xlu0 0
        %8776 = vperm.xlu0 %8775, %v7662
        %v8777 = vpop.permute.xlu0 %8776
        %8780 = vset.pattern.permute.xlu0 0
        %8781 = vperm.xlu0 %8780, %v7663
        %v8782 = vpop.permute.xlu0 %8781
        %8785 = vset.pattern.permute.xlu0 0
        %8786 = vperm.xlu0 %8785, %v7664
        %v8787 = vpop.permute.xlu0 %8786
        %8790 = vset.pattern.permute.xlu0 0
        %8791 = vperm.xlu0 %8790, %v7665
        %v8792 = vpop.permute.xlu0 %8791
        %8795 = vset.pattern.permute.xlu0 0
        %8796 = vperm.xlu0 %8795, %v7666
        %v8797 = vpop.permute.xlu0 %8796
        %8800 = vset.pattern.permute.xlu0 0
        %8801 = vperm.xlu0 %8800, %v7667
        %v8802 = vpop.permute.xlu0 %8801
        %8805 = vset.pattern.permute.xlu0 0
        %8806 = vperm.xlu0 %8805, %v7668
        %v8807 = vpop.permute.xlu0 %8806
        %8810 = vset.pattern.permute.xlu0 0
        %8811 = vperm.xlu0 %8810, %v7669
        %v8812 = vpop.permute.xlu0 %8811
        %8815 = vset.pattern.permute.xlu0 0
        %8816 = vperm.xlu0 %8815, %v7670
        %v8817 = vpop.permute.xlu0 %8816
        %8820 = vset.pattern.permute.xlu0 0
        %8821 = vperm.xlu0 %8820, %v7671
        %v8822 = vpop.permute.xlu0 %8821
        %8825 = vset.pattern.permute.xlu0 0
        %8826 = vperm.xlu0 %8825, %v7672
        %v8827 = vpop.permute.xlu0 %8826
        %8830 = vset.pattern.permute.xlu0 0
        %8831 = vperm.xlu0 %8830, %v7673
        %v8832 = vpop.permute.xlu0 %8831
        %8835 = vset.pattern.permute.xlu0 0
        %8836 = vperm.xlu0 %8835, %v7674
        %v8837 = vpop.permute.xlu0 %8836
        %8840 = vset.pattern.permute.xlu0 0
        %8841 = vperm.xlu0 %8840, %v7675
        %v8842 = vpop.permute.xlu0 %8841
        %8845 = vset.pattern.permute.xlu0 0
        %8846 = vperm.xlu0 %8845, %v7676
        %v8847 = vpop.permute.xlu0 %8846
        %8850 = vset.pattern.permute.xlu0 0
        %8851 = vperm.xlu0 %8850, %v7677
        %v8852 = vpop.permute.xlu0 %8851
        %8855 = vset.pattern.permute.xlu0 0
        %8856 = vperm.xlu0 %8855, %v7678
        %v8857 = vpop.permute.xlu0 %8856
        %8860 = vset.pattern.permute.xlu0 0
        %8861 = vperm.xlu0 %8860, %v7679
        %v8862 = vpop.permute.xlu0 %8861
        %8865 = vset.pattern.permute.xlu0 0
        %8866 = vperm.xlu0 %8865, %v7680
        %v8867 = vpop.permute.xlu0 %8866
        %8870 = vset.pattern.permute.xlu0 0
        %8871 = vperm.xlu0 %8870, %v7681
        %v8872 = vpop.permute.xlu0 %8871
        %8875 = vset.pattern.permute.xlu0 0
        %8876 = vperm.xlu0 %8875, %v7682
        %v8877 = vpop.permute.xlu0 %8876
        %8880 = vset.pattern.permute.xlu0 0
        %8881 = vperm.xlu0 %8880, %v7683
        %v8882 = vpop.permute.xlu0 %8881
        %8885 = vset.pattern.permute.xlu0 0
        %8886 = vperm.xlu0 %8885, %v7684
        %v8887 = vpop.permute.xlu0 %8886
        %8890 = vset.pattern.permute.xlu0 0
        %8891 = vperm.xlu0 %8890, %v7685
        %v8892 = vpop.permute.xlu0 %8891
        %8895 = vset.pattern.permute.xlu0 0
        %8896 = vperm.xlu0 %8895, %v7686
        %v8897 = vpop.permute.xlu0 %8896
        %8900 = vset.pattern.permute.xlu0 0
        %8901 = vperm.xlu0 %8900, %v7687
        %v8902 = vpop.permute.xlu0 %8901
        %8905 = vset.pattern.permute.xlu0 0
        %8906 = vperm.xlu0 %8905, %v7688
        %v8907 = vpop.permute.xlu0 %8906
        %8910 = vset.pattern.permute.xlu0 0
        %8911 = vperm.xlu0 %8910, %v7689
        %v8912 = vpop.permute.xlu0 %8911
        %8915 = vset.pattern.permute.xlu0 0
        %8916 = vperm.xlu0 %8915, %v7690
        %v8917 = vpop.permute.xlu0 %8916
        %8920 = vset.pattern.permute.xlu0 0
        %8921 = vperm.xlu0 %8920, %v7691
        %v8922 = vpop.permute.xlu0 %8921
        %8925 = vset.pattern.permute.xlu0 0
        %8926 = vperm.xlu0 %8925, %v7692
        %v8927 = vpop.permute.xlu0 %8926
        %8930 = vset.pattern.permute.xlu0 0
        %8931 = vperm.xlu0 %8930, %v7693
        %v8932 = vpop.permute.xlu0 %8931
        %8935 = vset.pattern.permute.xlu0 0
        %8936 = vperm.xlu0 %8935, %v7694
        %v8937 = vpop.permute.xlu0 %8936
        %8940 = vset.pattern.permute.xlu0 0
        %8941 = vperm.xlu0 %8940, %v7695
        %v8942 = vpop.permute.xlu0 %8941
        %8945 = vset.pattern.permute.xlu0 0
        %8946 = vperm.xlu0 %8945, %v7696
        %v8947 = vpop.permute.xlu0 %8946
        %8950 = vset.pattern.permute.xlu0 0
        %8951 = vperm.xlu0 %8950, %v7697
        %v8952 = vpop.permute.xlu0 %8951
        %8955 = vset.pattern.permute.xlu0 0
        %8956 = vperm.xlu0 %8955, %v7698
        %v8957 = vpop.permute.xlu0 %8956
        %8960 = vset.pattern.permute.xlu0 0
        %8961 = vperm.xlu0 %8960, %v7699
        %v8962 = vpop.permute.xlu0 %8961
        %8965 = vset.pattern.permute.xlu0 0
        %8966 = vperm.xlu0 %8965, %v7700
        %v8967 = vpop.permute.xlu0 %8966
        %8970 = vset.pattern.permute.xlu0 0
        %8971 = vperm.xlu0 %8970, %v7701
        %v8972 = vpop.permute.xlu0 %8971
        %8975 = vset.pattern.permute.xlu0 0
        %8976 = vperm.xlu0 %8975, %v7702
        %v8977 = vpop.permute.xlu0 %8976
        %8980 = vset.pattern.permute.xlu0 0
        %8981 = vperm.xlu0 %8980, %v7703
        %v8982 = vpop.permute.xlu0 %8981
        %v8984 = vmul.f32 %v6936, %v7707
        %v8985 = vmul.f32 %v6937, %v7707
        %v8986 = vmul.f32 %v6938, %v7712
        %v8987 = vmul.f32 %v6939, %v7712
        %v8988 = vmul.f32 %v6940, %v7717
        %v8989 = vmul.f32 %v6941, %v7717
        %v8990 = vmul.f32 %v6942, %v7722
        %v8991 = vmul.f32 %v6943, %v7722
        %v8992 = vmul.f32 %v6944, %v7727
        %v8993 = vmul.f32 %v6945, %v7727
        %v8994 = vmul.f32 %v6946, %v7732
        %v8995 = vmul.f32 %v6947, %v7732
        %v8996 = vmul.f32 %v6948, %v7737
        %v8997 = vmul.f32 %v6949, %v7737
        %v8998 = vmul.f32 %v6950, %v7742
        %v8999 = vmul.f32 %v6951, %v7742
        %v9000 = vmul.f32 %v6952, %v7747
        %v9001 = vmul.f32 %v6953, %v7747
        %v9002 = vmul.f32 %v6954, %v7752
        %v9003 = vmul.f32 %v6955, %v7752
        %v9004 = vmul.f32 %v6956, %v7757
        %v9005 = vmul.f32 %v6957, %v7757
        %v9006 = vmul.f32 %v6958, %v7762
        %v9007 = vmul.f32 %v6959, %v7762
        %v9008 = vmul.f32 %v6960, %v7767
        %v9009 = vmul.f32 %v6961, %v7767
        %v9010 = vmul.f32 %v6962, %v7772
        %v9011 = vmul.f32 %v6963, %v7772
        %v9012 = vmul.f32 %v6964, %v7777
        %v9013 = vmul.f32 %v6965, %v7777
        %v9014 = vmul.f32 %v6966, %v7782
        %v9015 = vmul.f32 %v6967, %v7782
        %v9016 = vmul.f32 %v6968, %v7787
        %v9017 = vmul.f32 %v6969, %v7787
        %v9018 = vmul.f32 %v6970, %v7792
        %v9019 = vmul.f32 %v6971, %v7792
        %v9020 = vmul.f32 %v6972, %v7797
        %v9021 = vmul.f32 %v6973, %v7797
        %v9022 = vmul.f32 %v6974, %v7802
        %v9023 = vmul.f32 %v6975, %v7802
        %v9024 = vmul.f32 %v6976, %v7807
        %v9025 = vmul.f32 %v6977, %v7807
        %v9026 = vmul.f32 %v6978, %v7812
        %v9027 = vmul.f32 %v6979, %v7812
        %v9028 = vmul.f32 %v6980, %v7817
        %v9029 = vmul.f32 %v6981, %v7817
        %v9030 = vmul.f32 %v6982, %v7822
        %v9031 = vmul.f32 %v6983, %v7822
        %v9032 = vmul.f32 %v6984, %v7827
        %v9033 = vmul.f32 %v6985, %v7827
        %v9034 = vmul.f32 %v6986, %v7832
        %v9035 = vmul.f32 %v6987, %v7832
        %v9036 = vmul.f32 %v6988, %v7837
        %v9037 = vmul.f32 %v6989, %v7837
        %v9038 = vmul.f32 %v6990, %v7842
        %v9039 = vmul.f32 %v6991, %v7842
        %v9040 = vmul.f32 %v6992, %v7847
        %v9041 = vmul.f32 %v6993, %v7847
        %v9042 = vmul.f32 %v6994, %v7852
        %v9043 = vmul.f32 %v6995, %v7852
        %v9044 = vmul.f32 %v6996, %v7857
        %v9045 = vmul.f32 %v6997, %v7857
        %v9046 = vmul.f32 %v6998, %v7862
        %v9047 = vmul.f32 %v6999, %v7862
        %v9048 = vmul.f32 %v7000, %v7867
        %v9049 = vmul.f32 %v7001, %v7867
        %v9050 = vmul.f32 %v7002, %v7872
        %v9051 = vmul.f32 %v7003, %v7872
        %v9052 = vmul.f32 %v7004, %v7877
        %v9053 = vmul.f32 %v7005, %v7877
        %v9054 = vmul.f32 %v7006, %v7882
        %v9055 = vmul.f32 %v7007, %v7882
        %v9056 = vmul.f32 %v7008, %v7887
        %v9057 = vmul.f32 %v7009, %v7887
        %v9058 = vmul.f32 %v7010, %v7892
        %v9059 = vmul.f32 %v7011, %v7892
        %v9060 = vmul.f32 %v7012, %v7897
        %v9061 = vmul.f32 %v7013, %v7897
        %v9062 = vmul.f32 %v7014, %v7902
        %v9063 = vmul.f32 %v7015, %v7902
        %v9064 = vmul.f32 %v7016, %v7907
        %v9065 = vmul.f32 %v7017, %v7907
        %v9066 = vmul.f32 %v7018, %v7912
        %v9067 = vmul.f32 %v7019, %v7912
        %v9068 = vmul.f32 %v7020, %v7917
        %v9069 = vmul.f32 %v7021, %v7917
        %v9070 = vmul.f32 %v7022, %v7922
        %v9071 = vmul.f32 %v7023, %v7922
        %v9072 = vmul.f32 %v7024, %v7927
        %v9073 = vmul.f32 %v7025, %v7927
        %v9074 = vmul.f32 %v7026, %v7932
        %v9075 = vmul.f32 %v7027, %v7932
        %v9076 = vmul.f32 %v7028, %v7937
        %v9077 = vmul.f32 %v7029, %v7937
        %v9078 = vmul.f32 %v7030, %v7942
        %v9079 = vmul.f32 %v7031, %v7942
        %v9080 = vmul.f32 %v7032, %v7947
        %v9081 = vmul.f32 %v7033, %v7947
        %v9082 = vmul.f32 %v7034, %v7952
        %v9083 = vmul.f32 %v7035, %v7952
        %v9084 = vmul.f32 %v7036, %v7957
        %v9085 = vmul.f32 %v7037, %v7957
        %v9086 = vmul.f32 %v7038, %v7962
        %v9087 = vmul.f32 %v7039, %v7962
        %v9088 = vmul.f32 %v7040, %v7967
        %v9089 = vmul.f32 %v7041, %v7967
        %v9090 = vmul.f32 %v7042, %v7972
        %v9091 = vmul.f32 %v7043, %v7972
        %v9092 = vmul.f32 %v7044, %v7977
        %v9093 = vmul.f32 %v7045, %v7977
        %v9094 = vmul.f32 %v7046, %v7982
        %v9095 = vmul.f32 %v7047, %v7982
        %v9096 = vmul.f32 %v7048, %v7987
        %v9097 = vmul.f32 %v7049, %v7987
        %v9098 = vmul.f32 %v7050, %v7992
        %v9099 = vmul.f32 %v7051, %v7992
        %v9100 = vmul.f32 %v7052, %v7997
        %v9101 = vmul.f32 %v7053, %v7997
        %v9102 = vmul.f32 %v7054, %v8002
        %v9103 = vmul.f32 %v7055, %v8002
        %v9104 = vmul.f32 %v7056, %v8007
        %v9105 = vmul.f32 %v7057, %v8007
        %v9106 = vmul.f32 %v7058, %v8012
        %v9107 = vmul.f32 %v7059, %v8012
        %v9108 = vmul.f32 %v7060, %v8017
        %v9109 = vmul.f32 %v7061, %v8017
        %v9110 = vmul.f32 %v7062, %v8022
        %v9111 = vmul.f32 %v7063, %v8022
        %v9112 = vmul.f32 %v7064, %v8027
        %v9113 = vmul.f32 %v7065, %v8027
        %v9114 = vmul.f32 %v7066, %v8032
        %v9115 = vmul.f32 %v7067, %v8032
        %v9116 = vmul.f32 %v7068, %v8037
        %v9117 = vmul.f32 %v7069, %v8037
        %v9118 = vmul.f32 %v7070, %v8042
        %v9119 = vmul.f32 %v7071, %v8042
        %v9120 = vmul.f32 %v7072, %v8047
        %v9121 = vmul.f32 %v7073, %v8047
        %v9122 = vmul.f32 %v7074, %v8052
        %v9123 = vmul.f32 %v7075, %v8052
        %v9124 = vmul.f32 %v7076, %v8057
        %v9125 = vmul.f32 %v7077, %v8057
        %v9126 = vmul.f32 %v7078, %v8062
        %v9127 = vmul.f32 %v7079, %v8062
        %v9128 = vmul.f32 %v7080, %v8067
        %v9129 = vmul.f32 %v7081, %v8067
        %v9130 = vmul.f32 %v7082, %v8072
        %v9131 = vmul.f32 %v7083, %v8072
        %v9132 = vmul.f32 %v7084, %v8077
        %v9133 = vmul.f32 %v7085, %v8077
        %v9134 = vmul.f32 %v7086, %v8082
        %v9135 = vmul.f32 %v7087, %v8082
        %v9136 = vmul.f32 %v7088, %v8087
        %v9137 = vmul.f32 %v7089, %v8087
        %v9138 = vmul.f32 %v7090, %v8092
        %v9139 = vmul.f32 %v7091, %v8092
        %v9140 = vmul.f32 %v7092, %v8097
        %v9141 = vmul.f32 %v7093, %v8097
        %v9142 = vmul.f32 %v7094, %v8102
        %v9143 = vmul.f32 %v7095, %v8102
        %v9144 = vmul.f32 %v7096, %v8107
        %v9145 = vmul.f32 %v7097, %v8107
        %v9146 = vmul.f32 %v7098, %v8112
        %v9147 = vmul.f32 %v7099, %v8112
        %v9148 = vmul.f32 %v7100, %v8117
        %v9149 = vmul.f32 %v7101, %v8117
        %v9150 = vmul.f32 %v7102, %v8122
        %v9151 = vmul.f32 %v7103, %v8122
        %v9152 = vmul.f32 %v7104, %v8127
        %v9153 = vmul.f32 %v7105, %v8127
        %v9154 = vmul.f32 %v7106, %v8132
        %v9155 = vmul.f32 %v7107, %v8132
        %v9156 = vmul.f32 %v7108, %v8137
        %v9157 = vmul.f32 %v7109, %v8137
        %v9158 = vmul.f32 %v7110, %v8142
        %v9159 = vmul.f32 %v7111, %v8142
        %v9160 = vmul.f32 %v7112, %v8147
        %v9161 = vmul.f32 %v7113, %v8147
        %v9162 = vmul.f32 %v7114, %v8152
        %v9163 = vmul.f32 %v7115, %v8152
        %v9164 = vmul.f32 %v7116, %v8157
        %v9165 = vmul.f32 %v7117, %v8157
        %v9166 = vmul.f32 %v7118, %v8162
        %v9167 = vmul.f32 %v7119, %v8162
        %v9168 = vmul.f32 %v7120, %v8167
        %v9169 = vmul.f32 %v7121, %v8167
        %v9170 = vmul.f32 %v7122, %v8172
        %v9171 = vmul.f32 %v7123, %v8172
        %v9172 = vmul.f32 %v7124, %v8177
        %v9173 = vmul.f32 %v7125, %v8177
        %v9174 = vmul.f32 %v7126, %v8182
        %v9175 = vmul.f32 %v7127, %v8182
        %v9176 = vmul.f32 %v7128, %v8187
        %v9177 = vmul.f32 %v7129, %v8187
        %v9178 = vmul.f32 %v7130, %v8192
        %v9179 = vmul.f32 %v7131, %v8192
        %v9180 = vmul.f32 %v7132, %v8197
        %v9181 = vmul.f32 %v7133, %v8197
        %v9182 = vmul.f32 %v7134, %v8202
        %v9183 = vmul.f32 %v7135, %v8202
        %v9184 = vmul.f32 %v7136, %v8207
        %v9185 = vmul.f32 %v7137, %v8207
        %v9186 = vmul.f32 %v7138, %v8212
        %v9187 = vmul.f32 %v7139, %v8212
        %v9188 = vmul.f32 %v7140, %v8217
        %v9189 = vmul.f32 %v7141, %v8217
        %v9190 = vmul.f32 %v7142, %v8222
        %v9191 = vmul.f32 %v7143, %v8222
        %v9192 = vmul.f32 %v7144, %v8227
        %v9193 = vmul.f32 %v7145, %v8227
        %v9194 = vmul.f32 %v7146, %v8232
        %v9195 = vmul.f32 %v7147, %v8232
        %v9196 = vmul.f32 %v7148, %v8237
        %v9197 = vmul.f32 %v7149, %v8237
        %v9198 = vmul.f32 %v7150, %v8242
        %v9199 = vmul.f32 %v7151, %v8242
        %v9200 = vmul.f32 %v7152, %v8247
        %v9201 = vmul.f32 %v7153, %v8247
        %v9202 = vmul.f32 %v7154, %v8252
        %v9203 = vmul.f32 %v7155, %v8252
        %v9204 = vmul.f32 %v7156, %v8257
        %v9205 = vmul.f32 %v7157, %v8257
        %v9206 = vmul.f32 %v7158, %v8262
        %v9207 = vmul.f32 %v7159, %v8262
        %v9208 = vmul.f32 %v7160, %v8267
        %v9209 = vmul.f32 %v7161, %v8267
        %v9210 = vmul.f32 %v7162, %v8272
        %v9211 = vmul.f32 %v7163, %v8272
        %v9212 = vmul.f32 %v7164, %v8277
        %v9213 = vmul.f32 %v7165, %v8277
        %v9214 = vmul.f32 %v7166, %v8282
        %v9215 = vmul.f32 %v7167, %v8282
        %v9216 = vmul.f32 %v7168, %v8287
        %v9217 = vmul.f32 %v7169, %v8287
        %v9218 = vmul.f32 %v7170, %v8292
        %v9219 = vmul.f32 %v7171, %v8292
        %v9220 = vmul.f32 %v7172, %v8297
        %v9221 = vmul.f32 %v7173, %v8297
        %v9222 = vmul.f32 %v7174, %v8302
        %v9223 = vmul.f32 %v7175, %v8302
        %v9224 = vmul.f32 %v7176, %v8307
        %v9225 = vmul.f32 %v7177, %v8307
        %v9226 = vmul.f32 %v7178, %v8312
        %v9227 = vmul.f32 %v7179, %v8312
        %v9228 = vmul.f32 %v7180, %v8317
        %v9229 = vmul.f32 %v7181, %v8317
        %v9230 = vmul.f32 %v7182, %v8322
        %v9231 = vmul.f32 %v7183, %v8322
        %v9232 = vmul.f32 %v7184, %v8327
        %v9233 = vmul.f32 %v7185, %v8327
        %v9234 = vmul.f32 %v7186, %v8332
        %v9235 = vmul.f32 %v7187, %v8332
        %v9236 = vmul.f32 %v7188, %v8337
        %v9237 = vmul.f32 %v7189, %v8337
        %v9238 = vmul.f32 %v7190, %v8342
        %v9239 = vmul.f32 %v7191, %v8342
        %v9240 = vmul.f32 %v7192, %v8347
        %v9241 = vmul.f32 %v7193, %v8347
        %v9242 = vmul.f32 %v7194, %v8352
        %v9243 = vmul.f32 %v7195, %v8352
        %v9244 = vmul.f32 %v7196, %v8357
        %v9245 = vmul.f32 %v7197, %v8357
        %v9246 = vmul.f32 %v7198, %v8362
        %v9247 = vmul.f32 %v7199, %v8362
        %v9248 = vmul.f32 %v7200, %v8367
        %v9249 = vmul.f32 %v7201, %v8367
        %v9250 = vmul.f32 %v7202, %v8372
        %v9251 = vmul.f32 %v7203, %v8372
        %v9252 = vmul.f32 %v7204, %v8377
        %v9253 = vmul.f32 %v7205, %v8377
        %v9254 = vmul.f32 %v7206, %v8382
        %v9255 = vmul.f32 %v7207, %v8382
        %v9256 = vmul.f32 %v7208, %v8387
        %v9257 = vmul.f32 %v7209, %v8387
        %v9258 = vmul.f32 %v7210, %v8392
        %v9259 = vmul.f32 %v7211, %v8392
        %v9260 = vmul.f32 %v7212, %v8397
        %v9261 = vmul.f32 %v7213, %v8397
        %v9262 = vmul.f32 %v7214, %v8402
        %v9263 = vmul.f32 %v7215, %v8402
        %v9264 = vmul.f32 %v7216, %v8407
        %v9265 = vmul.f32 %v7217, %v8407
        %v9266 = vmul.f32 %v7218, %v8412
        %v9267 = vmul.f32 %v7219, %v8412
        %v9268 = vmul.f32 %v7220, %v8417
        %v9269 = vmul.f32 %v7221, %v8417
        %v9270 = vmul.f32 %v7222, %v8422
        %v9271 = vmul.f32 %v7223, %v8422
        %v9272 = vmul.f32 %v7224, %v8427
        %v9273 = vmul.f32 %v7225, %v8427
        %v9274 = vmul.f32 %v7226, %v8432
        %v9275 = vmul.f32 %v7227, %v8432
        %v9276 = vmul.f32 %v7228, %v8437
        %v9277 = vmul.f32 %v7229, %v8437
        %v9278 = vmul.f32 %v7230, %v8442
        %v9279 = vmul.f32 %v7231, %v8442
        %v9280 = vmul.f32 %v7232, %v8447
        %v9281 = vmul.f32 %v7233, %v8447
        %v9282 = vmul.f32 %v7234, %v8452
        %v9283 = vmul.f32 %v7235, %v8452
        %v9284 = vmul.f32 %v7236, %v8457
        %v9285 = vmul.f32 %v7237, %v8457
        %v9286 = vmul.f32 %v7238, %v8462
        %v9287 = vmul.f32 %v7239, %v8462
        %v9288 = vmul.f32 %v7240, %v8467
        %v9289 = vmul.f32 %v7241, %v8467
        %v9290 = vmul.f32 %v7242, %v8472
        %v9291 = vmul.f32 %v7243, %v8472
        %v9292 = vmul.f32 %v7244, %v8477
        %v9293 = vmul.f32 %v7245, %v8477
        %v9294 = vmul.f32 %v7246, %v8482
        %v9295 = vmul.f32 %v7247, %v8482
        %v9296 = vmul.f32 %v7248, %v8487
        %v9297 = vmul.f32 %v7249, %v8487
        %v9298 = vmul.f32 %v7250, %v8492
        %v9299 = vmul.f32 %v7251, %v8492
        %v9300 = vmul.f32 %v7252, %v8497
        %v9301 = vmul.f32 %v7253, %v8497
        %v9302 = vmul.f32 %v7254, %v8502
        %v9303 = vmul.f32 %v7255, %v8502
        %v9304 = vmul.f32 %v7256, %v8507
        %v9305 = vmul.f32 %v7257, %v8507
        %v9306 = vmul.f32 %v7258, %v8512
        %v9307 = vmul.f32 %v7259, %v8512
        %v9308 = vmul.f32 %v7260, %v8517
        %v9309 = vmul.f32 %v7261, %v8517
        %v9310 = vmul.f32 %v7262, %v8522
        %v9311 = vmul.f32 %v7263, %v8522
        %v9312 = vmul.f32 %v7264, %v8527
        %v9313 = vmul.f32 %v7265, %v8527
        %v9314 = vmul.f32 %v7266, %v8532
        %v9315 = vmul.f32 %v7267, %v8532
        %v9316 = vmul.f32 %v7268, %v8537
        %v9317 = vmul.f32 %v7269, %v8537
        %v9318 = vmul.f32 %v7270, %v8542
        %v9319 = vmul.f32 %v7271, %v8542
        %v9320 = vmul.f32 %v7272, %v8547
        %v9321 = vmul.f32 %v7273, %v8547
        %v9322 = vmul.f32 %v7274, %v8552
        %v9323 = vmul.f32 %v7275, %v8552
        %v9324 = vmul.f32 %v7276, %v8557
        %v9325 = vmul.f32 %v7277, %v8557
        %v9326 = vmul.f32 %v7278, %v8562
        %v9327 = vmul.f32 %v7279, %v8562
        %v9328 = vmul.f32 %v7280, %v8567
        %v9329 = vmul.f32 %v7281, %v8567
        %v9330 = vmul.f32 %v7282, %v8572
        %v9331 = vmul.f32 %v7283, %v8572
        %v9332 = vmul.f32 %v7284, %v8577
        %v9333 = vmul.f32 %v7285, %v8577
        %v9334 = vmul.f32 %v7286, %v8582
        %v9335 = vmul.f32 %v7287, %v8582
        %v9336 = vmul.f32 %v7288, %v8587
        %v9337 = vmul.f32 %v7289, %v8587
        %v9338 = vmul.f32 %v7290, %v8592
        %v9339 = vmul.f32 %v7291, %v8592
        %v9340 = vmul.f32 %v7292, %v8597
        %v9341 = vmul.f32 %v7293, %v8597
        %v9342 = vmul.f32 %v7294, %v8602
        %v9343 = vmul.f32 %v7295, %v8602
        %v9344 = vmul.f32 %v7296, %v8607
        %v9345 = vmul.f32 %v7297, %v8607
        %v9346 = vmul.f32 %v7298, %v8612
        %v9347 = vmul.f32 %v7299, %v8612
        %v9348 = vmul.f32 %v7300, %v8617
        %v9349 = vmul.f32 %v7301, %v8617
        %v9350 = vmul.f32 %v7302, %v8622
        %v9351 = vmul.f32 %v7303, %v8622
        %v9352 = vmul.f32 %v7304, %v8627
        %v9353 = vmul.f32 %v7305, %v8627
        %v9354 = vmul.f32 %v7306, %v8632
        %v9355 = vmul.f32 %v7307, %v8632
        %v9356 = vmul.f32 %v7308, %v8637
        %v9357 = vmul.f32 %v7309, %v8637
        %v9358 = vmul.f32 %v7310, %v8642
        %v9359 = vmul.f32 %v7311, %v8642
        %v9360 = vmul.f32 %v7312, %v8647
        %v9361 = vmul.f32 %v7313, %v8647
        %v9362 = vmul.f32 %v7314, %v8652
        %v9363 = vmul.f32 %v7315, %v8652
        %v9364 = vmul.f32 %v7316, %v8657
        %v9365 = vmul.f32 %v7317, %v8657
        %v9366 = vmul.f32 %v7318, %v8662
        %v9367 = vmul.f32 %v7319, %v8662
        %v9368 = vmul.f32 %v7320, %v8667
        %v9369 = vmul.f32 %v7321, %v8667
        %v9370 = vmul.f32 %v7322, %v8672
        %v9371 = vmul.f32 %v7323, %v8672
        %v9372 = vmul.f32 %v7324, %v8677
        %v9373 = vmul.f32 %v7325, %v8677
        %v9374 = vmul.f32 %v7326, %v8682
        %v9375 = vmul.f32 %v7327, %v8682
        %v9376 = vmul.f32 %v7328, %v8687
        %v9377 = vmul.f32 %v7329, %v8687
        %v9378 = vmul.f32 %v7330, %v8692
        %v9379 = vmul.f32 %v7331, %v8692
        %v9380 = vmul.f32 %v7332, %v8697
        %v9381 = vmul.f32 %v7333, %v8697
        %v9382 = vmul.f32 %v7334, %v8702
        %v9383 = vmul.f32 %v7335, %v8702
        %v9384 = vmul.f32 %v7336, %v8707
        %v9385 = vmul.f32 %v7337, %v8707
        %v9386 = vmul.f32 %v7338, %v8712
        %v9387 = vmul.f32 %v7339, %v8712
        %v9388 = vmul.f32 %v7340, %v8717
        %v9389 = vmul.f32 %v7341, %v8717
        %v9390 = vmul.f32 %v7342, %v8722
        %v9391 = vmul.f32 %v7343, %v8722
        %v9392 = vmul.f32 %v7344, %v8727
        %v9393 = vmul.f32 %v7345, %v8727
        %v9394 = vmul.f32 %v7346, %v8732
        %v9395 = vmul.f32 %v7347, %v8732
        %v9396 = vmul.f32 %v7348, %v8737
        %v9397 = vmul.f32 %v7349, %v8737
        %v9398 = vmul.f32 %v7350, %v8742
        %v9399 = vmul.f32 %v7351, %v8742
        %v9400 = vmul.f32 %v7352, %v8747
        %v9401 = vmul.f32 %v7353, %v8747
        %v9402 = vmul.f32 %v7354, %v8752
        %v9403 = vmul.f32 %v7355, %v8752
        %v9404 = vmul.f32 %v7356, %v8757
        %v9405 = vmul.f32 %v7357, %v8757
        %v9406 = vmul.f32 %v7358, %v8762
        %v9407 = vmul.f32 %v7359, %v8762
        %v9408 = vmul.f32 %v7360, %v8767
        %v9409 = vmul.f32 %v7361, %v8767
        %v9410 = vmul.f32 %v7362, %v8772
        %v9411 = vmul.f32 %v7363, %v8772
        %v9412 = vmul.f32 %v7364, %v8777
        %v9413 = vmul.f32 %v7365, %v8777
        %v9414 = vmul.f32 %v7366, %v8782
        %v9415 = vmul.f32 %v7367, %v8782
        %v9416 = vmul.f32 %v7368, %v8787
        %v9417 = vmul.f32 %v7369, %v8787
        %v9418 = vmul.f32 %v7370, %v8792
        %v9419 = vmul.f32 %v7371, %v8792
        %v9420 = vmul.f32 %v7372, %v8797
        %v9421 = vmul.f32 %v7373, %v8797
        %v9422 = vmul.f32 %v7374, %v8802
        %v9423 = vmul.f32 %v7375, %v8802
        %v9424 = vmul.f32 %v7376, %v8807
        %v9425 = vmul.f32 %v7377, %v8807
        %v9426 = vmul.f32 %v7378, %v8812
        %v9427 = vmul.f32 %v7379, %v8812
        %v9428 = vmul.f32 %v7380, %v8817
        %v9429 = vmul.f32 %v7381, %v8817
        %v9430 = vmul.f32 %v7382, %v8822
        %v9431 = vmul.f32 %v7383, %v8822
        %v9432 = vmul.f32 %v7384, %v8827
        %v9433 = vmul.f32 %v7385, %v8827
        %v9434 = vmul.f32 %v7386, %v8832
        %v9435 = vmul.f32 %v7387, %v8832
        %v9436 = vmul.f32 %v7388, %v8837
        %v9437 = vmul.f32 %v7389, %v8837
        %v9438 = vmul.f32 %v7390, %v8842
        %v9439 = vmul.f32 %v7391, %v8842
        %v9440 = vmul.f32 %v7392, %v8847
        %v9441 = vmul.f32 %v7393, %v8847
        %v9442 = vmul.f32 %v7394, %v8852
        %v9443 = vmul.f32 %v7395, %v8852
        %v9444 = vmul.f32 %v7396, %v8857
        %v9445 = vmul.f32 %v7397, %v8857
        %v9446 = vmul.f32 %v7398, %v8862
        %v9447 = vmul.f32 %v7399, %v8862
        %v9448 = vmul.f32 %v7400, %v8867
        %v9449 = vmul.f32 %v7401, %v8867
        %v9450 = vmul.f32 %v7402, %v8872
        %v9451 = vmul.f32 %v7403, %v8872
        %v9452 = vmul.f32 %v7404, %v8877
        %v9453 = vmul.f32 %v7405, %v8877
        %v9454 = vmul.f32 %v7406, %v8882
        %v9455 = vmul.f32 %v7407, %v8882
        %v9456 = vmul.f32 %v7408, %v8887
        %v9457 = vmul.f32 %v7409, %v8887
        %v9458 = vmul.f32 %v7410, %v8892
        %v9459 = vmul.f32 %v7411, %v8892
        %v9460 = vmul.f32 %v7412, %v8897
        %v9461 = vmul.f32 %v7413, %v8897
        %v9462 = vmul.f32 %v7414, %v8902
        %v9463 = vmul.f32 %v7415, %v8902
        %v9464 = vmul.f32 %v7416, %v8907
        %v9465 = vmul.f32 %v7417, %v8907
        %v9466 = vmul.f32 %v7418, %v8912
        %v9467 = vmul.f32 %v7419, %v8912
        %v9468 = vmul.f32 %v7420, %v8917
        %v9469 = vmul.f32 %v7421, %v8917
        %v9470 = vmul.f32 %v7422, %v8922
        %v9471 = vmul.f32 %v7423, %v8922
        %v9472 = vmul.f32 %v7424, %v8927
        %v9473 = vmul.f32 %v7425, %v8927
        %v9474 = vmul.f32 %v7426, %v8932
        %v9475 = vmul.f32 %v7427, %v8932
        %v9476 = vmul.f32 %v7428, %v8937
        %v9477 = vmul.f32 %v7429, %v8937
        %v9478 = vmul.f32 %v7430, %v8942
        %v9479 = vmul.f32 %v7431, %v8942
        %v9480 = vmul.f32 %v7432, %v8947
        %v9481 = vmul.f32 %v7433, %v8947
        %v9482 = vmul.f32 %v7434, %v8952
        %v9483 = vmul.f32 %v7435, %v8952
        %v9484 = vmul.f32 %v7436, %v8957
        %v9485 = vmul.f32 %v7437, %v8957
        %v9486 = vmul.f32 %v7438, %v8962
        %v9487 = vmul.f32 %v7439, %v8962
        %v9488 = vmul.f32 %v7440, %v8967
        %v9489 = vmul.f32 %v7441, %v8967
        %v9490 = vmul.f32 %v7442, %v8972
        %v9491 = vmul.f32 %v7443, %v8972
        %v9492 = vmul.f32 %v7444, %v8977
        %v9493 = vmul.f32 %v7445, %v8977
        %v9494 = vmul.f32 %v7446, %v8982
        %v9495 = vmul.f32 %v7447, %v8982
        %v9496 = vadd.f32 %v8984, %v8986
        %v9497 = vadd.f32 %v9496, %v8988
        %v9498 = vadd.f32 %v9497, %v8990
        %v9499 = vadd.f32 %v9498, %v8992
        %v9500 = vadd.f32 %v9499, %v8994
        %v9501 = vadd.f32 %v9500, %v8996
        %v9502 = vadd.f32 %v9501, %v8998
        %v9503 = vadd.f32 %v9502, %v9000
        %v9504 = vadd.f32 %v9503, %v9002
        %v9505 = vadd.f32 %v9504, %v9004
        %v9506 = vadd.f32 %v9505, %v9006
        %v9507 = vadd.f32 %v9506, %v9008
        %v9508 = vadd.f32 %v9507, %v9010
        %v9509 = vadd.f32 %v9508, %v9012
        %v9510 = vadd.f32 %v9509, %v9014
        %v9511 = vadd.f32 %v9510, %v9016
        %v9512 = vadd.f32 %v9511, %v9018
        %v9513 = vadd.f32 %v9512, %v9020
        %v9514 = vadd.f32 %v9513, %v9022
        %v9515 = vadd.f32 %v9514, %v9024
        %v9516 = vadd.f32 %v9515, %v9026
        %v9517 = vadd.f32 %v9516, %v9028
        %v9518 = vadd.f32 %v9517, %v9030
        %v9519 = vadd.f32 %v9518, %v9032
        %v9520 = vadd.f32 %v9519, %v9034
        %v9521 = vadd.f32 %v9520, %v9036
        %v9522 = vadd.f32 %v9521, %v9038
        %v9523 = vadd.f32 %v9522, %v9040
        %v9524 = vadd.f32 %v9523, %v9042
        %v9525 = vadd.f32 %v9524, %v9044
        %v9526 = vadd.f32 %v9525, %v9046
        %v9527 = vadd.f32 %v9526, %v9048
        %v9528 = vadd.f32 %v9527, %v9050
        %v9529 = vadd.f32 %v9528, %v9052
        %v9530 = vadd.f32 %v9529, %v9054
        %v9531 = vadd.f32 %v9530, %v9056
        %v9532 = vadd.f32 %v9531, %v9058
        %v9533 = vadd.f32 %v9532, %v9060
        %v9534 = vadd.f32 %v9533, %v9062
        %v9535 = vadd.f32 %v9534, %v9064
        %v9536 = vadd.f32 %v9535, %v9066
        %v9537 = vadd.f32 %v9536, %v9068
        %v9538 = vadd.f32 %v9537, %v9070
        %v9539 = vadd.f32 %v9538, %v9072
        %v9540 = vadd.f32 %v9539, %v9074
        %v9541 = vadd.f32 %v9540, %v9076
        %v9542 = vadd.f32 %v9541, %v9078
        %v9543 = vadd.f32 %v9542, %v9080
        %v9544 = vadd.f32 %v9543, %v9082
        %v9545 = vadd.f32 %v9544, %v9084
        %v9546 = vadd.f32 %v9545, %v9086
        %v9547 = vadd.f32 %v9546, %v9088
        %v9548 = vadd.f32 %v9547, %v9090
        %v9549 = vadd.f32 %v9548, %v9092
        %v9550 = vadd.f32 %v9549, %v9094
        %v9551 = vadd.f32 %v9550, %v9096
        %v9552 = vadd.f32 %v9551, %v9098
        %v9553 = vadd.f32 %v9552, %v9100
        %v9554 = vadd.f32 %v9553, %v9102
        %v9555 = vadd.f32 %v9554, %v9104
        %v9556 = vadd.f32 %v9555, %v9106
        %v9557 = vadd.f32 %v9556, %v9108
        %v9558 = vadd.f32 %v9557, %v9110
        %v9559 = vadd.f32 %v9558, %v9112
        %v9560 = vadd.f32 %v9559, %v9114
        %v9561 = vadd.f32 %v9560, %v9116
        %v9562 = vadd.f32 %v9561, %v9118
        %v9563 = vadd.f32 %v9562, %v9120
        %v9564 = vadd.f32 %v9563, %v9122
        %v9565 = vadd.f32 %v9564, %v9124
        %v9566 = vadd.f32 %v9565, %v9126
        %v9567 = vadd.f32 %v9566, %v9128
        %v9568 = vadd.f32 %v9567, %v9130
        %v9569 = vadd.f32 %v9568, %v9132
        %v9570 = vadd.f32 %v9569, %v9134
        %v9571 = vadd.f32 %v9570, %v9136
        %v9572 = vadd.f32 %v9571, %v9138
        %v9573 = vadd.f32 %v9572, %v9140
        %v9574 = vadd.f32 %v9573, %v9142
        %v9575 = vadd.f32 %v9574, %v9144
        %v9576 = vadd.f32 %v9575, %v9146
        %v9577 = vadd.f32 %v9576, %v9148
        %v9578 = vadd.f32 %v9577, %v9150
        %v9579 = vadd.f32 %v9578, %v9152
        %v9580 = vadd.f32 %v9579, %v9154
        %v9581 = vadd.f32 %v9580, %v9156
        %v9582 = vadd.f32 %v9581, %v9158
        %v9583 = vadd.f32 %v9582, %v9160
        %v9584 = vadd.f32 %v9583, %v9162
        %v9585 = vadd.f32 %v9584, %v9164
        %v9586 = vadd.f32 %v9585, %v9166
        %v9587 = vadd.f32 %v9586, %v9168
        %v9588 = vadd.f32 %v9587, %v9170
        %v9589 = vadd.f32 %v9588, %v9172
        %v9590 = vadd.f32 %v9589, %v9174
        %v9591 = vadd.f32 %v9590, %v9176
        %v9592 = vadd.f32 %v9591, %v9178
        %v9593 = vadd.f32 %v9592, %v9180
        %v9594 = vadd.f32 %v9593, %v9182
        %v9595 = vadd.f32 %v9594, %v9184
        %v9596 = vadd.f32 %v9595, %v9186
        %v9597 = vadd.f32 %v9596, %v9188
        %v9598 = vadd.f32 %v9597, %v9190
        %v9599 = vadd.f32 %v9598, %v9192
        %v9600 = vadd.f32 %v9599, %v9194
        %v9601 = vadd.f32 %v9600, %v9196
        %v9602 = vadd.f32 %v9601, %v9198
        %v9603 = vadd.f32 %v9602, %v9200
        %v9604 = vadd.f32 %v9603, %v9202
        %v9605 = vadd.f32 %v9604, %v9204
        %v9606 = vadd.f32 %v9605, %v9206
        %v9607 = vadd.f32 %v9606, %v9208
        %v9608 = vadd.f32 %v9607, %v9210
        %v9609 = vadd.f32 %v9608, %v9212
        %v9610 = vadd.f32 %v9609, %v9214
        %v9611 = vadd.f32 %v9610, %v9216
        %v9612 = vadd.f32 %v9611, %v9218
        %v9613 = vadd.f32 %v9612, %v9220
        %v9614 = vadd.f32 %v9613, %v9222
        %v9615 = vadd.f32 %v9614, %v9224
        %v9616 = vadd.f32 %v9615, %v9226
        %v9617 = vadd.f32 %v9616, %v9228
        %v9618 = vadd.f32 %v9617, %v9230
        %v9619 = vadd.f32 %v9618, %v9232
        %v9620 = vadd.f32 %v9619, %v9234
        %v9621 = vadd.f32 %v9620, %v9236
        %v9622 = vadd.f32 %v9621, %v9238
        %v9623 = vadd.f32 %v9622, %v9240
        %v9624 = vadd.f32 %v9623, %v9242
        %v9625 = vadd.f32 %v9624, %v9244
        %v9626 = vadd.f32 %v9625, %v9246
        %v9627 = vadd.f32 %v9626, %v9248
        %v9628 = vadd.f32 %v9627, %v9250
        %v9629 = vadd.f32 %v9628, %v9252
        %v9630 = vadd.f32 %v9629, %v9254
        %v9631 = vadd.f32 %v9630, %v9256
        %v9632 = vadd.f32 %v9631, %v9258
        %v9633 = vadd.f32 %v9632, %v9260
        %v9634 = vadd.f32 %v9633, %v9262
        %v9635 = vadd.f32 %v9634, %v9264
        %v9636 = vadd.f32 %v9635, %v9266
        %v9637 = vadd.f32 %v9636, %v9268
        %v9638 = vadd.f32 %v9637, %v9270
        %v9639 = vadd.f32 %v9638, %v9272
        %v9640 = vadd.f32 %v9639, %v9274
        %v9641 = vadd.f32 %v9640, %v9276
        %v9642 = vadd.f32 %v9641, %v9278
        %v9643 = vadd.f32 %v9642, %v9280
        %v9644 = vadd.f32 %v9643, %v9282
        %v9645 = vadd.f32 %v9644, %v9284
        %v9646 = vadd.f32 %v9645, %v9286
        %v9647 = vadd.f32 %v9646, %v9288
        %v9648 = vadd.f32 %v9647, %v9290
        %v9649 = vadd.f32 %v9648, %v9292
        %v9650 = vadd.f32 %v9649, %v9294
        %v9651 = vadd.f32 %v9650, %v9296
        %v9652 = vadd.f32 %v9651, %v9298
        %v9653 = vadd.f32 %v9652, %v9300
        %v9654 = vadd.f32 %v9653, %v9302
        %v9655 = vadd.f32 %v9654, %v9304
        %v9656 = vadd.f32 %v9655, %v9306
        %v9657 = vadd.f32 %v9656, %v9308
        %v9658 = vadd.f32 %v9657, %v9310
        %v9659 = vadd.f32 %v9658, %v9312
        %v9660 = vadd.f32 %v9659, %v9314
        %v9661 = vadd.f32 %v9660, %v9316
        %v9662 = vadd.f32 %v9661, %v9318
        %v9663 = vadd.f32 %v9662, %v9320
        %v9664 = vadd.f32 %v9663, %v9322
        %v9665 = vadd.f32 %v9664, %v9324
        %v9666 = vadd.f32 %v9665, %v9326
        %v9667 = vadd.f32 %v9666, %v9328
        %v9668 = vadd.f32 %v9667, %v9330
        %v9669 = vadd.f32 %v9668, %v9332
        %v9670 = vadd.f32 %v9669, %v9334
        %v9671 = vadd.f32 %v9670, %v9336
        %v9672 = vadd.f32 %v9671, %v9338
        %v9673 = vadd.f32 %v9672, %v9340
        %v9674 = vadd.f32 %v9673, %v9342
        %v9675 = vadd.f32 %v9674, %v9344
        %v9676 = vadd.f32 %v9675, %v9346
        %v9677 = vadd.f32 %v9676, %v9348
        %v9678 = vadd.f32 %v9677, %v9350
        %v9679 = vadd.f32 %v9678, %v9352
        %v9680 = vadd.f32 %v9679, %v9354
        %v9681 = vadd.f32 %v9680, %v9356
        %v9682 = vadd.f32 %v9681, %v9358
        %v9683 = vadd.f32 %v9682, %v9360
        %v9684 = vadd.f32 %v9683, %v9362
        %v9685 = vadd.f32 %v9684, %v9364
        %v9686 = vadd.f32 %v9685, %v9366
        %v9687 = vadd.f32 %v9686, %v9368
        %v9688 = vadd.f32 %v9687, %v9370
        %v9689 = vadd.f32 %v9688, %v9372
        %v9690 = vadd.f32 %v9689, %v9374
        %v9691 = vadd.f32 %v9690, %v9376
        %v9692 = vadd.f32 %v9691, %v9378
        %v9693 = vadd.f32 %v9692, %v9380
        %v9694 = vadd.f32 %v9693, %v9382
        %v9695 = vadd.f32 %v9694, %v9384
        %v9696 = vadd.f32 %v9695, %v9386
        %v9697 = vadd.f32 %v9696, %v9388
        %v9698 = vadd.f32 %v9697, %v9390
        %v9699 = vadd.f32 %v9698, %v9392
        %v9700 = vadd.f32 %v9699, %v9394
        %v9701 = vadd.f32 %v9700, %v9396
        %v9702 = vadd.f32 %v9701, %v9398
        %v9703 = vadd.f32 %v9702, %v9400
        %v9704 = vadd.f32 %v9703, %v9402
        %v9705 = vadd.f32 %v9704, %v9404
        %v9706 = vadd.f32 %v9705, %v9406
        %v9707 = vadd.f32 %v9706, %v9408
        %v9708 = vadd.f32 %v9707, %v9410
        %v9709 = vadd.f32 %v9708, %v9412
        %v9710 = vadd.f32 %v9709, %v9414
        %v9711 = vadd.f32 %v9710, %v9416
        %v9712 = vadd.f32 %v9711, %v9418
        %v9713 = vadd.f32 %v9712, %v9420
        %v9714 = vadd.f32 %v9713, %v9422
        %v9715 = vadd.f32 %v9714, %v9424
        %v9716 = vadd.f32 %v9715, %v9426
        %v9717 = vadd.f32 %v9716, %v9428
        %v9718 = vadd.f32 %v9717, %v9430
        %v9719 = vadd.f32 %v9718, %v9432
        %v9720 = vadd.f32 %v9719, %v9434
        %v9721 = vadd.f32 %v9720, %v9436
        %v9722 = vadd.f32 %v9721, %v9438
        %v9723 = vadd.f32 %v9722, %v9440
        %v9724 = vadd.f32 %v9723, %v9442
        %v9725 = vadd.f32 %v9724, %v9444
        %v9726 = vadd.f32 %v9725, %v9446
        %v9727 = vadd.f32 %v9726, %v9448
        %v9728 = vadd.f32 %v9727, %v9450
        %v9729 = vadd.f32 %v9728, %v9452
        %v9730 = vadd.f32 %v9729, %v9454
        %v9731 = vadd.f32 %v9730, %v9456
        %v9732 = vadd.f32 %v9731, %v9458
        %v9733 = vadd.f32 %v9732, %v9460
        %v9734 = vadd.f32 %v9733, %v9462
        %v9735 = vadd.f32 %v9734, %v9464
        %v9736 = vadd.f32 %v9735, %v9466
        %v9737 = vadd.f32 %v9736, %v9468
        %v9738 = vadd.f32 %v9737, %v9470
        %v9739 = vadd.f32 %v9738, %v9472
        %v9740 = vadd.f32 %v9739, %v9474
        %v9741 = vadd.f32 %v9740, %v9476
        %v9742 = vadd.f32 %v9741, %v9478
        %v9743 = vadd.f32 %v9742, %v9480
        %v9744 = vadd.f32 %v9743, %v9482
        %v9745 = vadd.f32 %v9744, %v9484
        %v9746 = vadd.f32 %v9745, %v9486
        %v9747 = vadd.f32 %v9746, %v9488
        %v9748 = vadd.f32 %v9747, %v9490
        %v9749 = vadd.f32 %v9748, %v9492
        %v9750 = vadd.f32 %v9749, %v9494
        %v9751 = vrot.slane %v9750, 4
        %v9752 = vadd.f32 %v9750, %v9751
        %v9753 = vrot.slane %v9752, 2
        %v9754 = vadd.f32 %v9752, %v9753
        %v9755 = vrot.slane %v9754, 1
        %v9756 = vadd.f32 %v9754, %v9755
        %v9757 = vadd.f32 %v8985, %v8987
        %v9758 = vadd.f32 %v9757, %v8989
        %v9759 = vadd.f32 %v9758, %v8991
        %v9760 = vadd.f32 %v9759, %v8993
        %v9761 = vadd.f32 %v9760, %v8995
        %v9762 = vadd.f32 %v9761, %v8997
        %v9763 = vadd.f32 %v9762, %v8999
        %v9764 = vadd.f32 %v9763, %v9001
        %v9765 = vadd.f32 %v9764, %v9003
        %v9766 = vadd.f32 %v9765, %v9005
        %v9767 = vadd.f32 %v9766, %v9007
        %v9768 = vadd.f32 %v9767, %v9009
        %v9769 = vadd.f32 %v9768, %v9011
        %v9770 = vadd.f32 %v9769, %v9013
        %v9771 = vadd.f32 %v9770, %v9015
        %v9772 = vadd.f32 %v9771, %v9017
        %v9773 = vadd.f32 %v9772, %v9019
        %v9774 = vadd.f32 %v9773, %v9021
        %v9775 = vadd.f32 %v9774, %v9023
        %v9776 = vadd.f32 %v9775, %v9025
        %v9777 = vadd.f32 %v9776, %v9027
        %v9778 = vadd.f32 %v9777, %v9029
        %v9779 = vadd.f32 %v9778, %v9031
        %v9780 = vadd.f32 %v9779, %v9033
        %v9781 = vadd.f32 %v9780, %v9035
        %v9782 = vadd.f32 %v9781, %v9037
        %v9783 = vadd.f32 %v9782, %v9039
        %v9784 = vadd.f32 %v9783, %v9041
        %v9785 = vadd.f32 %v9784, %v9043
        %v9786 = vadd.f32 %v9785, %v9045
        %v9787 = vadd.f32 %v9786, %v9047
        %v9788 = vadd.f32 %v9787, %v9049
        %v9789 = vadd.f32 %v9788, %v9051
        %v9790 = vadd.f32 %v9789, %v9053
        %v9791 = vadd.f32 %v9790, %v9055
        %v9792 = vadd.f32 %v9791, %v9057
        %v9793 = vadd.f32 %v9792, %v9059
        %v9794 = vadd.f32 %v9793, %v9061
        %v9795 = vadd.f32 %v9794, %v9063
        %v9796 = vadd.f32 %v9795, %v9065
        %v9797 = vadd.f32 %v9796, %v9067
        %v9798 = vadd.f32 %v9797, %v9069
        %v9799 = vadd.f32 %v9798, %v9071
        %v9800 = vadd.f32 %v9799, %v9073
        %v9801 = vadd.f32 %v9800, %v9075
        %v9802 = vadd.f32 %v9801, %v9077
        %v9803 = vadd.f32 %v9802, %v9079
        %v9804 = vadd.f32 %v9803, %v9081
        %v9805 = vadd.f32 %v9804, %v9083
        %v9806 = vadd.f32 %v9805, %v9085
        %v9807 = vadd.f32 %v9806, %v9087
        %v9808 = vadd.f32 %v9807, %v9089
        %v9809 = vadd.f32 %v9808, %v9091
        %v9810 = vadd.f32 %v9809, %v9093
        %v9811 = vadd.f32 %v9810, %v9095
        %v9812 = vadd.f32 %v9811, %v9097
        %v9813 = vadd.f32 %v9812, %v9099
        %v9814 = vadd.f32 %v9813, %v9101
        %v9815 = vadd.f32 %v9814, %v9103
        %v9816 = vadd.f32 %v9815, %v9105
        %v9817 = vadd.f32 %v9816, %v9107
        %v9818 = vadd.f32 %v9817, %v9109
        %v9819 = vadd.f32 %v9818, %v9111
        %v9820 = vadd.f32 %v9819, %v9113
        %v9821 = vadd.f32 %v9820, %v9115
        %v9822 = vadd.f32 %v9821, %v9117
        %v9823 = vadd.f32 %v9822, %v9119
        %v9824 = vadd.f32 %v9823, %v9121
        %v9825 = vadd.f32 %v9824, %v9123
        %v9826 = vadd.f32 %v9825, %v9125
        %v9827 = vadd.f32 %v9826, %v9127
        %v9828 = vadd.f32 %v9827, %v9129
        %v9829 = vadd.f32 %v9828, %v9131
        %v9830 = vadd.f32 %v9829, %v9133
        %v9831 = vadd.f32 %v9830, %v9135
        %v9832 = vadd.f32 %v9831, %v9137
        %v9833 = vadd.f32 %v9832, %v9139
        %v9834 = vadd.f32 %v9833, %v9141
        %v9835 = vadd.f32 %v9834, %v9143
        %v9836 = vadd.f32 %v9835, %v9145
        %v9837 = vadd.f32 %v9836, %v9147
        %v9838 = vadd.f32 %v9837, %v9149
        %v9839 = vadd.f32 %v9838, %v9151
        %v9840 = vadd.f32 %v9839, %v9153
        %v9841 = vadd.f32 %v9840, %v9155
        %v9842 = vadd.f32 %v9841, %v9157
        %v9843 = vadd.f32 %v9842, %v9159
        %v9844 = vadd.f32 %v9843, %v9161
        %v9845 = vadd.f32 %v9844, %v9163
        %v9846 = vadd.f32 %v9845, %v9165
        %v9847 = vadd.f32 %v9846, %v9167
        %v9848 = vadd.f32 %v9847, %v9169
        %v9849 = vadd.f32 %v9848, %v9171
        %v9850 = vadd.f32 %v9849, %v9173
        %v9851 = vadd.f32 %v9850, %v9175
        %v9852 = vadd.f32 %v9851, %v9177
        %v9853 = vadd.f32 %v9852, %v9179
        %v9854 = vadd.f32 %v9853, %v9181
        %v9855 = vadd.f32 %v9854, %v9183
        %v9856 = vadd.f32 %v9855, %v9185
        %v9857 = vadd.f32 %v9856, %v9187
        %v9858 = vadd.f32 %v9857, %v9189
        %v9859 = vadd.f32 %v9858, %v9191
        %v9860 = vadd.f32 %v9859, %v9193
        %v9861 = vadd.f32 %v9860, %v9195
        %v9862 = vadd.f32 %v9861, %v9197
        %v9863 = vadd.f32 %v9862, %v9199
        %v9864 = vadd.f32 %v9863, %v9201
        %v9865 = vadd.f32 %v9864, %v9203
        %v9866 = vadd.f32 %v9865, %v9205
        %v9867 = vadd.f32 %v9866, %v9207
        %v9868 = vadd.f32 %v9867, %v9209
        %v9869 = vadd.f32 %v9868, %v9211
        %v9870 = vadd.f32 %v9869, %v9213
        %v9871 = vadd.f32 %v9870, %v9215
        %v9872 = vadd.f32 %v9871, %v9217
        %v9873 = vadd.f32 %v9872, %v9219
        %v9874 = vadd.f32 %v9873, %v9221
        %v9875 = vadd.f32 %v9874, %v9223
        %v9876 = vadd.f32 %v9875, %v9225
        %v9877 = vadd.f32 %v9876, %v9227
        %v9878 = vadd.f32 %v9877, %v9229
        %v9879 = vadd.f32 %v9878, %v9231
        %v9880 = vadd.f32 %v9879, %v9233
        %v9881 = vadd.f32 %v9880, %v9235
        %v9882 = vadd.f32 %v9881, %v9237
        %v9883 = vadd.f32 %v9882, %v9239
        %v9884 = vadd.f32 %v9883, %v9241
        %v9885 = vadd.f32 %v9884, %v9243
        %v9886 = vadd.f32 %v9885, %v9245
        %v9887 = vadd.f32 %v9886, %v9247
        %v9888 = vadd.f32 %v9887, %v9249
        %v9889 = vadd.f32 %v9888, %v9251
        %v9890 = vadd.f32 %v9889, %v9253
        %v9891 = vadd.f32 %v9890, %v9255
        %v9892 = vadd.f32 %v9891, %v9257
        %v9893 = vadd.f32 %v9892, %v9259
        %v9894 = vadd.f32 %v9893, %v9261
        %v9895 = vadd.f32 %v9894, %v9263
        %v9896 = vadd.f32 %v9895, %v9265
        %v9897 = vadd.f32 %v9896, %v9267
        %v9898 = vadd.f32 %v9897, %v9269
        %v9899 = vadd.f32 %v9898, %v9271
        %v9900 = vadd.f32 %v9899, %v9273
        %v9901 = vadd.f32 %v9900, %v9275
        %v9902 = vadd.f32 %v9901, %v9277
        %v9903 = vadd.f32 %v9902, %v9279
        %v9904 = vadd.f32 %v9903, %v9281
        %v9905 = vadd.f32 %v9904, %v9283
        %v9906 = vadd.f32 %v9905, %v9285
        %v9907 = vadd.f32 %v9906, %v9287
        %v9908 = vadd.f32 %v9907, %v9289
        %v9909 = vadd.f32 %v9908, %v9291
        %v9910 = vadd.f32 %v9909, %v9293
        %v9911 = vadd.f32 %v9910, %v9295
        %v9912 = vadd.f32 %v9911, %v9297
        %v9913 = vadd.f32 %v9912, %v9299
        %v9914 = vadd.f32 %v9913, %v9301
        %v9915 = vadd.f32 %v9914, %v9303
        %v9916 = vadd.f32 %v9915, %v9305
        %v9917 = vadd.f32 %v9916, %v9307
        %v9918 = vadd.f32 %v9917, %v9309
        %v9919 = vadd.f32 %v9918, %v9311
        %v9920 = vadd.f32 %v9919, %v9313
        %v9921 = vadd.f32 %v9920, %v9315
        %v9922 = vadd.f32 %v9921, %v9317
        %v9923 = vadd.f32 %v9922, %v9319
        %v9924 = vadd.f32 %v9923, %v9321
        %v9925 = vadd.f32 %v9924, %v9323
        %v9926 = vadd.f32 %v9925, %v9325
        %v9927 = vadd.f32 %v9926, %v9327
        %v9928 = vadd.f32 %v9927, %v9329
        %v9929 = vadd.f32 %v9928, %v9331
        %v9930 = vadd.f32 %v9929, %v9333
        %v9931 = vadd.f32 %v9930, %v9335
        %v9932 = vadd.f32 %v9931, %v9337
        %v9933 = vadd.f32 %v9932, %v9339
        %v9934 = vadd.f32 %v9933, %v9341
        %v9935 = vadd.f32 %v9934, %v9343
        %v9936 = vadd.f32 %v9935, %v9345
        %v9937 = vadd.f32 %v9936, %v9347
        %v9938 = vadd.f32 %v9937, %v9349
        %v9939 = vadd.f32 %v9938, %v9351
        %v9940 = vadd.f32 %v9939, %v9353
        %v9941 = vadd.f32 %v9940, %v9355
        %v9942 = vadd.f32 %v9941, %v9357
        %v9943 = vadd.f32 %v9942, %v9359
        %v9944 = vadd.f32 %v9943, %v9361
        %v9945 = vadd.f32 %v9944, %v9363
        %v9946 = vadd.f32 %v9945, %v9365
        %v9947 = vadd.f32 %v9946, %v9367
        %v9948 = vadd.f32 %v9947, %v9369
        %v9949 = vadd.f32 %v9948, %v9371
        %v9950 = vadd.f32 %v9949, %v9373
        %v9951 = vadd.f32 %v9950, %v9375
        %v9952 = vadd.f32 %v9951, %v9377
        %v9953 = vadd.f32 %v9952, %v9379
        %v9954 = vadd.f32 %v9953, %v9381
        %v9955 = vadd.f32 %v9954, %v9383
        %v9956 = vadd.f32 %v9955, %v9385
        %v9957 = vadd.f32 %v9956, %v9387
        %v9958 = vadd.f32 %v9957, %v9389
        %v9959 = vadd.f32 %v9958, %v9391
        %v9960 = vadd.f32 %v9959, %v9393
        %v9961 = vadd.f32 %v9960, %v9395
        %v9962 = vadd.f32 %v9961, %v9397
        %v9963 = vadd.f32 %v9962, %v9399
        %v9964 = vadd.f32 %v9963, %v9401
        %v9965 = vadd.f32 %v9964, %v9403
        %v9966 = vadd.f32 %v9965, %v9405
        %v9967 = vadd.f32 %v9966, %v9407
        %v9968 = vadd.f32 %v9967, %v9409
        %v9969 = vadd.f32 %v9968, %v9411
        %v9970 = vadd.f32 %v9969, %v9413
        %v9971 = vadd.f32 %v9970, %v9415
        %v9972 = vadd.f32 %v9971, %v9417
        %v9973 = vadd.f32 %v9972, %v9419
        %v9974 = vadd.f32 %v9973, %v9421
        %v9975 = vadd.f32 %v9974, %v9423
        %v9976 = vadd.f32 %v9975, %v9425
        %v9977 = vadd.f32 %v9976, %v9427
        %v9978 = vadd.f32 %v9977, %v9429
        %v9979 = vadd.f32 %v9978, %v9431
        %v9980 = vadd.f32 %v9979, %v9433
        %v9981 = vadd.f32 %v9980, %v9435
        %v9982 = vadd.f32 %v9981, %v9437
        %v9983 = vadd.f32 %v9982, %v9439
        %v9984 = vadd.f32 %v9983, %v9441
        %v9985 = vadd.f32 %v9984, %v9443
        %v9986 = vadd.f32 %v9985, %v9445
        %v9987 = vadd.f32 %v9986, %v9447
        %v9988 = vadd.f32 %v9987, %v9449
        %v9989 = vadd.f32 %v9988, %v9451
        %v9990 = vadd.f32 %v9989, %v9453
        %v9991 = vadd.f32 %v9990, %v9455
        %v9992 = vadd.f32 %v9991, %v9457
        %v9993 = vadd.f32 %v9992, %v9459
        %v9994 = vadd.f32 %v9993, %v9461
        %v9995 = vadd.f32 %v9994, %v9463
        %v9996 = vadd.f32 %v9995, %v9465
        %v9997 = vadd.f32 %v9996, %v9467
        %v9998 = vadd.f32 %v9997, %v9469
        %v9999 = vadd.f32 %v9998, %v9471
        %v10000 = vadd.f32 %v9999, %v9473
        %v10001 = vadd.f32 %v10000, %v9475
        %v10002 = vadd.f32 %v10001, %v9477
        %v10003 = vadd.f32 %v10002, %v9479
        %v10004 = vadd.f32 %v10003, %v9481
        %v10005 = vadd.f32 %v10004, %v9483
        %v10006 = vadd.f32 %v10005, %v9485
        %v10007 = vadd.f32 %v10006, %v9487
        %v10008 = vadd.f32 %v10007, %v9489
        %v10009 = vadd.f32 %v10008, %v9491
        %v10010 = vadd.f32 %v10009, %v9493
        %v10011 = vadd.f32 %v10010, %v9495
        %v10012 = vrot.slane %v10011, 4
        %v10013 = vadd.f32 %v10011, %v10012
        %v10014 = vrot.slane %v10013, 2
        %v10015 = vadd.f32 %v10013, %v10014
        %v10016 = vrot.slane %v10015, 1
        %v10017 = vadd.f32 %v10015, %v10016
        %v10018 = vld [vmem:[#allocation2] sm:$0x1]
        %10020 = vset.pattern.permute.xlu0 0
        %10021 = vperm.xlu0 %10020, %v10018
        %v10022 = vpop.permute.xlu0 %10021
        %v10024 = vlaneseq
        %v10025 = vshrl.u32 %v10024, 7
        %v10026 = vsub.s32 0, %v10025
        %v10027 = vrot.slane %v10022, %v10026
        %v10028 = vadd.f32 %v9756, %v10027
        %v10029 = vadd.f32 %v10017, %v10027
        %v10032 = vcombine.low %v10028, %v10029
        %v10034 = vunpack.c.l.s4 1966171168
        %v10035 = vunpack.c.0.s8 %v10034
        %v10036 = vlaneseq
        %v10037 = vshrl.u32 %v10036, 7
        %v10038 = vsub.s32 %v10035, %v10037
        %v10039 = vrot.slane %v10032, %v10038
        %v10041 = vunpack.c.l.s4 1966171168
        %v10042 = vunpack.c.0.s8 %v10041
        %v10043 = vlaneseq
        %v10044 = vshrl.u32 %v10043, 7
        %v10045 = vsub.s32 %v10042, %v10044
        %v10046 = vrot.slane %v10039, %v10045
        %v10048 = vlaneseq
        %vm10049 = vcmp.ge.s32.totalorder %v10048, 0
        %vm10050 = vcmp.lt.s32.totalorder %v10048, 256
        %vm10051 = vmand %vm10049, %vm10050
        %10052 = vst.msk [vmem:[%s247] sm:$0x3] %vm10051, %v10046
        %s10053 = sand.u32 %s161, 1
        %s10054 = scalar_lea.sflag [#allocation4], %s10053
        %s10055 = sand.u32 %s161, 1
        %s10056 = smul.addr %s10055, 2
        %s10057 = scalar_lea.vmem [#allocation3], %s10056
        // Predicated region
        $region45: #{tpu_custom_call.1} parent=43 // pred_check
          %p10058 = pneg %p171
        $region46: #{tpu_custom_call.1} parent=43 // pred_check_branch
          %10060 = sbr.rel (%p10058) target = $region48
        $region47: #{tpu_custom_call.1} parent=43 // pred_region
          %s10061 = smul.u32 2, %s22
          %s10063 = ssub.s32 32, 32
          %10064 = vsyncadd %s10054, %s10063
          %s10065 = smul.addr %s10061, 16
          %s10066 = scalar_lea.hbm %s6, %s10065
          %s10068 = sshll.u32 %s10057, 4
          %s10069 = int_to_ptr.vmem [resolvable:$true] %s10068
          %10071 = dma.vmem_to_hbm [thread:$0]  %s10069, 32, %s10066, %s10054
        $region48: #{tpu_custom_call.1} parent=43 // pred_fallthru
          _
      $region44: #{tpu_custom_call.1} parent=5 // pred_fallthru
        _
      %p10072 = scmp.le.s32.totalorder 2, %s17
      // Predicated region
      $region49: #{tpu_custom_call.1} parent=5 // pred_check
        %p10073 = pneg %p10072
      $region50: #{tpu_custom_call.1} parent=5 // pred_check_branch
        %10075 = sbr.rel (%p10073) target = $region52
      $region51: #{tpu_custom_call.1} parent=5 // pred_region
        %s10076 = ssub.s32 %s17, 2
        // Predicated region
        $region53: #{tpu_custom_call.1} parent=51 // pred_check
          %p10077 = pneg %p177
        $region54: #{tpu_custom_call.1} parent=51 // pred_check_branch
          %10079 = sbr.rel (%p10077) target = $region56
        $region55: #{tpu_custom_call.1} parent=51 // pred_region
          %s10080 = sand.u32 %s162, 1
          %s10081 = scalar_lea.sflag [#allocation4], %s10080
          %s10082 = sand.u32 %s162, 1
          %s10083 = smul.addr %s10082, 2
          %s10084 = scalar_lea.vmem [#allocation3], %s10083
          %10085 = dma.done %s10081, 32
        $region56: #{tpu_custom_call.1} parent=51 // pred_fallthru
          _
      $region52: #{tpu_custom_call.1} parent=5 // pred_fallthru
        _
    $region6: #{tpu_custom_call.1} parent=1 // loop_footer
      %s21 = sadd.s32 1, %s17
    $region7: #{tpu_custom_call.1} parent=1 // loop_footer_branch
      %16 = sbr.rel target = $region3
    $region8: #{tpu_custom_call.1} parent=1 // loop_exit
      _
    %10086 = vsyncpa [#allocation4], 1
    %s10087 = scalar_lea.sflag [#allocation4], 1
    %10088 = vsyncpa %s10087, 1

</llo_original>
